<compile_context>
chip_gen: v5e
topology: v5e:2x2
jax: 0.10.0
libtpu: 0.0.40
codegen_flags: <defaults>
</compile_context>

<pallas_src>
import functools

import numpy as np
import jax
import jax.numpy as jnp
from jax import lax
from jax.experimental import pallas as pl
from jax.experimental.pallas import tpu as pltpu

PAD = 0            # Constants.PAD
LN_EPS = 1e-5      # torch.nn.LayerNorm default eps
NEG_INF = -1e30    # finite "masked" value (avoids inf - inf = NaN)
LANE = 128


def _round_up(x, m):
    return ((x + m - 1) // m) * m


def _pick_block_b(B, L, target_rows=256, max_unroll=8):
    """Largest divisor of B such that block_b*L feeds the MXU decent M tiles
    while keeping the in-kernel per-batch attention unroll bounded."""
    limit = max(1, min(max_unroll, target_rows // max(L, 1)))
    for bb in range(min(B, limit), 0, -1):
        if B % bb == 0:
            return bb
    return 1


# ----------------------------------------------------------------------------
# Fused decoder-STACK kernel: grid = (batch_blocks, n_layers).
# The output block (the residual stream) is resident across the layer axis.
# ----------------------------------------------------------------------------
def decoder_stack_kernel(
        x_ref, enc_ref, tgt_ref, src_ref,
        s_wq, s_bq, s_wkv, s_bkv, s_wo, s_bo, s_g, s_b,
        c_wq, c_bq, c_wkv, c_bkv, c_wo, c_bo, c_g, c_b,
        f_w1, f_b1, f_w2, f_b2, f_g, f_b,
        out_ref,
        *, n_head, d_h, d_hv, d_model):
    layer = pl.program_id(1)

    # Layer 0: seed the resident activation block with the (padded) embeddings.
    @pl.when(layer == 0)
    def _():
        out_ref[...] = x_ref[...]

    Bt, Lt, Dp = out_ref.shape
    Ls = enc_ref.shape[1]
    hdh = n_head * d_h

    # Residual stream: kept in VMEM (bf16) across layers, f32 inside the layer.
    x = out_ref[...].astype(jnp.float32).reshape(Bt * Lt, Dp)
    enc = enc_ref[...].reshape(Bt * Ls, Dp)                 # bf16, rows folded

    tgt_is_pad = tgt_ref[...] == PAD                        # (Bt, 1, Lt) bool
    src_is_pad = src_ref[...] == PAD                        # (Bt, 1, Ls) bool

    # Feature mask: 1.0 on real model dims, 0.0 on the lane padding (hoisted).
    feat_mask = (lax.broadcasted_iota(jnp.int32, (1, Dp), 1) < d_model
                 ).astype(jnp.float32)
    inv_d = jnp.float32(1.0 / d_model)

    # Causal mask for self-attention (hoisted; shared by all layers/batches).
    rows = lax.broadcasted_iota(jnp.int32, (Lt, Lt), 0)
    cols = lax.broadcasted_iota(jnp.int32, (Lt, Lt), 1)
    causal = cols > rows

    def layer_norm(v, g_ref, b_ref):
        # Padded lanes of v are exactly zero -> sum/d_model is the true mean.
        mean = jnp.sum(v, axis=-1, keepdims=True) * inv_d
        cent = (v - mean) * feat_mask
        var = jnp.sum(cent * cent, axis=-1, keepdims=True) * inv_d
        return cent * lax.rsqrt(var + LN_EPS) * g_ref[0] + b_ref[0]

    def mha(xq, xkv, lk, key_pad, causal_mask,
            wq, bq, wkv, bkv, wo, bo, g, b):
        # xq : (Bt*Lt, Dp) f32;  xkv : (Bt*lk, Dp) f32/bf16
        # Fused projections on the FOLDED row dim (big MXU M tiles).
        # 1/sqrt(d_k) is already folded into wq / bq.
        q = jnp.dot(xq.astype(jnp.bfloat16), wq[0],
                    preferred_element_type=jnp.float32) + bq[0]     # (Bt*Lt, H*d_h)
        kv = jnp.dot(xkv.astype(jnp.bfloat16), wkv[0],
                     preferred_element_type=jnp.float32) + bkv[0]   # (Bt*lk, H*(d_h+d_hv))
        k = kv[:, :hdh]
        v = kv[:, hdh:]

        outs = []
        for bb in range(Bt):            # static, small unroll
            qb = q[bb * Lt:(bb + 1) * Lt]
            kb = k[bb * lk:(bb + 1) * lk]
            vb = v[bb * lk:(bb + 1) * lk]
            kp = jnp.broadcast_to(key_pad[bb], (Lt, lk))            # (Lt, lk)
            msk = kp if causal_mask is None else (kp | causal_mask)
            heads = []
            for h in range(n_head):     # lane-aligned 128-wide head slices
                qh = qb[:, h * d_h:(h + 1) * d_h].astype(jnp.bfloat16)
                kh = kb[:, h * d_h:(h + 1) * d_h].astype(jnp.bfloat16)
                vh = vb[:, h * d_hv:(h + 1) * d_hv].astype(jnp.bfloat16)
                s = lax.dot_general(qh, kh, (((1,), (1,)), ((), ())),
                                    preferred_element_type=jnp.float32)  # (Lt, lk)
                s = jnp.where(msk, jnp.float32(NEG_INF), s)
                s = s - jnp.max(s, axis=-1, keepdims=True)
                p = jnp.exp(s)
                p = p * pl.reciprocal(jnp.sum(p, axis=-1, keepdims=True),
                                      approx=True)
                heads.append(jnp.dot(p.astype(jnp.bfloat16), vh,
                                     preferred_element_type=jnp.float32))
            outs.append(jnp.concatenate(heads, axis=-1))            # (Lt, H*d_hv)
        attn = jnp.concatenate(outs, axis=0)                        # (Bt*Lt, H*d_hv)
        proj = jnp.dot(attn.astype(jnp.bfloat16), wo[0],
                       preferred_element_type=jnp.float32) + bo[0]
        return layer_norm(proj + xq, g, b)

    # ---- self-attn -> cross-attn -> position-wise FFN, all in VMEM ----
    h = mha(x, x, Lt, tgt_is_pad, causal,
            s_wq, s_bq, s_wkv, s_bkv, s_wo, s_bo, s_g, s_b)
    h = mha(h, enc, Ls, src_is_pad, None,
            c_wq, c_bq, c_wkv, c_bkv, c_wo, c_bo, c_g, c_b)

    ff = jnp.dot(h.astype(jnp.bfloat16), f_w1[0],
                 preferred_element_type=jnp.float32) + f_b1[0]
    ff = jnp.maximum(ff, 0.0)
    ff = jnp.dot(ff.astype(jnp.bfloat16), f_w2[0],
                 preferred_element_type=jnp.float32) + f_b2[0]
    out = layer_norm(ff + h, f_g, f_b)
    out_ref[...] = out.reshape(Bt, Lt, Dp).astype(out_ref.dtype)


_WEIGHT_NAMES = [
    "s_wq", "s_bq", "s_wkv", "s_bkv", "s_wo", "s_bo", "s_g", "s_b",
    "c_wq", "c_bq", "c_wkv", "c_bkv", "c_wo", "c_bo", "c_g", "c_b",
    "f_w1", "f_b1", "f_w2", "f_b2", "f_g", "f_b",
]


def decoder_stack(x0, enc, tgt_ids, src_ids, wdict,
                  *, n_head, d_h, d_hv, d_model, block_b):
    B, Lt, Dp = x0.shape
    Ls = enc.shape[1]
    n_layers = wdict["s_wq"].shape[0]
    weights = [wdict[n] for n in _WEIGHT_NAMES]

    def wspec(a):
        blk = (1,) + a.shape[1:]
        return pl.BlockSpec(blk, lambda b, l, _n=a.ndim - 1: (l,) + (0,) * _n)

    # Advisory cost hint so XLA schedules the fused call sensibly.
    hdh, hdhv = n_head * d_h, n_head * d_hv
    DIp = wdict["f_w1"].shape[-1]
    fl_self = Lt * Dp * hdh + Lt * Dp * (hdh + hdhv) \
        + n_head * Lt * Lt * (d_h + d_hv) + Lt * hdhv * Dp
    fl_cross = Lt * Dp * hdh + Ls * Dp * (hdh + hdhv) \
        + n_head * Lt * Ls * (d_h + d_hv) + Lt * hdhv * Dp
    fl_ffn = 2 * Lt * Dp * DIp
    flops = 2 * B * n_layers * (fl_self + fl_cross + fl_ffn)
    transcend = B * n_layers * n_head * (Lt * Lt + Lt * Ls)
    bytes_acc = sum(int(np.prod(a.shape)) * a.dtype.itemsize
                    for a in [x0, enc, tgt_ids, src_ids] + weights) \
        + B * Lt * Dp * 2
    ce = pl.CostEstimate(flops=int(flops), transcendentals=int(transcend),
                         bytes_accessed=int(bytes_acc))

    kernel = functools.partial(decoder_stack_kernel, n_head=n_head,
                               d_h=d_h, d_hv=d_hv, d_model=d_model)
    # TODO(synk): for production-length sequences on v7x (64 MiB VMEM) add a
    # query-tile grid axis / online softmax and set vmem_limit_bytes.
    return pl.pallas_call(
        kernel,
        out_shape=jax.ShapeDtypeStruct((B, Lt, Dp), jnp.bfloat16),
        grid=(B // block_b, n_layers),
        in_specs=[
            pl.BlockSpec((block_b, Lt, Dp), lambda b, l: (b, 0, 0)),  # embeddings
            pl.BlockSpec((block_b, Ls, Dp), lambda b, l: (b, 0, 0)),  # enc_output
            pl.BlockSpec((block_b, 1, Lt), lambda b, l: (b, 0, 0)),   # tgt ids
            pl.BlockSpec((block_b, 1, Ls), lambda b, l: (b, 0, 0)),   # src ids
        ] + [wspec(a) for a in weights],
        out_specs=pl.BlockSpec((block_b, Lt, Dp), lambda b, l: (b, 0, 0)),
        compiler_params=pltpu.CompilerParams(
            dimension_semantics=("parallel", "arbitrary")),
        cost_estimate=ce,
    )(x0, enc, tgt_ids, src_ids, *weights)


# ----------------------------------------------------------------------------
# Sinusoid table (plain JAX/NumPy glue, identical to the reference)
# ----------------------------------------------------------------------------
def get_sinusoid_encoding_table(n_position, d_hid, padding_idx=None):
    def cal_angle(position, hid_idx):
        return position / np.power(10000, 2 * (hid_idx // 2) / d_hid)
    table = np.array([[cal_angle(pos, j) for j in range(d_hid)]
                      for pos in range(n_position)])
    table[:, 0::2] = np.sin(table[:, 0::2])
    table[:, 1::2] = np.cos(table[:, 1::2])
    if padding_idx is not None:
        table[padding_idx] = 0.0
    return jnp.asarray(table, dtype=jnp.float32)


# ----------------------------------------------------------------------------
# Parameter init (natural PyTorch-like shapes) + kernel-ready preparation
# ----------------------------------------------------------------------------
def init_decoder_params(key, *, n_tgt_vocab, n_position, d_word_vec, n_layers,
                        n_head, d_k, d_v, d_model, d_inner):
    keys = iter(jax.random.split(key, 1 + n_layers * 10 + 4))

    emb = jax.random.normal(next(keys), (n_tgt_vocab, d_word_vec), jnp.float32) * 0.1
    emb = emb.at[PAD].set(0.0)                      # padding_idx=PAD row is zero
    pos = get_sinusoid_encoding_table(n_position, d_word_vec, padding_idx=0)

    def lin(k, din, dout, scale):
        return jax.random.normal(k, (din, dout), jnp.float32) * scale

    def attn_params():
        return {
            "wq": lin(next(keys), d_model, n_head * d_k, (2.0 / (d_model + d_k)) ** 0.5),
            "bq": jnp.zeros((1, n_head * d_k), jnp.float32),
            "wk": lin(next(keys), d_model, n_head * d_k, (2.0 / (d_model + d_k)) ** 0.5),
            "bk": jnp.zeros((1, n_head * d_k), jnp.float32),
            "wv": lin(next(keys), d_model, n_head * d_v, (2.0 / (d_model + d_v)) ** 0.5),
            "bv": jnp.zeros((1, n_head * d_v), jnp.float32),
            "wo": lin(next(keys), n_head * d_v, d_model, (1.0 / (n_head * d_v)) ** 0.5),
            "bo": jnp.zeros((1, d_model), jnp.float32),
            "ln_g": jnp.ones((1, d_model), jnp.float32),
            "ln_b": jnp.zeros((1, d_model), jnp.float32),
        }

    layers = []
    for _ in range(n_layers):
        slf = attn_params()
        enc = attn_params()
        ffn = {
            "w1": lin(next(keys), d_model, d_inner, (1.0 / d_model) ** 0.5),
            "b1": jnp.zeros((1, d_inner), jnp.float32),
            "w2": lin(next(keys), d_inner, d_model, (1.0 / d_inner) ** 0.5),
            "b2": jnp.zeros((1, d_model), jnp.float32),
            "ln_g": jnp.ones((1, d_model), jnp.float32),
            "ln_b": jnp.zeros((1, d_model), jnp.float32),
        }
        layers.append({"slf": slf, "enc": enc, "ffn": ffn})

    return {"emb": emb, "pos": pos, "layers": layers}


def prepare_decoder_params(params, *, n_head, d_k, d_v, d_model, d_inner):
    """Pad feature dims to 128 lanes, place each head in its own 128-lane-aligned
    group (so the kernel slices heads without relayouts), fuse K/V projections,
    fold 1/sqrt(d_k) into Wq/bq, cast matmul weights to bf16, and stack the
    per-layer weights along a leading n_layers axis for the fused-stack grid."""
    d_pad = _round_up(d_model, LANE)
    di_pad = _round_up(d_inner, LANE)
    d_h = _round_up(d_k, LANE)
    d_hv = _round_up(d_v, LANE)
    scale = 1.0 / float(np.sqrt(d_k))

    def pad2(a, r, c):
        return jnp.pad(a, ((0, r - a.shape[0]), (0, c - a.shape[1])))

    def head_cols(w, ds, db):
        # (rows, H*ds) -> (rows, H*db); head h at lane offset h*db, rest zero.
        out = jnp.zeros((w.shape[0], n_head * db), w.dtype)
        for h in range(n_head):
            out = out.at[:, h * db:h * db + ds].set(w[:, h * ds:(h + 1) * ds])
        return out

    def head_rows(w, ds, db):
        out = jnp.zeros((n_head * db, w.shape[1]), w.dtype)
        for h in range(n_head):
            out = out.at[h * db:h * db + ds, :].set(w[h * ds:(h + 1) * ds, :])
        return out

    def prep_attn(p):
        wq = head_cols(p["wq"] * scale, d_k, d_h)
        bq = head_cols(p["bq"] * scale, d_k, d_h)
        wk = head_cols(p["wk"], d_k, d_h)
        bk = head_cols(p["bk"], d_k, d_h)
        wv = head_cols(p["wv"], d_v, d_hv)
        bv = head_cols(p["bv"], d_v, d_hv)
        wo = head_rows(p["wo"], d_v, d_hv)
        return dict(
            wq=pad2(wq, d_pad, n_head * d_h).astype(jnp.bfloat16),
            bq=bq.astype(jnp.float32),
            wkv=pad2(jnp.concatenate([wk, wv], axis=1), d_pad,
                     n_head * (d_h + d_hv)).astype(jnp.bfloat16),
            bkv=jnp.concatenate([bk, bv], axis=1).astype(jnp.float32),
            wo=pad2(wo, n_head * d_hv, d_pad).astype(jnp.bfloat16),
            bo=pad2(p["bo"], 1, d_pad),
            g=pad2(p["ln_g"], 1, d_pad),
            b=pad2(p["ln_b"], 1, d_pad))

    def prep_ffn(p):
        return dict(
            w1=pad2(p["w1"], d_pad, di_pad).astype(jnp.bfloat16),
            b1=pad2(p["b1"], 1, di_pad),
            w2=pad2(p["w2"], di_pad, d_pad).astype(jnp.bfloat16),
            b2=pad2(p["b2"], 1, d_pad),
            g=pad2(p["ln_g"], 1, d_pad),
            b=pad2(p["ln_b"], 1, d_pad))

    per_layer = [dict(slf=prep_attn(l["slf"]), enc=prep_attn(l["enc"]),
                      ffn=prep_ffn(l["ffn"])) for l in params["layers"]]

    def st(group, name):
        return jnp.stack([lp[group][name] for lp in per_layer], axis=0)

    stacked = {
        "s_wq": st("slf", "wq"), "s_bq": st("slf", "bq"),
        "s_wkv": st("slf", "wkv"), "s_bkv": st("slf", "bkv"),
        "s_wo": st("slf", "wo"), "s_bo": st("slf", "bo"),
        "s_g": st("slf", "g"), "s_b": st("slf", "b"),
        "c_wq": st("enc", "wq"), "c_bq": st("enc", "bq"),
        "c_wkv": st("enc", "wkv"), "c_bkv": st("enc", "bkv"),
        "c_wo": st("enc", "wo"), "c_bo": st("enc", "bo"),
        "c_g": st("enc", "g"), "c_b": st("enc", "b"),
        "f_w1": st("ffn", "w1"), "f_b1": st("ffn", "b1"),
        "f_w2": st("ffn", "w2"), "f_b2": st("ffn", "b2"),
        "f_g": st("ffn", "g"), "f_b": st("ffn", "b"),
    }
    return dict(emb=params["emb"], pos=params["pos"],
                d_pad=d_pad, d_h=d_h, d_hv=d_hv, weights=stacked)


# ----------------------------------------------------------------------------
# Decoder forward (mirrors Decoder.forward, eval mode)
# ----------------------------------------------------------------------------
def decoder_forward(tgt_seq, tgt_pos, src_seq, enc_output, prep,
                    *, n_head, d_k, d_v, d_model, block_b=None):
    d_pad = prep["d_pad"]
    B, Lt = tgt_seq.shape

    non_pad = (tgt_seq != PAD).astype(jnp.float32)[:, :, None]    # (B, Lt, 1)
    tgt_ids = tgt_seq.astype(jnp.int32)[:, None, :]               # (B, 1, Lt)
    src_ids = src_seq.astype(jnp.int32)[:, None, :]               # (B, 1, Ls)

    x = prep["emb"][tgt_seq] + prep["pos"][tgt_pos]               # (B, Lt, D)
    x = jnp.pad(x, ((0, 0), (0, 0), (0, d_pad - d_model))).astype(jnp.bfloat16)
    enc = jnp.pad(enc_output, ((0, 0), (0, 0), (0, d_pad - d_model))
                  ).astype(jnp.bfloat16)

    if block_b is None:
        block_b = _pick_block_b(B, Lt)
    assert B % block_b == 0

    # TODO(synk): ACT adaptive-halting loop and dropout are omitted
    # (eval-mode forward through the standard decoder-layer stack).
    out = decoder_stack(x, enc, tgt_ids, src_ids, prep["weights"],
                        n_head=n_head, d_h=prep["d_h"], d_hv=prep["d_hv"],
                        d_model=d_model, block_b=block_b)

    # In the reference the non-pad mask zeroes PAD query rows after every
    # sublayer; those rows never influence non-PAD rows (PAD keys are masked,
    # FFN/LayerNorm/residual are per-position), so one final multiply is
    # mathematically equivalent.
    return out[:, :, :d_model].astype(jnp.float32) * non_pad


# ----------------------------------------------------------------------------
if __name__ == "__main__":
    # Small, forward-consistent shapes.
    n_tgt_vocab = 16
    len_max_seq = 8
    n_position = len_max_seq + 1
    d_word_vec = d_model = 32
    n_layers = 2
    n_head, d_k, d_v = 4, 8, 8
    d_inner = 64
    B, L_tgt, L_src = 2, 8, 8

    key = jax.random.PRNGKey(0)
    kp, kt, ks, ke = jax.random.split(key, 4)

    raw_params = init_decoder_params(
        kp, n_tgt_vocab=n_tgt_vocab, n_position=n_position, d_word_vec=d_word_vec,
        n_layers=n_layers, n_head=n_head, d_k=d_k, d_v=d_v,
        d_model=d_model, d_inner=d_inner)
    prep = prepare_decoder_params(
        raw_params, n_head=n_head, d_k=d_k, d_v=d_v,
        d_model=d_model, d_inner=d_inner)

    tgt_seq = jax.random.randint(kt, (B, L_tgt), 1, n_tgt_vocab).astype(jnp.int32)
    tgt_seq = tgt_seq.at[1, -2:].set(PAD)           # pad tail of sequence 1
    tgt_pos = jnp.where(tgt_seq != PAD,
                        jnp.arange(1, L_tgt + 1, dtype=jnp.int32)[None, :],
                        0).astype(jnp.int32)

    src_seq = jax.random.randint(ks, (B, L_src), 1, n_tgt_vocab).astype(jnp.int32)
    src_seq = src_seq.at[1, -1].set(PAD)
    enc_output = jax.random.normal(ke, (B, L_src, d_model), jnp.float32)

    out = decoder_forward(tgt_seq, tgt_pos, src_seq, enc_output, prep,
                          n_head=n_head, d_k=d_k, d_v=d_v, d_model=d_model)
    jax.block_until_ready(out)
    assert out.shape == (B, L_tgt, d_model)
    assert bool(jnp.all(jnp.isfinite(out)))
    print("KERNEL_OK")
</pallas_src>

<mosaic_0001>
module attributes {stable_mosaic.version = 11 : i64} {
  func.func @decoder_stack_kernel(%arg0: i32, %arg1: i32, %arg2: memref<2x8x128xbf16, #tpu.memory_space<vmem>>, %arg3: memref<2x8x128xbf16, #tpu.memory_space<vmem>>, %arg4: memref<2x1x8xi32, #tpu.memory_space<vmem>>, %arg5: memref<2x1x8xi32, #tpu.memory_space<vmem>>, %arg6: memref<1x128x512xbf16, #tpu.memory_space<vmem>>, %arg7: memref<1x1x512xf32, #tpu.memory_space<vmem>>, %arg8: memref<1x128x1024xbf16, #tpu.memory_space<vmem>>, %arg9: memref<1x1x1024xf32, #tpu.memory_space<vmem>>, %arg10: memref<1x512x128xbf16, #tpu.memory_space<vmem>>, %arg11: memref<1x1x128xf32, #tpu.memory_space<vmem>>, %arg12: memref<1x1x128xf32, #tpu.memory_space<vmem>>, %arg13: memref<1x1x128xf32, #tpu.memory_space<vmem>>, %arg14: memref<1x128x512xbf16, #tpu.memory_space<vmem>>, %arg15: memref<1x1x512xf32, #tpu.memory_space<vmem>>, %arg16: memref<1x128x1024xbf16, #tpu.memory_space<vmem>>, %arg17: memref<1x1x1024xf32, #tpu.memory_space<vmem>>, %arg18: memref<1x512x128xbf16, #tpu.memory_space<vmem>>, %arg19: memref<1x1x128xf32, #tpu.memory_space<vmem>>, %arg20: memref<1x1x128xf32, #tpu.memory_space<vmem>>, %arg21: memref<1x1x128xf32, #tpu.memory_space<vmem>>, %arg22: memref<1x128x128xbf16, #tpu.memory_space<vmem>>, %arg23: memref<1x1x128xf32, #tpu.memory_space<vmem>>, %arg24: memref<1x128x128xbf16, #tpu.memory_space<vmem>>, %arg25: memref<1x1x128xf32, #tpu.memory_space<vmem>>, %arg26: memref<1x1x128xf32, #tpu.memory_space<vmem>>, %arg27: memref<1x1x128xf32, #tpu.memory_space<vmem>>, %arg28: memref<2x8x128xbf16, #tpu.memory_space<vmem>>) attributes {dimension_semantics = [#tpu.dimension_semantics<parallel>, #tpu.dimension_semantics<arbitrary>], iteration_bounds = array<i64: 1, 2>, scalar_prefetch = 0 : i64, scratch_operands = 0 : i64, tpu.core_type = #tpu.core_type<tc>, window_params = [{transform_indices = @transform_0, window_bounds = array<i64: 2, 8, 128>}, {transform_indices = @transform_1, window_bounds = array<i64: 2, 8, 128>}, {transform_indices = @transform_2, window_bounds = array<i64: 2, 1, 8>}, {transform_indices = @transform_3, window_bounds = array<i64: 2, 1, 8>}, {transform_indices = @transform_4, window_bounds = array<i64: 1, 128, 512>}, {transform_indices = @transform_5, window_bounds = array<i64: 1, 1, 512>}, {transform_indices = @transform_6, window_bounds = array<i64: 1, 128, 1024>}, {transform_indices = @transform_7, window_bounds = array<i64: 1, 1, 1024>}, {transform_indices = @transform_8, window_bounds = array<i64: 1, 512, 128>}, {transform_indices = @transform_9, window_bounds = array<i64: 1, 1, 128>}, {transform_indices = @transform_10, window_bounds = array<i64: 1, 1, 128>}, {transform_indices = @transform_11, window_bounds = array<i64: 1, 1, 128>}, {transform_indices = @transform_12, window_bounds = array<i64: 1, 128, 512>}, {transform_indices = @transform_13, window_bounds = array<i64: 1, 1, 512>}, {transform_indices = @transform_14, window_bounds = array<i64: 1, 128, 1024>}, {transform_indices = @transform_15, window_bounds = array<i64: 1, 1, 1024>}, {transform_indices = @transform_16, window_bounds = array<i64: 1, 512, 128>}, {transform_indices = @transform_17, window_bounds = array<i64: 1, 1, 128>}, {transform_indices = @transform_18, window_bounds = array<i64: 1, 1, 128>}, {transform_indices = @transform_19, window_bounds = array<i64: 1, 1, 128>}, {transform_indices = @transform_20, window_bounds = array<i64: 1, 128, 128>}, {transform_indices = @transform_21, window_bounds = array<i64: 1, 1, 128>}, {transform_indices = @transform_22, window_bounds = array<i64: 1, 128, 128>}, {transform_indices = @transform_23, window_bounds = array<i64: 1, 1, 128>}, {transform_indices = @transform_24, window_bounds = array<i64: 1, 1, 128>}, {transform_indices = @transform_25, window_bounds = array<i64: 1, 1, 128>}, {transform_indices = @transform_26, window_bounds = array<i64: 2, 8, 128>}]} {
    %c0_i32 = arith.constant 0 : i32
    %0 = arith.cmpi eq, %arg1, %c0_i32 : i32
    %1 = arith.extui %0 : i1 to i32
    %c0_i32_0 = arith.constant 0 : i32
    %2 = arith.cmpi ne, %1, %c0_i32_0 : i32
    scf.if %2 {
      %c0_186 = arith.constant 0 : index
      %c0_187 = arith.constant 0 : index
      %c0_188 = arith.constant 0 : index
      %547 = vector.load %arg2[%c0_186, %c0_187, %c0_188] : memref<2x8x128xbf16, #tpu.memory_space<vmem>>, vector<2x8x128xbf16>
      %c0_189 = arith.constant 0 : index
      %c0_190 = arith.constant 0 : index
      %c0_191 = arith.constant 0 : index
      %548 = vector.load %arg28[%c0_189, %c0_190, %c0_191] : memref<2x8x128xbf16, #tpu.memory_space<vmem>>, vector<2x8x128xbf16>
      tpu.vector_store %arg28[%c0_189, %c0_190, %c0_191], %547 {strides = array<i32>} : memref<2x8x128xbf16, #tpu.memory_space<vmem>>, vector<2x8x128xbf16>,
    } else {
    }
    %c0 = arith.constant 0 : index
    %c0_1 = arith.constant 0 : index
    %c0_2 = arith.constant 0 : index
    %3 = vector.load %arg28[%c0, %c0_1, %c0_2] : memref<2x8x128xbf16, #tpu.memory_space<vmem>>, vector<2x8x128xbf16>
    %4 = arith.extf %3 : vector<2x8x128xbf16> to vector<2x8x128xf32>
    %5 = vector.shape_cast %4 : vector<2x8x128xf32> to vector<16x128xf32>
    %c0_3 = arith.constant 0 : index
    %c0_4 = arith.constant 0 : index
    %c0_5 = arith.constant 0 : index
    %6 = vector.load %arg3[%c0_3, %c0_4, %c0_5] : memref<2x8x128xbf16, #tpu.memory_space<vmem>>, vector<2x8x128xbf16>
    %7 = vector.shape_cast %6 : vector<2x8x128xbf16> to vector<16x128xbf16>
    %c0_6 = arith.constant 0 : index
    %c0_7 = arith.constant 0 : index
    %c0_8 = arith.constant 0 : index
    %8 = vector.load %arg4[%c0_6, %c0_7, %c0_8] : memref<2x1x8xi32, #tpu.memory_space<vmem>>, vector<2x1x8xi32>
    %c0_i32_9 = arith.constant 0 : i32
    %9 = vector.broadcast %c0_i32_9 : i32 to vector<2x1x8xi32>
    %10 = arith.cmpi eq, %8, %9 : vector<2x1x8xi32>
    %c0_10 = arith.constant 0 : index
    %c0_11 = arith.constant 0 : index
    %c0_12 = arith.constant 0 : index
    %11 = vector.load %arg5[%c0_10, %c0_11, %c0_12] : memref<2x1x8xi32, #tpu.memory_space<vmem>>, vector<2x1x8xi32>
    %c0_i32_13 = arith.constant 0 : i32
    %12 = vector.broadcast %c0_i32_13 : i32 to vector<2x1x8xi32>
    %13 = arith.cmpi eq, %11, %12 : vector<2x1x8xi32>
    %14 = tpu.iota {dimensions = array<i32: 1>} : vector<1x128xi32>
    %c32_i32 = arith.constant 32 : i32
    %15 = vector.broadcast %c32_i32 : i32 to vector<1x128xi32>
    %16 = arith.cmpi slt, %14, %15 : vector<1x128xi32>
    %17 = arith.extui %16 : vector<1x128xi1> to vector<1x128xi32>
    %18 = arith.sitofp %17 : vector<1x128xi32> to vector<1x128xf32>
    %19 = tpu.iota {dimensions = array<i32: 0>} : vector<8x8xi32>
    %20 = tpu.iota {dimensions = array<i32: 1>} : vector<8x8xi32>
    %21 = arith.cmpi sgt, %20, %19 : vector<8x8xi32>
    %22 = arith.truncf %5 : vector<16x128xf32> to vector<16x128xbf16>
    %c0_14 = arith.constant 0 : index
    %c0_15 = arith.constant 0 : index
    %c0_16 = arith.constant 0 : index
    %23 = vector.load %arg6[%c0_14, %c0_15, %c0_16] : memref<1x128x512xbf16, #tpu.memory_space<vmem>>, vector<1x128x512xbf16>
    %24 = vector.shape_cast %23 : vector<1x128x512xbf16> to vector<128x512xbf16>
    %cst = arith.constant dense<0.000000e+00> : vector<16x512xf32>
    %25 = tpu.matmul %22, %24, %cst {dimension_numbers = #tpu.dot_dimension_numbers<[1], [0], [0], [1], [0, 0, 1, 1], [], []>} : vector<16x128xbf16>, vector<128x512xbf16>, vector<16x512xf32> -> vector<16x512xf32>
    %c0_17 = arith.constant 0 : index
    %c0_18 = arith.constant 0 : index
    %c0_19 = arith.constant 0 : index
    %26 = vector.load %arg7[%c0_17, %c0_18, %c0_19] : memref<1x1x512xf32, #tpu.memory_space<vmem>>, vector<1x1x512xf32>
    %27 = vector.shape_cast %26 : vector<1x1x512xf32> to vector<1x512xf32>
    %28 = vector.broadcast %27 : vector<1x512xf32> to vector<16x512xf32>
    %29 = arith.addf %25, %28 : vector<16x512xf32>
    %30 = arith.truncf %5 : vector<16x128xf32> to vector<16x128xbf16>
    %c0_20 = arith.constant 0 : index
    %c0_21 = arith.constant 0 : index
    %c0_22 = arith.constant 0 : index
    %31 = vector.load %arg8[%c0_20, %c0_21, %c0_22] : memref<1x128x1024xbf16, #tpu.memory_space<vmem>>, vector<1x128x1024xbf16>
    %32 = vector.shape_cast %31 : vector<1x128x1024xbf16> to vector<128x1024xbf16>
    %cst_23 = arith.constant dense<0.000000e+00> : vector<16x1024xf32>
    %33 = tpu.matmul %30, %32, %cst_23 {dimension_numbers = #tpu.dot_dimension_numbers<[1], [0], [0], [1], [0, 0, 1, 1], [], []>} : vector<16x128xbf16>, vector<128x1024xbf16>, vector<16x1024xf32> -> vector<16x1024xf32>
    %c0_24 = arith.constant 0 : index
    %c0_25 = arith.constant 0 : index
    %c0_26 = arith.constant 0 : index
    %34 = vector.load %arg9[%c0_24, %c0_25, %c0_26] : memref<1x1x1024xf32, #tpu.memory_space<vmem>>, vector<1x1x1024xf32>
    %35 = vector.shape_cast %34 : vector<1x1x1024xf32> to vector<1x1024xf32>
    %36 = vector.broadcast %35 : vector<1x1024xf32> to vector<16x1024xf32>
    %37 = arith.addf %33, %36 : vector<16x1024xf32>
    %38 = vector.extract_strided_slice %37 {offsets = [0, 0], sizes = [16, 512], strides = [1, 1]} : vector<16x1024xf32> to vector<16x512xf32>
    %39 = vector.extract_strided_slice %37 {offsets = [0, 512], sizes = [16, 512], strides = [1, 1]} : vector<16x1024xf32> to vector<16x512xf32>
    %40 = vector.extract_strided_slice %29 {offsets = [0, 0], sizes = [8, 512], strides = [1, 1]} : vector<16x512xf32> to vector<8x512xf32>
    %41 = vector.extract_strided_slice %38 {offsets = [0, 0], sizes = [8, 512], strides = [1, 1]} : vector<16x512xf32> to vector<8x512xf32>
    %42 = vector.extract_strided_slice %39 {offsets = [0, 0], sizes = [8, 512], strides = [1, 1]} : vector<16x512xf32> to vector<8x512xf32>
    %43 = vector.extract_strided_slice %10 {offsets = [0, 0, 0], sizes = [1, 1, 8], strides = [1, 1, 1]} : vector<2x1x8xi1> to vector<1x1x8xi1>
    %44 = vector.shape_cast %43 : vector<1x1x8xi1> to vector<1x8xi1>
    %45 = vector.shape_cast %44 : vector<1x8xi1> to vector<1x8xi1>
    %46 = vector.broadcast %45 : vector<1x8xi1> to vector<8x8xi1>
    %47 = arith.ori %46, %21 : vector<8x8xi1>
    %48 = vector.extract_strided_slice %40 {offsets = [0, 0], sizes = [8, 128], strides = [1, 1]} : vector<8x512xf32> to vector<8x128xf32>
    %49 = arith.truncf %48 : vector<8x128xf32> to vector<8x128xbf16>
    %50 = vector.extract_strided_slice %41 {offsets = [0, 0], sizes = [8, 128], strides = [1, 1]} : vector<8x512xf32> to vector<8x128xf32>
    %51 = arith.truncf %50 : vector<8x128xf32> to vector<8x128xbf16>
    %52 = vector.extract_strided_slice %42 {offsets = [0, 0], sizes = [8, 128], strides = [1, 1]} : vector<8x512xf32> to vector<8x128xf32>
    %53 = arith.truncf %52 : vector<8x128xf32> to vector<8x128xbf16>
    %cst_27 = arith.constant dense<0.000000e+00> : vector<8x8xf32>
    %54 = tpu.matmul %49, %51, %cst_27 {dimension_numbers = #tpu.dot_dimension_numbers<[1], [1], [0], [0], [0, 0, 1, 0], [], []>} : vector<8x128xbf16>, vector<8x128xbf16>, vector<8x8xf32> -> vector<8x8xf32>
    %cst_28 = arith.constant -1.000000e+30 : f32
    %55 = vector.broadcast %cst_28 : f32 to vector<8x8xf32>
    %56 = arith.select %47, %55, %54 : vector<8x8xi1>, vector<8x8xf32>
    %cst_29 = arith.constant dense<0xFF800000> : vector<8xf32>
    %57 = vector.multi_reduction <maximumf>, %56, %cst_29 [1] : vector<8x8xf32> to vector<8xf32>
    %58 = vector.shape_cast %57 : vector<8xf32> to vector<8x1xf32>
    %59 = vector.broadcast %58 : vector<8x1xf32> to vector<8x8xf32>
    %60 = arith.subf %56, %59 : vector<8x8xf32>
    %61 = math.exp %60 : vector<8x8xf32>
    %cst_30 = arith.constant dense<0.000000e+00> : vector<8xf32>
    %62 = vector.multi_reduction <add>, %61, %cst_30 [1] : vector<8x8xf32> to vector<8xf32>
    %63 = vector.shape_cast %62 : vector<8xf32> to vector<8x1xf32>
    %64 = tpu.reciprocal %63 {approx = true} : vector<8x1xf32> -> vector<8x1xf32>
    %65 = vector.broadcast %64 : vector<8x1xf32> to vector<8x8xf32>
    %66 = arith.mulf %61, %65 : vector<8x8xf32>
    %67 = arith.truncf %66 : vector<8x8xf32> to vector<8x8xbf16>
    %cst_31 = arith.constant dense<0.000000e+00> : vector<8x128xf32>
    %68 = tpu.matmul %67, %53, %cst_31 {dimension_numbers = #tpu.dot_dimension_numbers<[1], [0], [0], [1], [0, 0, 1, 1], [], []>} : vector<8x8xbf16>, vector<8x128xbf16>, vector<8x128xf32> -> vector<8x128xf32>
    %69 = vector.extract_strided_slice %40 {offsets = [0, 128], sizes = [8, 128], strides = [1, 1]} : vector<8x512xf32> to vector<8x128xf32>
    %70 = arith.truncf %69 : vector<8x128xf32> to vector<8x128xbf16>
    %71 = vector.extract_strided_slice %41 {offsets = [0, 128], sizes = [8, 128], strides = [1, 1]} : vector<8x512xf32> to vector<8x128xf32>
    %72 = arith.truncf %71 : vector<8x128xf32> to vector<8x128xbf16>
    %73 = vector.extract_strided_slice %42 {offsets = [0, 128], sizes = [8, 128], strides = [1, 1]} : vector<8x512xf32> to vector<8x128xf32>
    %74 = arith.truncf %73 : vector<8x128xf32> to vector<8x128xbf16>
    %cst_32 = arith.constant dense<0.000000e+00> : vector<8x8xf32>
    %75 = tpu.matmul %70, %72, %cst_32 {dimension_numbers = #tpu.dot_dimension_numbers<[1], [1], [0], [0], [0, 0, 1, 0], [], []>} : vector<8x128xbf16>, vector<8x128xbf16>, vector<8x8xf32> -> vector<8x8xf32>
    %cst_33 = arith.constant -1.000000e+30 : f32
    %76 = vector.broadcast %cst_33 : f32 to vector<8x8xf32>
    %77 = arith.select %47, %76, %75 : vector<8x8xi1>, vector<8x8xf32>
    %cst_34 = arith.constant dense<0xFF800000> : vector<8xf32>
    %78 = vector.multi_reduction <maximumf>, %77, %cst_34 [1] : vector<8x8xf32> to vector<8xf32>
    %79 = vector.shape_cast %78 : vector<8xf32> to vector<8x1xf32>
    %80 = vector.broadcast %79 : vector<8x1xf32> to vector<8x8xf32>
    %81 = arith.subf %77, %80 : vector<8x8xf32>
    %82 = math.exp %81 : vector<8x8xf32>
    %cst_35 = arith.constant dense<0.000000e+00> : vector<8xf32>
    %83 = vector.multi_reduction <add>, %82, %cst_35 [1] : vector<8x8xf32> to vector<8xf32>
    %84 = vector.shape_cast %83 : vector<8xf32> to vector<8x1xf32>
    %85 = tpu.reciprocal %84 {approx = true} : vector<8x1xf32> -> vector<8x1xf32>
    %86 = vector.broadcast %85 : vector<8x1xf32> to vector<8x8xf32>
    %87 = arith.mulf %82, %86 : vector<8x8xf32>
    %88 = arith.truncf %87 : vector<8x8xf32> to vector<8x8xbf16>
    %cst_36 = arith.constant dense<0.000000e+00> : vector<8x128xf32>
    %89 = tpu.matmul %88, %74, %cst_36 {dimension_numbers = #tpu.dot_dimension_numbers<[1], [0], [0], [1], [0, 0, 1, 1], [], []>} : vector<8x8xbf16>, vector<8x128xbf16>, vector<8x128xf32> -> vector<8x128xf32>
    %90 = vector.extract_strided_slice %40 {offsets = [0, 256], sizes = [8, 128], strides = [1, 1]} : vector<8x512xf32> to vector<8x128xf32>
    %91 = arith.truncf %90 : vector<8x128xf32> to vector<8x128xbf16>
    %92 = vector.extract_strided_slice %41 {offsets = [0, 256], sizes = [8, 128], strides = [1, 1]} : vector<8x512xf32> to vector<8x128xf32>
    %93 = arith.truncf %92 : vector<8x128xf32> to vector<8x128xbf16>
    %94 = vector.extract_strided_slice %42 {offsets = [0, 256], sizes = [8, 128], strides = [1, 1]} : vector<8x512xf32> to vector<8x128xf32>
    %95 = arith.truncf %94 : vector<8x128xf32> to vector<8x128xbf16>
    %cst_37 = arith.constant dense<0.000000e+00> : vector<8x8xf32>
    %96 = tpu.matmul %91, %93, %cst_37 {dimension_numbers = #tpu.dot_dimension_numbers<[1], [1], [0], [0], [0, 0, 1, 0], [], []>} : vector<8x128xbf16>, vector<8x128xbf16>, vector<8x8xf32> -> vector<8x8xf32>
    %cst_38 = arith.constant -1.000000e+30 : f32
    %97 = vector.broadcast %cst_38 : f32 to vector<8x8xf32>
    %98 = arith.select %47, %97, %96 : vector<8x8xi1>, vector<8x8xf32>
    %cst_39 = arith.constant dense<0xFF800000> : vector<8xf32>
    %99 = vector.multi_reduction <maximumf>, %98, %cst_39 [1] : vector<8x8xf32> to vector<8xf32>
    %100 = vector.shape_cast %99 : vector<8xf32> to vector<8x1xf32>
    %101 = vector.broadcast %100 : vector<8x1xf32> to vector<8x8xf32>
    %102 = arith.subf %98, %101 : vector<8x8xf32>
    %103 = math.exp %102 : vector<8x8xf32>
    %cst_40 = arith.constant dense<0.000000e+00> : vector<8xf32>
    %104 = vector.multi_reduction <add>, %103, %cst_40 [1] : vector<8x8xf32> to vector<8xf32>
    %105 = vector.shape_cast %104 : vector<8xf32> to vector<8x1xf32>
    %106 = tpu.reciprocal %105 {approx = true} : vector<8x1xf32> -> vector<8x1xf32>
    %107 = vector.broadcast %106 : vector<8x1xf32> to vector<8x8xf32>
    %108 = arith.mulf %103, %107 : vector<8x8xf32>
    %109 = arith.truncf %108 : vector<8x8xf32> to vector<8x8xbf16>
    %cst_41 = arith.constant dense<0.000000e+00> : vector<8x128xf32>
    %110 = tpu.matmul %109, %95, %cst_41 {dimension_numbers = #tpu.dot_dimension_numbers<[1], [0], [0], [1], [0, 0, 1, 1], [], []>} : vector<8x8xbf16>, vector<8x128xbf16>, vector<8x128xf32> -> vector<8x128xf32>
    %111 = vector.extract_strided_slice %40 {offsets = [0, 384], sizes = [8, 128], strides = [1, 1]} : vector<8x512xf32> to vector<8x128xf32>
    %112 = arith.truncf %111 : vector<8x128xf32> to vector<8x128xbf16>
    %113 = vector.extract_strided_slice %41 {offsets = [0, 384], sizes = [8, 128], strides = [1, 1]} : vector<8x512xf32> to vector<8x128xf32>
    %114 = arith.truncf %113 : vector<8x128xf32> to vector<8x128xbf16>
    %115 = vector.extract_strided_slice %42 {offsets = [0, 384], sizes = [8, 128], strides = [1, 1]} : vector<8x512xf32> to vector<8x128xf32>
    %116 = arith.truncf %115 : vector<8x128xf32> to vector<8x128xbf16>
    %cst_42 = arith.constant dense<0.000000e+00> : vector<8x8xf32>
    %117 = tpu.matmul %112, %114, %cst_42 {dimension_numbers = #tpu.dot_dimension_numbers<[1], [1], [0], [0], [0, 0, 1, 0], [], []>} : vector<8x128xbf16>, vector<8x128xbf16>, vector<8x8xf32> -> vector<8x8xf32>
    %cst_43 = arith.constant -1.000000e+30 : f32
    %118 = vector.broadcast %cst_43 : f32 to vector<8x8xf32>
    %119 = arith.select %47, %118, %117 : vector<8x8xi1>, vector<8x8xf32>
    %cst_44 = arith.constant dense<0xFF800000> : vector<8xf32>
    %120 = vector.multi_reduction <maximumf>, %119, %cst_44 [1] : vector<8x8xf32> to vector<8xf32>
    %121 = vector.shape_cast %120 : vector<8xf32> to vector<8x1xf32>
    %122 = vector.broadcast %121 : vector<8x1xf32> to vector<8x8xf32>
    %123 = arith.subf %119, %122 : vector<8x8xf32>
    %124 = math.exp %123 : vector<8x8xf32>
    %cst_45 = arith.constant dense<0.000000e+00> : vector<8xf32>
    %125 = vector.multi_reduction <add>, %124, %cst_45 [1] : vector<8x8xf32> to vector<8xf32>
    %126 = vector.shape_cast %125 : vector<8xf32> to vector<8x1xf32>
    %127 = tpu.reciprocal %126 {approx = true} : vector<8x1xf32> -> vector<8x1xf32>
    %128 = vector.broadcast %127 : vector<8x1xf32> to vector<8x8xf32>
    %129 = arith.mulf %124, %128 : vector<8x8xf32>
    %130 = arith.truncf %129 : vector<8x8xf32> to vector<8x8xbf16>
    %cst_46 = arith.constant dense<0.000000e+00> : vector<8x128xf32>
    %131 = tpu.matmul %130, %116, %cst_46 {dimension_numbers = #tpu.dot_dimension_numbers<[1], [0], [0], [1], [0, 0, 1, 1], [], []>} : vector<8x8xbf16>, vector<8x128xbf16>, vector<8x128xf32> -> vector<8x128xf32>
    %132 = tpu.concatenate %68, %89, %110, %131 in 1 : vector<8x128xf32>, vector<8x128xf32>, vector<8x128xf32>, vector<8x128xf32> -> vector<8x512xf32>
    %133 = vector.extract_strided_slice %29 {offsets = [8, 0], sizes = [8, 512], strides = [1, 1]} : vector<16x512xf32> to vector<8x512xf32>
    %134 = vector.extract_strided_slice %38 {offsets = [8, 0], sizes = [8, 512], strides = [1, 1]} : vector<16x512xf32> to vector<8x512xf32>
    %135 = vector.extract_strided_slice %39 {offsets = [8, 0], sizes = [8, 512], strides = [1, 1]} : vector<16x512xf32> to vector<8x512xf32>
    %136 = vector.extract_strided_slice %10 {offsets = [1, 0, 0], sizes = [1, 1, 8], strides = [1, 1, 1]} : vector<2x1x8xi1> to vector<1x1x8xi1>
    %137 = vector.shape_cast %136 : vector<1x1x8xi1> to vector<1x8xi1>
    %138 = vector.shape_cast %137 : vector<1x8xi1> to vector<1x8xi1>
    %139 = vector.broadcast %138 : vector<1x8xi1> to vector<8x8xi1>
    %140 = arith.ori %139, %21 : vector<8x8xi1>
    %141 = vector.extract_strided_slice %133 {offsets = [0, 0], sizes = [8, 128], strides = [1, 1]} : vector<8x512xf32> to vector<8x128xf32>
    %142 = arith.truncf %141 : vector<8x128xf32> to vector<8x128xbf16>
    %143 = vector.extract_strided_slice %134 {offsets = [0, 0], sizes = [8, 128], strides = [1, 1]} : vector<8x512xf32> to vector<8x128xf32>
    %144 = arith.truncf %143 : vector<8x128xf32> to vector<8x128xbf16>
    %145 = vector.extract_strided_slice %135 {offsets = [0, 0], sizes = [8, 128], strides = [1, 1]} : vector<8x512xf32> to vector<8x128xf32>
    %146 = arith.truncf %145 : vector<8x128xf32> to vector<8x128xbf16>
    %cst_47 = arith.constant dense<0.000000e+00> : vector<8x8xf32>
    %147 = tpu.matmul %142, %144, %cst_47 {dimension_numbers = #tpu.dot_dimension_numbers<[1], [1], [0], [0], [0, 0, 1, 0], [], []>} : vector<8x128xbf16>, vector<8x128xbf16>, vector<8x8xf32> -> vector<8x8xf32>
    %cst_48 = arith.constant -1.000000e+30 : f32
    %148 = vector.broadcast %cst_48 : f32 to vector<8x8xf32>
    %149 = arith.select %140, %148, %147 : vector<8x8xi1>, vector<8x8xf32>
    %cst_49 = arith.constant dense<0xFF800000> : vector<8xf32>
    %150 = vector.multi_reduction <maximumf>, %149, %cst_49 [1] : vector<8x8xf32> to vector<8xf32>
    %151 = vector.shape_cast %150 : vector<8xf32> to vector<8x1xf32>
    %152 = vector.broadcast %151 : vector<8x1xf32> to vector<8x8xf32>
    %153 = arith.subf %149, %152 : vector<8x8xf32>
    %154 = math.exp %153 : vector<8x8xf32>
    %cst_50 = arith.constant dense<0.000000e+00> : vector<8xf32>
    %155 = vector.multi_reduction <add>, %154, %cst_50 [1] : vector<8x8xf32> to vector<8xf32>
    %156 = vector.shape_cast %155 : vector<8xf32> to vector<8x1xf32>
    %157 = tpu.reciprocal %156 {approx = true} : vector<8x1xf32> -> vector<8x1xf32>
    %158 = vector.broadcast %157 : vector<8x1xf32> to vector<8x8xf32>
    %159 = arith.mulf %154, %158 : vector<8x8xf32>
    %160 = arith.truncf %159 : vector<8x8xf32> to vector<8x8xbf16>
    %cst_51 = arith.constant dense<0.000000e+00> : vector<8x128xf32>
    %161 = tpu.matmul %160, %146, %cst_51 {dimension_numbers = #tpu.dot_dimension_numbers<[1], [0], [0], [1], [0, 0, 1, 1], [], []>} : vector<8x8xbf16>, vector<8x128xbf16>, vector<8x128xf32> -> vector<8x128xf32>
    %162 = vector.extract_strided_slice %133 {offsets = [0, 128], sizes = [8, 128], strides = [1, 1]} : vector<8x512xf32> to vector<8x128xf32>
    %163 = arith.truncf %162 : vector<8x128xf32> to vector<8x128xbf16>
    %164 = vector.extract_strided_slice %134 {offsets = [0, 128], sizes = [8, 128], strides = [1, 1]} : vector<8x512xf32> to vector<8x128xf32>
    %165 = arith.truncf %164 : vector<8x128xf32> to vector<8x128xbf16>
    %166 = vector.extract_strided_slice %135 {offsets = [0, 128], sizes = [8, 128], strides = [1, 1]} : vector<8x512xf32> to vector<8x128xf32>
    %167 = arith.truncf %166 : vector<8x128xf32> to vector<8x128xbf16>
    %cst_52 = arith.constant dense<0.000000e+00> : vector<8x8xf32>
    %168 = tpu.matmul %163, %165, %cst_52 {dimension_numbers = #tpu.dot_dimension_numbers<[1], [1], [0], [0], [0, 0, 1, 0], [], []>} : vector<8x128xbf16>, vector<8x128xbf16>, vector<8x8xf32> -> vector<8x8xf32>
    %cst_53 = arith.constant -1.000000e+30 : f32
    %169 = vector.broadcast %cst_53 : f32 to vector<8x8xf32>
    %170 = arith.select %140, %169, %168 : vector<8x8xi1>, vector<8x8xf32>
    %cst_54 = arith.constant dense<0xFF800000> : vector<8xf32>
    %171 = vector.multi_reduction <maximumf>, %170, %cst_54 [1] : vector<8x8xf32> to vector<8xf32>
    %172 = vector.shape_cast %171 : vector<8xf32> to vector<8x1xf32>
    %173 = vector.broadcast %172 : vector<8x1xf32> to vector<8x8xf32>
    %174 = arith.subf %170, %173 : vector<8x8xf32>
    %175 = math.exp %174 : vector<8x8xf32>
    %cst_55 = arith.constant dense<0.000000e+00> : vector<8xf32>
    %176 = vector.multi_reduction <add>, %175, %cst_55 [1] : vector<8x8xf32> to vector<8xf32>
    %177 = vector.shape_cast %176 : vector<8xf32> to vector<8x1xf32>
    %178 = tpu.reciprocal %177 {approx = true} : vector<8x1xf32> -> vector<8x1xf32>
    %179 = vector.broadcast %178 : vector<8x1xf32> to vector<8x8xf32>
    %180 = arith.mulf %175, %179 : vector<8x8xf32>
    %181 = arith.truncf %180 : vector<8x8xf32> to vector<8x8xbf16>
    %cst_56 = arith.constant dense<0.000000e+00> : vector<8x128xf32>
    %182 = tpu.matmul %181, %167, %cst_56 {dimension_numbers = #tpu.dot_dimension_numbers<[1], [0], [0], [1], [0, 0, 1, 1], [], []>} : vector<8x8xbf16>, vector<8x128xbf16>, vector<8x128xf32> -> vector<8x128xf32>
    %183 = vector.extract_strided_slice %133 {offsets = [0, 256], sizes = [8, 128], strides = [1, 1]} : vector<8x512xf32> to vector<8x128xf32>
    %184 = arith.truncf %183 : vector<8x128xf32> to vector<8x128xbf16>
    %185 = vector.extract_strided_slice %134 {offsets = [0, 256], sizes = [8, 128], strides = [1, 1]} : vector<8x512xf32> to vector<8x128xf32>
    %186 = arith.truncf %185 : vector<8x128xf32> to vector<8x128xbf16>
    %187 = vector.extract_strided_slice %135 {offsets = [0, 256], sizes = [8, 128], strides = [1, 1]} : vector<8x512xf32> to vector<8x128xf32>
    %188 = arith.truncf %187 : vector<8x128xf32> to vector<8x128xbf16>
    %cst_57 = arith.constant dense<0.000000e+00> : vector<8x8xf32>
    %189 = tpu.matmul %184, %186, %cst_57 {dimension_numbers = #tpu.dot_dimension_numbers<[1], [1], [0], [0], [0, 0, 1, 0], [], []>} : vector<8x128xbf16>, vector<8x128xbf16>, vector<8x8xf32> -> vector<8x8xf32>
    %cst_58 = arith.constant -1.000000e+30 : f32
    %190 = vector.broadcast %cst_58 : f32 to vector<8x8xf32>
    %191 = arith.select %140, %190, %189 : vector<8x8xi1>, vector<8x8xf32>
    %cst_59 = arith.constant dense<0xFF800000> : vector<8xf32>
    %192 = vector.multi_reduction <maximumf>, %191, %cst_59 [1] : vector<8x8xf32> to vector<8xf32>
    %193 = vector.shape_cast %192 : vector<8xf32> to vector<8x1xf32>
    %194 = vector.broadcast %193 : vector<8x1xf32> to vector<8x8xf32>
    %195 = arith.subf %191, %194 : vector<8x8xf32>
    %196 = math.exp %195 : vector<8x8xf32>
    %cst_60 = arith.constant dense<0.000000e+00> : vector<8xf32>
    %197 = vector.multi_reduction <add>, %196, %cst_60 [1] : vector<8x8xf32> to vector<8xf32>
    %198 = vector.shape_cast %197 : vector<8xf32> to vector<8x1xf32>
    %199 = tpu.reciprocal %198 {approx = true} : vector<8x1xf32> -> vector<8x1xf32>
    %200 = vector.broadcast %199 : vector<8x1xf32> to vector<8x8xf32>
    %201 = arith.mulf %196, %200 : vector<8x8xf32>
    %202 = arith.truncf %201 : vector<8x8xf32> to vector<8x8xbf16>
    %cst_61 = arith.constant dense<0.000000e+00> : vector<8x128xf32>
    %203 = tpu.matmul %202, %188, %cst_61 {dimension_numbers = #tpu.dot_dimension_numbers<[1], [0], [0], [1], [0, 0, 1, 1], [], []>} : vector<8x8xbf16>, vector<8x128xbf16>, vector<8x128xf32> -> vector<8x128xf32>
    %204 = vector.extract_strided_slice %133 {offsets = [0, 384], sizes = [8, 128], strides = [1, 1]} : vector<8x512xf32> to vector<8x128xf32>
    %205 = arith.truncf %204 : vector<8x128xf32> to vector<8x128xbf16>
    %206 = vector.extract_strided_slice %134 {offsets = [0, 384], sizes = [8, 128], strides = [1, 1]} : vector<8x512xf32> to vector<8x128xf32>
    %207 = arith.truncf %206 : vector<8x128xf32> to vector<8x128xbf16>
    %208 = vector.extract_strided_slice %135 {offsets = [0, 384], sizes = [8, 128], strides = [1, 1]} : vector<8x512xf32> to vector<8x128xf32>
    %209 = arith.truncf %208 : vector<8x128xf32> to vector<8x128xbf16>
    %cst_62 = arith.constant dense<0.000000e+00> : vector<8x8xf32>
    %210 = tpu.matmul %205, %207, %cst_62 {dimension_numbers = #tpu.dot_dimension_numbers<[1], [1], [0], [0], [0, 0, 1, 0], [], []>} : vector<8x128xbf16>, vector<8x128xbf16>, vector<8x8xf32> -> vector<8x8xf32>
    %cst_63 = arith.constant -1.000000e+30 : f32
    %211 = vector.broadcast %cst_63 : f32 to vector<8x8xf32>
    %212 = arith.select %140, %211, %210 : vector<8x8xi1>, vector<8x8xf32>
    %cst_64 = arith.constant dense<0xFF800000> : vector<8xf32>
    %213 = vector.multi_reduction <maximumf>, %212, %cst_64 [1] : vector<8x8xf32> to vector<8xf32>
    %214 = vector.shape_cast %213 : vector<8xf32> to vector<8x1xf32>
    %215 = vector.broadcast %214 : vector<8x1xf32> to vector<8x8xf32>
    %216 = arith.subf %212, %215 : vector<8x8xf32>
    %217 = math.exp %216 : vector<8x8xf32>
    %cst_65 = arith.constant dense<0.000000e+00> : vector<8xf32>
    %218 = vector.multi_reduction <add>, %217, %cst_65 [1] : vector<8x8xf32> to vector<8xf32>
    %219 = vector.shape_cast %218 : vector<8xf32> to vector<8x1xf32>
    %220 = tpu.reciprocal %219 {approx = true} : vector<8x1xf32> -> vector<8x1xf32>
    %221 = vector.broadcast %220 : vector<8x1xf32> to vector<8x8xf32>
    %222 = arith.mulf %217, %221 : vector<8x8xf32>
    %223 = arith.truncf %222 : vector<8x8xf32> to vector<8x8xbf16>
    %cst_66 = arith.constant dense<0.000000e+00> : vector<8x128xf32>
    %224 = tpu.matmul %223, %209, %cst_66 {dimension_numbers = #tpu.dot_dimension_numbers<[1], [0], [0], [1], [0, 0, 1, 1], [], []>} : vector<8x8xbf16>, vector<8x128xbf16>, vector<8x128xf32> -> vector<8x128xf32>
    %225 = tpu.concatenate %161, %182, %203, %224 in 1 : vector<8x128xf32>, vector<8x128xf32>, vector<8x128xf32>, vector<8x128xf32> -> vector<8x512xf32>
    %226 = tpu.concatenate %132, %225 in 0 : vector<8x512xf32>, vector<8x512xf32> -> vector<16x512xf32>
    %227 = arith.truncf %226 : vector<16x512xf32> to vector<16x512xbf16>
    %c0_67 = arith.constant 0 : index
    %c0_68 = arith.constant 0 : index
    %c0_69 = arith.constant 0 : index
    %228 = vector.load %arg10[%c0_67, %c0_68, %c0_69] : memref<1x512x128xbf16, #tpu.memory_space<vmem>>, vector<1x512x128xbf16>
    %229 = vector.shape_cast %228 : vector<1x512x128xbf16> to vector<512x128xbf16>
    %cst_70 = arith.constant dense<0.000000e+00> : vector<16x128xf32>
    %230 = tpu.matmul %227, %229, %cst_70 {dimension_numbers = #tpu.dot_dimension_numbers<[1], [0], [0], [1], [0, 0, 1, 1], [], []>} : vector<16x512xbf16>, vector<512x128xbf16>, vector<16x128xf32> -> vector<16x128xf32>
    %c0_71 = arith.constant 0 : index
    %c0_72 = arith.constant 0 : index
    %c0_73 = arith.constant 0 : index
    %231 = vector.load %arg11[%c0_71, %c0_72, %c0_73] : memref<1x1x128xf32, #tpu.memory_space<vmem>>, vector<1x1x128xf32>
    %232 = vector.shape_cast %231 : vector<1x1x128xf32> to vector<1x128xf32>
    %233 = vector.broadcast %232 : vector<1x128xf32> to vector<16x128xf32>
    %234 = arith.addf %230, %233 : vector<16x128xf32>
    %235 = arith.addf %234, %5 : vector<16x128xf32>
    %cst_74 = arith.constant dense<0.000000e+00> : vector<16xf32>
    %236 = vector.multi_reduction <add>, %235, %cst_74 [1] : vector<16x128xf32> to vector<16xf32>
    %237 = vector.shape_cast %236 : vector<16xf32> to vector<16x1xf32>
    %cst_75 = arith.constant 3.125000e-02 : f32
    %238 = vector.broadcast %cst_75 : f32 to vector<16x1xf32>
    %239 = arith.mulf %237, %238 : vector<16x1xf32>
    %240 = vector.broadcast %239 : vector<16x1xf32> to vector<16x128xf32>
    %241 = arith.subf %235, %240 : vector<16x128xf32>
    %242 = vector.broadcast %18 : vector<1x128xf32> to vector<16x128xf32>
    %243 = arith.mulf %241, %242 : vector<16x128xf32>
    %244 = arith.mulf %243, %243 : vector<16x128xf32>
    %cst_76 = arith.constant dense<0.000000e+00> : vector<16xf32>
    %245 = vector.multi_reduction <add>, %244, %cst_76 [1] : vector<16x128xf32> to vector<16xf32>
    %246 = vector.shape_cast %245 : vector<16xf32> to vector<16x1xf32>
    %cst_77 = arith.constant 3.125000e-02 : f32
    %247 = vector.broadcast %cst_77 : f32 to vector<16x1xf32>
    %248 = arith.mulf %246, %247 : vector<16x1xf32>
    %cst_78 = arith.constant 9.99999974E-6 : f32
    %249 = vector.broadcast %cst_78 : f32 to vector<16x1xf32>
    %250 = arith.addf %248, %249 : vector<16x1xf32>
    %251 = math.rsqrt %250 : vector<16x1xf32>
    %252 = vector.broadcast %251 : vector<16x1xf32> to vector<16x128xf32>
    %253 = arith.mulf %243, %252 : vector<16x128xf32>
    %c0_79 = arith.constant 0 : index
    %c0_80 = arith.constant 0 : index
    %c0_81 = arith.constant 0 : index
    %254 = vector.load %arg12[%c0_79, %c0_80, %c0_81] : memref<1x1x128xf32, #tpu.memory_space<vmem>>, vector<1x1x128xf32>
    %255 = vector.shape_cast %254 : vector<1x1x128xf32> to vector<1x128xf32>
    %256 = vector.broadcast %255 : vector<1x128xf32> to vector<16x128xf32>
    %257 = arith.mulf %253, %256 : vector<16x128xf32>
    %c0_82 = arith.constant 0 : index
    %c0_83 = arith.constant 0 : index
    %c0_84 = arith.constant 0 : index
    %258 = vector.load %arg13[%c0_82, %c0_83, %c0_84] : memref<1x1x128xf32, #tpu.memory_space<vmem>>, vector<1x1x128xf32>
    %259 = vector.shape_cast %258 : vector<1x1x128xf32> to vector<1x128xf32>
    %260 = vector.broadcast %259 : vector<1x128xf32> to vector<16x128xf32>
    %261 = arith.addf %257, %260 : vector<16x128xf32>
    %262 = arith.truncf %261 : vector<16x128xf32> to vector<16x128xbf16>
    %c0_85 = arith.constant 0 : index
    %c0_86 = arith.constant 0 : index
    %c0_87 = arith.constant 0 : index
    %263 = vector.load %arg14[%c0_85, %c0_86, %c0_87] : memref<1x128x512xbf16, #tpu.memory_space<vmem>>, vector<1x128x512xbf16>
    %264 = vector.shape_cast %263 : vector<1x128x512xbf16> to vector<128x512xbf16>
    %cst_88 = arith.constant dense<0.000000e+00> : vector<16x512xf32>
    %265 = tpu.matmul %262, %264, %cst_88 {dimension_numbers = #tpu.dot_dimension_numbers<[1], [0], [0], [1], [0, 0, 1, 1], [], []>} : vector<16x128xbf16>, vector<128x512xbf16>, vector<16x512xf32> -> vector<16x512xf32>
    %c0_89 = arith.constant 0 : index
    %c0_90 = arith.constant 0 : index
    %c0_91 = arith.constant 0 : index
    %266 = vector.load %arg15[%c0_89, %c0_90, %c0_91] : memref<1x1x512xf32, #tpu.memory_space<vmem>>, vector<1x1x512xf32>
    %267 = vector.shape_cast %266 : vector<1x1x512xf32> to vector<1x512xf32>
    %268 = vector.broadcast %267 : vector<1x512xf32> to vector<16x512xf32>
    %269 = arith.addf %265, %268 : vector<16x512xf32>
    %c0_92 = arith.constant 0 : index
    %c0_93 = arith.constant 0 : index
    %c0_94 = arith.constant 0 : index
    %270 = vector.load %arg16[%c0_92, %c0_93, %c0_94] : memref<1x128x1024xbf16, #tpu.memory_space<vmem>>, vector<1x128x1024xbf16>
    %271 = vector.shape_cast %270 : vector<1x128x1024xbf16> to vector<128x1024xbf16>
    %cst_95 = arith.constant dense<0.000000e+00> : vector<16x1024xf32>
    %272 = tpu.matmul %7, %271, %cst_95 {dimension_numbers = #tpu.dot_dimension_numbers<[1], [0], [0], [1], [0, 0, 1, 1], [], []>} : vector<16x128xbf16>, vector<128x1024xbf16>, vector<16x1024xf32> -> vector<16x1024xf32>
    %c0_96 = arith.constant 0 : index
    %c0_97 = arith.constant 0 : index
    %c0_98 = arith.constant 0 : index
    %273 = vector.load %arg17[%c0_96, %c0_97, %c0_98] : memref<1x1x1024xf32, #tpu.memory_space<vmem>>, vector<1x1x1024xf32>
    %274 = vector.shape_cast %273 : vector<1x1x1024xf32> to vector<1x1024xf32>
    %275 = vector.broadcast %274 : vector<1x1024xf32> to vector<16x1024xf32>
    %276 = arith.addf %272, %275 : vector<16x1024xf32>
    %277 = vector.extract_strided_slice %276 {offsets = [0, 0], sizes = [16, 512], strides = [1, 1]} : vector<16x1024xf32> to vector<16x512xf32>
    %278 = vector.extract_strided_slice %276 {offsets = [0, 512], sizes = [16, 512], strides = [1, 1]} : vector<16x1024xf32> to vector<16x512xf32>
    %279 = vector.extract_strided_slice %269 {offsets = [0, 0], sizes = [8, 512], strides = [1, 1]} : vector<16x512xf32> to vector<8x512xf32>
    %280 = vector.extract_strided_slice %277 {offsets = [0, 0], sizes = [8, 512], strides = [1, 1]} : vector<16x512xf32> to vector<8x512xf32>
    %281 = vector.extract_strided_slice %278 {offsets = [0, 0], sizes = [8, 512], strides = [1, 1]} : vector<16x512xf32> to vector<8x512xf32>
    %282 = vector.extract_strided_slice %13 {offsets = [0, 0, 0], sizes = [1, 1, 8], strides = [1, 1, 1]} : vector<2x1x8xi1> to vector<1x1x8xi1>
    %283 = vector.shape_cast %282 : vector<1x1x8xi1> to vector<1x8xi1>
    %284 = vector.shape_cast %283 : vector<1x8xi1> to vector<1x8xi1>
    %285 = vector.broadcast %284 : vector<1x8xi1> to vector<8x8xi1>
    %286 = vector.extract_strided_slice %279 {offsets = [0, 0], sizes = [8, 128], strides = [1, 1]} : vector<8x512xf32> to vector<8x128xf32>
    %287 = arith.truncf %286 : vector<8x128xf32> to vector<8x128xbf16>
    %288 = vector.extract_strided_slice %280 {offsets = [0, 0], sizes = [8, 128], strides = [1, 1]} : vector<8x512xf32> to vector<8x128xf32>
    %289 = arith.truncf %288 : vector<8x128xf32> to vector<8x128xbf16>
    %290 = vector.extract_strided_slice %281 {offsets = [0, 0], sizes = [8, 128], strides = [1, 1]} : vector<8x512xf32> to vector<8x128xf32>
    %291 = arith.truncf %290 : vector<8x128xf32> to vector<8x128xbf16>
    %cst_99 = arith.constant dense<0.000000e+00> : vector<8x8xf32>
    %292 = tpu.matmul %287, %289, %cst_99 {dimension_numbers = #tpu.dot_dimension_numbers<[1], [1], [0], [0], [0, 0, 1, 0], [], []>} : vector<8x128xbf16>, vector<8x128xbf16>, vector<8x8xf32> -> vector<8x8xf32>
    %cst_100 = arith.constant -1.000000e+30 : f32
    %293 = vector.broadcast %cst_100 : f32 to vector<8x8xf32>
    %294 = arith.select %285, %293, %292 : vector<8x8xi1>, vector<8x8xf32>
    %cst_101 = arith.constant dense<0xFF800000> : vector<8xf32>
    %295 = vector.multi_reduction <maximumf>, %294, %cst_101 [1] : vector<8x8xf32> to vector<8xf32>
    %296 = vector.shape_cast %295 : vector<8xf32> to vector<8x1xf32>
    %297 = vector.broadcast %296 : vector<8x1xf32> to vector<8x8xf32>
    %298 = arith.subf %294, %297 : vector<8x8xf32>
    %299 = math.exp %298 : vector<8x8xf32>
    %cst_102 = arith.constant dense<0.000000e+00> : vector<8xf32>
    %300 = vector.multi_reduction <add>, %299, %cst_102 [1] : vector<8x8xf32> to vector<8xf32>
    %301 = vector.shape_cast %300 : vector<8xf32> to vector<8x1xf32>
    %302 = tpu.reciprocal %301 {approx = true} : vector<8x1xf32> -> vector<8x1xf32>
    %303 = vector.broadcast %302 : vector<8x1xf32> to vector<8x8xf32>
    %304 = arith.mulf %299, %303 : vector<8x8xf32>
    %305 = arith.truncf %304 : vector<8x8xf32> to vector<8x8xbf16>
    %cst_103 = arith.constant dense<0.000000e+00> : vector<8x128xf32>
    %306 = tpu.matmul %305, %291, %cst_103 {dimension_numbers = #tpu.dot_dimension_numbers<[1], [0], [0], [1], [0, 0, 1, 1], [], []>} : vector<8x8xbf16>, vector<8x128xbf16>, vector<8x128xf32> -> vector<8x128xf32>
    %307 = vector.extract_strided_slice %279 {offsets = [0, 128], sizes = [8, 128], strides = [1, 1]} : vector<8x512xf32> to vector<8x128xf32>
    %308 = arith.truncf %307 : vector<8x128xf32> to vector<8x128xbf16>
    %309 = vector.extract_strided_slice %280 {offsets = [0, 128], sizes = [8, 128], strides = [1, 1]} : vector<8x512xf32> to vector<8x128xf32>
    %310 = arith.truncf %309 : vector<8x128xf32> to vector<8x128xbf16>
    %311 = vector.extract_strided_slice %281 {offsets = [0, 128], sizes = [8, 128], strides = [1, 1]} : vector<8x512xf32> to vector<8x128xf32>
    %312 = arith.truncf %311 : vector<8x128xf32> to vector<8x128xbf16>
    %cst_104 = arith.constant dense<0.000000e+00> : vector<8x8xf32>
    %313 = tpu.matmul %308, %310, %cst_104 {dimension_numbers = #tpu.dot_dimension_numbers<[1], [1], [0], [0], [0, 0, 1, 0], [], []>} : vector<8x128xbf16>, vector<8x128xbf16>, vector<8x8xf32> -> vector<8x8xf32>
    %cst_105 = arith.constant -1.000000e+30 : f32
    %314 = vector.broadcast %cst_105 : f32 to vector<8x8xf32>
    %315 = arith.select %285, %314, %313 : vector<8x8xi1>, vector<8x8xf32>
    %cst_106 = arith.constant dense<0xFF800000> : vector<8xf32>
    %316 = vector.multi_reduction <maximumf>, %315, %cst_106 [1] : vector<8x8xf32> to vector<8xf32>
    %317 = vector.shape_cast %316 : vector<8xf32> to vector<8x1xf32>
    %318 = vector.broadcast %317 : vector<8x1xf32> to vector<8x8xf32>
    %319 = arith.subf %315, %318 : vector<8x8xf32>
    %320 = math.exp %319 : vector<8x8xf32>
    %cst_107 = arith.constant dense<0.000000e+00> : vector<8xf32>
    %321 = vector.multi_reduction <add>, %320, %cst_107 [1] : vector<8x8xf32> to vector<8xf32>
    %322 = vector.shape_cast %321 : vector<8xf32> to vector<8x1xf32>
    %323 = tpu.reciprocal %322 {approx = true} : vector<8x1xf32> -> vector<8x1xf32>
    %324 = vector.broadcast %323 : vector<8x1xf32> to vector<8x8xf32>
    %325 = arith.mulf %320, %324 : vector<8x8xf32>
    %326 = arith.truncf %325 : vector<8x8xf32> to vector<8x8xbf16>
    %cst_108 = arith.constant dense<0.000000e+00> : vector<8x128xf32>
    %327 = tpu.matmul %326, %312, %cst_108 {dimension_numbers = #tpu.dot_dimension_numbers<[1], [0], [0], [1], [0, 0, 1, 1], [], []>} : vector<8x8xbf16>, vector<8x128xbf16>, vector<8x128xf32> -> vector<8x128xf32>
    %328 = vector.extract_strided_slice %279 {offsets = [0, 256], sizes = [8, 128], strides = [1, 1]} : vector<8x512xf32> to vector<8x128xf32>
    %329 = arith.truncf %328 : vector<8x128xf32> to vector<8x128xbf16>
    %330 = vector.extract_strided_slice %280 {offsets = [0, 256], sizes = [8, 128], strides = [1, 1]} : vector<8x512xf32> to vector<8x128xf32>
    %331 = arith.truncf %330 : vector<8x128xf32> to vector<8x128xbf16>
    %332 = vector.extract_strided_slice %281 {offsets = [0, 256], sizes = [8, 128], strides = [1, 1]} : vector<8x512xf32> to vector<8x128xf32>
    %333 = arith.truncf %332 : vector<8x128xf32> to vector<8x128xbf16>
    %cst_109 = arith.constant dense<0.000000e+00> : vector<8x8xf32>
    %334 = tpu.matmul %329, %331, %cst_109 {dimension_numbers = #tpu.dot_dimension_numbers<[1], [1], [0], [0], [0, 0, 1, 0], [], []>} : vector<8x128xbf16>, vector<8x128xbf16>, vector<8x8xf32> -> vector<8x8xf32>
    %cst_110 = arith.constant -1.000000e+30 : f32
    %335 = vector.broadcast %cst_110 : f32 to vector<8x8xf32>
    %336 = arith.select %285, %335, %334 : vector<8x8xi1>, vector<8x8xf32>
    %cst_111 = arith.constant dense<0xFF800000> : vector<8xf32>
    %337 = vector.multi_reduction <maximumf>, %336, %cst_111 [1] : vector<8x8xf32> to vector<8xf32>
    %338 = vector.shape_cast %337 : vector<8xf32> to vector<8x1xf32>
    %339 = vector.broadcast %338 : vector<8x1xf32> to vector<8x8xf32>
    %340 = arith.subf %336, %339 : vector<8x8xf32>
    %341 = math.exp %340 : vector<8x8xf32>
    %cst_112 = arith.constant dense<0.000000e+00> : vector<8xf32>
    %342 = vector.multi_reduction <add>, %341, %cst_112 [1] : vector<8x8xf32> to vector<8xf32>
    %343 = vector.shape_cast %342 : vector<8xf32> to vector<8x1xf32>
    %344 = tpu.reciprocal %343 {approx = true} : vector<8x1xf32> -> vector<8x1xf32>
    %345 = vector.broadcast %344 : vector<8x1xf32> to vector<8x8xf32>
    %346 = arith.mulf %341, %345 : vector<8x8xf32>
    %347 = arith.truncf %346 : vector<8x8xf32> to vector<8x8xbf16>
    %cst_113 = arith.constant dense<0.000000e+00> : vector<8x128xf32>
    %348 = tpu.matmul %347, %333, %cst_113 {dimension_numbers = #tpu.dot_dimension_numbers<[1], [0], [0], [1], [0, 0, 1, 1], [], []>} : vector<8x8xbf16>, vector<8x128xbf16>, vector<8x128xf32> -> vector<8x128xf32>
    %349 = vector.extract_strided_slice %279 {offsets = [0, 384], sizes = [8, 128], strides = [1, 1]} : vector<8x512xf32> to vector<8x128xf32>
    %350 = arith.truncf %349 : vector<8x128xf32> to vector<8x128xbf16>
    %351 = vector.extract_strided_slice %280 {offsets = [0, 384], sizes = [8, 128], strides = [1, 1]} : vector<8x512xf32> to vector<8x128xf32>
    %352 = arith.truncf %351 : vector<8x128xf32> to vector<8x128xbf16>
    %353 = vector.extract_strided_slice %281 {offsets = [0, 384], sizes = [8, 128], strides = [1, 1]} : vector<8x512xf32> to vector<8x128xf32>
    %354 = arith.truncf %353 : vector<8x128xf32> to vector<8x128xbf16>
    %cst_114 = arith.constant dense<0.000000e+00> : vector<8x8xf32>
    %355 = tpu.matmul %350, %352, %cst_114 {dimension_numbers = #tpu.dot_dimension_numbers<[1], [1], [0], [0], [0, 0, 1, 0], [], []>} : vector<8x128xbf16>, vector<8x128xbf16>, vector<8x8xf32> -> vector<8x8xf32>
    %cst_115 = arith.constant -1.000000e+30 : f32
    %356 = vector.broadcast %cst_115 : f32 to vector<8x8xf32>
    %357 = arith.select %285, %356, %355 : vector<8x8xi1>, vector<8x8xf32>
    %cst_116 = arith.constant dense<0xFF800000> : vector<8xf32>
    %358 = vector.multi_reduction <maximumf>, %357, %cst_116 [1] : vector<8x8xf32> to vector<8xf32>
    %359 = vector.shape_cast %358 : vector<8xf32> to vector<8x1xf32>
    %360 = vector.broadcast %359 : vector<8x1xf32> to vector<8x8xf32>
    %361 = arith.subf %357, %360 : vector<8x8xf32>
    %362 = math.exp %361 : vector<8x8xf32>
    %cst_117 = arith.constant dense<0.000000e+00> : vector<8xf32>
    %363 = vector.multi_reduction <add>, %362, %cst_117 [1] : vector<8x8xf32> to vector<8xf32>
    %364 = vector.shape_cast %363 : vector<8xf32> to vector<8x1xf32>
    %365 = tpu.reciprocal %364 {approx = true} : vector<8x1xf32> -> vector<8x1xf32>
    %366 = vector.broadcast %365 : vector<8x1xf32> to vector<8x8xf32>
    %367 = arith.mulf %362, %366 : vector<8x8xf32>
    %368 = arith.truncf %367 : vector<8x8xf32> to vector<8x8xbf16>
    %cst_118 = arith.constant dense<0.000000e+00> : vector<8x128xf32>
    %369 = tpu.matmul %368, %354, %cst_118 {dimension_numbers = #tpu.dot_dimension_numbers<[1], [0], [0], [1], [0, 0, 1, 1], [], []>} : vector<8x8xbf16>, vector<8x128xbf16>, vector<8x128xf32> -> vector<8x128xf32>
    %370 = tpu.concatenate %306, %327, %348, %369 in 1 : vector<8x128xf32>, vector<8x128xf32>, vector<8x128xf32>, vector<8x128xf32> -> vector<8x512xf32>
    %371 = vector.extract_strided_slice %269 {offsets = [8, 0], sizes = [8, 512], strides = [1, 1]} : vector<16x512xf32> to vector<8x512xf32>
    %372 = vector.extract_strided_slice %277 {offsets = [8, 0], sizes = [8, 512], strides = [1, 1]} : vector<16x512xf32> to vector<8x512xf32>
    %373 = vector.extract_strided_slice %278 {offsets = [8, 0], sizes = [8, 512], strides = [1, 1]} : vector<16x512xf32> to vector<8x512xf32>
    %374 = vector.extract_strided_slice %13 {offsets = [1, 0, 0], sizes = [1, 1, 8], strides = [1, 1, 1]} : vector<2x1x8xi1> to vector<1x1x8xi1>
    %375 = vector.shape_cast %374 : vector<1x1x8xi1> to vector<1x8xi1>
    %376 = vector.shape_cast %375 : vector<1x8xi1> to vector<1x8xi1>
    %377 = vector.broadcast %376 : vector<1x8xi1> to vector<8x8xi1>
    %378 = vector.extract_strided_slice %371 {offsets = [0, 0], sizes = [8, 128], strides = [1, 1]} : vector<8x512xf32> to vector<8x128xf32>
    %379 = arith.truncf %378 : vector<8x128xf32> to vector<8x128xbf16>
    %380 = vector.extract_strided_slice %372 {offsets = [0, 0], sizes = [8, 128], strides = [1, 1]} : vector<8x512xf32> to vector<8x128xf32>
    %381 = arith.truncf %380 : vector<8x128xf32> to vector<8x128xbf16>
    %382 = vector.extract_strided_slice %373 {offsets = [0, 0], sizes = [8, 128], strides = [1, 1]} : vector<8x512xf32> to vector<8x128xf32>
    %383 = arith.truncf %382 : vector<8x128xf32> to vector<8x128xbf16>
    %cst_119 = arith.constant dense<0.000000e+00> : vector<8x8xf32>
    %384 = tpu.matmul %379, %381, %cst_119 {dimension_numbers = #tpu.dot_dimension_numbers<[1], [1], [0], [0], [0, 0, 1, 0], [], []>} : vector<8x128xbf16>, vector<8x128xbf16>, vector<8x8xf32> -> vector<8x8xf32>
    %cst_120 = arith.constant -1.000000e+30 : f32
    %385 = vector.broadcast %cst_120 : f32 to vector<8x8xf32>
    %386 = arith.select %377, %385, %384 : vector<8x8xi1>, vector<8x8xf32>
    %cst_121 = arith.constant dense<0xFF800000> : vector<8xf32>
    %387 = vector.multi_reduction <maximumf>, %386, %cst_121 [1] : vector<8x8xf32> to vector<8xf32>
    %388 = vector.shape_cast %387 : vector<8xf32> to vector<8x1xf32>
    %389 = vector.broadcast %388 : vector<8x1xf32> to vector<8x8xf32>
    %390 = arith.subf %386, %389 : vector<8x8xf32>
    %391 = math.exp %390 : vector<8x8xf32>
    %cst_122 = arith.constant dense<0.000000e+00> : vector<8xf32>
    %392 = vector.multi_reduction <add>, %391, %cst_122 [1] : vector<8x8xf32> to vector<8xf32>
    %393 = vector.shape_cast %392 : vector<8xf32> to vector<8x1xf32>
    %394 = tpu.reciprocal %393 {approx = true} : vector<8x1xf32> -> vector<8x1xf32>
    %395 = vector.broadcast %394 : vector<8x1xf32> to vector<8x8xf32>
    %396 = arith.mulf %391, %395 : vector<8x8xf32>
    %397 = arith.truncf %396 : vector<8x8xf32> to vector<8x8xbf16>
    %cst_123 = arith.constant dense<0.000000e+00> : vector<8x128xf32>
    %398 = tpu.matmul %397, %383, %cst_123 {dimension_numbers = #tpu.dot_dimension_numbers<[1], [0], [0], [1], [0, 0, 1, 1], [], []>} : vector<8x8xbf16>, vector<8x128xbf16>, vector<8x128xf32> -> vector<8x128xf32>
    %399 = vector.extract_strided_slice %371 {offsets = [0, 128], sizes = [8, 128], strides = [1, 1]} : vector<8x512xf32> to vector<8x128xf32>
    %400 = arith.truncf %399 : vector<8x128xf32> to vector<8x128xbf16>
    %401 = vector.extract_strided_slice %372 {offsets = [0, 128], sizes = [8, 128], strides = [1, 1]} : vector<8x512xf32> to vector<8x128xf32>
    %402 = arith.truncf %401 : vector<8x128xf32> to vector<8x128xbf16>
    %403 = vector.extract_strided_slice %373 {offsets = [0, 128], sizes = [8, 128], strides = [1, 1]} : vector<8x512xf32> to vector<8x128xf32>
    %404 = arith.truncf %403 : vector<8x128xf32> to vector<8x128xbf16>
    %cst_124 = arith.constant dense<0.000000e+00> : vector<8x8xf32>
    %405 = tpu.matmul %400, %402, %cst_124 {dimension_numbers = #tpu.dot_dimension_numbers<[1], [1], [0], [0], [0, 0, 1, 0], [], []>} : vector<8x128xbf16>, vector<8x128xbf16>, vector<8x8xf32> -> vector<8x8xf32>
    %cst_125 = arith.constant -1.000000e+30 : f32
    %406 = vector.broadcast %cst_125 : f32 to vector<8x8xf32>
    %407 = arith.select %377, %406, %405 : vector<8x8xi1>, vector<8x8xf32>
    %cst_126 = arith.constant dense<0xFF800000> : vector<8xf32>
    %408 = vector.multi_reduction <maximumf>, %407, %cst_126 [1] : vector<8x8xf32> to vector<8xf32>
    %409 = vector.shape_cast %408 : vector<8xf32> to vector<8x1xf32>
    %410 = vector.broadcast %409 : vector<8x1xf32> to vector<8x8xf32>
    %411 = arith.subf %407, %410 : vector<8x8xf32>
    %412 = math.exp %411 : vector<8x8xf32>
    %cst_127 = arith.constant dense<0.000000e+00> : vector<8xf32>
    %413 = vector.multi_reduction <add>, %412, %cst_127 [1] : vector<8x8xf32> to vector<8xf32>
    %414 = vector.shape_cast %413 : vector<8xf32> to vector<8x1xf32>
    %415 = tpu.reciprocal %414 {approx = true} : vector<8x1xf32> -> vector<8x1xf32>
    %416 = vector.broadcast %415 : vector<8x1xf32> to vector<8x8xf32>
    %417 = arith.mulf %412, %416 : vector<8x8xf32>
    %418 = arith.truncf %417 : vector<8x8xf32> to vector<8x8xbf16>
    %cst_128 = arith.constant dense<0.000000e+00> : vector<8x128xf32>
    %419 = tpu.matmul %418, %404, %cst_128 {dimension_numbers = #tpu.dot_dimension_numbers<[1], [0], [0], [1], [0, 0, 1, 1], [], []>} : vector<8x8xbf16>, vector<8x128xbf16>, vector<8x128xf32> -> vector<8x128xf32>
    %420 = vector.extract_strided_slice %371 {offsets = [0, 256], sizes = [8, 128], strides = [1, 1]} : vector<8x512xf32> to vector<8x128xf32>
    %421 = arith.truncf %420 : vector<8x128xf32> to vector<8x128xbf16>
    %422 = vector.extract_strided_slice %372 {offsets = [0, 256], sizes = [8, 128], strides = [1, 1]} : vector<8x512xf32> to vector<8x128xf32>
    %423 = arith.truncf %422 : vector<8x128xf32> to vector<8x128xbf16>
    %424 = vector.extract_strided_slice %373 {offsets = [0, 256], sizes = [8, 128], strides = [1, 1]} : vector<8x512xf32> to vector<8x128xf32>
    %425 = arith.truncf %424 : vector<8x128xf32> to vector<8x128xbf16>
    %cst_129 = arith.constant dense<0.000000e+00> : vector<8x8xf32>
    %426 = tpu.matmul %421, %423, %cst_129 {dimension_numbers = #tpu.dot_dimension_numbers<[1], [1], [0], [0], [0, 0, 1, 0], [], []>} : vector<8x128xbf16>, vector<8x128xbf16>, vector<8x8xf32> -> vector<8x8xf32>
    %cst_130 = arith.constant -1.000000e+30 : f32
    %427 = vector.broadcast %cst_130 : f32 to vector<8x8xf32>
    %428 = arith.select %377, %427, %426 : vector<8x8xi1>, vector<8x8xf32>
    %cst_131 = arith.constant dense<0xFF800000> : vector<8xf32>
    %429 = vector.multi_reduction <maximumf>, %428, %cst_131 [1] : vector<8x8xf32> to vector<8xf32>
    %430 = vector.shape_cast %429 : vector<8xf32> to vector<8x1xf32>
    %431 = vector.broadcast %430 : vector<8x1xf32> to vector<8x8xf32>
    %432 = arith.subf %428, %431 : vector<8x8xf32>
    %433 = math.exp %432 : vector<8x8xf32>
    %cst_132 = arith.constant dense<0.000000e+00> : vector<8xf32>
    %434 = vector.multi_reduction <add>, %433, %cst_132 [1] : vector<8x8xf32> to vector<8xf32>
    %435 = vector.shape_cast %434 : vector<8xf32> to vector<8x1xf32>
    %436 = tpu.reciprocal %435 {approx = true} : vector<8x1xf32> -> vector<8x1xf32>
    %437 = vector.broadcast %436 : vector<8x1xf32> to vector<8x8xf32>
    %438 = arith.mulf %433, %437 : vector<8x8xf32>
    %439 = arith.truncf %438 : vector<8x8xf32> to vector<8x8xbf16>
    %cst_133 = arith.constant dense<0.000000e+00> : vector<8x128xf32>
    %440 = tpu.matmul %439, %425, %cst_133 {dimension_numbers = #tpu.dot_dimension_numbers<[1], [0], [0], [1], [0, 0, 1, 1], [], []>} : vector<8x8xbf16>, vector<8x128xbf16>, vector<8x128xf32> -> vector<8x128xf32>
    %441 = vector.extract_strided_slice %371 {offsets = [0, 384], sizes = [8, 128], strides = [1, 1]} : vector<8x512xf32> to vector<8x128xf32>
    %442 = arith.truncf %441 : vector<8x128xf32> to vector<8x128xbf16>
    %443 = vector.extract_strided_slice %372 {offsets = [0, 384], sizes = [8, 128], strides = [1, 1]} : vector<8x512xf32> to vector<8x128xf32>
    %444 = arith.truncf %443 : vector<8x128xf32> to vector<8x128xbf16>
    %445 = vector.extract_strided_slice %373 {offsets = [0, 384], sizes = [8, 128], strides = [1, 1]} : vector<8x512xf32> to vector<8x128xf32>
    %446 = arith.truncf %445 : vector<8x128xf32> to vector<8x128xbf16>
    %cst_134 = arith.constant dense<0.000000e+00> : vector<8x8xf32>
    %447 = tpu.matmul %442, %444, %cst_134 {dimension_numbers = #tpu.dot_dimension_numbers<[1], [1], [0], [0], [0, 0, 1, 0], [], []>} : vector<8x128xbf16>, vector<8x128xbf16>, vector<8x8xf32> -> vector<8x8xf32>
    %cst_135 = arith.constant -1.000000e+30 : f32
    %448 = vector.broadcast %cst_135 : f32 to vector<8x8xf32>
    %449 = arith.select %377, %448, %447 : vector<8x8xi1>, vector<8x8xf32>
    %cst_136 = arith.constant dense<0xFF800000> : vector<8xf32>
    %450 = vector.multi_reduction <maximumf>, %449, %cst_136 [1] : vector<8x8xf32> to vector<8xf32>
    %451 = vector.shape_cast %450 : vector<8xf32> to vector<8x1xf32>
    %452 = vector.broadcast %451 : vector<8x1xf32> to vector<8x8xf32>
    %453 = arith.subf %449, %452 : vector<8x8xf32>
    %454 = math.exp %453 : vector<8x8xf32>
    %cst_137 = arith.constant dense<0.000000e+00> : vector<8xf32>
    %455 = vector.multi_reduction <add>, %454, %cst_137 [1] : vector<8x8xf32> to vector<8xf32>
    %456 = vector.shape_cast %455 : vector<8xf32> to vector<8x1xf32>
    %457 = tpu.reciprocal %456 {approx = true} : vector<8x1xf32> -> vector<8x1xf32>
    %458 = vector.broadcast %457 : vector<8x1xf32> to vector<8x8xf32>
    %459 = arith.mulf %454, %458 : vector<8x8xf32>
    %460 = arith.truncf %459 : vector<8x8xf32> to vector<8x8xbf16>
    %cst_138 = arith.constant dense<0.000000e+00> : vector<8x128xf32>
    %461 = tpu.matmul %460, %446, %cst_138 {dimension_numbers = #tpu.dot_dimension_numbers<[1], [0], [0], [1], [0, 0, 1, 1], [], []>} : vector<8x8xbf16>, vector<8x128xbf16>, vector<8x128xf32> -> vector<8x128xf32>
    %462 = tpu.concatenate %398, %419, %440, %461 in 1 : vector<8x128xf32>, vector<8x128xf32>, vector<8x128xf32>, vector<8x128xf32> -> vector<8x512xf32>
    %463 = tpu.concatenate %370, %462 in 0 : vector<8x512xf32>, vector<8x512xf32> -> vector<16x512xf32>
    %464 = arith.truncf %463 : vector<16x512xf32> to vector<16x512xbf16>
    %c0_139 = arith.constant 0 : index
    %c0_140 = arith.constant 0 : index
    %c0_141 = arith.constant 0 : index
    %465 = vector.load %arg18[%c0_139, %c0_140, %c0_141] : memref<1x512x128xbf16, #tpu.memory_space<vmem>>, vector<1x512x128xbf16>
    %466 = vector.shape_cast %465 : vector<1x512x128xbf16> to vector<512x128xbf16>
    %cst_142 = arith.constant dense<0.000000e+00> : vector<16x128xf32>
    %467 = tpu.matmul %464, %466, %cst_142 {dimension_numbers = #tpu.dot_dimension_numbers<[1], [0], [0], [1], [0, 0, 1, 1], [], []>} : vector<16x512xbf16>, vector<512x128xbf16>, vector<16x128xf32> -> vector<16x128xf32>
    %c0_143 = arith.constant 0 : index
    %c0_144 = arith.constant 0 : index
    %c0_145 = arith.constant 0 : index
    %468 = vector.load %arg19[%c0_143, %c0_144, %c0_145] : memref<1x1x128xf32, #tpu.memory_space<vmem>>, vector<1x1x128xf32>
    %469 = vector.shape_cast %468 : vector<1x1x128xf32> to vector<1x128xf32>
    %470 = vector.broadcast %469 : vector<1x128xf32> to vector<16x128xf32>
    %471 = arith.addf %467, %470 : vector<16x128xf32>
    %472 = arith.addf %471, %261 : vector<16x128xf32>
    %cst_146 = arith.constant dense<0.000000e+00> : vector<16xf32>
    %473 = vector.multi_reduction <add>, %472, %cst_146 [1] : vector<16x128xf32> to vector<16xf32>
    %474 = vector.shape_cast %473 : vector<16xf32> to vector<16x1xf32>
    %cst_147 = arith.constant 3.125000e-02 : f32
    %475 = vector.broadcast %cst_147 : f32 to vector<16x1xf32>
    %476 = arith.mulf %474, %475 : vector<16x1xf32>
    %477 = vector.broadcast %476 : vector<16x1xf32> to vector<16x128xf32>
    %478 = arith.subf %472, %477 : vector<16x128xf32>
    %479 = vector.broadcast %18 : vector<1x128xf32> to vector<16x128xf32>
    %480 = arith.mulf %478, %479 : vector<16x128xf32>
    %481 = arith.mulf %480, %480 : vector<16x128xf32>
    %cst_148 = arith.constant dense<0.000000e+00> : vector<16xf32>
    %482 = vector.multi_reduction <add>, %481, %cst_148 [1] : vector<16x128xf32> to vector<16xf32>
    %483 = vector.shape_cast %482 : vector<16xf32> to vector<16x1xf32>
    %cst_149 = arith.constant 3.125000e-02 : f32
    %484 = vector.broadcast %cst_149 : f32 to vector<16x1xf32>
    %485 = arith.mulf %483, %484 : vector<16x1xf32>
    %cst_150 = arith.constant 9.99999974E-6 : f32
    %486 = vector.broadcast %cst_150 : f32 to vector<16x1xf32>
    %487 = arith.addf %485, %486 : vector<16x1xf32>
    %488 = math.rsqrt %487 : vector<16x1xf32>
    %489 = vector.broadcast %488 : vector<16x1xf32> to vector<16x128xf32>
    %490 = arith.mulf %480, %489 : vector<16x128xf32>
    %c0_151 = arith.constant 0 : index
    %c0_152 = arith.constant 0 : index
    %c0_153 = arith.constant 0 : index
    %491 = vector.load %arg20[%c0_151, %c0_152, %c0_153] : memref<1x1x128xf32, #tpu.memory_space<vmem>>, vector<1x1x128xf32>
    %492 = vector.shape_cast %491 : vector<1x1x128xf32> to vector<1x128xf32>
    %493 = vector.broadcast %492 : vector<1x128xf32> to vector<16x128xf32>
    %494 = arith.mulf %490, %493 : vector<16x128xf32>
    %c0_154 = arith.constant 0 : index
    %c0_155 = arith.constant 0 : index
    %c0_156 = arith.constant 0 : index
    %495 = vector.load %arg21[%c0_154, %c0_155, %c0_156] : memref<1x1x128xf32, #tpu.memory_space<vmem>>, vector<1x1x128xf32>
    %496 = vector.shape_cast %495 : vector<1x1x128xf32> to vector<1x128xf32>
    %497 = vector.broadcast %496 : vector<1x128xf32> to vector<16x128xf32>
    %498 = arith.addf %494, %497 : vector<16x128xf32>
    %499 = arith.truncf %498 : vector<16x128xf32> to vector<16x128xbf16>
    %c0_157 = arith.constant 0 : index
    %c0_158 = arith.constant 0 : index
    %c0_159 = arith.constant 0 : index
    %500 = vector.load %arg22[%c0_157, %c0_158, %c0_159] : memref<1x128x128xbf16, #tpu.memory_space<vmem>>, vector<1x128x128xbf16>
    %501 = vector.shape_cast %500 : vector<1x128x128xbf16> to vector<128x128xbf16>
    %cst_160 = arith.constant dense<0.000000e+00> : vector<16x128xf32>
    %502 = tpu.matmul %499, %501, %cst_160 {dimension_numbers = #tpu.dot_dimension_numbers<[1], [0], [0], [1], [0, 0, 1, 1], [], []>} : vector<16x128xbf16>, vector<128x128xbf16>, vector<16x128xf32> -> vector<16x128xf32>
    %c0_161 = arith.constant 0 : index
    %c0_162 = arith.constant 0 : index
    %c0_163 = arith.constant 0 : index
    %503 = vector.load %arg23[%c0_161, %c0_162, %c0_163] : memref<1x1x128xf32, #tpu.memory_space<vmem>>, vector<1x1x128xf32>
    %504 = vector.shape_cast %503 : vector<1x1x128xf32> to vector<1x128xf32>
    %505 = vector.broadcast %504 : vector<1x128xf32> to vector<16x128xf32>
    %506 = arith.addf %502, %505 : vector<16x128xf32>
    %cst_164 = arith.constant 0.000000e+00 : f32
    %507 = vector.broadcast %cst_164 : f32 to vector<16x128xf32>
    %508 = arith.maximumf %506, %507 : vector<16x128xf32>
    %509 = arith.truncf %508 : vector<16x128xf32> to vector<16x128xbf16>
    %c0_165 = arith.constant 0 : index
    %c0_166 = arith.constant 0 : index
    %c0_167 = arith.constant 0 : index
    %510 = vector.load %arg24[%c0_165, %c0_166, %c0_167] : memref<1x128x128xbf16, #tpu.memory_space<vmem>>, vector<1x128x128xbf16>
    %511 = vector.shape_cast %510 : vector<1x128x128xbf16> to vector<128x128xbf16>
    %cst_168 = arith.constant dense<0.000000e+00> : vector<16x128xf32>
    %512 = tpu.matmul %509, %511, %cst_168 {dimension_numbers = #tpu.dot_dimension_numbers<[1], [0], [0], [1], [0, 0, 1, 1], [], []>} : vector<16x128xbf16>, vector<128x128xbf16>, vector<16x128xf32> -> vector<16x128xf32>
    %c0_169 = arith.constant 0 : index
    %c0_170 = arith.constant 0 : index
    %c0_171 = arith.constant 0 : index
    %513 = vector.load %arg25[%c0_169, %c0_170, %c0_171] : memref<1x1x128xf32, #tpu.memory_space<vmem>>, vector<1x1x128xf32>
    %514 = vector.shape_cast %513 : vector<1x1x128xf32> to vector<1x128xf32>
    %515 = vector.broadcast %514 : vector<1x128xf32> to vector<16x128xf32>
    %516 = arith.addf %512, %515 : vector<16x128xf32>
    %517 = arith.addf %516, %498 : vector<16x128xf32>
    %cst_172 = arith.constant dense<0.000000e+00> : vector<16xf32>
    %518 = vector.multi_reduction <add>, %517, %cst_172 [1] : vector<16x128xf32> to vector<16xf32>
    %519 = vector.shape_cast %518 : vector<16xf32> to vector<16x1xf32>
    %cst_173 = arith.constant 3.125000e-02 : f32
    %520 = vector.broadcast %cst_173 : f32 to vector<16x1xf32>
    %521 = arith.mulf %519, %520 : vector<16x1xf32>
    %522 = vector.broadcast %521 : vector<16x1xf32> to vector<16x128xf32>
    %523 = arith.subf %517, %522 : vector<16x128xf32>
    %524 = vector.broadcast %18 : vector<1x128xf32> to vector<16x128xf32>
    %525 = arith.mulf %523, %524 : vector<16x128xf32>
    %526 = arith.mulf %525, %525 : vector<16x128xf32>
    %cst_174 = arith.constant dense<0.000000e+00> : vector<16xf32>
    %527 = vector.multi_reduction <add>, %526, %cst_174 [1] : vector<16x128xf32> to vector<16xf32>
    %528 = vector.shape_cast %527 : vector<16xf32> to vector<16x1xf32>
    %cst_175 = arith.constant 3.125000e-02 : f32
    %529 = vector.broadcast %cst_175 : f32 to vector<16x1xf32>
    %530 = arith.mulf %528, %529 : vector<16x1xf32>
    %cst_176 = arith.constant 9.99999974E-6 : f32
    %531 = vector.broadcast %cst_176 : f32 to vector<16x1xf32>
    %532 = arith.addf %530, %531 : vector<16x1xf32>
    %533 = math.rsqrt %532 : vector<16x1xf32>
    %534 = vector.broadcast %533 : vector<16x1xf32> to vector<16x128xf32>
    %535 = arith.mulf %525, %534 : vector<16x128xf32>
    %c0_177 = arith.constant 0 : index
    %c0_178 = arith.constant 0 : index
    %c0_179 = arith.constant 0 : index
    %536 = vector.load %arg26[%c0_177, %c0_178, %c0_179] : memref<1x1x128xf32, #tpu.memory_space<vmem>>, vector<1x1x128xf32>
    %537 = vector.shape_cast %536 : vector<1x1x128xf32> to vector<1x128xf32>
    %538 = vector.broadcast %537 : vector<1x128xf32> to vector<16x128xf32>
    %539 = arith.mulf %535, %538 : vector<16x128xf32>
    %c0_180 = arith.constant 0 : index
    %c0_181 = arith.constant 0 : index
    %c0_182 = arith.constant 0 : index
    %540 = vector.load %arg27[%c0_180, %c0_181, %c0_182] : memref<1x1x128xf32, #tpu.memory_space<vmem>>, vector<1x1x128xf32>
    %541 = vector.shape_cast %540 : vector<1x1x128xf32> to vector<1x128xf32>
    %542 = vector.broadcast %541 : vector<1x128xf32> to vector<16x128xf32>
    %543 = arith.addf %539, %542 : vector<16x128xf32>
    %544 = vector.shape_cast %543 : vector<16x128xf32> to vector<2x8x128xf32>
    %545 = arith.truncf %544 : vector<2x8x128xf32> to vector<2x8x128xbf16>
    %c0_183 = arith.constant 0 : index
    %c0_184 = arith.constant 0 : index
    %c0_185 = arith.constant 0 : index
    %546 = vector.load %arg28[%c0_183, %c0_184, %c0_185] : memref<2x8x128xbf16, #tpu.memory_space<vmem>>, vector<2x8x128xbf16>
    tpu.vector_store %arg28[%c0_183, %c0_184, %c0_185], %545 {strides = array<i32>} : memref<2x8x128xbf16, #tpu.memory_space<vmem>>, vector<2x8x128xbf16>,
    return
  }
  func.func @transform_0(%arg0: i32, %arg1: i32) -> (i32, i32, i32) {
    %c0_i32 = arith.constant 0 : i32
    %c0_i32_0 = arith.constant 0 : i32
    %c0_i32_1 = arith.constant 0 : i32
    return %arg0, %c0_i32, %c0_i32_0 : i32, i32, i32
  }
  func.func @transform_1(%arg0: i32, %arg1: i32) -> (i32, i32, i32) {
    %c0_i32 = arith.constant 0 : i32
    %c0_i32_0 = arith.constant 0 : i32
    %c0_i32_1 = arith.constant 0 : i32
    return %arg0, %c0_i32, %c0_i32_0 : i32, i32, i32
  }
  func.func @transform_2(%arg0: i32, %arg1: i32) -> (i32, i32, i32) {
    %c0_i32 = arith.constant 0 : i32
    %c0_i32_0 = arith.constant 0 : i32
    %c0_i32_1 = arith.constant 0 : i32
    return %arg0, %c0_i32, %c0_i32_0 : i32, i32, i32
  }
  func.func @transform_3(%arg0: i32, %arg1: i32) -> (i32, i32, i32) {
    %c0_i32 = arith.constant 0 : i32
    %c0_i32_0 = arith.constant 0 : i32
    %c0_i32_1 = arith.constant 0 : i32
    return %arg0, %c0_i32, %c0_i32_0 : i32, i32, i32
  }
  func.func @transform_4(%arg0: i32, %arg1: i32) -> (i32, i32, i32) {
    %c0_i32 = arith.constant 0 : i32
    %c0_i32_0 = arith.constant 0 : i32
    %c0_i32_1 = arith.constant 0 : i32
    return %arg1, %c0_i32, %c0_i32_0 : i32, i32, i32
  }
  func.func @transform_5(%arg0: i32, %arg1: i32) -> (i32, i32, i32) {
    %c0_i32 = arith.constant 0 : i32
    %c0_i32_0 = arith.constant 0 : i32
    %c0_i32_1 = arith.constant 0 : i32
    return %arg1, %c0_i32, %c0_i32_0 : i32, i32, i32
  }
  func.func @transform_6(%arg0: i32, %arg1: i32) -> (i32, i32, i32) {
    %c0_i32 = arith.constant 0 : i32
    %c0_i32_0 = arith.constant 0 : i32
    %c0_i32_1 = arith.constant 0 : i32
    return %arg1, %c0_i32, %c0_i32_0 : i32, i32, i32
  }
  func.func @transform_7(%arg0: i32, %arg1: i32) -> (i32, i32, i32) {
    %c0_i32 = arith.constant 0 : i32
    %c0_i32_0 = arith.constant 0 : i32
    %c0_i32_1 = arith.constant 0 : i32
    return %arg1, %c0_i32, %c0_i32_0 : i32, i32, i32
  }
  func.func @transform_8(%arg0: i32, %arg1: i32) -> (i32, i32, i32) {
    %c0_i32 = arith.constant 0 : i32
    %c0_i32_0 = arith.constant 0 : i32
    %c0_i32_1 = arith.constant 0 : i32
    return %arg1, %c0_i32, %c0_i32_0 : i32, i32, i32
  }
  func.func @transform_9(%arg0: i32, %arg1: i32) -> (i32, i32, i32) {
    %c0_i32 = arith.constant 0 : i32
    %c0_i32_0 = arith.constant 0 : i32
    %c0_i32_1 = arith.constant 0 : i32
    return %arg1, %c0_i32, %c0_i32_0 : i32, i32, i32
  }
  func.func @transform_10(%arg0: i32, %arg1: i32) -> (i32, i32, i32) {
    %c0_i32 = arith.constant 0 : i32
    %c0_i32_0 = arith.constant 0 : i32
    %c0_i32_1 = arith.constant 0 : i32
    return %arg1, %c0_i32, %c0_i32_0 : i32, i32, i32
  }
  func.func @transform_11(%arg0: i32, %arg1: i32) -> (i32, i32, i32) {
    %c0_i32 = arith.constant 0 : i32
    %c0_i32_0 = arith.constant 0 : i32
    %c0_i32_1 = arith.constant 0 : i32
    return %arg1, %c0_i32, %c0_i32_0 : i32, i32, i32
  }
  func.func @transform_12(%arg0: i32, %arg1: i32) -> (i32, i32, i32) {
    %c0_i32 = arith.constant 0 : i32
    %c0_i32_0 = arith.constant 0 : i32
    %c0_i32_1 = arith.constant 0 : i32
    return %arg1, %c0_i32, %c0_i32_0 : i32, i32, i32
  }
  func.func @transform_13(%arg0: i32, %arg1: i32) -> (i32, i32, i32) {
    %c0_i32 = arith.constant 0 : i32
    %c0_i32_0 = arith.constant 0 : i32
    %c0_i32_1 = arith.constant 0 : i32
    return %arg1, %c0_i32, %c0_i32_0 : i32, i32, i32
  }
  func.func @transform_14(%arg0: i32, %arg1: i32) -> (i32, i32, i32) {
    %c0_i32 = arith.constant 0 : i32
    %c0_i32_0 = arith.constant 0 : i32
    %c0_i32_1 = arith.constant 0 : i32
    return %arg1, %c0_i32, %c0_i32_0 : i32, i32, i32
  }
  func.func @transform_15(%arg0: i32, %arg1: i32) -> (i32, i32, i32) {
    %c0_i32 = arith.constant 0 : i32
    %c0_i32_0 = arith.constant 0 : i32
    %c0_i32_1 = arith.constant 0 : i32
    return %arg1, %c0_i32, %c0_i32_0 : i32, i32, i32
  }
  func.func @transform_16(%arg0: i32, %arg1: i32) -> (i32, i32, i32) {
    %c0_i32 = arith.constant 0 : i32
    %c0_i32_0 = arith.constant 0 : i32
    %c0_i32_1 = arith.constant 0 : i32
    return %arg1, %c0_i32, %c0_i32_0 : i32, i32, i32
  }
  func.func @transform_17(%arg0: i32, %arg1: i32) -> (i32, i32, i32) {
    %c0_i32 = arith.constant 0 : i32
    %c0_i32_0 = arith.constant 0 : i32
    %c0_i32_1 = arith.constant 0 : i32
    return %arg1, %c0_i32, %c0_i32_0 : i32, i32, i32
  }
  func.func @transform_18(%arg0: i32, %arg1: i32) -> (i32, i32, i32) {
    %c0_i32 = arith.constant 0 : i32
    %c0_i32_0 = arith.constant 0 : i32
    %c0_i32_1 = arith.constant 0 : i32
    return %arg1, %c0_i32, %c0_i32_0 : i32, i32, i32
  }
  func.func @transform_19(%arg0: i32, %arg1: i32) -> (i32, i32, i32) {
    %c0_i32 = arith.constant 0 : i32
    %c0_i32_0 = arith.constant 0 : i32
    %c0_i32_1 = arith.constant 0 : i32
    return %arg1, %c0_i32, %c0_i32_0 : i32, i32, i32
  }
  func.func @transform_20(%arg0: i32, %arg1: i32) -> (i32, i32, i32) {
    %c0_i32 = arith.constant 0 : i32
    %c0_i32_0 = arith.constant 0 : i32
    %c0_i32_1 = arith.constant 0 : i32
    return %arg1, %c0_i32, %c0_i32_0 : i32, i32, i32
  }
  func.func @transform_21(%arg0: i32, %arg1: i32) -> (i32, i32, i32) {
    %c0_i32 = arith.constant 0 : i32
    %c0_i32_0 = arith.constant 0 : i32
    %c0_i32_1 = arith.constant 0 : i32
    return %arg1, %c0_i32, %c0_i32_0 : i32, i32, i32
  }
  func.func @transform_22(%arg0: i32, %arg1: i32) -> (i32, i32, i32) {
    %c0_i32 = arith.constant 0 : i32
    %c0_i32_0 = arith.constant 0 : i32
    %c0_i32_1 = arith.constant 0 : i32
    return %arg1, %c0_i32, %c0_i32_0 : i32, i32, i32
  }
  func.func @transform_23(%arg0: i32, %arg1: i32) -> (i32, i32, i32) {
    %c0_i32 = arith.constant 0 : i32
    %c0_i32_0 = arith.constant 0 : i32
    %c0_i32_1 = arith.constant 0 : i32
    return %arg1, %c0_i32, %c0_i32_0 : i32, i32, i32
  }
  func.func @transform_24(%arg0: i32, %arg1: i32) -> (i32, i32, i32) {
    %c0_i32 = arith.constant 0 : i32
    %c0_i32_0 = arith.constant 0 : i32
    %c0_i32_1 = arith.constant 0 : i32
    return %arg1, %c0_i32, %c0_i32_0 : i32, i32, i32
  }
  func.func @transform_25(%arg0: i32, %arg1: i32) -> (i32, i32, i32) {
    %c0_i32 = arith.constant 0 : i32
    %c0_i32_0 = arith.constant 0 : i32
    %c0_i32_1 = arith.constant 0 : i32
    return %arg1, %c0_i32, %c0_i32_0 : i32, i32, i32
  }
  func.func @transform_26(%arg0: i32, %arg1: i32) -> (i32, i32, i32) {
    %c0_i32 = arith.constant 0 : i32
    %c0_i32_0 = arith.constant 0 : i32
    %c0_i32_1 = arith.constant 0 : i32
    return %arg0, %c0_i32, %c0_i32_0 : i32, i32, i32
  }
}

</mosaic_0001>

<llo_original>
// kernel: tpu_custom_call.1
$region0: #{tpu_custom_call.1}
  #allocation0 [shape = 'u32[]', space=smem, size = 0x4, offset = 0x4, fixed_abs, tag = 'smem constant byte address 0x4 - core index']
  #allocation1 [shape = 'u32[72,128]{1,0:T(1,128)}', space=vmem, size = 0x9000, scoped, tag = 'internal scratch']
  %s0 = inlined_call_operand.hbm [shape: bf16[2,8,128], index: 0, kind: input, shape index: {}]
  %s1 = inlined_call_operand.hbm [shape: bf16[2,8,128], index: 1, kind: input, shape index: {}]
  %s2 = inlined_call_operand.hbm [shape: s32[2,1,8], index: 2, kind: input, shape index: {}]
  %s3 = inlined_call_operand.vmem [shape: s32[2,1,8], index: 3, kind: input, shape index: {}]
  %s4 = inlined_call_operand.hbm [shape: bf16[2,128,512], index: 4, kind: input, shape index: {}]
  %s5 = inlined_call_operand.hbm [shape: f32[2,1,512], index: 5, kind: input, shape index: {}]
  %s6 = inlined_call_operand.hbm [shape: bf16[2,128,1024], index: 6, kind: input, shape index: {}]
  %s7 = inlined_call_operand.hbm [shape: f32[2,1,1024], index: 7, kind: input, shape index: {}]
  %s8 = inlined_call_operand.hbm [shape: bf16[2,512,128], index: 8, kind: input, shape index: {}]
  %s9 = inlined_call_operand.vmem [shape: f32[2,1,128], index: 9, kind: input, shape index: {}]
  %s10 = inlined_call_operand.hbm [shape: f32[2,1,128], index: 10, kind: input, shape index: {}]
  %s11 = inlined_call_operand.hbm [shape: f32[2,1,128], index: 11, kind: input, shape index: {}]
  %s12 = inlined_call_operand.hbm [shape: bf16[2,128,512], index: 12, kind: input, shape index: {}]
  %s13 = inlined_call_operand.vmem [shape: f32[2,1,512], index: 13, kind: input, shape index: {}]
  %s14 = inlined_call_operand.hbm [shape: bf16[2,128,1024], index: 14, kind: input, shape index: {}]
  %s15 = inlined_call_operand.hbm [shape: f32[2,1,1024], index: 15, kind: input, shape index: {}]
  %s16 = inlined_call_operand.hbm [shape: bf16[2,512,128], index: 16, kind: input, shape index: {}]
  %s17 = inlined_call_operand.vmem [shape: f32[2,1,128], index: 17, kind: input, shape index: {}]
  %s18 = inlined_call_operand.vmem [shape: f32[2,1,128], index: 18, kind: input, shape index: {}]
  %s19 = inlined_call_operand.vmem [shape: f32[2,1,128], index: 19, kind: input, shape index: {}]
  %s20 = inlined_call_operand.hbm [shape: bf16[2,128,128], index: 20, kind: input, shape index: {}]
  %s21 = inlined_call_operand.vmem [shape: f32[2,1,128], index: 21, kind: input, shape index: {}]
  %s22 = inlined_call_operand.hbm [shape: bf16[2,128,128], index: 22, kind: input, shape index: {}]
  %s23 = inlined_call_operand.vmem [shape: f32[2,1,128], index: 23, kind: input, shape index: {}]
  %s24 = inlined_call_operand.hbm [shape: f32[2,1,128], index: 24, kind: input, shape index: {}]
  %s25 = inlined_call_operand.vmem [shape: f32[2,1,128], index: 25, kind: input, shape index: {}]
  %s26 = inlined_call_operand.hbm [shape: bf16[2,8,128], index: 26, kind: output, shape index: {}]
  %s27 = sld [smem:[#allocation0]]
  $region209: #{tpu_custom_call.1} parent=0
    _
  %s29 = ssub.s32 1, %s27
  %s30 = scalar_select 0, %s29, %s27
  $region1: #{tpu_custom_call.1} parent=0
    #allocation2 [shape = 'u8[4096]{0}', space=vmem, size = 0x1000, scoped, tag = 'input window, operand 0, single buffered']
    #allocation3 [shape = 's32[2]{0}', space=sflag, size = 0x8, scoped, tag = 'scoped memory for tpu_custom_call.1']
    #allocation4 [shape = 's32[2]{0}', space=sflag, size = 0x8, scoped, tag = 'scoped memory for tpu_custom_call.1']
    #allocation5 [shape = 'u8[4096]{0}', space=vmem, size = 0x1000, scoped, tag = 'input window, operand 1, single buffered']
    #allocation6 [shape = 's32[1]{0}', space=sflag, size = 0x4, scoped, tag = 'scoped memory for tpu_custom_call.1']
    #allocation7 [shape = 'u8[1024]{0}', space=vmem, size = 0x400, scoped, tag = 'input window, operand 2, single buffered']
    #allocation8 [shape = 'u8[262144]{0}', space=vmem, size = 0x40000, scoped, tag = 'input window, operand 4']
    #allocation9 [shape = 's32[2]{0}', space=sflag, size = 0x8, scoped, tag = 'scoped memory for tpu_custom_call.1']
    #allocation10 [shape = 'u8[4096]{0}', space=vmem, size = 0x1000, scoped, tag = 'input window, operand 5']
    #allocation11 [shape = 'u8[524288]{0}', space=vmem, size = 0x80000, scoped, tag = 'input window, operand 6']
    #allocation12 [shape = 's32[2]{0}', space=sflag, size = 0x8, scoped, tag = 'scoped memory for tpu_custom_call.1']
    #allocation13 [shape = 'u8[8192]{0}', space=vmem, size = 0x2000, scoped, tag = 'input window, operand 7']
    #allocation14 [shape = 'u8[262144]{0}', space=vmem, size = 0x40000, scoped, tag = 'input window, operand 8']
    #allocation15 [shape = 's32[2]{0}', space=sflag, size = 0x8, scoped, tag = 'scoped memory for tpu_custom_call.1']
    #allocation16 [shape = 'u8[1024]{0}', space=vmem, size = 0x400, scoped, tag = 'input window, operand 10']
    #allocation17 [shape = 'u8[1024]{0}', space=vmem, size = 0x400, scoped, tag = 'input window, operand 11']
    #allocation18 [shape = 's32[2]{0}', space=sflag, size = 0x8, scoped, tag = 'scoped memory for tpu_custom_call.1']
    #allocation19 [shape = 'u8[262144]{0}', space=vmem, size = 0x40000, scoped, tag = 'input window, operand 12']
    #allocation20 [shape = 'u8[524288]{0}', space=vmem, size = 0x80000, scoped, tag = 'input window, operand 14']
    #allocation21 [shape = 's32[2]{0}', space=sflag, size = 0x8, scoped, tag = 'scoped memory for tpu_custom_call.1']
    #allocation22 [shape = 'u8[8192]{0}', space=vmem, size = 0x2000, scoped, tag = 'input window, operand 15']
    #allocation23 [shape = 'u8[262144]{0}', space=vmem, size = 0x40000, scoped, tag = 'input window, operand 16']
    #allocation24 [shape = 's32[2]{0}', space=sflag, size = 0x8, scoped, tag = 'scoped memory for tpu_custom_call.1']
    #allocation25 [shape = 'u8[65536]{0}', space=vmem, size = 0x10000, scoped, tag = 'input window, operand 20']
    #allocation26 [shape = 'u8[65536]{0}', space=vmem, size = 0x10000, scoped, tag = 'input window, operand 22']
    #allocation27 [shape = 's32[2]{0}', space=sflag, size = 0x8, scoped, tag = 'scoped memory for tpu_custom_call.1']
    #allocation28 [shape = 'u8[1024]{0}', space=vmem, size = 0x400, scoped, tag = 'input window, operand 24']
    #allocation29 [shape = 'u8[4096]{0}', space=vmem, size = 0x1000, scoped, tag = 'output window, operand 0, single buffered']
    %31 = vsyncpa [#allocation3], 0
    %32 = vsyncpa [#allocation6], 0
    %33 = vsyncpa [#allocation9], 0
    %s34 = scalar_lea.sflag [#allocation9], 1
    %35 = vsyncpa %s34, 0
    %36 = vsyncpa [#allocation12], 0
    %s37 = scalar_lea.sflag [#allocation12], 1
    %38 = vsyncpa %s37, 0
    %39 = vsyncpa [#allocation15], 0
    %s40 = scalar_lea.sflag [#allocation15], 1
    %41 = vsyncpa %s40, 0
    %42 = vsyncpa [#allocation18], 0
    %s43 = scalar_lea.sflag [#allocation18], 1
    %44 = vsyncpa %s43, 0
    %45 = vsyncpa [#allocation21], 0
    %s46 = scalar_lea.sflag [#allocation21], 1
    %47 = vsyncpa %s46, 0
    %48 = vsyncpa [#allocation24], 0
    %s49 = scalar_lea.sflag [#allocation24], 1
    %50 = vsyncpa %s49, 0
    %51 = vsyncpa [#allocation27], 0
    %s52 = scalar_lea.sflag [#allocation27], 1
    %53 = vsyncpa %s52, 0
    %54 = vsyncpa [#allocation4], 0
    loop: start=0, step=1, limit=4
    $region2: #{tpu_custom_call.1} parent=1 // loop_pre_header
      _
    $region3: #{tpu_custom_call.1} parent=1 // loop_header
      %s56 = sphi 0, %s60
      %p57 = scmp.ge.s32.totalorder %s56, 4
      %s63 = sphi 0, %s75
      %s64 = sphi 0, %s71
      %s65 = sphi 0, %s63
      %s66 = sphi 0, %s64
      %s67 = sphi 0, %s65
      %s68 = sphi 0, %s66
      %s78 = sphi 0, %s80
      %s81 = sphi 0, %s78
      %s82 = sphi 0, %s81
      %s98 = sphi 0, %s82
      %s104 = sphi 0, %s106
      %s107 = sphi 0, %s104
      %s108 = sphi 0, %s107
      %s124 = sphi 0, %s108
      %s130 = sphi 0, %s132
      %s133 = sphi 0, %s130
      %s134 = sphi 0, %s133
      %s150 = sphi 0, %s134
      %s156 = sphi 0, %s158
      %s159 = sphi 0, %s156
      %s160 = sphi 0, %s159
      %s176 = sphi 0, %s160
      %s182 = sphi 0, %s184
      %s185 = sphi 0, %s182
      %s186 = sphi 0, %s185
      %s202 = sphi 0, %s186
      %s208 = sphi 0, %s210
      %s211 = sphi 0, %s208
      %s212 = sphi 0, %s211
      %s228 = sphi 0, %s212
      %s234 = sphi 0, %s236
      %s237 = sphi 0, %s234
      %s238 = sphi 0, %s237
      %s254 = sphi 0, %s238
      %s260 = sphi 0, %s262
      %s263 = sphi 0, %s260
      %s264 = sphi 0, %s263
      %s280 = sphi 0, %s264
      %s286 = sphi 0, %s288
      %s289 = sphi 0, %s286
      %s290 = sphi 0, %s289
      %s306 = sphi 0, %s290
      %s312 = sphi 0, %s314
      %s315 = sphi 0, %s312
      %s316 = sphi 0, %s315
      %s332 = sphi 0, %s316
      %s338 = sphi 0, %s340
      %s341 = sphi 0, %s338
      %s342 = sphi 0, %s341
      %s358 = sphi 0, %s342
      %s364 = sphi 0, %s366
      %s367 = sphi 0, %s364
      %s368 = sphi 0, %s367
      %s384 = sphi 0, %s368
      %s390 = sphi 0, %s392
      %s393 = sphi 0, %s390
      %s394 = sphi 0, %s393
      %s410 = sphi 0, %s394
      %s416 = sphi 0, %s418
      %s419 = sphi 0, %s416
      %s420 = sphi 0, %s419
      %s436 = sphi 0, %s420
      %s442 = sphi 0, %s444
      %s445 = sphi 0, %s442
      %s446 = sphi 0, %s445
      %s462 = sphi 0, %s446
      %s468 = sphi 0, %s470
      %s471 = sphi 0, %s468
      %s472 = sphi 0, %s471
      %s488 = sphi 0, %s472
      %s494 = sphi 0, %s496
      %s497 = sphi 0, %s494
      %s498 = sphi 0, %s497
      %s514 = sphi 0, %s498
      %s520 = sphi 0, %s522
      %s523 = sphi 0, %s520
      %s524 = sphi 0, %s523
      %s540 = sphi 0, %s524
      %s546 = sphi 0, %s548
      %s549 = sphi 0, %s546
      %s550 = sphi 0, %s549
      %s566 = sphi 0, %s550
      %s572 = sphi 0, %s574
      %s575 = sphi 0, %s572
      %s576 = sphi 0, %s575
      %s592 = sphi 0, %s576
      %s598 = sphi 0, %s600
      %s601 = sphi 0, %s598
      %s602 = sphi 0, %s601
      %s618 = sphi 0, %s602
      %s624 = sphi 0, %s626
      %s627 = sphi 0, %s624
      %s628 = sphi 0, %s627
      %s644 = sphi 0, %s628
      %s650 = sphi 0, %s652
      %s653 = sphi 0, %s650
      %s654 = sphi 0, %s653
      %s670 = sphi 0, %s654
      %s676 = sphi 0, %s678
      %s679 = sphi 0, %s676
      %s680 = sphi 0, %s679
      %s696 = sphi 0, %s680
      %s702 = sphi 0, %s704
      %s705 = sphi 0, %s702
      %s706 = sphi 0, %s705
      %s722 = sphi 0, %s706
      %s728 = sphi 0, %s730
      %s731 = sphi 0, %s728
      %s732 = sphi 0, %s731
      %s748 = sphi 0, %s732
      %s754 = sphi 0, %s756
      %s757 = sphi 0, %s754
      %s758 = sphi 0, %s757
      %s774 = sphi 0, %s758
    $region4: #{tpu_custom_call.1} parent=1 // loop_header_branch
      %59 = sbr.rel (%p57) target = $region8
    $region5: #{tpu_custom_call.1} parent=1 // loop_body
      %s61 = ssub.s32 %s56, 1
      %s62 = ssub.s32 %s56, 2
      %s69 = sadd.s32 1, %s64
      %p70 = scmp.ge.s32.totalorder %s69, 2
      %s71 = scalar_select %p70, 0, %s69
      %s72 = sadd.s32 1, %s63
      %s73 = scalar_select %p70, %s72, %s63
      %p74 = scmp.ge.s32.totalorder %s73, 1
      %s75 = scalar_select %p74, 0, %s73
      %s76 = ssub.s32 %s63, %s75
      %p77 = scmp.eq.s32.totalorder %s76, 0
      %s79 = sadd.s32 %s78, 1
      %s80 = scalar_select %p77, %s78, %s79
      %p83 = pneg %p77
      %p84 = scmp.eq.s32.totalorder %s56, 1
      %p85 = por %p83, %p84
      %p86 = scmp.ne.s32.totalorder %s78, %s81
      %p87 = scmp.eq.s32.totalorder %s56, 0
      %p88 = por %p86, %p87
      %p89 = scmp.ne.s32.totalorder %s78, %s81
      %p90 = scmp.eq.s32.totalorder %s61, 1
      %p91 = por %p89, %p90
      %p92 = scmp.ne.s32.totalorder %s81, %s82
      %p93 = scmp.eq.s32.totalorder %s61, 0
      %p94 = por %p92, %p93
      %p95 = scmp.ne.s32.totalorder %s81, %s82
      %p96 = scmp.eq.s32.totalorder %s62, 1
      %p97 = por %p95, %p96
      %p99 = scmp.ne.s32.totalorder %s82, %s98
      %p100 = scmp.eq.s32.totalorder %s62, 0
      %p101 = por %p99, %p100
      %s102 = ssub.s32 %s63, %s75
      %p103 = scmp.eq.s32.totalorder %s102, 0
      %s105 = sadd.s32 %s104, 1
      %s106 = scalar_select %p103, %s104, %s105
      %p109 = pneg %p103
      %p110 = scmp.eq.s32.totalorder %s56, 1
      %p111 = por %p109, %p110
      %p112 = scmp.ne.s32.totalorder %s104, %s107
      %p113 = scmp.eq.s32.totalorder %s56, 0
      %p114 = por %p112, %p113
      %p115 = scmp.ne.s32.totalorder %s104, %s107
      %p116 = scmp.eq.s32.totalorder %s61, 1
      %p117 = por %p115, %p116
      %p118 = scmp.ne.s32.totalorder %s107, %s108
      %p119 = scmp.eq.s32.totalorder %s61, 0
      %p120 = por %p118, %p119
      %p121 = scmp.ne.s32.totalorder %s107, %s108
      %p122 = scmp.eq.s32.totalorder %s62, 1
      %p123 = por %p121, %p122
      %p125 = scmp.ne.s32.totalorder %s108, %s124
      %p126 = scmp.eq.s32.totalorder %s62, 0
      %p127 = por %p125, %p126
      %s128 = ssub.s32 %s63, %s75
      %p129 = scmp.eq.s32.totalorder %s128, 0
      %s131 = sadd.s32 %s130, 1
      %s132 = scalar_select %p129, %s130, %s131
      %p135 = pneg %p129
      %p136 = scmp.eq.s32.totalorder %s56, 1
      %p137 = por %p135, %p136
      %p138 = scmp.ne.s32.totalorder %s130, %s133
      %p139 = scmp.eq.s32.totalorder %s56, 0
      %p140 = por %p138, %p139
      %p141 = scmp.ne.s32.totalorder %s130, %s133
      %p142 = scmp.eq.s32.totalorder %s61, 1
      %p143 = por %p141, %p142
      %p144 = scmp.ne.s32.totalorder %s133, %s134
      %p145 = scmp.eq.s32.totalorder %s61, 0
      %p146 = por %p144, %p145
      %p147 = scmp.ne.s32.totalorder %s133, %s134
      %p148 = scmp.eq.s32.totalorder %s62, 1
      %p149 = por %p147, %p148
      %p151 = scmp.ne.s32.totalorder %s134, %s150
      %p152 = scmp.eq.s32.totalorder %s62, 0
      %p153 = por %p151, %p152
      %s154 = ssub.s32 %s63, %s75
      %p155 = scmp.eq.s32.totalorder %s154, 0
      %s157 = sadd.s32 %s156, 1
      %s158 = scalar_select %p155, %s156, %s157
      %p161 = pneg %p155
      %p162 = scmp.eq.s32.totalorder %s56, 1
      %p163 = por %p161, %p162
      %p164 = scmp.ne.s32.totalorder %s156, %s159
      %p165 = scmp.eq.s32.totalorder %s56, 0
      %p166 = por %p164, %p165
      %p167 = scmp.ne.s32.totalorder %s156, %s159
      %p168 = scmp.eq.s32.totalorder %s61, 1
      %p169 = por %p167, %p168
      %p170 = scmp.ne.s32.totalorder %s159, %s160
      %p171 = scmp.eq.s32.totalorder %s61, 0
      %p172 = por %p170, %p171
      %p173 = scmp.ne.s32.totalorder %s159, %s160
      %p174 = scmp.eq.s32.totalorder %s62, 1
      %p175 = por %p173, %p174
      %p177 = scmp.ne.s32.totalorder %s160, %s176
      %p178 = scmp.eq.s32.totalorder %s62, 0
      %p179 = por %p177, %p178
      %s180 = ssub.s32 %s64, %s71
      %p181 = scmp.eq.s32.totalorder %s180, 0
      %s183 = sadd.s32 %s182, 1
      %s184 = scalar_select %p181, %s182, %s183
      %p187 = pneg %p181
      %p188 = scmp.eq.s32.totalorder %s56, 1
      %p189 = por %p187, %p188
      %p190 = scmp.ne.s32.totalorder %s182, %s185
      %p191 = scmp.eq.s32.totalorder %s56, 0
      %p192 = por %p190, %p191
      %p193 = scmp.ne.s32.totalorder %s182, %s185
      %p194 = scmp.eq.s32.totalorder %s61, 1
      %p195 = por %p193, %p194
      %p196 = scmp.ne.s32.totalorder %s185, %s186
      %p197 = scmp.eq.s32.totalorder %s61, 0
      %p198 = por %p196, %p197
      %p199 = scmp.ne.s32.totalorder %s185, %s186
      %p200 = scmp.eq.s32.totalorder %s62, 1
      %p201 = por %p199, %p200
      %p203 = scmp.ne.s32.totalorder %s186, %s202
      %p204 = scmp.eq.s32.totalorder %s62, 0
      %p205 = por %p203, %p204
      %s206 = ssub.s32 %s64, %s71
      %p207 = scmp.eq.s32.totalorder %s206, 0
      %s209 = sadd.s32 %s208, 1
      %s210 = scalar_select %p207, %s208, %s209
      %p213 = pneg %p207
      %p214 = scmp.eq.s32.totalorder %s56, 1
      %p215 = por %p213, %p214
      %p216 = scmp.ne.s32.totalorder %s208, %s211
      %p217 = scmp.eq.s32.totalorder %s56, 0
      %p218 = por %p216, %p217
      %p219 = scmp.ne.s32.totalorder %s208, %s211
      %p220 = scmp.eq.s32.totalorder %s61, 1
      %p221 = por %p219, %p220
      %p222 = scmp.ne.s32.totalorder %s211, %s212
      %p223 = scmp.eq.s32.totalorder %s61, 0
      %p224 = por %p222, %p223
      %p225 = scmp.ne.s32.totalorder %s211, %s212
      %p226 = scmp.eq.s32.totalorder %s62, 1
      %p227 = por %p225, %p226
      %p229 = scmp.ne.s32.totalorder %s212, %s228
      %p230 = scmp.eq.s32.totalorder %s62, 0
      %p231 = por %p229, %p230
      %s232 = ssub.s32 %s64, %s71
      %p233 = scmp.eq.s32.totalorder %s232, 0
      %s235 = sadd.s32 %s234, 1
      %s236 = scalar_select %p233, %s234, %s235
      %p239 = pneg %p233
      %p240 = scmp.eq.s32.totalorder %s56, 1
      %p241 = por %p239, %p240
      %p242 = scmp.ne.s32.totalorder %s234, %s237
      %p243 = scmp.eq.s32.totalorder %s56, 0
      %p244 = por %p242, %p243
      %p245 = scmp.ne.s32.totalorder %s234, %s237
      %p246 = scmp.eq.s32.totalorder %s61, 1
      %p247 = por %p245, %p246
      %p248 = scmp.ne.s32.totalorder %s237, %s238
      %p249 = scmp.eq.s32.totalorder %s61, 0
      %p250 = por %p248, %p249
      %p251 = scmp.ne.s32.totalorder %s237, %s238
      %p252 = scmp.eq.s32.totalorder %s62, 1
      %p253 = por %p251, %p252
      %p255 = scmp.ne.s32.totalorder %s238, %s254
      %p256 = scmp.eq.s32.totalorder %s62, 0
      %p257 = por %p255, %p256
      %s258 = ssub.s32 %s64, %s71
      %p259 = scmp.eq.s32.totalorder %s258, 0
      %s261 = sadd.s32 %s260, 1
      %s262 = scalar_select %p259, %s260, %s261
      %p265 = pneg %p259
      %p266 = scmp.eq.s32.totalorder %s56, 1
      %p267 = por %p265, %p266
      %p268 = scmp.ne.s32.totalorder %s260, %s263
      %p269 = scmp.eq.s32.totalorder %s56, 0
      %p270 = por %p268, %p269
      %p271 = scmp.ne.s32.totalorder %s260, %s263
      %p272 = scmp.eq.s32.totalorder %s61, 1
      %p273 = por %p271, %p272
      %p274 = scmp.ne.s32.totalorder %s263, %s264
      %p275 = scmp.eq.s32.totalorder %s61, 0
      %p276 = por %p274, %p275
      %p277 = scmp.ne.s32.totalorder %s263, %s264
      %p278 = scmp.eq.s32.totalorder %s62, 1
      %p279 = por %p277, %p278
      %p281 = scmp.ne.s32.totalorder %s264, %s280
      %p282 = scmp.eq.s32.totalorder %s62, 0
      %p283 = por %p281, %p282
      %s284 = ssub.s32 %s64, %s71
      %p285 = scmp.eq.s32.totalorder %s284, 0
      %s287 = sadd.s32 %s286, 1
      %s288 = scalar_select %p285, %s286, %s287
      %p291 = pneg %p285
      %p292 = scmp.eq.s32.totalorder %s56, 1
      %p293 = por %p291, %p292
      %p294 = scmp.ne.s32.totalorder %s286, %s289
      %p295 = scmp.eq.s32.totalorder %s56, 0
      %p296 = por %p294, %p295
      %p297 = scmp.ne.s32.totalorder %s286, %s289
      %p298 = scmp.eq.s32.totalorder %s61, 1
      %p299 = por %p297, %p298
      %p300 = scmp.ne.s32.totalorder %s289, %s290
      %p301 = scmp.eq.s32.totalorder %s61, 0
      %p302 = por %p300, %p301
      %p303 = scmp.ne.s32.totalorder %s289, %s290
      %p304 = scmp.eq.s32.totalorder %s62, 1
      %p305 = por %p303, %p304
      %p307 = scmp.ne.s32.totalorder %s290, %s306
      %p308 = scmp.eq.s32.totalorder %s62, 0
      %p309 = por %p307, %p308
      %s310 = ssub.s32 %s64, %s71
      %p311 = scmp.eq.s32.totalorder %s310, 0
      %s313 = sadd.s32 %s312, 1
      %s314 = scalar_select %p311, %s312, %s313
      %p317 = pneg %p311
      %p318 = scmp.eq.s32.totalorder %s56, 1
      %p319 = por %p317, %p318
      %p320 = scmp.ne.s32.totalorder %s312, %s315
      %p321 = scmp.eq.s32.totalorder %s56, 0
      %p322 = por %p320, %p321
      %p323 = scmp.ne.s32.totalorder %s312, %s315
      %p324 = scmp.eq.s32.totalorder %s61, 1
      %p325 = por %p323, %p324
      %p326 = scmp.ne.s32.totalorder %s315, %s316
      %p327 = scmp.eq.s32.totalorder %s61, 0
      %p328 = por %p326, %p327
      %p329 = scmp.ne.s32.totalorder %s315, %s316
      %p330 = scmp.eq.s32.totalorder %s62, 1
      %p331 = por %p329, %p330
      %p333 = scmp.ne.s32.totalorder %s316, %s332
      %p334 = scmp.eq.s32.totalorder %s62, 0
      %p335 = por %p333, %p334
      %s336 = ssub.s32 %s64, %s71
      %p337 = scmp.eq.s32.totalorder %s336, 0
      %s339 = sadd.s32 %s338, 1
      %s340 = scalar_select %p337, %s338, %s339
      %p343 = pneg %p337
      %p344 = scmp.eq.s32.totalorder %s56, 1
      %p345 = por %p343, %p344
      %p346 = scmp.ne.s32.totalorder %s338, %s341
      %p347 = scmp.eq.s32.totalorder %s56, 0
      %p348 = por %p346, %p347
      %p349 = scmp.ne.s32.totalorder %s338, %s341
      %p350 = scmp.eq.s32.totalorder %s61, 1
      %p351 = por %p349, %p350
      %p352 = scmp.ne.s32.totalorder %s341, %s342
      %p353 = scmp.eq.s32.totalorder %s61, 0
      %p354 = por %p352, %p353
      %p355 = scmp.ne.s32.totalorder %s341, %s342
      %p356 = scmp.eq.s32.totalorder %s62, 1
      %p357 = por %p355, %p356
      %p359 = scmp.ne.s32.totalorder %s342, %s358
      %p360 = scmp.eq.s32.totalorder %s62, 0
      %p361 = por %p359, %p360
      %s362 = ssub.s32 %s64, %s71
      %p363 = scmp.eq.s32.totalorder %s362, 0
      %s365 = sadd.s32 %s364, 1
      %s366 = scalar_select %p363, %s364, %s365
      %p369 = pneg %p363
      %p370 = scmp.eq.s32.totalorder %s56, 1
      %p371 = por %p369, %p370
      %p372 = scmp.ne.s32.totalorder %s364, %s367
      %p373 = scmp.eq.s32.totalorder %s56, 0
      %p374 = por %p372, %p373
      %p375 = scmp.ne.s32.totalorder %s364, %s367
      %p376 = scmp.eq.s32.totalorder %s61, 1
      %p377 = por %p375, %p376
      %p378 = scmp.ne.s32.totalorder %s367, %s368
      %p379 = scmp.eq.s32.totalorder %s61, 0
      %p380 = por %p378, %p379
      %p381 = scmp.ne.s32.totalorder %s367, %s368
      %p382 = scmp.eq.s32.totalorder %s62, 1
      %p383 = por %p381, %p382
      %p385 = scmp.ne.s32.totalorder %s368, %s384
      %p386 = scmp.eq.s32.totalorder %s62, 0
      %p387 = por %p385, %p386
      %s388 = ssub.s32 %s64, %s71
      %p389 = scmp.eq.s32.totalorder %s388, 0
      %s391 = sadd.s32 %s390, 1
      %s392 = scalar_select %p389, %s390, %s391
      %p395 = pneg %p389
      %p396 = scmp.eq.s32.totalorder %s56, 1
      %p397 = por %p395, %p396
      %p398 = scmp.ne.s32.totalorder %s390, %s393
      %p399 = scmp.eq.s32.totalorder %s56, 0
      %p400 = por %p398, %p399
      %p401 = scmp.ne.s32.totalorder %s390, %s393
      %p402 = scmp.eq.s32.totalorder %s61, 1
      %p403 = por %p401, %p402
      %p404 = scmp.ne.s32.totalorder %s393, %s394
      %p405 = scmp.eq.s32.totalorder %s61, 0
      %p406 = por %p404, %p405
      %p407 = scmp.ne.s32.totalorder %s393, %s394
      %p408 = scmp.eq.s32.totalorder %s62, 1
      %p409 = por %p407, %p408
      %p411 = scmp.ne.s32.totalorder %s394, %s410
      %p412 = scmp.eq.s32.totalorder %s62, 0
      %p413 = por %p411, %p412
      %s414 = ssub.s32 %s64, %s71
      %p415 = scmp.eq.s32.totalorder %s414, 0
      %s417 = sadd.s32 %s416, 1
      %s418 = scalar_select %p415, %s416, %s417
      %p421 = pneg %p415
      %p422 = scmp.eq.s32.totalorder %s56, 1
      %p423 = por %p421, %p422
      %p424 = scmp.ne.s32.totalorder %s416, %s419
      %p425 = scmp.eq.s32.totalorder %s56, 0
      %p426 = por %p424, %p425
      %p427 = scmp.ne.s32.totalorder %s416, %s419
      %p428 = scmp.eq.s32.totalorder %s61, 1
      %p429 = por %p427, %p428
      %p430 = scmp.ne.s32.totalorder %s419, %s420
      %p431 = scmp.eq.s32.totalorder %s61, 0
      %p432 = por %p430, %p431
      %p433 = scmp.ne.s32.totalorder %s419, %s420
      %p434 = scmp.eq.s32.totalorder %s62, 1
      %p435 = por %p433, %p434
      %p437 = scmp.ne.s32.totalorder %s420, %s436
      %p438 = scmp.eq.s32.totalorder %s62, 0
      %p439 = por %p437, %p438
      %s440 = ssub.s32 %s64, %s71
      %p441 = scmp.eq.s32.totalorder %s440, 0
      %s443 = sadd.s32 %s442, 1
      %s444 = scalar_select %p441, %s442, %s443
      %p447 = pneg %p441
      %p448 = scmp.eq.s32.totalorder %s56, 1
      %p449 = por %p447, %p448
      %p450 = scmp.ne.s32.totalorder %s442, %s445
      %p451 = scmp.eq.s32.totalorder %s56, 0
      %p452 = por %p450, %p451
      %p453 = scmp.ne.s32.totalorder %s442, %s445
      %p454 = scmp.eq.s32.totalorder %s61, 1
      %p455 = por %p453, %p454
      %p456 = scmp.ne.s32.totalorder %s445, %s446
      %p457 = scmp.eq.s32.totalorder %s61, 0
      %p458 = por %p456, %p457
      %p459 = scmp.ne.s32.totalorder %s445, %s446
      %p460 = scmp.eq.s32.totalorder %s62, 1
      %p461 = por %p459, %p460
      %p463 = scmp.ne.s32.totalorder %s446, %s462
      %p464 = scmp.eq.s32.totalorder %s62, 0
      %p465 = por %p463, %p464
      %s466 = ssub.s32 %s64, %s71
      %p467 = scmp.eq.s32.totalorder %s466, 0
      %s469 = sadd.s32 %s468, 1
      %s470 = scalar_select %p467, %s468, %s469
      %p473 = pneg %p467
      %p474 = scmp.eq.s32.totalorder %s56, 1
      %p475 = por %p473, %p474
      %p476 = scmp.ne.s32.totalorder %s468, %s471
      %p477 = scmp.eq.s32.totalorder %s56, 0
      %p478 = por %p476, %p477
      %p479 = scmp.ne.s32.totalorder %s468, %s471
      %p480 = scmp.eq.s32.totalorder %s61, 1
      %p481 = por %p479, %p480
      %p482 = scmp.ne.s32.totalorder %s471, %s472
      %p483 = scmp.eq.s32.totalorder %s61, 0
      %p484 = por %p482, %p483
      %p485 = scmp.ne.s32.totalorder %s471, %s472
      %p486 = scmp.eq.s32.totalorder %s62, 1
      %p487 = por %p485, %p486
      %p489 = scmp.ne.s32.totalorder %s472, %s488
      %p490 = scmp.eq.s32.totalorder %s62, 0
      %p491 = por %p489, %p490
      %s492 = ssub.s32 %s64, %s71
      %p493 = scmp.eq.s32.totalorder %s492, 0
      %s495 = sadd.s32 %s494, 1
      %s496 = scalar_select %p493, %s494, %s495
      %p499 = pneg %p493
      %p500 = scmp.eq.s32.totalorder %s56, 1
      %p501 = por %p499, %p500
      %p502 = scmp.ne.s32.totalorder %s494, %s497
      %p503 = scmp.eq.s32.totalorder %s56, 0
      %p504 = por %p502, %p503
      %p505 = scmp.ne.s32.totalorder %s494, %s497
      %p506 = scmp.eq.s32.totalorder %s61, 1
      %p507 = por %p505, %p506
      %p508 = scmp.ne.s32.totalorder %s497, %s498
      %p509 = scmp.eq.s32.totalorder %s61, 0
      %p510 = por %p508, %p509
      %p511 = scmp.ne.s32.totalorder %s497, %s498
      %p512 = scmp.eq.s32.totalorder %s62, 1
      %p513 = por %p511, %p512
      %p515 = scmp.ne.s32.totalorder %s498, %s514
      %p516 = scmp.eq.s32.totalorder %s62, 0
      %p517 = por %p515, %p516
      %s518 = ssub.s32 %s64, %s71
      %p519 = scmp.eq.s32.totalorder %s518, 0
      %s521 = sadd.s32 %s520, 1
      %s522 = scalar_select %p519, %s520, %s521
      %p525 = pneg %p519
      %p526 = scmp.eq.s32.totalorder %s56, 1
      %p527 = por %p525, %p526
      %p528 = scmp.ne.s32.totalorder %s520, %s523
      %p529 = scmp.eq.s32.totalorder %s56, 0
      %p530 = por %p528, %p529
      %p531 = scmp.ne.s32.totalorder %s520, %s523
      %p532 = scmp.eq.s32.totalorder %s61, 1
      %p533 = por %p531, %p532
      %p534 = scmp.ne.s32.totalorder %s523, %s524
      %p535 = scmp.eq.s32.totalorder %s61, 0
      %p536 = por %p534, %p535
      %p537 = scmp.ne.s32.totalorder %s523, %s524
      %p538 = scmp.eq.s32.totalorder %s62, 1
      %p539 = por %p537, %p538
      %p541 = scmp.ne.s32.totalorder %s524, %s540
      %p542 = scmp.eq.s32.totalorder %s62, 0
      %p543 = por %p541, %p542
      %s544 = ssub.s32 %s64, %s71
      %p545 = scmp.eq.s32.totalorder %s544, 0
      %s547 = sadd.s32 %s546, 1
      %s548 = scalar_select %p545, %s546, %s547
      %p551 = pneg %p545
      %p552 = scmp.eq.s32.totalorder %s56, 1
      %p553 = por %p551, %p552
      %p554 = scmp.ne.s32.totalorder %s546, %s549
      %p555 = scmp.eq.s32.totalorder %s56, 0
      %p556 = por %p554, %p555
      %p557 = scmp.ne.s32.totalorder %s546, %s549
      %p558 = scmp.eq.s32.totalorder %s61, 1
      %p559 = por %p557, %p558
      %p560 = scmp.ne.s32.totalorder %s549, %s550
      %p561 = scmp.eq.s32.totalorder %s61, 0
      %p562 = por %p560, %p561
      %p563 = scmp.ne.s32.totalorder %s549, %s550
      %p564 = scmp.eq.s32.totalorder %s62, 1
      %p565 = por %p563, %p564
      %p567 = scmp.ne.s32.totalorder %s550, %s566
      %p568 = scmp.eq.s32.totalorder %s62, 0
      %p569 = por %p567, %p568
      %s570 = ssub.s32 %s64, %s71
      %p571 = scmp.eq.s32.totalorder %s570, 0
      %s573 = sadd.s32 %s572, 1
      %s574 = scalar_select %p571, %s572, %s573
      %p577 = pneg %p571
      %p578 = scmp.eq.s32.totalorder %s56, 1
      %p579 = por %p577, %p578
      %p580 = scmp.ne.s32.totalorder %s572, %s575
      %p581 = scmp.eq.s32.totalorder %s56, 0
      %p582 = por %p580, %p581
      %p583 = scmp.ne.s32.totalorder %s572, %s575
      %p584 = scmp.eq.s32.totalorder %s61, 1
      %p585 = por %p583, %p584
      %p586 = scmp.ne.s32.totalorder %s575, %s576
      %p587 = scmp.eq.s32.totalorder %s61, 0
      %p588 = por %p586, %p587
      %p589 = scmp.ne.s32.totalorder %s575, %s576
      %p590 = scmp.eq.s32.totalorder %s62, 1
      %p591 = por %p589, %p590
      %p593 = scmp.ne.s32.totalorder %s576, %s592
      %p594 = scmp.eq.s32.totalorder %s62, 0
      %p595 = por %p593, %p594
      %s596 = ssub.s32 %s64, %s71
      %p597 = scmp.eq.s32.totalorder %s596, 0
      %s599 = sadd.s32 %s598, 1
      %s600 = scalar_select %p597, %s598, %s599
      %p603 = pneg %p597
      %p604 = scmp.eq.s32.totalorder %s56, 1
      %p605 = por %p603, %p604
      %p606 = scmp.ne.s32.totalorder %s598, %s601
      %p607 = scmp.eq.s32.totalorder %s56, 0
      %p608 = por %p606, %p607
      %p609 = scmp.ne.s32.totalorder %s598, %s601
      %p610 = scmp.eq.s32.totalorder %s61, 1
      %p611 = por %p609, %p610
      %p612 = scmp.ne.s32.totalorder %s601, %s602
      %p613 = scmp.eq.s32.totalorder %s61, 0
      %p614 = por %p612, %p613
      %p615 = scmp.ne.s32.totalorder %s601, %s602
      %p616 = scmp.eq.s32.totalorder %s62, 1
      %p617 = por %p615, %p616
      %p619 = scmp.ne.s32.totalorder %s602, %s618
      %p620 = scmp.eq.s32.totalorder %s62, 0
      %p621 = por %p619, %p620
      %s622 = ssub.s32 %s64, %s71
      %p623 = scmp.eq.s32.totalorder %s622, 0
      %s625 = sadd.s32 %s624, 1
      %s626 = scalar_select %p623, %s624, %s625
      %p629 = pneg %p623
      %p630 = scmp.eq.s32.totalorder %s56, 1
      %p631 = por %p629, %p630
      %p632 = scmp.ne.s32.totalorder %s624, %s627
      %p633 = scmp.eq.s32.totalorder %s56, 0
      %p634 = por %p632, %p633
      %p635 = scmp.ne.s32.totalorder %s624, %s627
      %p636 = scmp.eq.s32.totalorder %s61, 1
      %p637 = por %p635, %p636
      %p638 = scmp.ne.s32.totalorder %s627, %s628
      %p639 = scmp.eq.s32.totalorder %s61, 0
      %p640 = por %p638, %p639
      %p641 = scmp.ne.s32.totalorder %s627, %s628
      %p642 = scmp.eq.s32.totalorder %s62, 1
      %p643 = por %p641, %p642
      %p645 = scmp.ne.s32.totalorder %s628, %s644
      %p646 = scmp.eq.s32.totalorder %s62, 0
      %p647 = por %p645, %p646
      %s648 = ssub.s32 %s64, %s71
      %p649 = scmp.eq.s32.totalorder %s648, 0
      %s651 = sadd.s32 %s650, 1
      %s652 = scalar_select %p649, %s650, %s651
      %p655 = pneg %p649
      %p656 = scmp.eq.s32.totalorder %s56, 1
      %p657 = por %p655, %p656
      %p658 = scmp.ne.s32.totalorder %s650, %s653
      %p659 = scmp.eq.s32.totalorder %s56, 0
      %p660 = por %p658, %p659
      %p661 = scmp.ne.s32.totalorder %s650, %s653
      %p662 = scmp.eq.s32.totalorder %s61, 1
      %p663 = por %p661, %p662
      %p664 = scmp.ne.s32.totalorder %s653, %s654
      %p665 = scmp.eq.s32.totalorder %s61, 0
      %p666 = por %p664, %p665
      %p667 = scmp.ne.s32.totalorder %s653, %s654
      %p668 = scmp.eq.s32.totalorder %s62, 1
      %p669 = por %p667, %p668
      %p671 = scmp.ne.s32.totalorder %s654, %s670
      %p672 = scmp.eq.s32.totalorder %s62, 0
      %p673 = por %p671, %p672
      %s674 = ssub.s32 %s64, %s71
      %p675 = scmp.eq.s32.totalorder %s674, 0
      %s677 = sadd.s32 %s676, 1
      %s678 = scalar_select %p675, %s676, %s677
      %p681 = pneg %p675
      %p682 = scmp.eq.s32.totalorder %s56, 1
      %p683 = por %p681, %p682
      %p684 = scmp.ne.s32.totalorder %s676, %s679
      %p685 = scmp.eq.s32.totalorder %s56, 0
      %p686 = por %p684, %p685
      %p687 = scmp.ne.s32.totalorder %s676, %s679
      %p688 = scmp.eq.s32.totalorder %s61, 1
      %p689 = por %p687, %p688
      %p690 = scmp.ne.s32.totalorder %s679, %s680
      %p691 = scmp.eq.s32.totalorder %s61, 0
      %p692 = por %p690, %p691
      %p693 = scmp.ne.s32.totalorder %s679, %s680
      %p694 = scmp.eq.s32.totalorder %s62, 1
      %p695 = por %p693, %p694
      %p697 = scmp.ne.s32.totalorder %s680, %s696
      %p698 = scmp.eq.s32.totalorder %s62, 0
      %p699 = por %p697, %p698
      %s700 = ssub.s32 %s64, %s71
      %p701 = scmp.eq.s32.totalorder %s700, 0
      %s703 = sadd.s32 %s702, 1
      %s704 = scalar_select %p701, %s702, %s703
      %p707 = pneg %p701
      %p708 = scmp.eq.s32.totalorder %s56, 1
      %p709 = por %p707, %p708
      %p710 = scmp.ne.s32.totalorder %s702, %s705
      %p711 = scmp.eq.s32.totalorder %s56, 0
      %p712 = por %p710, %p711
      %p713 = scmp.ne.s32.totalorder %s702, %s705
      %p714 = scmp.eq.s32.totalorder %s61, 1
      %p715 = por %p713, %p714
      %p716 = scmp.ne.s32.totalorder %s705, %s706
      %p717 = scmp.eq.s32.totalorder %s61, 0
      %p718 = por %p716, %p717
      %p719 = scmp.ne.s32.totalorder %s705, %s706
      %p720 = scmp.eq.s32.totalorder %s62, 1
      %p721 = por %p719, %p720
      %p723 = scmp.ne.s32.totalorder %s706, %s722
      %p724 = scmp.eq.s32.totalorder %s62, 0
      %p725 = por %p723, %p724
      %s726 = ssub.s32 %s64, %s71
      %p727 = scmp.eq.s32.totalorder %s726, 0
      %s729 = sadd.s32 %s728, 1
      %s730 = scalar_select %p727, %s728, %s729
      %p733 = pneg %p727
      %p734 = scmp.eq.s32.totalorder %s56, 1
      %p735 = por %p733, %p734
      %p736 = scmp.ne.s32.totalorder %s728, %s731
      %p737 = scmp.eq.s32.totalorder %s56, 0
      %p738 = por %p736, %p737
      %p739 = scmp.ne.s32.totalorder %s728, %s731
      %p740 = scmp.eq.s32.totalorder %s61, 1
      %p741 = por %p739, %p740
      %p742 = scmp.ne.s32.totalorder %s731, %s732
      %p743 = scmp.eq.s32.totalorder %s61, 0
      %p744 = por %p742, %p743
      %p745 = scmp.ne.s32.totalorder %s731, %s732
      %p746 = scmp.eq.s32.totalorder %s62, 1
      %p747 = por %p745, %p746
      %p749 = scmp.ne.s32.totalorder %s732, %s748
      %p750 = scmp.eq.s32.totalorder %s62, 0
      %p751 = por %p749, %p750
      %s752 = ssub.s32 %s63, %s75
      %p753 = scmp.eq.s32.totalorder %s752, 0
      %s755 = sadd.s32 %s754, 1
      %s756 = scalar_select %p753, %s754, %s755
      %p759 = pneg %p753
      %p760 = scmp.eq.s32.totalorder %s56, 1
      %p761 = por %p759, %p760
      %p762 = scmp.ne.s32.totalorder %s754, %s757
      %p763 = scmp.eq.s32.totalorder %s56, 0
      %p764 = por %p762, %p763
      %p765 = scmp.ne.s32.totalorder %s754, %s757
      %p766 = scmp.eq.s32.totalorder %s61, 1
      %p767 = por %p765, %p766
      %p768 = scmp.ne.s32.totalorder %s757, %s758
      %p769 = scmp.eq.s32.totalorder %s61, 0
      %p770 = por %p768, %p769
      %p771 = scmp.ne.s32.totalorder %s757, %s758
      %p772 = scmp.eq.s32.totalorder %s62, 1
      %p773 = por %p771, %p772
      %p775 = scmp.ne.s32.totalorder %s758, %s774
      %p776 = scmp.eq.s32.totalorder %s62, 0
      %p777 = por %p775, %p776
      %p778 = scmp.le.s32.totalorder 1, %s56
      %p779 = scmp.lt.s32.totalorder %s56, 3
      %p780 = pnand %p778, %p779
      %p781 = pneg %p780
      // Predicated region
      $region9: #{tpu_custom_call.1} parent=5 // pred_check
        _
      $region10: #{tpu_custom_call.1} parent=5 // pred_check_branch
        %783 = sbr.rel (%p780) target = $region12
      $region11: #{tpu_custom_call.1} parent=5 // pred_region
        %s784 = ssub.s32 %s56, 1
        // Predicated region
        $region13: #{tpu_custom_call.1} parent=11 // pred_check
          %p785 = pneg %p94
        $region14: #{tpu_custom_call.1} parent=11 // pred_check_branch
          %787 = sbr.rel (%p785) target = $region16
        $region15: #{tpu_custom_call.1} parent=11 // pred_region
          %s788 = smul.u32 2, %s65
          %790 = vsyncadd [#allocation3], 0
          %s791 = smul.addr %s788, 4
          %s792 = scalar_lea.hbm %s0, %s791
          %s793 = sshll.u32 %s792, 4
          %s794 = int_to_ptr.hbm [resolvable:$true] %s793
          %s795 = sshll.u32 [#allocation2], 4
          %s796 = int_to_ptr.vmem [resolvable:$true] %s795
          %801 = dma.hbm_to_vmem [thread:$0]  %s794, 128, %s796, [#allocation3], 64, 64, 4
        $region16: #{tpu_custom_call.1} parent=11 // pred_fallthru
          _
        // Predicated region
        $region17: #{tpu_custom_call.1} parent=11 // pred_check
          %p802 = pneg %p120
        $region18: #{tpu_custom_call.1} parent=11 // pred_check_branch
          %804 = sbr.rel (%p802) target = $region20
        $region19: #{tpu_custom_call.1} parent=11 // pred_region
          %s805 = smul.u32 2, %s65
          %807 = vsyncadd [#allocation6], 0
          %s808 = smul.addr %s805, 4
          %s809 = scalar_lea.hbm %s1, %s808
          %s810 = sshll.u32 %s809, 4
          %s811 = int_to_ptr.hbm [resolvable:$true] %s810
          %s812 = sshll.u32 [#allocation5], 4
          %s813 = int_to_ptr.vmem [resolvable:$true] %s812
          %818 = dma.hbm_to_vmem [thread:$0]  %s811, 128, %s813, [#allocation6], 64, 64, 4
        $region20: #{tpu_custom_call.1} parent=11 // pred_fallthru
          _
        // Predicated region
        $region21: #{tpu_custom_call.1} parent=11 // pred_check
          %p819 = pneg %p146
        $region22: #{tpu_custom_call.1} parent=11 // pred_check_branch
          %821 = sbr.rel (%p819) target = $region24
        $region23: #{tpu_custom_call.1} parent=11 // pred_region
          %s822 = smul.u32 2, %s65
          %824 = vsyncadd [#allocation6], 0
          %s825 = scalar_lea.hbm %s2, %s822
          %s826 = sshll.u32 %s825, 4
          %s827 = int_to_ptr.hbm [resolvable:$true] %s826
          %s828 = sshll.u32 [#allocation7], 4
          %s829 = int_to_ptr.vmem [resolvable:$true] %s828
          %834 = dma.hbm_to_vmem [thread:$0]  %s827, 32, %s829, [#allocation6], 16, 16, 1
        $region24: #{tpu_custom_call.1} parent=11 // pred_fallthru
          _
        // Predicated region
        $region25: #{tpu_custom_call.1} parent=11 // pred_check
          %p835 = pneg %p172
        $region26: #{tpu_custom_call.1} parent=11 // pred_check_branch
          %837 = sbr.rel (%p835) target = $region28
        $region27: #{tpu_custom_call.1} parent=11 // pred_region
          %s838 = smul.u32 2, %s65
          %p839 = scmp.lt.s32.totalorder %s838, 1
          %s840 = scalar_select %p839, %s838, 1
          %s841 = scalar_lea.vmem %s3, %s840
          %s842 = smul.u32 2, %s65
        $region28: #{tpu_custom_call.1} parent=11 // pred_fallthru
          _
      $region12: #{tpu_custom_call.1} parent=5 // pred_fallthru
        _
      %p843 = scmp.lt.s32.totalorder %s56, 2
      // Predicated region
      $region29: #{tpu_custom_call.1} parent=5 // pred_check
        %p844 = pneg %p843
      $region30: #{tpu_custom_call.1} parent=5 // pred_check_branch
        %846 = sbr.rel (%p844) target = $region32
      $region31: #{tpu_custom_call.1} parent=5 // pred_region
        // Predicated region
        $region33: #{tpu_custom_call.1} parent=31 // pred_check
          %p847 = pneg %p192
        $region34: #{tpu_custom_call.1} parent=31 // pred_check_branch
          %849 = sbr.rel (%p847) target = $region36
        $region35: #{tpu_custom_call.1} parent=31 // pred_region
          %s850 = sand.u32 %s56, 1
          %s851 = scalar_lea.sflag [#allocation9], %s850
          %s852 = sand.u32 %s182, 1
          %s853 = smul.addr %s852, 256
          %s854 = scalar_lea.vmem [#allocation8], %s853
          %856 = vsyncadd %s851, 0
          %s857 = smul.addr %s64, 64
          %s858 = smul.addr %s857, 4
          %s859 = scalar_lea.hbm %s4, %s858
          %s860 = sshll.u32 %s859, 4
          %s861 = int_to_ptr.hbm [resolvable:$true] %s860
          %s862 = sshll.u32 %s854, 4
          %s863 = int_to_ptr.vmem [resolvable:$true] %s862
          %868 = dma.hbm_to_vmem [thread:$0]  %s861, 4096, %s863, %s851, 256, 256, 16
        $region36: #{tpu_custom_call.1} parent=31 // pred_fallthru
          _
        // Predicated region
        $region37: #{tpu_custom_call.1} parent=31 // pred_check
          %p869 = pneg %p218
        $region38: #{tpu_custom_call.1} parent=31 // pred_check_branch
          %871 = sbr.rel (%p869) target = $region40
        $region39: #{tpu_custom_call.1} parent=31 // pred_region
          %s872 = sand.u32 %s56, 1
          %s873 = scalar_lea.sflag [#allocation9], %s872
          %s874 = sand.u32 %s208, 1
          %s875 = smul.addr %s874, 4
          %s876 = scalar_lea.vmem [#allocation10], %s875
          %878 = vsyncadd %s873, 0
          %s879 = smul.addr %s64, 4
          %s880 = scalar_lea.hbm %s5, %s879
          %s882 = sshll.u32 %s880, 4
          %s883 = int_to_ptr.hbm [resolvable:$true] %s882
          %s884 = sshll.u32 %s876, 4
          %s885 = int_to_ptr.vmem [resolvable:$true] %s884
          %887 = dma.hbm_to_vmem [thread:$0]  %s883, 64, %s885, %s873
        $region40: #{tpu_custom_call.1} parent=31 // pred_fallthru
          _
        // Predicated region
        $region41: #{tpu_custom_call.1} parent=31 // pred_check
          %p888 = pneg %p244
        $region42: #{tpu_custom_call.1} parent=31 // pred_check_branch
          %890 = sbr.rel (%p888) target = $region44
        $region43: #{tpu_custom_call.1} parent=31 // pred_region
          %s891 = sand.u32 %s56, 1
          %s892 = scalar_lea.sflag [#allocation12], %s891
          %s893 = sand.u32 %s234, 1
          %s894 = smul.addr %s893, 512
          %s895 = scalar_lea.vmem [#allocation11], %s894
          %897 = vsyncadd %s892, 0
          %s898 = smul.addr %s64, 128
          %s899 = smul.addr %s898, 4
          %s900 = scalar_lea.hbm %s6, %s899
          %s901 = sshll.u32 %s900, 4
          %s902 = int_to_ptr.hbm [resolvable:$true] %s901
          %s903 = sshll.u32 %s895, 4
          %s904 = int_to_ptr.vmem [resolvable:$true] %s903
          %909 = dma.hbm_to_vmem [thread:$0]  %s902, 8192, %s904, %s892, 512, 512, 32
        $region44: #{tpu_custom_call.1} parent=31 // pred_fallthru
          _
        // Predicated region
        $region45: #{tpu_custom_call.1} parent=31 // pred_check
          %p910 = pneg %p270
        $region46: #{tpu_custom_call.1} parent=31 // pred_check_branch
          %912 = sbr.rel (%p910) target = $region48
        $region47: #{tpu_custom_call.1} parent=31 // pred_region
          %s913 = sand.u32 %s56, 1
          %s914 = scalar_lea.sflag [#allocation12], %s913
          %s915 = sand.u32 %s260, 1
          %s916 = smul.addr %s915, 8
          %s917 = scalar_lea.vmem [#allocation13], %s916
          %919 = vsyncadd %s914, 0
          %s920 = smul.addr %s64, 8
          %s921 = scalar_lea.hbm %s7, %s920
          %s923 = sshll.u32 %s921, 4
          %s924 = int_to_ptr.hbm [resolvable:$true] %s923
          %s925 = sshll.u32 %s917, 4
          %s926 = int_to_ptr.vmem [resolvable:$true] %s925
          %928 = dma.hbm_to_vmem [thread:$0]  %s924, 128, %s926, %s914
        $region48: #{tpu_custom_call.1} parent=31 // pred_fallthru
          _
        // Predicated region
        $region49: #{tpu_custom_call.1} parent=31 // pred_check
          %p929 = pneg %p296
        $region50: #{tpu_custom_call.1} parent=31 // pred_check_branch
          %931 = sbr.rel (%p929) target = $region52
        $region51: #{tpu_custom_call.1} parent=31 // pred_region
          %s932 = sand.u32 %s56, 1
          %s933 = scalar_lea.sflag [#allocation15], %s932
          %s934 = sand.u32 %s286, 1
          %s935 = smul.addr %s934, 256
          %s936 = scalar_lea.vmem [#allocation14], %s935
          %938 = vsyncadd %s933, 0
          %s939 = smul.addr %s64, 64
          %s940 = smul.addr %s939, 4
          %s941 = scalar_lea.hbm %s8, %s940
          %s942 = sshll.u32 %s941, 4
          %s943 = int_to_ptr.hbm [resolvable:$true] %s942
          %s944 = sshll.u32 %s936, 4
          %s945 = int_to_ptr.vmem [resolvable:$true] %s944
          %950 = dma.hbm_to_vmem [thread:$0]  %s943, 4096, %s945, %s933, 64, 64, 4
        $region52: #{tpu_custom_call.1} parent=31 // pred_fallthru
          _
        // Predicated region
        $region53: #{tpu_custom_call.1} parent=31 // pred_check
          %p951 = pneg %p322
        $region54: #{tpu_custom_call.1} parent=31 // pred_check_branch
          %953 = sbr.rel (%p951) target = $region56
        $region55: #{tpu_custom_call.1} parent=31 // pred_region
          %p954 = scmp.lt.s32.totalorder %s64, 1
          %s955 = scalar_select %p954, %s64, 1
          %s956 = scalar_lea.vmem %s9, %s955
        $region56: #{tpu_custom_call.1} parent=31 // pred_fallthru
          _
        // Predicated region
        $region57: #{tpu_custom_call.1} parent=31 // pred_check
          %p957 = pneg %p348
        $region58: #{tpu_custom_call.1} parent=31 // pred_check_branch
          %959 = sbr.rel (%p957) target = $region60
        $region59: #{tpu_custom_call.1} parent=31 // pred_region
          %s960 = sand.u32 %s56, 1
          %s961 = scalar_lea.sflag [#allocation15], %s960
          %s962 = sand.u32 %s338, 1
          %s963 = scalar_lea.vmem [#allocation16], %s962
          %965 = vsyncadd %s961, 0
          %s966 = scalar_lea.hbm %s10, %s64
          %s968 = sshll.u32 %s966, 4
          %s969 = int_to_ptr.hbm [resolvable:$true] %s968
          %s970 = sshll.u32 %s963, 4
          %s971 = int_to_ptr.vmem [resolvable:$true] %s970
          %973 = dma.hbm_to_vmem [thread:$0]  %s969, 16, %s971, %s961
        $region60: #{tpu_custom_call.1} parent=31 // pred_fallthru
          _
        // Predicated region
        $region61: #{tpu_custom_call.1} parent=31 // pred_check
          %p974 = pneg %p374
        $region62: #{tpu_custom_call.1} parent=31 // pred_check_branch
          %976 = sbr.rel (%p974) target = $region64
        $region63: #{tpu_custom_call.1} parent=31 // pred_region
          %s977 = sand.u32 %s56, 1
          %s978 = scalar_lea.sflag [#allocation18], %s977
          %s979 = sand.u32 %s364, 1
          %s980 = scalar_lea.vmem [#allocation17], %s979
          %982 = vsyncadd %s978, 0
          %s983 = scalar_lea.hbm %s11, %s64
          %s985 = sshll.u32 %s983, 4
          %s986 = int_to_ptr.hbm [resolvable:$true] %s985
          %s987 = sshll.u32 %s980, 4
          %s988 = int_to_ptr.vmem [resolvable:$true] %s987
          %990 = dma.hbm_to_vmem [thread:$0]  %s986, 16, %s988, %s978
        $region64: #{tpu_custom_call.1} parent=31 // pred_fallthru
          _
        // Predicated region
        $region65: #{tpu_custom_call.1} parent=31 // pred_check
          %p991 = pneg %p400
        $region66: #{tpu_custom_call.1} parent=31 // pred_check_branch
          %993 = sbr.rel (%p991) target = $region68
        $region67: #{tpu_custom_call.1} parent=31 // pred_region
          %s994 = sand.u32 %s56, 1
          %s995 = scalar_lea.sflag [#allocation18], %s994
          %s996 = sand.u32 %s390, 1
          %s997 = smul.addr %s996, 256
          %s998 = scalar_lea.vmem [#allocation19], %s997
          %1000 = vsyncadd %s995, 0
          %s1001 = smul.addr %s64, 64
          %s1002 = smul.addr %s1001, 4
          %s1003 = scalar_lea.hbm %s12, %s1002
          %s1004 = sshll.u32 %s1003, 4
          %s1005 = int_to_ptr.hbm [resolvable:$true] %s1004
          %s1006 = sshll.u32 %s998, 4
          %s1007 = int_to_ptr.vmem [resolvable:$true] %s1006
          %1012 = dma.hbm_to_vmem [thread:$0]  %s1005, 4096, %s1007, %s995, 256, 256, 16
        $region68: #{tpu_custom_call.1} parent=31 // pred_fallthru
          _
        // Predicated region
        $region69: #{tpu_custom_call.1} parent=31 // pred_check
          %p1013 = pneg %p426
        $region70: #{tpu_custom_call.1} parent=31 // pred_check_branch
          %1015 = sbr.rel (%p1013) target = $region72
        $region71: #{tpu_custom_call.1} parent=31 // pred_region
          %p1016 = scmp.lt.s32.totalorder %s64, 1
          %s1017 = scalar_select %p1016, %s64, 1
          %s1018 = smul.addr %s1017, 4
          %s1019 = scalar_lea.vmem %s13, %s1018
        $region72: #{tpu_custom_call.1} parent=31 // pred_fallthru
          _
        // Predicated region
        $region73: #{tpu_custom_call.1} parent=31 // pred_check
          %p1020 = pneg %p452
        $region74: #{tpu_custom_call.1} parent=31 // pred_check_branch
          %1022 = sbr.rel (%p1020) target = $region76
        $region75: #{tpu_custom_call.1} parent=31 // pred_region
          %s1023 = sand.u32 %s56, 1
          %s1024 = scalar_lea.sflag [#allocation21], %s1023
          %s1025 = sand.u32 %s442, 1
          %s1026 = smul.addr %s1025, 512
          %s1027 = scalar_lea.vmem [#allocation20], %s1026
          %1029 = vsyncadd %s1024, 0
          %s1030 = smul.addr %s64, 128
          %s1031 = smul.addr %s1030, 4
          %s1032 = scalar_lea.hbm %s14, %s1031
          %s1033 = sshll.u32 %s1032, 4
          %s1034 = int_to_ptr.hbm [resolvable:$true] %s1033
          %s1035 = sshll.u32 %s1027, 4
          %s1036 = int_to_ptr.vmem [resolvable:$true] %s1035
          %1041 = dma.hbm_to_vmem [thread:$0]  %s1034, 8192, %s1036, %s1024, 512, 512, 32
        $region76: #{tpu_custom_call.1} parent=31 // pred_fallthru
          _
        // Predicated region
        $region77: #{tpu_custom_call.1} parent=31 // pred_check
          %p1042 = pneg %p478
        $region78: #{tpu_custom_call.1} parent=31 // pred_check_branch
          %1044 = sbr.rel (%p1042) target = $region80
        $region79: #{tpu_custom_call.1} parent=31 // pred_region
          %s1045 = sand.u32 %s56, 1
          %s1046 = scalar_lea.sflag [#allocation21], %s1045
          %s1047 = sand.u32 %s468, 1
          %s1048 = smul.addr %s1047, 8
          %s1049 = scalar_lea.vmem [#allocation22], %s1048
          %1051 = vsyncadd %s1046, 0
          %s1052 = smul.addr %s64, 8
          %s1053 = scalar_lea.hbm %s15, %s1052
          %s1055 = sshll.u32 %s1053, 4
          %s1056 = int_to_ptr.hbm [resolvable:$true] %s1055
          %s1057 = sshll.u32 %s1049, 4
          %s1058 = int_to_ptr.vmem [resolvable:$true] %s1057
          %1060 = dma.hbm_to_vmem [thread:$0]  %s1056, 128, %s1058, %s1046
        $region80: #{tpu_custom_call.1} parent=31 // pred_fallthru
          _
        // Predicated region
        $region81: #{tpu_custom_call.1} parent=31 // pred_check
          %p1061 = pneg %p504
        $region82: #{tpu_custom_call.1} parent=31 // pred_check_branch
          %1063 = sbr.rel (%p1061) target = $region84
        $region83: #{tpu_custom_call.1} parent=31 // pred_region
          %s1064 = sand.u32 %s56, 1
          %s1065 = scalar_lea.sflag [#allocation24], %s1064
          %s1066 = sand.u32 %s494, 1
          %s1067 = smul.addr %s1066, 256
          %s1068 = scalar_lea.vmem [#allocation23], %s1067
          %1070 = vsyncadd %s1065, 0
          %s1071 = smul.addr %s64, 64
          %s1072 = smul.addr %s1071, 4
          %s1073 = scalar_lea.hbm %s16, %s1072
          %s1074 = sshll.u32 %s1073, 4
          %s1075 = int_to_ptr.hbm [resolvable:$true] %s1074
          %s1076 = sshll.u32 %s1068, 4
          %s1077 = int_to_ptr.vmem [resolvable:$true] %s1076
          %1082 = dma.hbm_to_vmem [thread:$0]  %s1075, 4096, %s1077, %s1065, 64, 64, 4
        $region84: #{tpu_custom_call.1} parent=31 // pred_fallthru
          _
        // Predicated region
        $region85: #{tpu_custom_call.1} parent=31 // pred_check
          %p1083 = pneg %p530
        $region86: #{tpu_custom_call.1} parent=31 // pred_check_branch
          %1085 = sbr.rel (%p1083) target = $region88
        $region87: #{tpu_custom_call.1} parent=31 // pred_region
          %p1086 = scmp.lt.s32.totalorder %s64, 1
          %s1087 = scalar_select %p1086, %s64, 1
          %s1088 = scalar_lea.vmem %s17, %s1087
        $region88: #{tpu_custom_call.1} parent=31 // pred_fallthru
          _
        // Predicated region
        $region89: #{tpu_custom_call.1} parent=31 // pred_check
          %p1089 = pneg %p556
        $region90: #{tpu_custom_call.1} parent=31 // pred_check_branch
          %1091 = sbr.rel (%p1089) target = $region92
        $region91: #{tpu_custom_call.1} parent=31 // pred_region
          %p1092 = scmp.lt.s32.totalorder %s64, 1
          %s1093 = scalar_select %p1092, %s64, 1
          %s1094 = scalar_lea.vmem %s18, %s1093
        $region92: #{tpu_custom_call.1} parent=31 // pred_fallthru
          _
        // Predicated region
        $region93: #{tpu_custom_call.1} parent=31 // pred_check
          %p1095 = pneg %p582
        $region94: #{tpu_custom_call.1} parent=31 // pred_check_branch
          %1097 = sbr.rel (%p1095) target = $region96
        $region95: #{tpu_custom_call.1} parent=31 // pred_region
          %p1098 = scmp.lt.s32.totalorder %s64, 1
          %s1099 = scalar_select %p1098, %s64, 1
          %s1100 = scalar_lea.vmem %s19, %s1099
        $region96: #{tpu_custom_call.1} parent=31 // pred_fallthru
          _
        // Predicated region
        $region97: #{tpu_custom_call.1} parent=31 // pred_check
          %p1101 = pneg %p608
        $region98: #{tpu_custom_call.1} parent=31 // pred_check_branch
          %1103 = sbr.rel (%p1101) target = $region100
        $region99: #{tpu_custom_call.1} parent=31 // pred_region
          %s1104 = sand.u32 %s56, 1
          %s1105 = scalar_lea.sflag [#allocation24], %s1104
          %s1106 = sand.u32 %s598, 1
          %s1107 = smul.addr %s1106, 64
          %s1108 = scalar_lea.vmem [#allocation25], %s1107
          %1110 = vsyncadd %s1105, 0
          %s1111 = smul.addr %s64, 16
          %s1112 = smul.addr %s1111, 4
          %s1113 = scalar_lea.hbm %s20, %s1112
          %s1114 = sshll.u32 %s1113, 4
          %s1115 = int_to_ptr.hbm [resolvable:$true] %s1114
          %s1116 = sshll.u32 %s1108, 4
          %s1117 = int_to_ptr.vmem [resolvable:$true] %s1116
          %1122 = dma.hbm_to_vmem [thread:$0]  %s1115, 1024, %s1117, %s1105, 64, 64, 4
        $region100: #{tpu_custom_call.1} parent=31 // pred_fallthru
          _
        // Predicated region
        $region101: #{tpu_custom_call.1} parent=31 // pred_check
          %p1123 = pneg %p634
        $region102: #{tpu_custom_call.1} parent=31 // pred_check_branch
          %1125 = sbr.rel (%p1123) target = $region104
        $region103: #{tpu_custom_call.1} parent=31 // pred_region
          %p1126 = scmp.lt.s32.totalorder %s64, 1
          %s1127 = scalar_select %p1126, %s64, 1
          %s1128 = scalar_lea.vmem %s21, %s1127
        $region104: #{tpu_custom_call.1} parent=31 // pred_fallthru
          _
        // Predicated region
        $region105: #{tpu_custom_call.1} parent=31 // pred_check
          %p1129 = pneg %p660
        $region106: #{tpu_custom_call.1} parent=31 // pred_check_branch
          %1131 = sbr.rel (%p1129) target = $region108
        $region107: #{tpu_custom_call.1} parent=31 // pred_region
          %s1132 = sand.u32 %s56, 1
          %s1133 = scalar_lea.sflag [#allocation27], %s1132
          %s1134 = sand.u32 %s650, 1
          %s1135 = smul.addr %s1134, 64
          %s1136 = scalar_lea.vmem [#allocation26], %s1135
          %1138 = vsyncadd %s1133, 0
          %s1139 = smul.addr %s64, 16
          %s1140 = smul.addr %s1139, 4
          %s1141 = scalar_lea.hbm %s22, %s1140
          %s1142 = sshll.u32 %s1141, 4
          %s1143 = int_to_ptr.hbm [resolvable:$true] %s1142
          %s1144 = sshll.u32 %s1136, 4
          %s1145 = int_to_ptr.vmem [resolvable:$true] %s1144
          %1150 = dma.hbm_to_vmem [thread:$0]  %s1143, 1024, %s1145, %s1133, 64, 64, 4
        $region108: #{tpu_custom_call.1} parent=31 // pred_fallthru
          _
        // Predicated region
        $region109: #{tpu_custom_call.1} parent=31 // pred_check
          %p1151 = pneg %p686
        $region110: #{tpu_custom_call.1} parent=31 // pred_check_branch
          %1153 = sbr.rel (%p1151) target = $region112
        $region111: #{tpu_custom_call.1} parent=31 // pred_region
          %p1154 = scmp.lt.s32.totalorder %s64, 1
          %s1155 = scalar_select %p1154, %s64, 1
          %s1156 = scalar_lea.vmem %s23, %s1155
        $region112: #{tpu_custom_call.1} parent=31 // pred_fallthru
          _
        // Predicated region
        $region113: #{tpu_custom_call.1} parent=31 // pred_check
          %p1157 = pneg %p712
        $region114: #{tpu_custom_call.1} parent=31 // pred_check_branch
          %1159 = sbr.rel (%p1157) target = $region116
        $region115: #{tpu_custom_call.1} parent=31 // pred_region
          %s1160 = sand.u32 %s56, 1
          %s1161 = scalar_lea.sflag [#allocation27], %s1160
          %s1162 = sand.u32 %s702, 1
          %s1163 = scalar_lea.vmem [#allocation28], %s1162
          %1165 = vsyncadd %s1161, 0
          %s1166 = scalar_lea.hbm %s24, %s64
          %s1168 = sshll.u32 %s1166, 4
          %s1169 = int_to_ptr.hbm [resolvable:$true] %s1168
          %s1170 = sshll.u32 %s1163, 4
          %s1171 = int_to_ptr.vmem [resolvable:$true] %s1170
          %1173 = dma.hbm_to_vmem [thread:$0]  %s1169, 16, %s1171, %s1161
        $region116: #{tpu_custom_call.1} parent=31 // pred_fallthru
          _
        // Predicated region
        $region117: #{tpu_custom_call.1} parent=31 // pred_check
          %p1174 = pneg %p738
        $region118: #{tpu_custom_call.1} parent=31 // pred_check_branch
          %1176 = sbr.rel (%p1174) target = $region120
        $region119: #{tpu_custom_call.1} parent=31 // pred_region
          %p1177 = scmp.lt.s32.totalorder %s64, 1
          %s1178 = scalar_select %p1177, %s64, 1
          %s1179 = scalar_lea.vmem %s25, %s1178
        $region120: #{tpu_custom_call.1} parent=31 // pred_fallthru
          _
      $region32: #{tpu_custom_call.1} parent=5 // pred_fallthru
        _
      %p1180 = scmp.le.s32.totalorder 1, %s56
      %p1181 = scmp.lt.s32.totalorder %s56, 3
      %p1182 = pnand %p1180, %p1181
      %p1183 = pneg %p1182
      // Predicated region
      $region121: #{tpu_custom_call.1} parent=5 // pred_check
        _
      $region122: #{tpu_custom_call.1} parent=5 // pred_check_branch
        %1185 = sbr.rel (%p1182) target = $region124
      $region123: #{tpu_custom_call.1} parent=5 // pred_region
        %s1186 = ssub.s32 %s56, 1
        // Predicated region
        $region125: #{tpu_custom_call.1} parent=123 // pred_check
          %p1187 = pneg %p94
        $region126: #{tpu_custom_call.1} parent=123 // pred_check_branch
          %1189 = sbr.rel (%p1187) target = $region128
        $region127: #{tpu_custom_call.1} parent=123 // pred_region
          %1191 = dma.done [#allocation3], 128
        $region128: #{tpu_custom_call.1} parent=123 // pred_fallthru
          _
        // Predicated region
        $region129: #{tpu_custom_call.1} parent=123 // pred_check
          %p1192 = pneg %p120
        $region130: #{tpu_custom_call.1} parent=123 // pred_check_branch
          %1194 = sbr.rel (%p1192) target = $region132
        $region131: #{tpu_custom_call.1} parent=123 // pred_region
          %1196 = dma.done [#allocation6], 128
        $region132: #{tpu_custom_call.1} parent=123 // pred_fallthru
          _
        // Predicated region
        $region133: #{tpu_custom_call.1} parent=123 // pred_check
          %p1197 = pneg %p146
        $region134: #{tpu_custom_call.1} parent=123 // pred_check_branch
          %1199 = sbr.rel (%p1197) target = $region136
        $region135: #{tpu_custom_call.1} parent=123 // pred_region
          %1201 = dma.done [#allocation6], 32
        $region136: #{tpu_custom_call.1} parent=123 // pred_fallthru
          _
        %s1202 = sand.u32 %s61, 1
        %s1203 = scalar_lea.sflag [#allocation9], %s1202
        %s1204 = sand.u32 %s185, 1
        %s1205 = smul.addr %s1204, 256
        %s1206 = scalar_lea.vmem [#allocation8], %s1205
        // Predicated region
        $region137: #{tpu_custom_call.1} parent=123 // pred_check
          %p1207 = pneg %p198
        $region138: #{tpu_custom_call.1} parent=123 // pred_check_branch
          %1209 = sbr.rel (%p1207) target = $region140
        $region139: #{tpu_custom_call.1} parent=123 // pred_region
          %1211 = dma.done %s1203, 4096
        $region140: #{tpu_custom_call.1} parent=123 // pred_fallthru
          _
        %s1212 = sand.u32 %s61, 1
        %s1213 = scalar_lea.sflag [#allocation9], %s1212
        %s1214 = sand.u32 %s211, 1
        %s1215 = smul.addr %s1214, 4
        %s1216 = scalar_lea.vmem [#allocation10], %s1215
        // Predicated region
        $region141: #{tpu_custom_call.1} parent=123 // pred_check
          %p1217 = pneg %p224
        $region142: #{tpu_custom_call.1} parent=123 // pred_check_branch
          %1219 = sbr.rel (%p1217) target = $region144
        $region143: #{tpu_custom_call.1} parent=123 // pred_region
          %1221 = dma.done %s1213, 64
        $region144: #{tpu_custom_call.1} parent=123 // pred_fallthru
          _
        %s1222 = sand.u32 %s61, 1
        %s1223 = scalar_lea.sflag [#allocation12], %s1222
        %s1224 = sand.u32 %s237, 1
        %s1225 = smul.addr %s1224, 512
        %s1226 = scalar_lea.vmem [#allocation11], %s1225
        // Predicated region
        $region145: #{tpu_custom_call.1} parent=123 // pred_check
          %p1227 = pneg %p250
        $region146: #{tpu_custom_call.1} parent=123 // pred_check_branch
          %1229 = sbr.rel (%p1227) target = $region148
        $region147: #{tpu_custom_call.1} parent=123 // pred_region
          %1231 = dma.done %s1223, 8192
        $region148: #{tpu_custom_call.1} parent=123 // pred_fallthru
          _
        %s1232 = sand.u32 %s61, 1
        %s1233 = scalar_lea.sflag [#allocation12], %s1232
        %s1234 = sand.u32 %s263, 1
        %s1235 = smul.addr %s1234, 8
        %s1236 = scalar_lea.vmem [#allocation13], %s1235
        // Predicated region
        $region149: #{tpu_custom_call.1} parent=123 // pred_check
          %p1237 = pneg %p276
        $region150: #{tpu_custom_call.1} parent=123 // pred_check_branch
          %1239 = sbr.rel (%p1237) target = $region152
        $region151: #{tpu_custom_call.1} parent=123 // pred_region
          %1241 = dma.done %s1233, 128
        $region152: #{tpu_custom_call.1} parent=123 // pred_fallthru
          _
        %s1242 = sand.u32 %s61, 1
        %s1243 = scalar_lea.sflag [#allocation15], %s1242
        %s1244 = sand.u32 %s289, 1
        %s1245 = smul.addr %s1244, 256
        %s1246 = scalar_lea.vmem [#allocation14], %s1245
        // Predicated region
        $region153: #{tpu_custom_call.1} parent=123 // pred_check
          %p1247 = pneg %p302
        $region154: #{tpu_custom_call.1} parent=123 // pred_check_branch
          %1249 = sbr.rel (%p1247) target = $region156
        $region155: #{tpu_custom_call.1} parent=123 // pred_region
          %1251 = dma.done %s1243, 4096
        $region156: #{tpu_custom_call.1} parent=123 // pred_fallthru
          _
        %s1252 = sand.u32 %s61, 1
        %s1253 = scalar_lea.sflag [#allocation15], %s1252
        %s1254 = sand.u32 %s341, 1
        %s1255 = scalar_lea.vmem [#allocation16], %s1254
        // Predicated region
        $region157: #{tpu_custom_call.1} parent=123 // pred_check
          %p1256 = pneg %p354
        $region158: #{tpu_custom_call.1} parent=123 // pred_check_branch
          %1258 = sbr.rel (%p1256) target = $region160
        $region159: #{tpu_custom_call.1} parent=123 // pred_region
          %1260 = dma.done %s1253, 16
        $region160: #{tpu_custom_call.1} parent=123 // pred_fallthru
          _
        %s1261 = sand.u32 %s61, 1
        %s1262 = scalar_lea.sflag [#allocation18], %s1261
        %s1263 = sand.u32 %s367, 1
        %s1264 = scalar_lea.vmem [#allocation17], %s1263
        // Predicated region
        $region161: #{tpu_custom_call.1} parent=123 // pred_check
          %p1265 = pneg %p380
        $region162: #{tpu_custom_call.1} parent=123 // pred_check_branch
          %1267 = sbr.rel (%p1265) target = $region164
        $region163: #{tpu_custom_call.1} parent=123 // pred_region
          %1269 = dma.done %s1262, 16
        $region164: #{tpu_custom_call.1} parent=123 // pred_fallthru
          _
        %s1270 = sand.u32 %s61, 1
        %s1271 = scalar_lea.sflag [#allocation18], %s1270
        %s1272 = sand.u32 %s393, 1
        %s1273 = smul.addr %s1272, 256
        %s1274 = scalar_lea.vmem [#allocation19], %s1273
        // Predicated region
        $region165: #{tpu_custom_call.1} parent=123 // pred_check
          %p1275 = pneg %p406
        $region166: #{tpu_custom_call.1} parent=123 // pred_check_branch
          %1277 = sbr.rel (%p1275) target = $region168
        $region167: #{tpu_custom_call.1} parent=123 // pred_region
          %1279 = dma.done %s1271, 4096
        $region168: #{tpu_custom_call.1} parent=123 // pred_fallthru
          _
        %s1280 = sand.u32 %s61, 1
        %s1281 = scalar_lea.sflag [#allocation21], %s1280
        %s1282 = sand.u32 %s445, 1
        %s1283 = smul.addr %s1282, 512
        %s1284 = scalar_lea.vmem [#allocation20], %s1283
        // Predicated region
        $region169: #{tpu_custom_call.1} parent=123 // pred_check
          %p1285 = pneg %p458
        $region170: #{tpu_custom_call.1} parent=123 // pred_check_branch
          %1287 = sbr.rel (%p1285) target = $region172
        $region171: #{tpu_custom_call.1} parent=123 // pred_region
          %1289 = dma.done %s1281, 8192
        $region172: #{tpu_custom_call.1} parent=123 // pred_fallthru
          _
        %s1290 = sand.u32 %s61, 1
        %s1291 = scalar_lea.sflag [#allocation21], %s1290
        %s1292 = sand.u32 %s471, 1
        %s1293 = smul.addr %s1292, 8
        %s1294 = scalar_lea.vmem [#allocation22], %s1293
        // Predicated region
        $region173: #{tpu_custom_call.1} parent=123 // pred_check
          %p1295 = pneg %p484
        $region174: #{tpu_custom_call.1} parent=123 // pred_check_branch
          %1297 = sbr.rel (%p1295) target = $region176
        $region175: #{tpu_custom_call.1} parent=123 // pred_region
          %1299 = dma.done %s1291, 128
        $region176: #{tpu_custom_call.1} parent=123 // pred_fallthru
          _
        %s1300 = sand.u32 %s61, 1
        %s1301 = scalar_lea.sflag [#allocation24], %s1300
        %s1302 = sand.u32 %s497, 1
        %s1303 = smul.addr %s1302, 256
        %s1304 = scalar_lea.vmem [#allocation23], %s1303
        // Predicated region
        $region177: #{tpu_custom_call.1} parent=123 // pred_check
          %p1305 = pneg %p510
        $region178: #{tpu_custom_call.1} parent=123 // pred_check_branch
          %1307 = sbr.rel (%p1305) target = $region180
        $region179: #{tpu_custom_call.1} parent=123 // pred_region
          %1309 = dma.done %s1301, 4096
        $region180: #{tpu_custom_call.1} parent=123 // pred_fallthru
          _
        %s1310 = sand.u32 %s61, 1
        %s1311 = scalar_lea.sflag [#allocation24], %s1310
        %s1312 = sand.u32 %s601, 1
        %s1313 = smul.addr %s1312, 64
        %s1314 = scalar_lea.vmem [#allocation25], %s1313
        // Predicated region
        $region181: #{tpu_custom_call.1} parent=123 // pred_check
          %p1315 = pneg %p614
        $region182: #{tpu_custom_call.1} parent=123 // pred_check_branch
          %1317 = sbr.rel (%p1315) target = $region184
        $region183: #{tpu_custom_call.1} parent=123 // pred_region
          %1319 = dma.done %s1311, 1024
        $region184: #{tpu_custom_call.1} parent=123 // pred_fallthru
          _
        %s1320 = sand.u32 %s61, 1
        %s1321 = scalar_lea.sflag [#allocation27], %s1320
        %s1322 = sand.u32 %s653, 1
        %s1323 = smul.addr %s1322, 64
        %s1324 = scalar_lea.vmem [#allocation26], %s1323
        // Predicated region
        $region185: #{tpu_custom_call.1} parent=123 // pred_check
          %p1325 = pneg %p666
        $region186: #{tpu_custom_call.1} parent=123 // pred_check_branch
          %1327 = sbr.rel (%p1325) target = $region188
        $region187: #{tpu_custom_call.1} parent=123 // pred_region
          %1329 = dma.done %s1321, 1024
        $region188: #{tpu_custom_call.1} parent=123 // pred_fallthru
          _
        %s1330 = sand.u32 %s61, 1
        %s1331 = scalar_lea.sflag [#allocation27], %s1330
        %s1332 = sand.u32 %s705, 1
        %s1333 = scalar_lea.vmem [#allocation28], %s1332
        // Predicated region
        $region189: #{tpu_custom_call.1} parent=123 // pred_check
          %p1334 = pneg %p718
        $region190: #{tpu_custom_call.1} parent=123 // pred_check_branch
          %1336 = sbr.rel (%p1334) target = $region192
        $region191: #{tpu_custom_call.1} parent=123 // pred_region
          %1338 = dma.done %s1331, 16
        $region192: #{tpu_custom_call.1} parent=123 // pred_fallthru
          _
        %p1339 = pneg %p94
        %p1340 = pneg %p91
        %p1341 = pneg %p120
        %p1342 = pneg %p117
        %p1343 = pneg %p146
        %p1344 = pneg %p143
        %s1345 = smul.u32 2, %s65
        %p1346 = scmp.lt.s32.totalorder %s1345, 1
        %s1347 = scalar_select %p1346, %s1345, 1
        %s1348 = scalar_lea.vmem %s3, %s1347
        %p1349 = pneg %p172
        %p1350 = pneg %p169
        %s1351 = sand.u32 %s61, 1
        %s1352 = scalar_lea.sflag [#allocation9], %s1351
        %s1353 = sand.u32 %s185, 1
        %s1354 = smul.addr %s1353, 256
        %s1355 = scalar_lea.vmem [#allocation8], %s1354
        %p1356 = pneg %p198
        %p1357 = pneg %p195
        %s1358 = sand.u32 %s61, 1
        %s1359 = scalar_lea.sflag [#allocation9], %s1358
        %s1360 = sand.u32 %s211, 1
        %s1361 = smul.addr %s1360, 4
        %s1362 = scalar_lea.vmem [#allocation10], %s1361
        %p1363 = pneg %p224
        %p1364 = pneg %p221
        %s1365 = sand.u32 %s61, 1
        %s1366 = scalar_lea.sflag [#allocation12], %s1365
        %s1367 = sand.u32 %s237, 1
        %s1368 = smul.addr %s1367, 512
        %s1369 = scalar_lea.vmem [#allocation11], %s1368
        %p1370 = pneg %p250
        %p1371 = pneg %p247
        %s1372 = sand.u32 %s61, 1
        %s1373 = scalar_lea.sflag [#allocation12], %s1372
        %s1374 = sand.u32 %s263, 1
        %s1375 = smul.addr %s1374, 8
        %s1376 = scalar_lea.vmem [#allocation13], %s1375
        %p1377 = pneg %p276
        %p1378 = pneg %p273
        %s1379 = sand.u32 %s61, 1
        %s1380 = scalar_lea.sflag [#allocation15], %s1379
        %s1381 = sand.u32 %s289, 1
        %s1382 = smul.addr %s1381, 256
        %s1383 = scalar_lea.vmem [#allocation14], %s1382
        %p1384 = pneg %p302
        %p1385 = pneg %p299
        %p1386 = scmp.lt.s32.totalorder %s66, 1
        %s1387 = scalar_select %p1386, %s66, 1
        %s1388 = scalar_lea.vmem %s9, %s1387
        %p1389 = pneg %p328
        %p1390 = pneg %p325
        %s1391 = sand.u32 %s61, 1
        %s1392 = scalar_lea.sflag [#allocation15], %s1391
        %s1393 = sand.u32 %s341, 1
        %s1394 = scalar_lea.vmem [#allocation16], %s1393
        %p1395 = pneg %p354
        %p1396 = pneg %p351
        %s1397 = sand.u32 %s61, 1
        %s1398 = scalar_lea.sflag [#allocation18], %s1397
        %s1399 = sand.u32 %s367, 1
        %s1400 = scalar_lea.vmem [#allocation17], %s1399
        %p1401 = pneg %p380
        %p1402 = pneg %p377
        %s1403 = sand.u32 %s61, 1
        %s1404 = scalar_lea.sflag [#allocation18], %s1403
        %s1405 = sand.u32 %s393, 1
        %s1406 = smul.addr %s1405, 256
        %s1407 = scalar_lea.vmem [#allocation19], %s1406
        %p1408 = pneg %p406
        %p1409 = pneg %p403
        %p1410 = scmp.lt.s32.totalorder %s66, 1
        %s1411 = scalar_select %p1410, %s66, 1
        %s1412 = smul.addr %s1411, 4
        %s1413 = scalar_lea.vmem %s13, %s1412
        %p1414 = pneg %p432
        %p1415 = pneg %p429
        %s1416 = sand.u32 %s61, 1
        %s1417 = scalar_lea.sflag [#allocation21], %s1416
        %s1418 = sand.u32 %s445, 1
        %s1419 = smul.addr %s1418, 512
        %s1420 = scalar_lea.vmem [#allocation20], %s1419
        %p1421 = pneg %p458
        %p1422 = pneg %p455
        %s1423 = sand.u32 %s61, 1
        %s1424 = scalar_lea.sflag [#allocation21], %s1423
        %s1425 = sand.u32 %s471, 1
        %s1426 = smul.addr %s1425, 8
        %s1427 = scalar_lea.vmem [#allocation22], %s1426
        %p1428 = pneg %p484
        %p1429 = pneg %p481
        %s1430 = sand.u32 %s61, 1
        %s1431 = scalar_lea.sflag [#allocation24], %s1430
        %s1432 = sand.u32 %s497, 1
        %s1433 = smul.addr %s1432, 256
        %s1434 = scalar_lea.vmem [#allocation23], %s1433
        %p1435 = pneg %p510
        %p1436 = pneg %p507
        %p1437 = scmp.lt.s32.totalorder %s66, 1
        %s1438 = scalar_select %p1437, %s66, 1
        %s1439 = scalar_lea.vmem %s17, %s1438
        %p1440 = pneg %p536
        %p1441 = pneg %p533
        %p1442 = scmp.lt.s32.totalorder %s66, 1
        %s1443 = scalar_select %p1442, %s66, 1
        %s1444 = scalar_lea.vmem %s18, %s1443
        %p1445 = pneg %p562
        %p1446 = pneg %p559
        %p1447 = scmp.lt.s32.totalorder %s66, 1
        %s1448 = scalar_select %p1447, %s66, 1
        %s1449 = scalar_lea.vmem %s19, %s1448
        %p1450 = pneg %p588
        %p1451 = pneg %p585
        %s1452 = sand.u32 %s61, 1
        %s1453 = scalar_lea.sflag [#allocation24], %s1452
        %s1454 = sand.u32 %s601, 1
        %s1455 = smul.addr %s1454, 64
        %s1456 = scalar_lea.vmem [#allocation25], %s1455
        %p1457 = pneg %p614
        %p1458 = pneg %p611
        %p1459 = scmp.lt.s32.totalorder %s66, 1
        %s1460 = scalar_select %p1459, %s66, 1
        %s1461 = scalar_lea.vmem %s21, %s1460
        %p1462 = pneg %p640
        %p1463 = pneg %p637
        %s1464 = sand.u32 %s61, 1
        %s1465 = scalar_lea.sflag [#allocation27], %s1464
        %s1466 = sand.u32 %s653, 1
        %s1467 = smul.addr %s1466, 64
        %s1468 = scalar_lea.vmem [#allocation26], %s1467
        %p1469 = pneg %p666
        %p1470 = pneg %p663
        %p1471 = scmp.lt.s32.totalorder %s66, 1
        %s1472 = scalar_select %p1471, %s66, 1
        %s1473 = scalar_lea.vmem %s23, %s1472
        %p1474 = pneg %p692
        %p1475 = pneg %p689
        %s1476 = sand.u32 %s61, 1
        %s1477 = scalar_lea.sflag [#allocation27], %s1476
        %s1478 = sand.u32 %s705, 1
        %s1479 = scalar_lea.vmem [#allocation28], %s1478
        %p1480 = pneg %p718
        %p1481 = pneg %p715
        %p1482 = scmp.lt.s32.totalorder %s66, 1
        %s1483 = scalar_select %p1482, %s66, 1
        %s1484 = scalar_lea.vmem %s25, %s1483
        %p1485 = pneg %p744
        %p1486 = pneg %p741
        %p1487 = pneg %p770
        %p1488 = pneg %p767
        %s1489 = smul.u32 2, %s65
        %s1490 = smul.u32 2, %s65
        %s1491 = smul.u32 2, %s65
        %s1492 = smul.u32 2, %s65
        %p1493 = scmp.lt.s32.totalorder %s1492, 1
        %s1494 = scalar_select %p1493, %s1492, 1
        %s1495 = scalar_lea.vmem %s3, %s1494
        %s1496 = smul.u32 2, %s65
        %p1497 = scmp.lt.s32.totalorder %s66, 1
        %s1498 = scalar_select %p1497, %s66, 1
        %s1499 = scalar_lea.vmem %s9, %s1498
        %p1500 = scmp.lt.s32.totalorder %s66, 1
        %s1501 = scalar_select %p1500, %s66, 1
        %s1502 = smul.addr %s1501, 4
        %s1503 = scalar_lea.vmem %s13, %s1502
        %p1504 = scmp.lt.s32.totalorder %s66, 1
        %s1505 = scalar_select %p1504, %s66, 1
        %s1506 = scalar_lea.vmem %s17, %s1505
        %p1507 = scmp.lt.s32.totalorder %s66, 1
        %s1508 = scalar_select %p1507, %s66, 1
        %s1509 = scalar_lea.vmem %s18, %s1508
        %p1510 = scmp.lt.s32.totalorder %s66, 1
        %s1511 = scalar_select %p1510, %s66, 1
        %s1512 = scalar_lea.vmem %s19, %s1511
        %p1513 = scmp.lt.s32.totalorder %s66, 1
        %s1514 = scalar_select %p1513, %s66, 1
        %s1515 = scalar_lea.vmem %s21, %s1514
        %p1516 = scmp.lt.s32.totalorder %s66, 1
        %s1517 = scalar_select %p1516, %s66, 1
        %s1518 = scalar_lea.vmem %s23, %s1517
        %p1519 = scmp.lt.s32.totalorder %s66, 1
        %s1520 = scalar_select %p1519, %s66, 1
        %s1521 = scalar_lea.vmem %s25, %s1520
        %s1522 = smul.u32 2, %s65
        %p1524 = scmp.eq.s32.totalorder %s66, 0
        // Predicated region
        $region193: #{tpu_custom_call.1} parent=123 // pred_check
          %p1525 = pneg %p1524
        $region194: #{tpu_custom_call.1} parent=123 // pred_check_branch
          %1527 = sbr.rel (%p1525) target = $region196
        $region195: #{tpu_custom_call.1} parent=123 // pred_region
          %v1528 = vld [vmem:[#allocation2] sm:$0xf]
          %v1529 = vld [vmem:[#allocation2 + $0x4] sm:$0xf]
          %1530 = vst [vmem:[#allocation29] sm:$0xf] %v1528
          %1531 = vst [vmem:[#allocation29 + $0x4] sm:$0xf] %v1529
        $region196: #{tpu_custom_call.1} parent=123 // pred_fallthru
          _
        %v1532 = vld [vmem:[#allocation29] sm:$0xf]
        %v1533 = vld [vmem:[#allocation29 + $0x4] sm:$0xf]
        %v1534 = vunpack.c.l.bf16 %v1532
        %v1535 = vunpack.c.l.bf16 %v1533
        %v1536 = vld [vmem:[#allocation5] sm:$0xf]
        %v1537 = vld [vmem:[#allocation5 + $0x4] sm:$0xf]
        %v1538 = vld [vmem:[#allocation7] sm:$0x1]
        %v1539 = vld [vmem:[#allocation7 + $0x1] sm:$0x1]
        %vm1540 = vcmp.eq.s32.totalorder %v1538, 0
        %vm1541 = vcmp.eq.s32.totalorder %v1539, 0
        %v1542 = vld [vmem:[%s1495] sm:$0x1]
        %v1543 = vld [vmem:[%s1495 + $0x1] sm:$0x1]
        %vm1544 = vcmp.eq.s32.totalorder %v1542, 0
        %vm1545 = vcmp.eq.s32.totalorder %v1543, 0
        %v1546 = vlaneseq
        %v1547 = vand.u32 %v1546, 127
        %vm1548 = vcmp.lt.s32.totalorder %v1547, 32
        %v1549 = vsel %vm1548, 1, 0
        %v1550 = vcvt.s32.f32 %v1549
        %v1551 = vlaneseq
        %v1552 = vshrl.u32 %v1551, 7
        %vm1553 = vcmp.gt.s32.totalorder %v1547, %v1552
        %v1554 = vpack.c.bf16 %v1535, %v1534
        %v1555 = vld [vmem:[%s1206] sm:$0xff]
        %v1556 = vld [vmem:[%s1206 + $0x8] sm:$0xff]
        %v1557 = vld [vmem:[%s1206 + $0x10] sm:$0xff]
        %v1558 = vld [vmem:[%s1206 + $0x18] sm:$0xff]
        %v1559 = vld [vmem:[%s1206 + $0x20] sm:$0xff]
        %v1560 = vld [vmem:[%s1206 + $0x28] sm:$0xff]
        %v1561 = vld [vmem:[%s1206 + $0x30] sm:$0xff]
        %v1562 = vld [vmem:[%s1206 + $0x38] sm:$0xff]
        %v1563 = vld [vmem:[%s1206 + $0x40] sm:$0xff]
        %v1564 = vld [vmem:[%s1206 + $0x48] sm:$0xff]
        %v1565 = vld [vmem:[%s1206 + $0x50] sm:$0xff]
        %v1566 = vld [vmem:[%s1206 + $0x58] sm:$0xff]
        %v1567 = vld [vmem:[%s1206 + $0x60] sm:$0xff]
        %v1568 = vld [vmem:[%s1206 + $0x68] sm:$0xff]
        %v1569 = vld [vmem:[%s1206 + $0x70] sm:$0xff]
        %v1570 = vld [vmem:[%s1206 + $0x78] sm:$0xff]
        %v1571 = vld [vmem:[%s1206 + $0x80] sm:$0xff]
        %v1572 = vld [vmem:[%s1206 + $0x88] sm:$0xff]
        %v1573 = vld [vmem:[%s1206 + $0x90] sm:$0xff]
        %v1574 = vld [vmem:[%s1206 + $0x98] sm:$0xff]
        %v1575 = vld [vmem:[%s1206 + $0xa0] sm:$0xff]
        %v1576 = vld [vmem:[%s1206 + $0xa8] sm:$0xff]
        %v1577 = vld [vmem:[%s1206 + $0xb0] sm:$0xff]
        %v1578 = vld [vmem:[%s1206 + $0xb8] sm:$0xff]
        %v1579 = vld [vmem:[%s1206 + $0xc0] sm:$0xff]
        %v1580 = vld [vmem:[%s1206 + $0xc8] sm:$0xff]
        %v1581 = vld [vmem:[%s1206 + $0xd0] sm:$0xff]
        %v1582 = vld [vmem:[%s1206 + $0xd8] sm:$0xff]
        %v1583 = vld [vmem:[%s1206 + $0xe0] sm:$0xff]
        %v1584 = vld [vmem:[%s1206 + $0xe8] sm:$0xff]
        %v1585 = vld [vmem:[%s1206 + $0xf0] sm:$0xff]
        %v1586 = vld [vmem:[%s1206 + $0xf8] sm:$0xff]
        %v1587 = vld [vmem:[%s1216] sm:$0xf]
        %v1589 = vperm.slane %v1587, 0
        %v1590 = vperm.slane %v1587, 1
        %v1591 = vperm.slane %v1587, 2
        %v1592 = vperm.slane %v1587, 3
        %v1629 = vunpack.c.l.b16 %v1555
        %v1630 = vunpack.c.h.b16 %v1555
        %v1631 = vunpack.c.l.b16 %v1556
        %v1632 = vunpack.c.h.b16 %v1556
        %v1633 = vunpack.c.l.b16 %v1557
        %v1634 = vunpack.c.h.b16 %v1557
        %v1635 = vunpack.c.l.b16 %v1558
        %v1636 = vunpack.c.h.b16 %v1558
        %v1637 = vunpack.c.l.b16 %v1559
        %v1638 = vunpack.c.h.b16 %v1559
        %v1639 = vunpack.c.l.b16 %v1560
        %v1640 = vunpack.c.h.b16 %v1560
        %v1641 = vunpack.c.l.b16 %v1561
        %v1642 = vunpack.c.h.b16 %v1561
        %v1643 = vunpack.c.l.b16 %v1562
        %v1644 = vunpack.c.h.b16 %v1562
        %v1645 = vunpack.c.l.b16 %v1563
        %v1646 = vunpack.c.h.b16 %v1563
        %v1647 = vunpack.c.l.b16 %v1564
        %v1648 = vunpack.c.h.b16 %v1564
        %v1649 = vunpack.c.l.b16 %v1565
        %v1650 = vunpack.c.h.b16 %v1565
        %v1651 = vunpack.c.l.b16 %v1566
        %v1652 = vunpack.c.h.b16 %v1566
        %v1653 = vunpack.c.l.b16 %v1567
        %v1654 = vunpack.c.h.b16 %v1567
        %v1655 = vunpack.c.l.b16 %v1568
        %v1656 = vunpack.c.h.b16 %v1568
        %v1657 = vunpack.c.l.b16 %v1569
        %v1658 = vunpack.c.h.b16 %v1569
        %v1659 = vunpack.c.l.b16 %v1570
        %v1660 = vunpack.c.h.b16 %v1570
        %v1661 = vunpack.c.l.b16 %v1571
        %v1662 = vunpack.c.h.b16 %v1571
        %v1663 = vunpack.c.l.b16 %v1572
        %v1664 = vunpack.c.h.b16 %v1572
        %v1665 = vunpack.c.l.b16 %v1573
        %v1666 = vunpack.c.h.b16 %v1573
        %v1667 = vunpack.c.l.b16 %v1574
        %v1668 = vunpack.c.h.b16 %v1574
        %v1669 = vunpack.c.l.b16 %v1575
        %v1670 = vunpack.c.h.b16 %v1575
        %v1671 = vunpack.c.l.b16 %v1576
        %v1672 = vunpack.c.h.b16 %v1576
        %v1673 = vunpack.c.l.b16 %v1577
        %v1674 = vunpack.c.h.b16 %v1577
        %v1675 = vunpack.c.l.b16 %v1578
        %v1676 = vunpack.c.h.b16 %v1578
        %v1677 = vunpack.c.l.b16 %v1579
        %v1678 = vunpack.c.h.b16 %v1579
        %v1679 = vunpack.c.l.b16 %v1580
        %v1680 = vunpack.c.h.b16 %v1580
        %v1681 = vunpack.c.l.b16 %v1581
        %v1682 = vunpack.c.h.b16 %v1581
        %v1683 = vunpack.c.l.b16 %v1582
        %v1684 = vunpack.c.h.b16 %v1582
        %v1685 = vunpack.c.l.b16 %v1583
        %v1686 = vunpack.c.h.b16 %v1583
        %v1687 = vunpack.c.l.b16 %v1584
        %v1688 = vunpack.c.h.b16 %v1584
        %v1689 = vunpack.c.l.b16 %v1585
        %v1690 = vunpack.c.h.b16 %v1585
        %v1691 = vunpack.c.l.b16 %v1586
        %v1692 = vunpack.c.h.b16 %v1586
        %v1693 = vpack.c.b16 %v1633, %v1629
        %v1694 = vpack.c.b16 %v1634, %v1630
        %v1695 = vpack.c.b16 %v1635, %v1631
        %v1696 = vpack.c.b16 %v1636, %v1632
        %v1697 = vpack.c.b16 %v1641, %v1637
        %v1698 = vpack.c.b16 %v1642, %v1638
        %v1699 = vpack.c.b16 %v1643, %v1639
        %v1700 = vpack.c.b16 %v1644, %v1640
        %v1701 = vpack.c.b16 %v1649, %v1645
        %v1702 = vpack.c.b16 %v1650, %v1646
        %v1703 = vpack.c.b16 %v1651, %v1647
        %v1704 = vpack.c.b16 %v1652, %v1648
        %v1705 = vpack.c.b16 %v1657, %v1653
        %v1706 = vpack.c.b16 %v1658, %v1654
        %v1707 = vpack.c.b16 %v1659, %v1655
        %v1708 = vpack.c.b16 %v1660, %v1656
        %v1709 = vpack.c.b16 %v1665, %v1661
        %v1710 = vpack.c.b16 %v1666, %v1662
        %v1711 = vpack.c.b16 %v1667, %v1663
        %v1712 = vpack.c.b16 %v1668, %v1664
        %v1713 = vpack.c.b16 %v1673, %v1669
        %v1714 = vpack.c.b16 %v1674, %v1670
        %v1715 = vpack.c.b16 %v1675, %v1671
        %v1716 = vpack.c.b16 %v1676, %v1672
        %v1717 = vpack.c.b16 %v1681, %v1677
        %v1718 = vpack.c.b16 %v1682, %v1678
        %v1719 = vpack.c.b16 %v1683, %v1679
        %v1720 = vpack.c.b16 %v1684, %v1680
        %v1721 = vpack.c.b16 %v1689, %v1685
        %v1722 = vpack.c.b16 %v1690, %v1686
        %v1723 = vpack.c.b16 %v1691, %v1687
        %v1724 = vpack.c.b16 %v1692, %v1688
        %1757 = vmatpush.bf16.msra.mxu0 %v1721
        %1758 = vmatpush.bf16.msra.mxu0 %v1717
        %1759 = vmatpush.bf16.msra.mxu0 %v1713
        %1760 = vmatpush.bf16.msra.mxu0 %v1709
        %1761 = vmatpush.bf16.msra.mxu0 %v1705
        %1762 = vmatpush.bf16.msra.mxu0 %v1701
        %1763 = vmatpush.bf16.msra.mxu0 %v1697
        %1764 = vmatpush.bf16.msra.mxu0 %v1693
        %1765 = vmatmul.bf16.gmra.mxu0 %v1554
        %v1766 = vpop.f32.mrf.mxu0
        %v1767 = vadd.f32 %v1589, %v1766
        %v1768 = vpop.f32.mrf.mxu0
        %v1769 = vadd.f32 %v1589, %v1768
        %1770 = vdwg.mxu0
        %1771 = vmatpush.bf16.msra.mxu0 %v1722
        %1772 = vmatpush.bf16.msra.mxu0 %v1718
        %1773 = vmatpush.bf16.msra.mxu0 %v1714
        %1774 = vmatpush.bf16.msra.mxu0 %v1710
        %1775 = vmatpush.bf16.msra.mxu0 %v1706
        %1776 = vmatpush.bf16.msra.mxu0 %v1702
        %1777 = vmatpush.bf16.msra.mxu0 %v1698
        %1778 = vmatpush.bf16.msra.mxu0 %v1694
        %1779 = vmatmul.bf16.gmra.mxu0 %v1554
        %v1780 = vpop.f32.mrf.mxu0
        %v1781 = vadd.f32 %v1590, %v1780
        %v1782 = vpop.f32.mrf.mxu0
        %v1783 = vadd.f32 %v1590, %v1782
        %1784 = vdwg.mxu0
        %1785 = vmatpush.bf16.msra.mxu0 %v1723
        %1786 = vmatpush.bf16.msra.mxu0 %v1719
        %1787 = vmatpush.bf16.msra.mxu0 %v1715
        %1788 = vmatpush.bf16.msra.mxu0 %v1711
        %1789 = vmatpush.bf16.msra.mxu0 %v1707
        %1790 = vmatpush.bf16.msra.mxu0 %v1703
        %1791 = vmatpush.bf16.msra.mxu0 %v1699
        %1792 = vmatpush.bf16.msra.mxu0 %v1695
        %1793 = vmatmul.bf16.gmra.mxu0 %v1554
        %v1794 = vpop.f32.mrf.mxu0
        %v1795 = vadd.f32 %v1591, %v1794
        %v1796 = vpop.f32.mrf.mxu0
        %v1797 = vadd.f32 %v1591, %v1796
        %1798 = vdwg.mxu0
        %1799 = vmatpush.bf16.msra.mxu0 %v1724
        %1800 = vmatpush.bf16.msra.mxu0 %v1720
        %1801 = vmatpush.bf16.msra.mxu0 %v1716
        %1802 = vmatpush.bf16.msra.mxu0 %v1712
        %1803 = vmatpush.bf16.msra.mxu0 %v1708
        %1804 = vmatpush.bf16.msra.mxu0 %v1704
        %1805 = vmatpush.bf16.msra.mxu0 %v1700
        %1806 = vmatpush.bf16.msra.mxu0 %v1696
        %1807 = vmatmul.bf16.gmra.mxu0 %v1554
        %v1808 = vpop.f32.mrf.mxu0
        %v1809 = vadd.f32 %v1592, %v1808
        %v1810 = vpop.f32.mrf.mxu0
        %v1811 = vadd.f32 %v1592, %v1810
        %1812 = vdwg.mxu0
        %v1813 = vld [vmem:[%s1226] sm:$0xff]
        %v1814 = vld [vmem:[%s1226 + $0x8] sm:$0xff]
        %v1815 = vld [vmem:[%s1226 + $0x10] sm:$0xff]
        %v1816 = vld [vmem:[%s1226 + $0x18] sm:$0xff]
        %v1817 = vld [vmem:[%s1226 + $0x20] sm:$0xff]
        %v1818 = vld [vmem:[%s1226 + $0x28] sm:$0xff]
        %v1819 = vld [vmem:[%s1226 + $0x30] sm:$0xff]
        %v1820 = vld [vmem:[%s1226 + $0x38] sm:$0xff]
        %v1821 = vld [vmem:[%s1226 + $0x40] sm:$0xff]
        %v1822 = vld [vmem:[%s1226 + $0x48] sm:$0xff]
        %v1823 = vld [vmem:[%s1226 + $0x50] sm:$0xff]
        %v1824 = vld [vmem:[%s1226 + $0x58] sm:$0xff]
        %v1825 = vld [vmem:[%s1226 + $0x60] sm:$0xff]
        %v1826 = vld [vmem:[%s1226 + $0x68] sm:$0xff]
        %v1827 = vld [vmem:[%s1226 + $0x70] sm:$0xff]
        %v1828 = vld [vmem:[%s1226 + $0x78] sm:$0xff]
        %v1829 = vld [vmem:[%s1226 + $0x80] sm:$0xff]
        %v1830 = vld [vmem:[%s1226 + $0x88] sm:$0xff]
        %v1831 = vld [vmem:[%s1226 + $0x90] sm:$0xff]
        %v1832 = vld [vmem:[%s1226 + $0x98] sm:$0xff]
        %v1833 = vld [vmem:[%s1226 + $0xa0] sm:$0xff]
        %v1834 = vld [vmem:[%s1226 + $0xa8] sm:$0xff]
        %v1835 = vld [vmem:[%s1226 + $0xb0] sm:$0xff]
        %v1836 = vld [vmem:[%s1226 + $0xb8] sm:$0xff]
        %v1837 = vld [vmem:[%s1226 + $0xc0] sm:$0xff]
        %v1838 = vld [vmem:[%s1226 + $0xc8] sm:$0xff]
        %v1839 = vld [vmem:[%s1226 + $0xd0] sm:$0xff]
        %v1840 = vld [vmem:[%s1226 + $0xd8] sm:$0xff]
        %v1841 = vld [vmem:[%s1226 + $0xe0] sm:$0xff]
        %v1842 = vld [vmem:[%s1226 + $0xe8] sm:$0xff]
        %v1843 = vld [vmem:[%s1226 + $0xf0] sm:$0xff]
        %v1844 = vld [vmem:[%s1226 + $0xf8] sm:$0xff]
        %v1845 = vld [vmem:[%s1226 + $0x100] sm:$0xff]
        %v1846 = vld [vmem:[%s1226 + $0x108] sm:$0xff]
        %v1847 = vld [vmem:[%s1226 + $0x110] sm:$0xff]
        %v1848 = vld [vmem:[%s1226 + $0x118] sm:$0xff]
        %v1849 = vld [vmem:[%s1226 + $0x120] sm:$0xff]
        %v1850 = vld [vmem:[%s1226 + $0x128] sm:$0xff]
        %v1851 = vld [vmem:[%s1226 + $0x130] sm:$0xff]
        %v1852 = vld [vmem:[%s1226 + $0x138] sm:$0xff]
        %v1853 = vld [vmem:[%s1226 + $0x140] sm:$0xff]
        %v1854 = vld [vmem:[%s1226 + $0x148] sm:$0xff]
        %v1855 = vld [vmem:[%s1226 + $0x150] sm:$0xff]
        %v1856 = vld [vmem:[%s1226 + $0x158] sm:$0xff]
        %v1857 = vld [vmem:[%s1226 + $0x160] sm:$0xff]
        %v1858 = vld [vmem:[%s1226 + $0x168] sm:$0xff]
        %v1859 = vld [vmem:[%s1226 + $0x170] sm:$0xff]
        %v1860 = vld [vmem:[%s1226 + $0x178] sm:$0xff]
        %v1861 = vld [vmem:[%s1226 + $0x180] sm:$0xff]
        %v1862 = vld [vmem:[%s1226 + $0x188] sm:$0xff]
        %v1863 = vld [vmem:[%s1226 + $0x190] sm:$0xff]
        %v1864 = vld [vmem:[%s1226 + $0x198] sm:$0xff]
        %v1865 = vld [vmem:[%s1226 + $0x1a0] sm:$0xff]
        %v1866 = vld [vmem:[%s1226 + $0x1a8] sm:$0xff]
        %v1867 = vld [vmem:[%s1226 + $0x1b0] sm:$0xff]
        %v1868 = vld [vmem:[%s1226 + $0x1b8] sm:$0xff]
        %v1869 = vld [vmem:[%s1226 + $0x1c0] sm:$0xff]
        %v1870 = vld [vmem:[%s1226 + $0x1c8] sm:$0xff]
        %v1871 = vld [vmem:[%s1226 + $0x1d0] sm:$0xff]
        %v1872 = vld [vmem:[%s1226 + $0x1d8] sm:$0xff]
        %v1873 = vld [vmem:[%s1226 + $0x1e0] sm:$0xff]
        %v1874 = vld [vmem:[%s1226 + $0x1e8] sm:$0xff]
        %v1875 = vld [vmem:[%s1226 + $0x1f0] sm:$0xff]
        %v1876 = vld [vmem:[%s1226 + $0x1f8] sm:$0xff]
        %v1877 = vld [vmem:[%s1236] sm:$0xff]
        %v1879 = vperm.slane %v1877, 0
        %v1880 = vperm.slane %v1877, 1
        %v1881 = vperm.slane %v1877, 2
        %v1882 = vperm.slane %v1877, 3
        %v1883 = vperm.slane %v1877, 4
        %v1884 = vperm.slane %v1877, 5
        %v1885 = vperm.slane %v1877, 6
        %v1886 = vperm.slane %v1877, 7
        %v1959 = vunpack.c.l.b16 %v1813
        %v1960 = vunpack.c.h.b16 %v1813
        %v1961 = vunpack.c.l.b16 %v1814
        %v1962 = vunpack.c.h.b16 %v1814
        %v1963 = vunpack.c.l.b16 %v1815
        %v1964 = vunpack.c.h.b16 %v1815
        %v1965 = vunpack.c.l.b16 %v1816
        %v1966 = vunpack.c.h.b16 %v1816
        %v1967 = vunpack.c.l.b16 %v1817
        %v1968 = vunpack.c.h.b16 %v1817
        %v1969 = vunpack.c.l.b16 %v1818
        %v1970 = vunpack.c.h.b16 %v1818
        %v1971 = vunpack.c.l.b16 %v1819
        %v1972 = vunpack.c.h.b16 %v1819
        %v1973 = vunpack.c.l.b16 %v1820
        %v1974 = vunpack.c.h.b16 %v1820
        %v1975 = vunpack.c.l.b16 %v1821
        %v1976 = vunpack.c.h.b16 %v1821
        %v1977 = vunpack.c.l.b16 %v1822
        %v1978 = vunpack.c.h.b16 %v1822
        %v1979 = vunpack.c.l.b16 %v1823
        %v1980 = vunpack.c.h.b16 %v1823
        %v1981 = vunpack.c.l.b16 %v1824
        %v1982 = vunpack.c.h.b16 %v1824
        %v1983 = vunpack.c.l.b16 %v1825
        %v1984 = vunpack.c.h.b16 %v1825
        %v1985 = vunpack.c.l.b16 %v1826
        %v1986 = vunpack.c.h.b16 %v1826
        %v1987 = vunpack.c.l.b16 %v1827
        %v1988 = vunpack.c.h.b16 %v1827
        %v1989 = vunpack.c.l.b16 %v1828
        %v1990 = vunpack.c.h.b16 %v1828
        %v1991 = vunpack.c.l.b16 %v1829
        %v1992 = vunpack.c.h.b16 %v1829
        %v1993 = vunpack.c.l.b16 %v1830
        %v1994 = vunpack.c.h.b16 %v1830
        %v1995 = vunpack.c.l.b16 %v1831
        %v1996 = vunpack.c.h.b16 %v1831
        %v1997 = vunpack.c.l.b16 %v1832
        %v1998 = vunpack.c.h.b16 %v1832
        %v1999 = vunpack.c.l.b16 %v1833
        %v2000 = vunpack.c.h.b16 %v1833
        %v2001 = vunpack.c.l.b16 %v1834
        %v2002 = vunpack.c.h.b16 %v1834
        %v2003 = vunpack.c.l.b16 %v1835
        %v2004 = vunpack.c.h.b16 %v1835
        %v2005 = vunpack.c.l.b16 %v1836
        %v2006 = vunpack.c.h.b16 %v1836
        %v2007 = vunpack.c.l.b16 %v1837
        %v2008 = vunpack.c.h.b16 %v1837
        %v2009 = vunpack.c.l.b16 %v1838
        %v2010 = vunpack.c.h.b16 %v1838
        %v2011 = vunpack.c.l.b16 %v1839
        %v2012 = vunpack.c.h.b16 %v1839
        %v2013 = vunpack.c.l.b16 %v1840
        %v2014 = vunpack.c.h.b16 %v1840
        %v2015 = vunpack.c.l.b16 %v1841
        %v2016 = vunpack.c.h.b16 %v1841
        %v2017 = vunpack.c.l.b16 %v1842
        %v2018 = vunpack.c.h.b16 %v1842
        %v2019 = vunpack.c.l.b16 %v1843
        %v2020 = vunpack.c.h.b16 %v1843
        %v2021 = vunpack.c.l.b16 %v1844
        %v2022 = vunpack.c.h.b16 %v1844
        %v2023 = vunpack.c.l.b16 %v1845
        %v2024 = vunpack.c.h.b16 %v1845
        %v2025 = vunpack.c.l.b16 %v1846
        %v2026 = vunpack.c.h.b16 %v1846
        %v2027 = vunpack.c.l.b16 %v1847
        %v2028 = vunpack.c.h.b16 %v1847
        %v2029 = vunpack.c.l.b16 %v1848
        %v2030 = vunpack.c.h.b16 %v1848
        %v2031 = vunpack.c.l.b16 %v1849
        %v2032 = vunpack.c.h.b16 %v1849
        %v2033 = vunpack.c.l.b16 %v1850
        %v2034 = vunpack.c.h.b16 %v1850
        %v2035 = vunpack.c.l.b16 %v1851
        %v2036 = vunpack.c.h.b16 %v1851
        %v2037 = vunpack.c.l.b16 %v1852
        %v2038 = vunpack.c.h.b16 %v1852
        %v2039 = vunpack.c.l.b16 %v1853
        %v2040 = vunpack.c.h.b16 %v1853
        %v2041 = vunpack.c.l.b16 %v1854
        %v2042 = vunpack.c.h.b16 %v1854
        %v2043 = vunpack.c.l.b16 %v1855
        %v2044 = vunpack.c.h.b16 %v1855
        %v2045 = vunpack.c.l.b16 %v1856
        %v2046 = vunpack.c.h.b16 %v1856
        %v2047 = vunpack.c.l.b16 %v1857
        %v2048 = vunpack.c.h.b16 %v1857
        %v2049 = vunpack.c.l.b16 %v1858
        %v2050 = vunpack.c.h.b16 %v1858
        %v2051 = vunpack.c.l.b16 %v1859
        %v2052 = vunpack.c.h.b16 %v1859
        %v2053 = vunpack.c.l.b16 %v1860
        %v2054 = vunpack.c.h.b16 %v1860
        %v2055 = vunpack.c.l.b16 %v1861
        %v2056 = vunpack.c.h.b16 %v1861
        %v2057 = vunpack.c.l.b16 %v1862
        %v2058 = vunpack.c.h.b16 %v1862
        %v2059 = vunpack.c.l.b16 %v1863
        %v2060 = vunpack.c.h.b16 %v1863
        %v2061 = vunpack.c.l.b16 %v1864
        %v2062 = vunpack.c.h.b16 %v1864
        %v2063 = vunpack.c.l.b16 %v1865
        %v2064 = vunpack.c.h.b16 %v1865
        %v2065 = vunpack.c.l.b16 %v1866
        %v2066 = vunpack.c.h.b16 %v1866
        %v2067 = vunpack.c.l.b16 %v1867
        %v2068 = vunpack.c.h.b16 %v1867
        %v2069 = vunpack.c.l.b16 %v1868
        %v2070 = vunpack.c.h.b16 %v1868
        %v2071 = vunpack.c.l.b16 %v1869
        %v2072 = vunpack.c.h.b16 %v1869
        %v2073 = vunpack.c.l.b16 %v1870
        %v2074 = vunpack.c.h.b16 %v1870
        %v2075 = vunpack.c.l.b16 %v1871
        %v2076 = vunpack.c.h.b16 %v1871
        %v2077 = vunpack.c.l.b16 %v1872
        %v2078 = vunpack.c.h.b16 %v1872
        %v2079 = vunpack.c.l.b16 %v1873
        %v2080 = vunpack.c.h.b16 %v1873
        %v2081 = vunpack.c.l.b16 %v1874
        %v2082 = vunpack.c.h.b16 %v1874
        %v2083 = vunpack.c.l.b16 %v1875
        %v2084 = vunpack.c.h.b16 %v1875
        %v2085 = vunpack.c.l.b16 %v1876
        %v2086 = vunpack.c.h.b16 %v1876
        %v2087 = vpack.c.b16 %v1967, %v1959
        %v2088 = vpack.c.b16 %v1968, %v1960
        %v2089 = vpack.c.b16 %v1969, %v1961
        %v2090 = vpack.c.b16 %v1970, %v1962
        %v2091 = vpack.c.b16 %v1971, %v1963
        %v2092 = vpack.c.b16 %v1972, %v1964
        %v2093 = vpack.c.b16 %v1973, %v1965
        %v2094 = vpack.c.b16 %v1974, %v1966
        %v2095 = vpack.c.b16 %v1983, %v1975
        %v2096 = vpack.c.b16 %v1984, %v1976
        %v2097 = vpack.c.b16 %v1985, %v1977
        %v2098 = vpack.c.b16 %v1986, %v1978
        %v2099 = vpack.c.b16 %v1987, %v1979
        %v2100 = vpack.c.b16 %v1988, %v1980
        %v2101 = vpack.c.b16 %v1989, %v1981
        %v2102 = vpack.c.b16 %v1990, %v1982
        %v2103 = vpack.c.b16 %v1999, %v1991
        %v2104 = vpack.c.b16 %v2000, %v1992
        %v2105 = vpack.c.b16 %v2001, %v1993
        %v2106 = vpack.c.b16 %v2002, %v1994
        %v2107 = vpack.c.b16 %v2003, %v1995
        %v2108 = vpack.c.b16 %v2004, %v1996
        %v2109 = vpack.c.b16 %v2005, %v1997
        %v2110 = vpack.c.b16 %v2006, %v1998
        %v2111 = vpack.c.b16 %v2015, %v2007
        %v2112 = vpack.c.b16 %v2016, %v2008
        %v2113 = vpack.c.b16 %v2017, %v2009
        %v2114 = vpack.c.b16 %v2018, %v2010
        %v2115 = vpack.c.b16 %v2019, %v2011
        %v2116 = vpack.c.b16 %v2020, %v2012
        %v2117 = vpack.c.b16 %v2021, %v2013
        %v2118 = vpack.c.b16 %v2022, %v2014
        %v2119 = vpack.c.b16 %v2031, %v2023
        %v2120 = vpack.c.b16 %v2032, %v2024
        %v2121 = vpack.c.b16 %v2033, %v2025
        %v2122 = vpack.c.b16 %v2034, %v2026
        %v2123 = vpack.c.b16 %v2035, %v2027
        %v2124 = vpack.c.b16 %v2036, %v2028
        %v2125 = vpack.c.b16 %v2037, %v2029
        %v2126 = vpack.c.b16 %v2038, %v2030
        %v2127 = vpack.c.b16 %v2047, %v2039
        %v2128 = vpack.c.b16 %v2048, %v2040
        %v2129 = vpack.c.b16 %v2049, %v2041
        %v2130 = vpack.c.b16 %v2050, %v2042
        %v2131 = vpack.c.b16 %v2051, %v2043
        %v2132 = vpack.c.b16 %v2052, %v2044
        %v2133 = vpack.c.b16 %v2053, %v2045
        %v2134 = vpack.c.b16 %v2054, %v2046
        %v2135 = vpack.c.b16 %v2063, %v2055
        %v2136 = vpack.c.b16 %v2064, %v2056
        %v2137 = vpack.c.b16 %v2065, %v2057
        %v2138 = vpack.c.b16 %v2066, %v2058
        %v2139 = vpack.c.b16 %v2067, %v2059
        %v2140 = vpack.c.b16 %v2068, %v2060
        %v2141 = vpack.c.b16 %v2069, %v2061
        %v2142 = vpack.c.b16 %v2070, %v2062
        %v2143 = vpack.c.b16 %v2079, %v2071
        %v2144 = vpack.c.b16 %v2080, %v2072
        %v2145 = vpack.c.b16 %v2081, %v2073
        %v2146 = vpack.c.b16 %v2082, %v2074
        %v2147 = vpack.c.b16 %v2083, %v2075
        %v2148 = vpack.c.b16 %v2084, %v2076
        %v2149 = vpack.c.b16 %v2085, %v2077
        %v2150 = vpack.c.b16 %v2086, %v2078
        %2215 = vmatpush.bf16.msra.mxu0 %v2143
        %2216 = vmatpush.bf16.msra.mxu0 %v2135
        %2217 = vmatpush.bf16.msra.mxu0 %v2127
        %2218 = vmatpush.bf16.msra.mxu0 %v2119
        %2219 = vmatpush.bf16.msra.mxu0 %v2111
        %2220 = vmatpush.bf16.msra.mxu0 %v2103
        %2221 = vmatpush.bf16.msra.mxu0 %v2095
        %2222 = vmatpush.bf16.msra.mxu0 %v2087
        %2223 = vmatmul.bf16.gmra.mxu0 %v1554
        %v2224 = vpop.f32.mrf.mxu0
        %v2225 = vadd.f32 %v1879, %v2224
        %v2226 = vpop.f32.mrf.mxu0
        %v2227 = vadd.f32 %v1879, %v2226
        %2228 = vdwg.mxu0
        %2229 = vmatpush.bf16.msra.mxu0 %v2144
        %2230 = vmatpush.bf16.msra.mxu0 %v2136
        %2231 = vmatpush.bf16.msra.mxu0 %v2128
        %2232 = vmatpush.bf16.msra.mxu0 %v2120
        %2233 = vmatpush.bf16.msra.mxu0 %v2112
        %2234 = vmatpush.bf16.msra.mxu0 %v2104
        %2235 = vmatpush.bf16.msra.mxu0 %v2096
        %2236 = vmatpush.bf16.msra.mxu0 %v2088
        %2237 = vmatmul.bf16.gmra.mxu0 %v1554
        %v2238 = vpop.f32.mrf.mxu0
        %v2239 = vadd.f32 %v1880, %v2238
        %v2240 = vpop.f32.mrf.mxu0
        %v2241 = vadd.f32 %v1880, %v2240
        %2242 = vdwg.mxu0
        %2243 = vmatpush.bf16.msra.mxu0 %v2145
        %2244 = vmatpush.bf16.msra.mxu0 %v2137
        %2245 = vmatpush.bf16.msra.mxu0 %v2129
        %2246 = vmatpush.bf16.msra.mxu0 %v2121
        %2247 = vmatpush.bf16.msra.mxu0 %v2113
        %2248 = vmatpush.bf16.msra.mxu0 %v2105
        %2249 = vmatpush.bf16.msra.mxu0 %v2097
        %2250 = vmatpush.bf16.msra.mxu0 %v2089
        %2251 = vmatmul.bf16.gmra.mxu0 %v1554
        %v2252 = vpop.f32.mrf.mxu0
        %v2253 = vadd.f32 %v1881, %v2252
        %v2254 = vpop.f32.mrf.mxu0
        %v2255 = vadd.f32 %v1881, %v2254
        %2256 = vdwg.mxu0
        %2257 = vmatpush.bf16.msra.mxu0 %v2146
        %2258 = vmatpush.bf16.msra.mxu0 %v2138
        %2259 = vmatpush.bf16.msra.mxu0 %v2130
        %2260 = vmatpush.bf16.msra.mxu0 %v2122
        %2261 = vmatpush.bf16.msra.mxu0 %v2114
        %2262 = vmatpush.bf16.msra.mxu0 %v2106
        %2263 = vmatpush.bf16.msra.mxu0 %v2098
        %2264 = vmatpush.bf16.msra.mxu0 %v2090
        %2265 = vmatmul.bf16.gmra.mxu0 %v1554
        %v2266 = vpop.f32.mrf.mxu0
        %v2267 = vadd.f32 %v1882, %v2266
        %v2268 = vpop.f32.mrf.mxu0
        %v2269 = vadd.f32 %v1882, %v2268
        %2270 = vdwg.mxu0
        %2271 = vmatpush.bf16.msra.mxu0 %v2147
        %2272 = vmatpush.bf16.msra.mxu0 %v2139
        %2273 = vmatpush.bf16.msra.mxu0 %v2131
        %2274 = vmatpush.bf16.msra.mxu0 %v2123
        %2275 = vmatpush.bf16.msra.mxu0 %v2115
        %2276 = vmatpush.bf16.msra.mxu0 %v2107
        %2277 = vmatpush.bf16.msra.mxu0 %v2099
        %2278 = vmatpush.bf16.msra.mxu0 %v2091
        %2279 = vmatmul.bf16.gmra.mxu0 %v1554
        %v2280 = vpop.f32.mrf.mxu0
        %v2281 = vadd.f32 %v1883, %v2280
        %v2282 = vpop.f32.mrf.mxu0
        %v2283 = vadd.f32 %v1883, %v2282
        %2284 = vdwg.mxu0
        %2285 = vmatpush.bf16.msra.mxu0 %v2148
        %2286 = vmatpush.bf16.msra.mxu0 %v2140
        %2287 = vmatpush.bf16.msra.mxu0 %v2132
        %2288 = vmatpush.bf16.msra.mxu0 %v2124
        %2289 = vmatpush.bf16.msra.mxu0 %v2116
        %2290 = vmatpush.bf16.msra.mxu0 %v2108
        %2291 = vmatpush.bf16.msra.mxu0 %v2100
        %2292 = vmatpush.bf16.msra.mxu0 %v2092
        %2293 = vmatmul.bf16.gmra.mxu0 %v1554
        %v2294 = vpop.f32.mrf.mxu0
        %v2295 = vadd.f32 %v1884, %v2294
        %v2296 = vpop.f32.mrf.mxu0
        %v2297 = vadd.f32 %v1884, %v2296
        %2298 = vdwg.mxu0
        %2299 = vmatpush.bf16.msra.mxu0 %v2149
        %2300 = vmatpush.bf16.msra.mxu0 %v2141
        %2301 = vmatpush.bf16.msra.mxu0 %v2133
        %2302 = vmatpush.bf16.msra.mxu0 %v2125
        %2303 = vmatpush.bf16.msra.mxu0 %v2117
        %2304 = vmatpush.bf16.msra.mxu0 %v2109
        %2305 = vmatpush.bf16.msra.mxu0 %v2101
        %2306 = vmatpush.bf16.msra.mxu0 %v2093
        %2307 = vmatmul.bf16.gmra.mxu0 %v1554
        %v2308 = vpop.f32.mrf.mxu0
        %v2309 = vadd.f32 %v1885, %v2308
        %v2310 = vpop.f32.mrf.mxu0
        %v2311 = vadd.f32 %v1885, %v2310
        %2312 = vdwg.mxu0
        %2313 = vmatpush.bf16.msra.mxu0 %v2150
        %2314 = vmatpush.bf16.msra.mxu0 %v2142
        %2315 = vmatpush.bf16.msra.mxu0 %v2134
        %2316 = vmatpush.bf16.msra.mxu0 %v2126
        %2317 = vmatpush.bf16.msra.mxu0 %v2118
        %2318 = vmatpush.bf16.msra.mxu0 %v2110
        %2319 = vmatpush.bf16.msra.mxu0 %v2102
        %2320 = vmatpush.bf16.msra.mxu0 %v2094
        %2321 = vmatmul.bf16.gmra.mxu0 %v1554
        %v2322 = vpop.f32.mrf.mxu0
        %v2323 = vadd.f32 %v1886, %v2322
        %v2324 = vpop.f32.mrf.mxu0
        %v2325 = vadd.f32 %v1886, %v2324
        %2326 = vdwg.mxu0
        %v2327 = vsel %vm1540, 1, 0
        %vm2328 = vcmp.eq.s32.totalorder %v2327, 1
        %v2329 = vsel %vm1553, 1, 0
        %v2330 = vrot.slane %v2329, 1
        %v2331 = vrot.slane %v2329, 2
        %v2332 = vrot.slane %v2329, 3
        %v2333 = vrot.slane %v2329, 4
        %v2334 = vrot.slane %v2329, 5
        %v2335 = vrot.slane %v2329, 6
        %v2336 = vrot.slane %v2329, 7
        %vm2337 = vcmp.ne.s32.totalorder %v2330, 0
        %vm2338 = vcmp.ne.s32.totalorder %v2331, 0
        %vm2339 = vcmp.ne.s32.totalorder %v2332, 0
        %vm2340 = vcmp.ne.s32.totalorder %v2333, 0
        %vm2341 = vcmp.ne.s32.totalorder %v2334, 0
        %vm2342 = vcmp.ne.s32.totalorder %v2335, 0
        %vm2343 = vcmp.ne.s32.totalorder %v2336, 0
        %vm2344 = vmor %vm2328, %vm1553
        %vm2345 = vmor %vm2328, %vm2337
        %vm2346 = vmor %vm2328, %vm2338
        %vm2347 = vmor %vm2328, %vm2339
        %vm2348 = vmor %vm2328, %vm2340
        %vm2349 = vmor %vm2328, %vm2341
        %vm2350 = vmor %vm2328, %vm2342
        %vm2351 = vmor %vm2328, %vm2343
        %v2352 = vpack.c.bf16 %v1767, %v1767
        %v2353 = vpack.c.bf16 %v2225, %v2225
        %v2354 = vpack.c.bf16 %v2281, %v2281
        %2355 = vmatpush.bf16.xpose.msra.mxu0 0
        %2356 = vmatpush.bf16.xpose.msra.mxu0 0
        %2357 = vmatpush.bf16.xpose.msra.mxu0 0
        %2358 = vmatpush.bf16.xpose.msra.mxu0 0
        %2359 = vmatpush.bf16.xpose.msra.mxu0 0
        %2360 = vmatpush.bf16.xpose.msra.mxu0 0
        %2361 = vmatpush.bf16.xpose.msra.mxu0 0
        %2362 = vmatpush.bf16.xpose.msra.mxu0 %v2353
        %2363 = vmatmul.bf16.gmra.mxu0 %v2352
        %v2364 = vpop.f32.mrf.mxu0
        %v2365 = vadd.f32 0.0, %v2364
        %v2366 = vpop.f32.mrf.mxu0
        %2367 = vdwg.mxu0
        %v2369 = vrot.slane %v2365, 1
        %v2370 = vrot.slane %v2365, 2
        %v2371 = vrot.slane %v2365, 3
        %v2372 = vrot.slane %v2365, 4
        %v2373 = vrot.slane %v2365, 5
        %v2374 = vrot.slane %v2365, 6
        %v2375 = vrot.slane %v2365, 7
        %v2383 = vsel %vm2344, -1e+30, %v2365
        %v2384 = vsel %vm2345, -1e+30, %v2369
        %v2385 = vsel %vm2346, -1e+30, %v2370
        %v2386 = vsel %vm2347, -1e+30, %v2371
        %v2387 = vsel %vm2348, -1e+30, %v2372
        %v2388 = vsel %vm2349, -1e+30, %v2373
        %v2389 = vsel %vm2350, -1e+30, %v2374
        %v2390 = vsel %vm2351, -1e+30, %v2375
        %2399 = vst [vmem:[#allocation1] ss:$9 sm:$0xff] %v2383
        %s2400 = scalar_lea.vmem [#allocation1], 1
        %2401 = vst [vmem:[%s2400] ss:$9 sm:$0xff] %v2384
        %s2402 = scalar_lea.vmem [#allocation1], 2
        %2403 = vst [vmem:[%s2402] ss:$9 sm:$0xff] %v2385
        %s2404 = scalar_lea.vmem [#allocation1], 3
        %2405 = vst [vmem:[%s2404] ss:$9 sm:$0xff] %v2386
        %s2406 = scalar_lea.vmem [#allocation1], 4
        %2407 = vst [vmem:[%s2406] ss:$9 sm:$0xff] %v2387
        %s2408 = scalar_lea.vmem [#allocation1], 5
        %2409 = vst [vmem:[%s2408] ss:$9 sm:$0xff] %v2388
        %s2410 = scalar_lea.vmem [#allocation1], 6
        %2411 = vst [vmem:[%s2410] ss:$9 sm:$0xff] %v2389
        %s2412 = scalar_lea.vmem [#allocation1], 7
        %2413 = vst [vmem:[%s2412] ss:$9 sm:$0xff] %v2390
        %v2414 = vld [vmem:[#allocation1] sm:$0xff]
        %vm2416 = vcmask 64512
        %v2417 = vsel %vm2416, %v2414, -inf
        %2418 = vmax.xlane.f32.xlu0 %v2417
        %v2419 = vpop.xlane.xlu0 %2418
        %v2421 = vperm.slane %v2419, 0
        %v2422 = vperm.slane %v2419, 1
        %v2423 = vperm.slane %v2419, 2
        %v2424 = vperm.slane %v2419, 3
        %v2425 = vperm.slane %v2419, 4
        %v2426 = vperm.slane %v2419, 5
        %v2427 = vperm.slane %v2419, 6
        %v2428 = vperm.slane %v2419, 7
        %v2437 = vsub.f32 %v2383, %v2421
        %v2438 = vsub.f32 %v2384, %v2422
        %v2439 = vsub.f32 %v2385, %v2423
        %v2440 = vsub.f32 %v2386, %v2424
        %v2441 = vsub.f32 %v2387, %v2425
        %v2442 = vsub.f32 %v2388, %v2426
        %v2443 = vsub.f32 %v2389, %v2427
        %v2444 = vsub.f32 %v2390, %v2428
        %v2445 = vmul.f32 %v2437, 1.442695
        %v2446 = vpow.pop %v2445
        %v2447 = vmul.f32 %v2438, 1.442695
        %v2448 = vpow.pop %v2447
        %v2449 = vmul.f32 %v2439, 1.442695
        %v2450 = vpow.pop %v2449
        %v2451 = vmul.f32 %v2440, 1.442695
        %v2452 = vpow.pop %v2451
        %v2453 = vmul.f32 %v2441, 1.442695
        %v2454 = vpow.pop %v2453
        %v2455 = vmul.f32 %v2442, 1.442695
        %v2456 = vpow.pop %v2455
        %v2457 = vmul.f32 %v2443, 1.442695
        %v2458 = vpow.pop %v2457
        %v2459 = vmul.f32 %v2444, 1.442695
        %v2460 = vpow.pop %v2459
        %2469 = vst [vmem:[#allocation1] ss:$9 sm:$0xff] %v2446
        %s2470 = scalar_lea.vmem [#allocation1], 1
        %2471 = vst [vmem:[%s2470] ss:$9 sm:$0xff] %v2448
        %s2472 = scalar_lea.vmem [#allocation1], 2
        %2473 = vst [vmem:[%s2472] ss:$9 sm:$0xff] %v2450
        %s2474 = scalar_lea.vmem [#allocation1], 3
        %2475 = vst [vmem:[%s2474] ss:$9 sm:$0xff] %v2452
        %s2476 = scalar_lea.vmem [#allocation1], 4
        %2477 = vst [vmem:[%s2476] ss:$9 sm:$0xff] %v2454
        %s2478 = scalar_lea.vmem [#allocation1], 5
        %2479 = vst [vmem:[%s2478] ss:$9 sm:$0xff] %v2456
        %s2480 = scalar_lea.vmem [#allocation1], 6
        %2481 = vst [vmem:[%s2480] ss:$9 sm:$0xff] %v2458
        %s2482 = scalar_lea.vmem [#allocation1], 7
        %2483 = vst [vmem:[%s2482] ss:$9 sm:$0xff] %v2460
        %v2484 = vld [vmem:[#allocation1] sm:$0xff]
        %v2486 = vsel %vm2416, %v2484, 0.0
        %2487 = vadd.xlane.f32.xlu0 %v2486
        %v2488 = vpop.xlane.xlu0 %2487
        %v2489 = vrcp.pop %v2488
        %v2491 = vperm.slane %v2489, 0
        %v2492 = vperm.slane %v2489, 1
        %v2493 = vperm.slane %v2489, 2
        %v2494 = vperm.slane %v2489, 3
        %v2495 = vperm.slane %v2489, 4
        %v2496 = vperm.slane %v2489, 5
        %v2497 = vperm.slane %v2489, 6
        %v2498 = vperm.slane %v2489, 7
        %v2507 = vmul.f32 %v2446, %v2491
        %v2508 = vmul.f32 %v2448, %v2492
        %v2509 = vmul.f32 %v2450, %v2493
        %v2510 = vmul.f32 %v2452, %v2494
        %v2511 = vmul.f32 %v2454, %v2495
        %v2512 = vmul.f32 %v2456, %v2496
        %v2513 = vmul.f32 %v2458, %v2497
        %v2514 = vmul.f32 %v2460, %v2498
        %v2515 = vpack.c.bf16 %v2507, %v2507
        %v2516 = vpack.c.bf16 %v2508, %v2508
        %v2517 = vpack.c.bf16 %v2509, %v2509
        %v2518 = vpack.c.bf16 %v2510, %v2510
        %v2519 = vpack.c.bf16 %v2511, %v2511
        %v2520 = vpack.c.bf16 %v2512, %v2512
        %v2521 = vpack.c.bf16 %v2513, %v2513
        %v2522 = vpack.c.bf16 %v2514, %v2514
        %v2531 = vunpack.c.l.b16 %v2515
        %v2532 = vunpack.c.l.b16 %v2516
        %v2533 = vunpack.c.l.b16 %v2517
        %v2534 = vunpack.c.l.b16 %v2518
        %v2535 = vunpack.c.l.b16 %v2519
        %v2536 = vunpack.c.l.b16 %v2520
        %v2537 = vunpack.c.l.b16 %v2521
        %v2538 = vunpack.c.l.b16 %v2522
        %v2539 = vrot.slane %v2532, 7
        %vm2540 = vcmask 1041409
        %v2541 = vsel %vm2540, %v2539, %v2531
        %v2542 = vrot.slane %v2533, 6
        %vm2543 = vcmask 1042434
        %v2544 = vsel %vm2543, %v2542, %v2541
        %v2545 = vrot.slane %v2534, 5
        %vm2546 = vcmask 1043459
        %v2547 = vsel %vm2546, %v2545, %v2544
        %v2548 = vrot.slane %v2535, 4
        %vm2549 = vcmask 1044484
        %v2550 = vsel %vm2549, %v2548, %v2547
        %v2551 = vrot.slane %v2536, 3
        %vm2552 = vcmask 1045509
        %v2553 = vsel %vm2552, %v2551, %v2550
        %v2554 = vrot.slane %v2537, 2
        %vm2555 = vcmask 1046534
        %v2556 = vsel %vm2555, %v2554, %v2553
        %v2557 = vrot.slane %v2538, 1
        %vm2558 = vcmask 1047559
        %v2559 = vsel %vm2558, %v2557, %v2556
        %v2560 = vpack.c.b16 %v2559, %v2559
        %v2562 = vsel %vm2416, %v2560, 0
        %vm2564 = vcmask 1043456
        %v2566 = vsel %vm2564, %v2354, 0
        %2568 = vmatpush.bf16.msra.mxu0 0
        %2569 = vmatpush.bf16.msra.mxu0 0
        %2570 = vmatpush.bf16.msra.mxu0 0
        %2571 = vmatpush.bf16.msra.mxu0 0
        %2572 = vmatpush.bf16.msra.mxu0 0
        %2573 = vmatpush.bf16.msra.mxu0 0
        %2574 = vmatpush.bf16.msra.mxu0 0
        %2575 = vmatpush.bf16.msra.mxu0 %v2566
        %2576 = vmatmul.bf16.gmra.mxu0 %v2562
        %v2577 = vpop.f32.mrf.mxu0
        %v2578 = vadd.f32 0.0, %v2577
        %v2579 = vpop.f32.mrf.mxu0
        %2580 = vdwg.mxu0
        %v2581 = vpack.c.bf16 %v1781, %v1781
        %v2582 = vpack.c.bf16 %v2239, %v2239
        %v2583 = vpack.c.bf16 %v2295, %v2295
        %2584 = vmatpush.bf16.xpose.msra.mxu0 0
        %2585 = vmatpush.bf16.xpose.msra.mxu0 0
        %2586 = vmatpush.bf16.xpose.msra.mxu0 0
        %2587 = vmatpush.bf16.xpose.msra.mxu0 0
        %2588 = vmatpush.bf16.xpose.msra.mxu0 0
        %2589 = vmatpush.bf16.xpose.msra.mxu0 0
        %2590 = vmatpush.bf16.xpose.msra.mxu0 0
        %2591 = vmatpush.bf16.xpose.msra.mxu0 %v2582
        %2592 = vmatmul.bf16.gmra.mxu0 %v2581
        %v2593 = vpop.f32.mrf.mxu0
        %v2594 = vadd.f32 0.0, %v2593
        %v2595 = vpop.f32.mrf.mxu0
        %2596 = vdwg.mxu0
        %v2598 = vrot.slane %v2594, 1
        %v2599 = vrot.slane %v2594, 2
        %v2600 = vrot.slane %v2594, 3
        %v2601 = vrot.slane %v2594, 4
        %v2602 = vrot.slane %v2594, 5
        %v2603 = vrot.slane %v2594, 6
        %v2604 = vrot.slane %v2594, 7
        %v2612 = vsel %vm2344, -1e+30, %v2594
        %v2613 = vsel %vm2345, -1e+30, %v2598
        %v2614 = vsel %vm2346, -1e+30, %v2599
        %v2615 = vsel %vm2347, -1e+30, %v2600
        %v2616 = vsel %vm2348, -1e+30, %v2601
        %v2617 = vsel %vm2349, -1e+30, %v2602
        %v2618 = vsel %vm2350, -1e+30, %v2603
        %v2619 = vsel %vm2351, -1e+30, %v2604
        %2628 = vst [vmem:[#allocation1] ss:$9 sm:$0xff] %v2612
        %s2629 = scalar_lea.vmem [#allocation1], 1
        %2630 = vst [vmem:[%s2629] ss:$9 sm:$0xff] %v2613
        %s2631 = scalar_lea.vmem [#allocation1], 2
        %2632 = vst [vmem:[%s2631] ss:$9 sm:$0xff] %v2614
        %s2633 = scalar_lea.vmem [#allocation1], 3
        %2634 = vst [vmem:[%s2633] ss:$9 sm:$0xff] %v2615
        %s2635 = scalar_lea.vmem [#allocation1], 4
        %2636 = vst [vmem:[%s2635] ss:$9 sm:$0xff] %v2616
        %s2637 = scalar_lea.vmem [#allocation1], 5
        %2638 = vst [vmem:[%s2637] ss:$9 sm:$0xff] %v2617
        %s2639 = scalar_lea.vmem [#allocation1], 6
        %2640 = vst [vmem:[%s2639] ss:$9 sm:$0xff] %v2618
        %s2641 = scalar_lea.vmem [#allocation1], 7
        %2642 = vst [vmem:[%s2641] ss:$9 sm:$0xff] %v2619
        %v2643 = vld [vmem:[#allocation1] sm:$0xff]
        %v2645 = vsel %vm2416, %v2643, -inf
        %2646 = vmax.xlane.f32.xlu0 %v2645
        %v2647 = vpop.xlane.xlu0 %2646
        %v2649 = vperm.slane %v2647, 0
        %v2650 = vperm.slane %v2647, 1
        %v2651 = vperm.slane %v2647, 2
        %v2652 = vperm.slane %v2647, 3
        %v2653 = vperm.slane %v2647, 4
        %v2654 = vperm.slane %v2647, 5
        %v2655 = vperm.slane %v2647, 6
        %v2656 = vperm.slane %v2647, 7
        %v2665 = vsub.f32 %v2612, %v2649
        %v2666 = vsub.f32 %v2613, %v2650
        %v2667 = vsub.f32 %v2614, %v2651
        %v2668 = vsub.f32 %v2615, %v2652
        %v2669 = vsub.f32 %v2616, %v2653
        %v2670 = vsub.f32 %v2617, %v2654
        %v2671 = vsub.f32 %v2618, %v2655
        %v2672 = vsub.f32 %v2619, %v2656
        %v2673 = vmul.f32 %v2665, 1.442695
        %v2674 = vpow.pop %v2673
        %v2675 = vmul.f32 %v2666, 1.442695
        %v2676 = vpow.pop %v2675
        %v2677 = vmul.f32 %v2667, 1.442695
        %v2678 = vpow.pop %v2677
        %v2679 = vmul.f32 %v2668, 1.442695
        %v2680 = vpow.pop %v2679
        %v2681 = vmul.f32 %v2669, 1.442695
        %v2682 = vpow.pop %v2681
        %v2683 = vmul.f32 %v2670, 1.442695
        %v2684 = vpow.pop %v2683
        %v2685 = vmul.f32 %v2671, 1.442695
        %v2686 = vpow.pop %v2685
        %v2687 = vmul.f32 %v2672, 1.442695
        %v2688 = vpow.pop %v2687
        %2697 = vst [vmem:[#allocation1] ss:$9 sm:$0xff] %v2674
        %s2698 = scalar_lea.vmem [#allocation1], 1
        %2699 = vst [vmem:[%s2698] ss:$9 sm:$0xff] %v2676
        %s2700 = scalar_lea.vmem [#allocation1], 2
        %2701 = vst [vmem:[%s2700] ss:$9 sm:$0xff] %v2678
        %s2702 = scalar_lea.vmem [#allocation1], 3
        %2703 = vst [vmem:[%s2702] ss:$9 sm:$0xff] %v2680
        %s2704 = scalar_lea.vmem [#allocation1], 4
        %2705 = vst [vmem:[%s2704] ss:$9 sm:$0xff] %v2682
        %s2706 = scalar_lea.vmem [#allocation1], 5
        %2707 = vst [vmem:[%s2706] ss:$9 sm:$0xff] %v2684
        %s2708 = scalar_lea.vmem [#allocation1], 6
        %2709 = vst [vmem:[%s2708] ss:$9 sm:$0xff] %v2686
        %s2710 = scalar_lea.vmem [#allocation1], 7
        %2711 = vst [vmem:[%s2710] ss:$9 sm:$0xff] %v2688
        %v2712 = vld [vmem:[#allocation1] sm:$0xff]
        %v2714 = vsel %vm2416, %v2712, 0.0
        %2715 = vadd.xlane.f32.xlu0 %v2714
        %v2716 = vpop.xlane.xlu0 %2715
        %v2717 = vrcp.pop %v2716
        %v2719 = vperm.slane %v2717, 0
        %v2720 = vperm.slane %v2717, 1
        %v2721 = vperm.slane %v2717, 2
        %v2722 = vperm.slane %v2717, 3
        %v2723 = vperm.slane %v2717, 4
        %v2724 = vperm.slane %v2717, 5
        %v2725 = vperm.slane %v2717, 6
        %v2726 = vperm.slane %v2717, 7
        %v2735 = vmul.f32 %v2674, %v2719
        %v2736 = vmul.f32 %v2676, %v2720
        %v2737 = vmul.f32 %v2678, %v2721
        %v2738 = vmul.f32 %v2680, %v2722
        %v2739 = vmul.f32 %v2682, %v2723
        %v2740 = vmul.f32 %v2684, %v2724
        %v2741 = vmul.f32 %v2686, %v2725
        %v2742 = vmul.f32 %v2688, %v2726
        %v2743 = vpack.c.bf16 %v2735, %v2735
        %v2744 = vpack.c.bf16 %v2736, %v2736
        %v2745 = vpack.c.bf16 %v2737, %v2737
        %v2746 = vpack.c.bf16 %v2738, %v2738
        %v2747 = vpack.c.bf16 %v2739, %v2739
        %v2748 = vpack.c.bf16 %v2740, %v2740
        %v2749 = vpack.c.bf16 %v2741, %v2741
        %v2750 = vpack.c.bf16 %v2742, %v2742
        %v2759 = vunpack.c.l.b16 %v2743
        %v2760 = vunpack.c.l.b16 %v2744
        %v2761 = vunpack.c.l.b16 %v2745
        %v2762 = vunpack.c.l.b16 %v2746
        %v2763 = vunpack.c.l.b16 %v2747
        %v2764 = vunpack.c.l.b16 %v2748
        %v2765 = vunpack.c.l.b16 %v2749
        %v2766 = vunpack.c.l.b16 %v2750
        %v2767 = vrot.slane %v2760, 7
        %v2768 = vsel %vm2540, %v2767, %v2759
        %v2769 = vrot.slane %v2761, 6
        %v2770 = vsel %vm2543, %v2769, %v2768
        %v2771 = vrot.slane %v2762, 5
        %v2772 = vsel %vm2546, %v2771, %v2770
        %v2773 = vrot.slane %v2763, 4
        %v2774 = vsel %vm2549, %v2773, %v2772
        %v2775 = vrot.slane %v2764, 3
        %v2776 = vsel %vm2552, %v2775, %v2774
        %v2777 = vrot.slane %v2765, 2
        %v2778 = vsel %vm2555, %v2777, %v2776
        %v2779 = vrot.slane %v2766, 1
        %v2780 = vsel %vm2558, %v2779, %v2778
        %v2781 = vpack.c.b16 %v2780, %v2780
        %v2783 = vsel %vm2416, %v2781, 0
        %v2786 = vsel %vm2564, %v2583, 0
        %2788 = vmatpush.bf16.msra.mxu0 0
        %2789 = vmatpush.bf16.msra.mxu0 0
        %2790 = vmatpush.bf16.msra.mxu0 0
        %2791 = vmatpush.bf16.msra.mxu0 0
        %2792 = vmatpush.bf16.msra.mxu0 0
        %2793 = vmatpush.bf16.msra.mxu0 0
        %2794 = vmatpush.bf16.msra.mxu0 0
        %2795 = vmatpush.bf16.msra.mxu0 %v2786
        %2796 = vmatmul.bf16.gmra.mxu0 %v2783
        %v2797 = vpop.f32.mrf.mxu0
        %v2798 = vadd.f32 0.0, %v2797
        %v2799 = vpop.f32.mrf.mxu0
        %2800 = vdwg.mxu0
        %v2801 = vpack.c.bf16 %v1795, %v1795
        %v2802 = vpack.c.bf16 %v2253, %v2253
        %v2803 = vpack.c.bf16 %v2309, %v2309
        %2804 = vmatpush.bf16.xpose.msra.mxu0 0
        %2805 = vmatpush.bf16.xpose.msra.mxu0 0
        %2806 = vmatpush.bf16.xpose.msra.mxu0 0
        %2807 = vmatpush.bf16.xpose.msra.mxu0 0
        %2808 = vmatpush.bf16.xpose.msra.mxu0 0
        %2809 = vmatpush.bf16.xpose.msra.mxu0 0
        %2810 = vmatpush.bf16.xpose.msra.mxu0 0
        %2811 = vmatpush.bf16.xpose.msra.mxu0 %v2802
        %2812 = vmatmul.bf16.gmra.mxu0 %v2801
        %v2813 = vpop.f32.mrf.mxu0
        %v2814 = vadd.f32 0.0, %v2813
        %v2815 = vpop.f32.mrf.mxu0
        %2816 = vdwg.mxu0
        %v2818 = vrot.slane %v2814, 1
        %v2819 = vrot.slane %v2814, 2
        %v2820 = vrot.slane %v2814, 3
        %v2821 = vrot.slane %v2814, 4
        %v2822 = vrot.slane %v2814, 5
        %v2823 = vrot.slane %v2814, 6
        %v2824 = vrot.slane %v2814, 7
        %v2832 = vsel %vm2344, -1e+30, %v2814
        %v2833 = vsel %vm2345, -1e+30, %v2818
        %v2834 = vsel %vm2346, -1e+30, %v2819
        %v2835 = vsel %vm2347, -1e+30, %v2820
        %v2836 = vsel %vm2348, -1e+30, %v2821
        %v2837 = vsel %vm2349, -1e+30, %v2822
        %v2838 = vsel %vm2350, -1e+30, %v2823
        %v2839 = vsel %vm2351, -1e+30, %v2824
        %2848 = vst [vmem:[#allocation1] ss:$9 sm:$0xff] %v2832
        %s2849 = scalar_lea.vmem [#allocation1], 1
        %2850 = vst [vmem:[%s2849] ss:$9 sm:$0xff] %v2833
        %s2851 = scalar_lea.vmem [#allocation1], 2
        %2852 = vst [vmem:[%s2851] ss:$9 sm:$0xff] %v2834
        %s2853 = scalar_lea.vmem [#allocation1], 3
        %2854 = vst [vmem:[%s2853] ss:$9 sm:$0xff] %v2835
        %s2855 = scalar_lea.vmem [#allocation1], 4
        %2856 = vst [vmem:[%s2855] ss:$9 sm:$0xff] %v2836
        %s2857 = scalar_lea.vmem [#allocation1], 5
        %2858 = vst [vmem:[%s2857] ss:$9 sm:$0xff] %v2837
        %s2859 = scalar_lea.vmem [#allocation1], 6
        %2860 = vst [vmem:[%s2859] ss:$9 sm:$0xff] %v2838
        %s2861 = scalar_lea.vmem [#allocation1], 7
        %2862 = vst [vmem:[%s2861] ss:$9 sm:$0xff] %v2839
        %v2863 = vld [vmem:[#allocation1] sm:$0xff]
        %v2865 = vsel %vm2416, %v2863, -inf
        %2866 = vmax.xlane.f32.xlu0 %v2865
        %v2867 = vpop.xlane.xlu0 %2866
        %v2869 = vperm.slane %v2867, 0
        %v2870 = vperm.slane %v2867, 1
        %v2871 = vperm.slane %v2867, 2
        %v2872 = vperm.slane %v2867, 3
        %v2873 = vperm.slane %v2867, 4
        %v2874 = vperm.slane %v2867, 5
        %v2875 = vperm.slane %v2867, 6
        %v2876 = vperm.slane %v2867, 7
        %v2885 = vsub.f32 %v2832, %v2869
        %v2886 = vsub.f32 %v2833, %v2870
        %v2887 = vsub.f32 %v2834, %v2871
        %v2888 = vsub.f32 %v2835, %v2872
        %v2889 = vsub.f32 %v2836, %v2873
        %v2890 = vsub.f32 %v2837, %v2874
        %v2891 = vsub.f32 %v2838, %v2875
        %v2892 = vsub.f32 %v2839, %v2876
        %v2893 = vmul.f32 %v2885, 1.442695
        %v2894 = vpow.pop %v2893
        %v2895 = vmul.f32 %v2886, 1.442695
        %v2896 = vpow.pop %v2895
        %v2897 = vmul.f32 %v2887, 1.442695
        %v2898 = vpow.pop %v2897
        %v2899 = vmul.f32 %v2888, 1.442695
        %v2900 = vpow.pop %v2899
        %v2901 = vmul.f32 %v2889, 1.442695
        %v2902 = vpow.pop %v2901
        %v2903 = vmul.f32 %v2890, 1.442695
        %v2904 = vpow.pop %v2903
        %v2905 = vmul.f32 %v2891, 1.442695
        %v2906 = vpow.pop %v2905
        %v2907 = vmul.f32 %v2892, 1.442695
        %v2908 = vpow.pop %v2907
        %2917 = vst [vmem:[#allocation1] ss:$9 sm:$0xff] %v2894
        %s2918 = scalar_lea.vmem [#allocation1], 1
        %2919 = vst [vmem:[%s2918] ss:$9 sm:$0xff] %v2896
        %s2920 = scalar_lea.vmem [#allocation1], 2
        %2921 = vst [vmem:[%s2920] ss:$9 sm:$0xff] %v2898
        %s2922 = scalar_lea.vmem [#allocation1], 3
        %2923 = vst [vmem:[%s2922] ss:$9 sm:$0xff] %v2900
        %s2924 = scalar_lea.vmem [#allocation1], 4
        %2925 = vst [vmem:[%s2924] ss:$9 sm:$0xff] %v2902
        %s2926 = scalar_lea.vmem [#allocation1], 5
        %2927 = vst [vmem:[%s2926] ss:$9 sm:$0xff] %v2904
        %s2928 = scalar_lea.vmem [#allocation1], 6
        %2929 = vst [vmem:[%s2928] ss:$9 sm:$0xff] %v2906
        %s2930 = scalar_lea.vmem [#allocation1], 7
        %2931 = vst [vmem:[%s2930] ss:$9 sm:$0xff] %v2908
        %v2932 = vld [vmem:[#allocation1] sm:$0xff]
        %v2934 = vsel %vm2416, %v2932, 0.0
        %2935 = vadd.xlane.f32.xlu0 %v2934
        %v2936 = vpop.xlane.xlu0 %2935
        %v2937 = vrcp.pop %v2936
        %v2939 = vperm.slane %v2937, 0
        %v2940 = vperm.slane %v2937, 1
        %v2941 = vperm.slane %v2937, 2
        %v2942 = vperm.slane %v2937, 3
        %v2943 = vperm.slane %v2937, 4
        %v2944 = vperm.slane %v2937, 5
        %v2945 = vperm.slane %v2937, 6
        %v2946 = vperm.slane %v2937, 7
        %v2955 = vmul.f32 %v2894, %v2939
        %v2956 = vmul.f32 %v2896, %v2940
        %v2957 = vmul.f32 %v2898, %v2941
        %v2958 = vmul.f32 %v2900, %v2942
        %v2959 = vmul.f32 %v2902, %v2943
        %v2960 = vmul.f32 %v2904, %v2944
        %v2961 = vmul.f32 %v2906, %v2945
        %v2962 = vmul.f32 %v2908, %v2946
        %v2963 = vpack.c.bf16 %v2955, %v2955
        %v2964 = vpack.c.bf16 %v2956, %v2956
        %v2965 = vpack.c.bf16 %v2957, %v2957
        %v2966 = vpack.c.bf16 %v2958, %v2958
        %v2967 = vpack.c.bf16 %v2959, %v2959
        %v2968 = vpack.c.bf16 %v2960, %v2960
        %v2969 = vpack.c.bf16 %v2961, %v2961
        %v2970 = vpack.c.bf16 %v2962, %v2962
        %v2979 = vunpack.c.l.b16 %v2963
        %v2980 = vunpack.c.l.b16 %v2964
        %v2981 = vunpack.c.l.b16 %v2965
        %v2982 = vunpack.c.l.b16 %v2966
        %v2983 = vunpack.c.l.b16 %v2967
        %v2984 = vunpack.c.l.b16 %v2968
        %v2985 = vunpack.c.l.b16 %v2969
        %v2986 = vunpack.c.l.b16 %v2970
        %v2987 = vrot.slane %v2980, 7
        %v2988 = vsel %vm2540, %v2987, %v2979
        %v2989 = vrot.slane %v2981, 6
        %v2990 = vsel %vm2543, %v2989, %v2988
        %v2991 = vrot.slane %v2982, 5
        %v2992 = vsel %vm2546, %v2991, %v2990
        %v2993 = vrot.slane %v2983, 4
        %v2994 = vsel %vm2549, %v2993, %v2992
        %v2995 = vrot.slane %v2984, 3
        %v2996 = vsel %vm2552, %v2995, %v2994
        %v2997 = vrot.slane %v2985, 2
        %v2998 = vsel %vm2555, %v2997, %v2996
        %v2999 = vrot.slane %v2986, 1
        %v3000 = vsel %vm2558, %v2999, %v2998
        %v3001 = vpack.c.b16 %v3000, %v3000
        %v3003 = vsel %vm2416, %v3001, 0
        %v3006 = vsel %vm2564, %v2803, 0
        %3008 = vmatpush.bf16.msra.mxu0 0
        %3009 = vmatpush.bf16.msra.mxu0 0
        %3010 = vmatpush.bf16.msra.mxu0 0
        %3011 = vmatpush.bf16.msra.mxu0 0
        %3012 = vmatpush.bf16.msra.mxu0 0
        %3013 = vmatpush.bf16.msra.mxu0 0
        %3014 = vmatpush.bf16.msra.mxu0 0
        %3015 = vmatpush.bf16.msra.mxu0 %v3006
        %3016 = vmatmul.bf16.gmra.mxu0 %v3003
        %v3017 = vpop.f32.mrf.mxu0
        %v3018 = vadd.f32 0.0, %v3017
        %v3019 = vpop.f32.mrf.mxu0
        %3020 = vdwg.mxu0
        %v3021 = vpack.c.bf16 %v1809, %v1809
        %v3022 = vpack.c.bf16 %v2267, %v2267
        %v3023 = vpack.c.bf16 %v2323, %v2323
        %3024 = vmatpush.bf16.xpose.msra.mxu0 0
        %3025 = vmatpush.bf16.xpose.msra.mxu0 0
        %3026 = vmatpush.bf16.xpose.msra.mxu0 0
        %3027 = vmatpush.bf16.xpose.msra.mxu0 0
        %3028 = vmatpush.bf16.xpose.msra.mxu0 0
        %3029 = vmatpush.bf16.xpose.msra.mxu0 0
        %3030 = vmatpush.bf16.xpose.msra.mxu0 0
        %3031 = vmatpush.bf16.xpose.msra.mxu0 %v3022
        %3032 = vmatmul.bf16.gmra.mxu0 %v3021
        %v3033 = vpop.f32.mrf.mxu0
        %v3034 = vadd.f32 0.0, %v3033
        %v3035 = vpop.f32.mrf.mxu0
        %3036 = vdwg.mxu0
        %v3038 = vrot.slane %v3034, 1
        %v3039 = vrot.slane %v3034, 2
        %v3040 = vrot.slane %v3034, 3
        %v3041 = vrot.slane %v3034, 4
        %v3042 = vrot.slane %v3034, 5
        %v3043 = vrot.slane %v3034, 6
        %v3044 = vrot.slane %v3034, 7
        %v3052 = vsel %vm2344, -1e+30, %v3034
        %v3053 = vsel %vm2345, -1e+30, %v3038
        %v3054 = vsel %vm2346, -1e+30, %v3039
        %v3055 = vsel %vm2347, -1e+30, %v3040
        %v3056 = vsel %vm2348, -1e+30, %v3041
        %v3057 = vsel %vm2349, -1e+30, %v3042
        %v3058 = vsel %vm2350, -1e+30, %v3043
        %v3059 = vsel %vm2351, -1e+30, %v3044
        %3068 = vst [vmem:[#allocation1] ss:$9 sm:$0xff] %v3052
        %s3069 = scalar_lea.vmem [#allocation1], 1
        %3070 = vst [vmem:[%s3069] ss:$9 sm:$0xff] %v3053
        %s3071 = scalar_lea.vmem [#allocation1], 2
        %3072 = vst [vmem:[%s3071] ss:$9 sm:$0xff] %v3054
        %s3073 = scalar_lea.vmem [#allocation1], 3
        %3074 = vst [vmem:[%s3073] ss:$9 sm:$0xff] %v3055
        %s3075 = scalar_lea.vmem [#allocation1], 4
        %3076 = vst [vmem:[%s3075] ss:$9 sm:$0xff] %v3056
        %s3077 = scalar_lea.vmem [#allocation1], 5
        %3078 = vst [vmem:[%s3077] ss:$9 sm:$0xff] %v3057
        %s3079 = scalar_lea.vmem [#allocation1], 6
        %3080 = vst [vmem:[%s3079] ss:$9 sm:$0xff] %v3058
        %s3081 = scalar_lea.vmem [#allocation1], 7
        %3082 = vst [vmem:[%s3081] ss:$9 sm:$0xff] %v3059
        %v3083 = vld [vmem:[#allocation1] sm:$0xff]
        %v3085 = vsel %vm2416, %v3083, -inf
        %3086 = vmax.xlane.f32.xlu0 %v3085
        %v3087 = vpop.xlane.xlu0 %3086
        %v3089 = vperm.slane %v3087, 0
        %v3090 = vperm.slane %v3087, 1
        %v3091 = vperm.slane %v3087, 2
        %v3092 = vperm.slane %v3087, 3
        %v3093 = vperm.slane %v3087, 4
        %v3094 = vperm.slane %v3087, 5
        %v3095 = vperm.slane %v3087, 6
        %v3096 = vperm.slane %v3087, 7
        %v3105 = vsub.f32 %v3052, %v3089
        %v3106 = vsub.f32 %v3053, %v3090
        %v3107 = vsub.f32 %v3054, %v3091
        %v3108 = vsub.f32 %v3055, %v3092
        %v3109 = vsub.f32 %v3056, %v3093
        %v3110 = vsub.f32 %v3057, %v3094
        %v3111 = vsub.f32 %v3058, %v3095
        %v3112 = vsub.f32 %v3059, %v3096
        %v3113 = vmul.f32 %v3105, 1.442695
        %v3114 = vpow.pop %v3113
        %v3115 = vmul.f32 %v3106, 1.442695
        %v3116 = vpow.pop %v3115
        %v3117 = vmul.f32 %v3107, 1.442695
        %v3118 = vpow.pop %v3117
        %v3119 = vmul.f32 %v3108, 1.442695
        %v3120 = vpow.pop %v3119
        %v3121 = vmul.f32 %v3109, 1.442695
        %v3122 = vpow.pop %v3121
        %v3123 = vmul.f32 %v3110, 1.442695
        %v3124 = vpow.pop %v3123
        %v3125 = vmul.f32 %v3111, 1.442695
        %v3126 = vpow.pop %v3125
        %v3127 = vmul.f32 %v3112, 1.442695
        %v3128 = vpow.pop %v3127
        %3137 = vst [vmem:[#allocation1] ss:$9 sm:$0xff] %v3114
        %s3138 = scalar_lea.vmem [#allocation1], 1
        %3139 = vst [vmem:[%s3138] ss:$9 sm:$0xff] %v3116
        %s3140 = scalar_lea.vmem [#allocation1], 2
        %3141 = vst [vmem:[%s3140] ss:$9 sm:$0xff] %v3118
        %s3142 = scalar_lea.vmem [#allocation1], 3
        %3143 = vst [vmem:[%s3142] ss:$9 sm:$0xff] %v3120
        %s3144 = scalar_lea.vmem [#allocation1], 4
        %3145 = vst [vmem:[%s3144] ss:$9 sm:$0xff] %v3122
        %s3146 = scalar_lea.vmem [#allocation1], 5
        %3147 = vst [vmem:[%s3146] ss:$9 sm:$0xff] %v3124
        %s3148 = scalar_lea.vmem [#allocation1], 6
        %3149 = vst [vmem:[%s3148] ss:$9 sm:$0xff] %v3126
        %s3150 = scalar_lea.vmem [#allocation1], 7
        %3151 = vst [vmem:[%s3150] ss:$9 sm:$0xff] %v3128
        %v3152 = vld [vmem:[#allocation1] sm:$0xff]
        %v3154 = vsel %vm2416, %v3152, 0.0
        %3155 = vadd.xlane.f32.xlu0 %v3154
        %v3156 = vpop.xlane.xlu0 %3155
        %v3157 = vrcp.pop %v3156
        %v3159 = vperm.slane %v3157, 0
        %v3160 = vperm.slane %v3157, 1
        %v3161 = vperm.slane %v3157, 2
        %v3162 = vperm.slane %v3157, 3
        %v3163 = vperm.slane %v3157, 4
        %v3164 = vperm.slane %v3157, 5
        %v3165 = vperm.slane %v3157, 6
        %v3166 = vperm.slane %v3157, 7
        %v3175 = vmul.f32 %v3114, %v3159
        %v3176 = vmul.f32 %v3116, %v3160
        %v3177 = vmul.f32 %v3118, %v3161
        %v3178 = vmul.f32 %v3120, %v3162
        %v3179 = vmul.f32 %v3122, %v3163
        %v3180 = vmul.f32 %v3124, %v3164
        %v3181 = vmul.f32 %v3126, %v3165
        %v3182 = vmul.f32 %v3128, %v3166
        %v3183 = vpack.c.bf16 %v3175, %v3175
        %v3184 = vpack.c.bf16 %v3176, %v3176
        %v3185 = vpack.c.bf16 %v3177, %v3177
        %v3186 = vpack.c.bf16 %v3178, %v3178
        %v3187 = vpack.c.bf16 %v3179, %v3179
        %v3188 = vpack.c.bf16 %v3180, %v3180
        %v3189 = vpack.c.bf16 %v3181, %v3181
        %v3190 = vpack.c.bf16 %v3182, %v3182
        %v3199 = vunpack.c.l.b16 %v3183
        %v3200 = vunpack.c.l.b16 %v3184
        %v3201 = vunpack.c.l.b16 %v3185
        %v3202 = vunpack.c.l.b16 %v3186
        %v3203 = vunpack.c.l.b16 %v3187
        %v3204 = vunpack.c.l.b16 %v3188
        %v3205 = vunpack.c.l.b16 %v3189
        %v3206 = vunpack.c.l.b16 %v3190
        %v3207 = vrot.slane %v3200, 7
        %v3208 = vsel %vm2540, %v3207, %v3199
        %v3209 = vrot.slane %v3201, 6
        %v3210 = vsel %vm2543, %v3209, %v3208
        %v3211 = vrot.slane %v3202, 5
        %v3212 = vsel %vm2546, %v3211, %v3210
        %v3213 = vrot.slane %v3203, 4
        %v3214 = vsel %vm2549, %v3213, %v3212
        %v3215 = vrot.slane %v3204, 3
        %v3216 = vsel %vm2552, %v3215, %v3214
        %v3217 = vrot.slane %v3205, 2
        %v3218 = vsel %vm2555, %v3217, %v3216
        %v3219 = vrot.slane %v3206, 1
        %v3220 = vsel %vm2558, %v3219, %v3218
        %v3221 = vpack.c.b16 %v3220, %v3220
        %v3223 = vsel %vm2416, %v3221, 0
        %v3226 = vsel %vm2564, %v3023, 0
        %3228 = vmatpush.bf16.msra.mxu0 0
        %3229 = vmatpush.bf16.msra.mxu0 0
        %3230 = vmatpush.bf16.msra.mxu0 0
        %3231 = vmatpush.bf16.msra.mxu0 0
        %3232 = vmatpush.bf16.msra.mxu0 0
        %3233 = vmatpush.bf16.msra.mxu0 0
        %3234 = vmatpush.bf16.msra.mxu0 0
        %3235 = vmatpush.bf16.msra.mxu0 %v3226
        %3236 = vmatmul.bf16.gmra.mxu0 %v3223
        %v3237 = vpop.f32.mrf.mxu0
        %v3238 = vadd.f32 0.0, %v3237
        %v3239 = vpop.f32.mrf.mxu0
        %3240 = vdwg.mxu0
        %v3241 = vsel %vm1541, 1, 0
        %vm3242 = vcmp.eq.s32.totalorder %v3241, 1
        %vm3243 = vmor %vm3242, %vm1553
        %vm3244 = vmor %vm3242, %vm2337
        %vm3245 = vmor %vm3242, %vm2338
        %vm3246 = vmor %vm3242, %vm2339
        %vm3247 = vmor %vm3242, %vm2340
        %vm3248 = vmor %vm3242, %vm2341
        %vm3249 = vmor %vm3242, %vm2342
        %vm3250 = vmor %vm3242, %vm2343
        %v3251 = vpack.c.bf16 %v1769, %v1769
        %v3252 = vpack.c.bf16 %v2227, %v2227
        %v3253 = vpack.c.bf16 %v2283, %v2283
        %3254 = vmatpush.bf16.xpose.msra.mxu0 0
        %3255 = vmatpush.bf16.xpose.msra.mxu0 0
        %3256 = vmatpush.bf16.xpose.msra.mxu0 0
        %3257 = vmatpush.bf16.xpose.msra.mxu0 0
        %3258 = vmatpush.bf16.xpose.msra.mxu0 0
        %3259 = vmatpush.bf16.xpose.msra.mxu0 0
        %3260 = vmatpush.bf16.xpose.msra.mxu0 0
        %3261 = vmatpush.bf16.xpose.msra.mxu0 %v3252
        %3262 = vmatmul.bf16.gmra.mxu0 %v3251
        %v3263 = vpop.f32.mrf.mxu0
        %v3264 = vadd.f32 0.0, %v3263
        %v3265 = vpop.f32.mrf.mxu0
        %3266 = vdwg.mxu0
        %v3268 = vrot.slane %v3264, 1
        %v3269 = vrot.slane %v3264, 2
        %v3270 = vrot.slane %v3264, 3
        %v3271 = vrot.slane %v3264, 4
        %v3272 = vrot.slane %v3264, 5
        %v3273 = vrot.slane %v3264, 6
        %v3274 = vrot.slane %v3264, 7
        %v3282 = vsel %vm3243, -1e+30, %v3264
        %v3283 = vsel %vm3244, -1e+30, %v3268
        %v3284 = vsel %vm3245, -1e+30, %v3269
        %v3285 = vsel %vm3246, -1e+30, %v3270
        %v3286 = vsel %vm3247, -1e+30, %v3271
        %v3287 = vsel %vm3248, -1e+30, %v3272
        %v3288 = vsel %vm3249, -1e+30, %v3273
        %v3289 = vsel %vm3250, -1e+30, %v3274
        %3298 = vst [vmem:[#allocation1] ss:$9 sm:$0xff] %v3282
        %s3299 = scalar_lea.vmem [#allocation1], 1
        %3300 = vst [vmem:[%s3299] ss:$9 sm:$0xff] %v3283
        %s3301 = scalar_lea.vmem [#allocation1], 2
        %3302 = vst [vmem:[%s3301] ss:$9 sm:$0xff] %v3284
        %s3303 = scalar_lea.vmem [#allocation1], 3
        %3304 = vst [vmem:[%s3303] ss:$9 sm:$0xff] %v3285
        %s3305 = scalar_lea.vmem [#allocation1], 4
        %3306 = vst [vmem:[%s3305] ss:$9 sm:$0xff] %v3286
        %s3307 = scalar_lea.vmem [#allocation1], 5
        %3308 = vst [vmem:[%s3307] ss:$9 sm:$0xff] %v3287
        %s3309 = scalar_lea.vmem [#allocation1], 6
        %3310 = vst [vmem:[%s3309] ss:$9 sm:$0xff] %v3288
        %s3311 = scalar_lea.vmem [#allocation1], 7
        %3312 = vst [vmem:[%s3311] ss:$9 sm:$0xff] %v3289
        %v3313 = vld [vmem:[#allocation1] sm:$0xff]
        %v3315 = vsel %vm2416, %v3313, -inf
        %3316 = vmax.xlane.f32.xlu0 %v3315
        %v3317 = vpop.xlane.xlu0 %3316
        %v3319 = vperm.slane %v3317, 0
        %v3320 = vperm.slane %v3317, 1
        %v3321 = vperm.slane %v3317, 2
        %v3322 = vperm.slane %v3317, 3
        %v3323 = vperm.slane %v3317, 4
        %v3324 = vperm.slane %v3317, 5
        %v3325 = vperm.slane %v3317, 6
        %v3326 = vperm.slane %v3317, 7
        %v3335 = vsub.f32 %v3282, %v3319
        %v3336 = vsub.f32 %v3283, %v3320
        %v3337 = vsub.f32 %v3284, %v3321
        %v3338 = vsub.f32 %v3285, %v3322
        %v3339 = vsub.f32 %v3286, %v3323
        %v3340 = vsub.f32 %v3287, %v3324
        %v3341 = vsub.f32 %v3288, %v3325
        %v3342 = vsub.f32 %v3289, %v3326
        %v3343 = vmul.f32 %v3335, 1.442695
        %v3344 = vpow.pop %v3343
        %v3345 = vmul.f32 %v3336, 1.442695
        %v3346 = vpow.pop %v3345
        %v3347 = vmul.f32 %v3337, 1.442695
        %v3348 = vpow.pop %v3347
        %v3349 = vmul.f32 %v3338, 1.442695
        %v3350 = vpow.pop %v3349
        %v3351 = vmul.f32 %v3339, 1.442695
        %v3352 = vpow.pop %v3351
        %v3353 = vmul.f32 %v3340, 1.442695
        %v3354 = vpow.pop %v3353
        %v3355 = vmul.f32 %v3341, 1.442695
        %v3356 = vpow.pop %v3355
        %v3357 = vmul.f32 %v3342, 1.442695
        %v3358 = vpow.pop %v3357
        %3367 = vst [vmem:[#allocation1] ss:$9 sm:$0xff] %v3344
        %s3368 = scalar_lea.vmem [#allocation1], 1
        %3369 = vst [vmem:[%s3368] ss:$9 sm:$0xff] %v3346
        %s3370 = scalar_lea.vmem [#allocation1], 2
        %3371 = vst [vmem:[%s3370] ss:$9 sm:$0xff] %v3348
        %s3372 = scalar_lea.vmem [#allocation1], 3
        %3373 = vst [vmem:[%s3372] ss:$9 sm:$0xff] %v3350
        %s3374 = scalar_lea.vmem [#allocation1], 4
        %3375 = vst [vmem:[%s3374] ss:$9 sm:$0xff] %v3352
        %s3376 = scalar_lea.vmem [#allocation1], 5
        %3377 = vst [vmem:[%s3376] ss:$9 sm:$0xff] %v3354
        %s3378 = scalar_lea.vmem [#allocation1], 6
        %3379 = vst [vmem:[%s3378] ss:$9 sm:$0xff] %v3356
        %s3380 = scalar_lea.vmem [#allocation1], 7
        %3381 = vst [vmem:[%s3380] ss:$9 sm:$0xff] %v3358
        %v3382 = vld [vmem:[#allocation1] sm:$0xff]
        %v3384 = vsel %vm2416, %v3382, 0.0
        %3385 = vadd.xlane.f32.xlu0 %v3384
        %v3386 = vpop.xlane.xlu0 %3385
        %v3387 = vrcp.pop %v3386
        %v3389 = vperm.slane %v3387, 0
        %v3390 = vperm.slane %v3387, 1
        %v3391 = vperm.slane %v3387, 2
        %v3392 = vperm.slane %v3387, 3
        %v3393 = vperm.slane %v3387, 4
        %v3394 = vperm.slane %v3387, 5
        %v3395 = vperm.slane %v3387, 6
        %v3396 = vperm.slane %v3387, 7
        %v3405 = vmul.f32 %v3344, %v3389
        %v3406 = vmul.f32 %v3346, %v3390
        %v3407 = vmul.f32 %v3348, %v3391
        %v3408 = vmul.f32 %v3350, %v3392
        %v3409 = vmul.f32 %v3352, %v3393
        %v3410 = vmul.f32 %v3354, %v3394
        %v3411 = vmul.f32 %v3356, %v3395
        %v3412 = vmul.f32 %v3358, %v3396
        %v3413 = vpack.c.bf16 %v3405, %v3405
        %v3414 = vpack.c.bf16 %v3406, %v3406
        %v3415 = vpack.c.bf16 %v3407, %v3407
        %v3416 = vpack.c.bf16 %v3408, %v3408
        %v3417 = vpack.c.bf16 %v3409, %v3409
        %v3418 = vpack.c.bf16 %v3410, %v3410
        %v3419 = vpack.c.bf16 %v3411, %v3411
        %v3420 = vpack.c.bf16 %v3412, %v3412
        %v3429 = vunpack.c.l.b16 %v3413
        %v3430 = vunpack.c.l.b16 %v3414
        %v3431 = vunpack.c.l.b16 %v3415
        %v3432 = vunpack.c.l.b16 %v3416
        %v3433 = vunpack.c.l.b16 %v3417
        %v3434 = vunpack.c.l.b16 %v3418
        %v3435 = vunpack.c.l.b16 %v3419
        %v3436 = vunpack.c.l.b16 %v3420
        %v3437 = vrot.slane %v3430, 7
        %v3438 = vsel %vm2540, %v3437, %v3429
        %v3439 = vrot.slane %v3431, 6
        %v3440 = vsel %vm2543, %v3439, %v3438
        %v3441 = vrot.slane %v3432, 5
        %v3442 = vsel %vm2546, %v3441, %v3440
        %v3443 = vrot.slane %v3433, 4
        %v3444 = vsel %vm2549, %v3443, %v3442
        %v3445 = vrot.slane %v3434, 3
        %v3446 = vsel %vm2552, %v3445, %v3444
        %v3447 = vrot.slane %v3435, 2
        %v3448 = vsel %vm2555, %v3447, %v3446
        %v3449 = vrot.slane %v3436, 1
        %v3450 = vsel %vm2558, %v3449, %v3448
        %v3451 = vpack.c.b16 %v3450, %v3450
        %v3453 = vsel %vm2416, %v3451, 0
        %v3456 = vsel %vm2564, %v3253, 0
        %3458 = vmatpush.bf16.msra.mxu0 0
        %3459 = vmatpush.bf16.msra.mxu0 0
        %3460 = vmatpush.bf16.msra.mxu0 0
        %3461 = vmatpush.bf16.msra.mxu0 0
        %3462 = vmatpush.bf16.msra.mxu0 0
        %3463 = vmatpush.bf16.msra.mxu0 0
        %3464 = vmatpush.bf16.msra.mxu0 0
        %3465 = vmatpush.bf16.msra.mxu0 %v3456
        %3466 = vmatmul.bf16.gmra.mxu0 %v3453
        %v3467 = vpop.f32.mrf.mxu0
        %v3468 = vadd.f32 0.0, %v3467
        %v3469 = vpop.f32.mrf.mxu0
        %3470 = vdwg.mxu0
        %v3471 = vpack.c.bf16 %v1783, %v1783
        %v3472 = vpack.c.bf16 %v2241, %v2241
        %v3473 = vpack.c.bf16 %v2297, %v2297
        %3474 = vmatpush.bf16.xpose.msra.mxu0 0
        %3475 = vmatpush.bf16.xpose.msra.mxu0 0
        %3476 = vmatpush.bf16.xpose.msra.mxu0 0
        %3477 = vmatpush.bf16.xpose.msra.mxu0 0
        %3478 = vmatpush.bf16.xpose.msra.mxu0 0
        %3479 = vmatpush.bf16.xpose.msra.mxu0 0
        %3480 = vmatpush.bf16.xpose.msra.mxu0 0
        %3481 = vmatpush.bf16.xpose.msra.mxu0 %v3472
        %3482 = vmatmul.bf16.gmra.mxu0 %v3471
        %v3483 = vpop.f32.mrf.mxu0
        %v3484 = vadd.f32 0.0, %v3483
        %v3485 = vpop.f32.mrf.mxu0
        %3486 = vdwg.mxu0
        %v3488 = vrot.slane %v3484, 1
        %v3489 = vrot.slane %v3484, 2
        %v3490 = vrot.slane %v3484, 3
        %v3491 = vrot.slane %v3484, 4
        %v3492 = vrot.slane %v3484, 5
        %v3493 = vrot.slane %v3484, 6
        %v3494 = vrot.slane %v3484, 7
        %v3502 = vsel %vm3243, -1e+30, %v3484
        %v3503 = vsel %vm3244, -1e+30, %v3488
        %v3504 = vsel %vm3245, -1e+30, %v3489
        %v3505 = vsel %vm3246, -1e+30, %v3490
        %v3506 = vsel %vm3247, -1e+30, %v3491
        %v3507 = vsel %vm3248, -1e+30, %v3492
        %v3508 = vsel %vm3249, -1e+30, %v3493
        %v3509 = vsel %vm3250, -1e+30, %v3494
        %3518 = vst [vmem:[#allocation1] ss:$9 sm:$0xff] %v3502
        %s3519 = scalar_lea.vmem [#allocation1], 1
        %3520 = vst [vmem:[%s3519] ss:$9 sm:$0xff] %v3503
        %s3521 = scalar_lea.vmem [#allocation1], 2
        %3522 = vst [vmem:[%s3521] ss:$9 sm:$0xff] %v3504
        %s3523 = scalar_lea.vmem [#allocation1], 3
        %3524 = vst [vmem:[%s3523] ss:$9 sm:$0xff] %v3505
        %s3525 = scalar_lea.vmem [#allocation1], 4
        %3526 = vst [vmem:[%s3525] ss:$9 sm:$0xff] %v3506
        %s3527 = scalar_lea.vmem [#allocation1], 5
        %3528 = vst [vmem:[%s3527] ss:$9 sm:$0xff] %v3507
        %s3529 = scalar_lea.vmem [#allocation1], 6
        %3530 = vst [vmem:[%s3529] ss:$9 sm:$0xff] %v3508
        %s3531 = scalar_lea.vmem [#allocation1], 7
        %3532 = vst [vmem:[%s3531] ss:$9 sm:$0xff] %v3509
        %v3533 = vld [vmem:[#allocation1] sm:$0xff]
        %v3535 = vsel %vm2416, %v3533, -inf
        %3536 = vmax.xlane.f32.xlu0 %v3535
        %v3537 = vpop.xlane.xlu0 %3536
        %v3539 = vperm.slane %v3537, 0
        %v3540 = vperm.slane %v3537, 1
        %v3541 = vperm.slane %v3537, 2
        %v3542 = vperm.slane %v3537, 3
        %v3543 = vperm.slane %v3537, 4
        %v3544 = vperm.slane %v3537, 5
        %v3545 = vperm.slane %v3537, 6
        %v3546 = vperm.slane %v3537, 7
        %v3555 = vsub.f32 %v3502, %v3539
        %v3556 = vsub.f32 %v3503, %v3540
        %v3557 = vsub.f32 %v3504, %v3541
        %v3558 = vsub.f32 %v3505, %v3542
        %v3559 = vsub.f32 %v3506, %v3543
        %v3560 = vsub.f32 %v3507, %v3544
        %v3561 = vsub.f32 %v3508, %v3545
        %v3562 = vsub.f32 %v3509, %v3546
        %v3563 = vmul.f32 %v3555, 1.442695
        %v3564 = vpow.pop %v3563
        %v3565 = vmul.f32 %v3556, 1.442695
        %v3566 = vpow.pop %v3565
        %v3567 = vmul.f32 %v3557, 1.442695
        %v3568 = vpow.pop %v3567
        %v3569 = vmul.f32 %v3558, 1.442695
        %v3570 = vpow.pop %v3569
        %v3571 = vmul.f32 %v3559, 1.442695
        %v3572 = vpow.pop %v3571
        %v3573 = vmul.f32 %v3560, 1.442695
        %v3574 = vpow.pop %v3573
        %v3575 = vmul.f32 %v3561, 1.442695
        %v3576 = vpow.pop %v3575
        %v3577 = vmul.f32 %v3562, 1.442695
        %v3578 = vpow.pop %v3577
        %3587 = vst [vmem:[#allocation1] ss:$9 sm:$0xff] %v3564
        %s3588 = scalar_lea.vmem [#allocation1], 1
        %3589 = vst [vmem:[%s3588] ss:$9 sm:$0xff] %v3566
        %s3590 = scalar_lea.vmem [#allocation1], 2
        %3591 = vst [vmem:[%s3590] ss:$9 sm:$0xff] %v3568
        %s3592 = scalar_lea.vmem [#allocation1], 3
        %3593 = vst [vmem:[%s3592] ss:$9 sm:$0xff] %v3570
        %s3594 = scalar_lea.vmem [#allocation1], 4
        %3595 = vst [vmem:[%s3594] ss:$9 sm:$0xff] %v3572
        %s3596 = scalar_lea.vmem [#allocation1], 5
        %3597 = vst [vmem:[%s3596] ss:$9 sm:$0xff] %v3574
        %s3598 = scalar_lea.vmem [#allocation1], 6
        %3599 = vst [vmem:[%s3598] ss:$9 sm:$0xff] %v3576
        %s3600 = scalar_lea.vmem [#allocation1], 7
        %3601 = vst [vmem:[%s3600] ss:$9 sm:$0xff] %v3578
        %v3602 = vld [vmem:[#allocation1] sm:$0xff]
        %v3604 = vsel %vm2416, %v3602, 0.0
        %3605 = vadd.xlane.f32.xlu0 %v3604
        %v3606 = vpop.xlane.xlu0 %3605
        %v3607 = vrcp.pop %v3606
        %v3609 = vperm.slane %v3607, 0
        %v3610 = vperm.slane %v3607, 1
        %v3611 = vperm.slane %v3607, 2
        %v3612 = vperm.slane %v3607, 3
        %v3613 = vperm.slane %v3607, 4
        %v3614 = vperm.slane %v3607, 5
        %v3615 = vperm.slane %v3607, 6
        %v3616 = vperm.slane %v3607, 7
        %v3625 = vmul.f32 %v3564, %v3609
        %v3626 = vmul.f32 %v3566, %v3610
        %v3627 = vmul.f32 %v3568, %v3611
        %v3628 = vmul.f32 %v3570, %v3612
        %v3629 = vmul.f32 %v3572, %v3613
        %v3630 = vmul.f32 %v3574, %v3614
        %v3631 = vmul.f32 %v3576, %v3615
        %v3632 = vmul.f32 %v3578, %v3616
        %v3633 = vpack.c.bf16 %v3625, %v3625
        %v3634 = vpack.c.bf16 %v3626, %v3626
        %v3635 = vpack.c.bf16 %v3627, %v3627
        %v3636 = vpack.c.bf16 %v3628, %v3628
        %v3637 = vpack.c.bf16 %v3629, %v3629
        %v3638 = vpack.c.bf16 %v3630, %v3630
        %v3639 = vpack.c.bf16 %v3631, %v3631
        %v3640 = vpack.c.bf16 %v3632, %v3632
        %v3649 = vunpack.c.l.b16 %v3633
        %v3650 = vunpack.c.l.b16 %v3634
        %v3651 = vunpack.c.l.b16 %v3635
        %v3652 = vunpack.c.l.b16 %v3636
        %v3653 = vunpack.c.l.b16 %v3637
        %v3654 = vunpack.c.l.b16 %v3638
        %v3655 = vunpack.c.l.b16 %v3639
        %v3656 = vunpack.c.l.b16 %v3640
        %v3657 = vrot.slane %v3650, 7
        %v3658 = vsel %vm2540, %v3657, %v3649
        %v3659 = vrot.slane %v3651, 6
        %v3660 = vsel %vm2543, %v3659, %v3658
        %v3661 = vrot.slane %v3652, 5
        %v3662 = vsel %vm2546, %v3661, %v3660
        %v3663 = vrot.slane %v3653, 4
        %v3664 = vsel %vm2549, %v3663, %v3662
        %v3665 = vrot.slane %v3654, 3
        %v3666 = vsel %vm2552, %v3665, %v3664
        %v3667 = vrot.slane %v3655, 2
        %v3668 = vsel %vm2555, %v3667, %v3666
        %v3669 = vrot.slane %v3656, 1
        %v3670 = vsel %vm2558, %v3669, %v3668
        %v3671 = vpack.c.b16 %v3670, %v3670
        %v3673 = vsel %vm2416, %v3671, 0
        %v3676 = vsel %vm2564, %v3473, 0
        %3678 = vmatpush.bf16.msra.mxu0 0
        %3679 = vmatpush.bf16.msra.mxu0 0
        %3680 = vmatpush.bf16.msra.mxu0 0
        %3681 = vmatpush.bf16.msra.mxu0 0
        %3682 = vmatpush.bf16.msra.mxu0 0
        %3683 = vmatpush.bf16.msra.mxu0 0
        %3684 = vmatpush.bf16.msra.mxu0 0
        %3685 = vmatpush.bf16.msra.mxu0 %v3676
        %3686 = vmatmul.bf16.gmra.mxu0 %v3673
        %v3687 = vpop.f32.mrf.mxu0
        %v3688 = vadd.f32 0.0, %v3687
        %v3689 = vpop.f32.mrf.mxu0
        %3690 = vdwg.mxu0
        %v3691 = vpack.c.bf16 %v1797, %v1797
        %v3692 = vpack.c.bf16 %v2255, %v2255
        %v3693 = vpack.c.bf16 %v2311, %v2311
        %3694 = vmatpush.bf16.xpose.msra.mxu0 0
        %3695 = vmatpush.bf16.xpose.msra.mxu0 0
        %3696 = vmatpush.bf16.xpose.msra.mxu0 0
        %3697 = vmatpush.bf16.xpose.msra.mxu0 0
        %3698 = vmatpush.bf16.xpose.msra.mxu0 0
        %3699 = vmatpush.bf16.xpose.msra.mxu0 0
        %3700 = vmatpush.bf16.xpose.msra.mxu0 0
        %3701 = vmatpush.bf16.xpose.msra.mxu0 %v3692
        %3702 = vmatmul.bf16.gmra.mxu0 %v3691
        %v3703 = vpop.f32.mrf.mxu0
        %v3704 = vadd.f32 0.0, %v3703
        %v3705 = vpop.f32.mrf.mxu0
        %3706 = vdwg.mxu0
        %v3708 = vrot.slane %v3704, 1
        %v3709 = vrot.slane %v3704, 2
        %v3710 = vrot.slane %v3704, 3
        %v3711 = vrot.slane %v3704, 4
        %v3712 = vrot.slane %v3704, 5
        %v3713 = vrot.slane %v3704, 6
        %v3714 = vrot.slane %v3704, 7
        %v3722 = vsel %vm3243, -1e+30, %v3704
        %v3723 = vsel %vm3244, -1e+30, %v3708
        %v3724 = vsel %vm3245, -1e+30, %v3709
        %v3725 = vsel %vm3246, -1e+30, %v3710
        %v3726 = vsel %vm3247, -1e+30, %v3711
        %v3727 = vsel %vm3248, -1e+30, %v3712
        %v3728 = vsel %vm3249, -1e+30, %v3713
        %v3729 = vsel %vm3250, -1e+30, %v3714
        %3738 = vst [vmem:[#allocation1] ss:$9 sm:$0xff] %v3722
        %s3739 = scalar_lea.vmem [#allocation1], 1
        %3740 = vst [vmem:[%s3739] ss:$9 sm:$0xff] %v3723
        %s3741 = scalar_lea.vmem [#allocation1], 2
        %3742 = vst [vmem:[%s3741] ss:$9 sm:$0xff] %v3724
        %s3743 = scalar_lea.vmem [#allocation1], 3
        %3744 = vst [vmem:[%s3743] ss:$9 sm:$0xff] %v3725
        %s3745 = scalar_lea.vmem [#allocation1], 4
        %3746 = vst [vmem:[%s3745] ss:$9 sm:$0xff] %v3726
        %s3747 = scalar_lea.vmem [#allocation1], 5
        %3748 = vst [vmem:[%s3747] ss:$9 sm:$0xff] %v3727
        %s3749 = scalar_lea.vmem [#allocation1], 6
        %3750 = vst [vmem:[%s3749] ss:$9 sm:$0xff] %v3728
        %s3751 = scalar_lea.vmem [#allocation1], 7
        %3752 = vst [vmem:[%s3751] ss:$9 sm:$0xff] %v3729
        %v3753 = vld [vmem:[#allocation1] sm:$0xff]
        %v3755 = vsel %vm2416, %v3753, -inf
        %3756 = vmax.xlane.f32.xlu0 %v3755
        %v3757 = vpop.xlane.xlu0 %3756
        %v3759 = vperm.slane %v3757, 0
        %v3760 = vperm.slane %v3757, 1
        %v3761 = vperm.slane %v3757, 2
        %v3762 = vperm.slane %v3757, 3
        %v3763 = vperm.slane %v3757, 4
        %v3764 = vperm.slane %v3757, 5
        %v3765 = vperm.slane %v3757, 6
        %v3766 = vperm.slane %v3757, 7
        %v3775 = vsub.f32 %v3722, %v3759
        %v3776 = vsub.f32 %v3723, %v3760
        %v3777 = vsub.f32 %v3724, %v3761
        %v3778 = vsub.f32 %v3725, %v3762
        %v3779 = vsub.f32 %v3726, %v3763
        %v3780 = vsub.f32 %v3727, %v3764
        %v3781 = vsub.f32 %v3728, %v3765
        %v3782 = vsub.f32 %v3729, %v3766
        %v3783 = vmul.f32 %v3775, 1.442695
        %v3784 = vpow.pop %v3783
        %v3785 = vmul.f32 %v3776, 1.442695
        %v3786 = vpow.pop %v3785
        %v3787 = vmul.f32 %v3777, 1.442695
        %v3788 = vpow.pop %v3787
        %v3789 = vmul.f32 %v3778, 1.442695
        %v3790 = vpow.pop %v3789
        %v3791 = vmul.f32 %v3779, 1.442695
        %v3792 = vpow.pop %v3791
        %v3793 = vmul.f32 %v3780, 1.442695
        %v3794 = vpow.pop %v3793
        %v3795 = vmul.f32 %v3781, 1.442695
        %v3796 = vpow.pop %v3795
        %v3797 = vmul.f32 %v3782, 1.442695
        %v3798 = vpow.pop %v3797
        %3807 = vst [vmem:[#allocation1] ss:$9 sm:$0xff] %v3784
        %s3808 = scalar_lea.vmem [#allocation1], 1
        %3809 = vst [vmem:[%s3808] ss:$9 sm:$0xff] %v3786
        %s3810 = scalar_lea.vmem [#allocation1], 2
        %3811 = vst [vmem:[%s3810] ss:$9 sm:$0xff] %v3788
        %s3812 = scalar_lea.vmem [#allocation1], 3
        %3813 = vst [vmem:[%s3812] ss:$9 sm:$0xff] %v3790
        %s3814 = scalar_lea.vmem [#allocation1], 4
        %3815 = vst [vmem:[%s3814] ss:$9 sm:$0xff] %v3792
        %s3816 = scalar_lea.vmem [#allocation1], 5
        %3817 = vst [vmem:[%s3816] ss:$9 sm:$0xff] %v3794
        %s3818 = scalar_lea.vmem [#allocation1], 6
        %3819 = vst [vmem:[%s3818] ss:$9 sm:$0xff] %v3796
        %s3820 = scalar_lea.vmem [#allocation1], 7
        %3821 = vst [vmem:[%s3820] ss:$9 sm:$0xff] %v3798
        %v3822 = vld [vmem:[#allocation1] sm:$0xff]
        %v3824 = vsel %vm2416, %v3822, 0.0
        %3825 = vadd.xlane.f32.xlu0 %v3824
        %v3826 = vpop.xlane.xlu0 %3825
        %v3827 = vrcp.pop %v3826
        %v3829 = vperm.slane %v3827, 0
        %v3830 = vperm.slane %v3827, 1
        %v3831 = vperm.slane %v3827, 2
        %v3832 = vperm.slane %v3827, 3
        %v3833 = vperm.slane %v3827, 4
        %v3834 = vperm.slane %v3827, 5
        %v3835 = vperm.slane %v3827, 6
        %v3836 = vperm.slane %v3827, 7
        %v3845 = vmul.f32 %v3784, %v3829
        %v3846 = vmul.f32 %v3786, %v3830
        %v3847 = vmul.f32 %v3788, %v3831
        %v3848 = vmul.f32 %v3790, %v3832
        %v3849 = vmul.f32 %v3792, %v3833
        %v3850 = vmul.f32 %v3794, %v3834
        %v3851 = vmul.f32 %v3796, %v3835
        %v3852 = vmul.f32 %v3798, %v3836
        %v3853 = vpack.c.bf16 %v3845, %v3845
        %v3854 = vpack.c.bf16 %v3846, %v3846
        %v3855 = vpack.c.bf16 %v3847, %v3847
        %v3856 = vpack.c.bf16 %v3848, %v3848
        %v3857 = vpack.c.bf16 %v3849, %v3849
        %v3858 = vpack.c.bf16 %v3850, %v3850
        %v3859 = vpack.c.bf16 %v3851, %v3851
        %v3860 = vpack.c.bf16 %v3852, %v3852
        %v3869 = vunpack.c.l.b16 %v3853
        %v3870 = vunpack.c.l.b16 %v3854
        %v3871 = vunpack.c.l.b16 %v3855
        %v3872 = vunpack.c.l.b16 %v3856
        %v3873 = vunpack.c.l.b16 %v3857
        %v3874 = vunpack.c.l.b16 %v3858
        %v3875 = vunpack.c.l.b16 %v3859
        %v3876 = vunpack.c.l.b16 %v3860
        %v3877 = vrot.slane %v3870, 7
        %v3878 = vsel %vm2540, %v3877, %v3869
        %v3879 = vrot.slane %v3871, 6
        %v3880 = vsel %vm2543, %v3879, %v3878
        %v3881 = vrot.slane %v3872, 5
        %v3882 = vsel %vm2546, %v3881, %v3880
        %v3883 = vrot.slane %v3873, 4
        %v3884 = vsel %vm2549, %v3883, %v3882
        %v3885 = vrot.slane %v3874, 3
        %v3886 = vsel %vm2552, %v3885, %v3884
        %v3887 = vrot.slane %v3875, 2
        %v3888 = vsel %vm2555, %v3887, %v3886
        %v3889 = vrot.slane %v3876, 1
        %v3890 = vsel %vm2558, %v3889, %v3888
        %v3891 = vpack.c.b16 %v3890, %v3890
        %v3893 = vsel %vm2416, %v3891, 0
        %v3896 = vsel %vm2564, %v3693, 0
        %3898 = vmatpush.bf16.msra.mxu0 0
        %3899 = vmatpush.bf16.msra.mxu0 0
        %3900 = vmatpush.bf16.msra.mxu0 0
        %3901 = vmatpush.bf16.msra.mxu0 0
        %3902 = vmatpush.bf16.msra.mxu0 0
        %3903 = vmatpush.bf16.msra.mxu0 0
        %3904 = vmatpush.bf16.msra.mxu0 0
        %3905 = vmatpush.bf16.msra.mxu0 %v3896
        %3906 = vmatmul.bf16.gmra.mxu0 %v3893
        %v3907 = vpop.f32.mrf.mxu0
        %v3908 = vadd.f32 0.0, %v3907
        %v3909 = vpop.f32.mrf.mxu0
        %3910 = vdwg.mxu0
        %v3911 = vpack.c.bf16 %v1811, %v1811
        %v3912 = vpack.c.bf16 %v2269, %v2269
        %v3913 = vpack.c.bf16 %v2325, %v2325
        %3914 = vmatpush.bf16.xpose.msra.mxu0 0
        %3915 = vmatpush.bf16.xpose.msra.mxu0 0
        %3916 = vmatpush.bf16.xpose.msra.mxu0 0
        %3917 = vmatpush.bf16.xpose.msra.mxu0 0
        %3918 = vmatpush.bf16.xpose.msra.mxu0 0
        %3919 = vmatpush.bf16.xpose.msra.mxu0 0
        %3920 = vmatpush.bf16.xpose.msra.mxu0 0
        %3921 = vmatpush.bf16.xpose.msra.mxu0 %v3912
        %3922 = vmatmul.bf16.gmra.mxu0 %v3911
        %v3923 = vpop.f32.mrf.mxu0
        %v3924 = vadd.f32 0.0, %v3923
        %v3925 = vpop.f32.mrf.mxu0
        %3926 = vdwg.mxu0
        %v3928 = vrot.slane %v3924, 1
        %v3929 = vrot.slane %v3924, 2
        %v3930 = vrot.slane %v3924, 3
        %v3931 = vrot.slane %v3924, 4
        %v3932 = vrot.slane %v3924, 5
        %v3933 = vrot.slane %v3924, 6
        %v3934 = vrot.slane %v3924, 7
        %v3942 = vsel %vm3243, -1e+30, %v3924
        %v3943 = vsel %vm3244, -1e+30, %v3928
        %v3944 = vsel %vm3245, -1e+30, %v3929
        %v3945 = vsel %vm3246, -1e+30, %v3930
        %v3946 = vsel %vm3247, -1e+30, %v3931
        %v3947 = vsel %vm3248, -1e+30, %v3932
        %v3948 = vsel %vm3249, -1e+30, %v3933
        %v3949 = vsel %vm3250, -1e+30, %v3934
        %3958 = vst [vmem:[#allocation1] ss:$9 sm:$0xff] %v3942
        %s3959 = scalar_lea.vmem [#allocation1], 1
        %3960 = vst [vmem:[%s3959] ss:$9 sm:$0xff] %v3943
        %s3961 = scalar_lea.vmem [#allocation1], 2
        %3962 = vst [vmem:[%s3961] ss:$9 sm:$0xff] %v3944
        %s3963 = scalar_lea.vmem [#allocation1], 3
        %3964 = vst [vmem:[%s3963] ss:$9 sm:$0xff] %v3945
        %s3965 = scalar_lea.vmem [#allocation1], 4
        %3966 = vst [vmem:[%s3965] ss:$9 sm:$0xff] %v3946
        %s3967 = scalar_lea.vmem [#allocation1], 5
        %3968 = vst [vmem:[%s3967] ss:$9 sm:$0xff] %v3947
        %s3969 = scalar_lea.vmem [#allocation1], 6
        %3970 = vst [vmem:[%s3969] ss:$9 sm:$0xff] %v3948
        %s3971 = scalar_lea.vmem [#allocation1], 7
        %3972 = vst [vmem:[%s3971] ss:$9 sm:$0xff] %v3949
        %v3973 = vld [vmem:[#allocation1] sm:$0xff]
        %v3975 = vsel %vm2416, %v3973, -inf
        %3976 = vmax.xlane.f32.xlu0 %v3975
        %v3977 = vpop.xlane.xlu0 %3976
        %v3979 = vperm.slane %v3977, 0
        %v3980 = vperm.slane %v3977, 1
        %v3981 = vperm.slane %v3977, 2
        %v3982 = vperm.slane %v3977, 3
        %v3983 = vperm.slane %v3977, 4
        %v3984 = vperm.slane %v3977, 5
        %v3985 = vperm.slane %v3977, 6
        %v3986 = vperm.slane %v3977, 7
        %v3995 = vsub.f32 %v3942, %v3979
        %v3996 = vsub.f32 %v3943, %v3980
        %v3997 = vsub.f32 %v3944, %v3981
        %v3998 = vsub.f32 %v3945, %v3982
        %v3999 = vsub.f32 %v3946, %v3983
        %v4000 = vsub.f32 %v3947, %v3984
        %v4001 = vsub.f32 %v3948, %v3985
        %v4002 = vsub.f32 %v3949, %v3986
        %v4003 = vmul.f32 %v3995, 1.442695
        %v4004 = vpow.pop %v4003
        %v4005 = vmul.f32 %v3996, 1.442695
        %v4006 = vpow.pop %v4005
        %v4007 = vmul.f32 %v3997, 1.442695
        %v4008 = vpow.pop %v4007
        %v4009 = vmul.f32 %v3998, 1.442695
        %v4010 = vpow.pop %v4009
        %v4011 = vmul.f32 %v3999, 1.442695
        %v4012 = vpow.pop %v4011
        %v4013 = vmul.f32 %v4000, 1.442695
        %v4014 = vpow.pop %v4013
        %v4015 = vmul.f32 %v4001, 1.442695
        %v4016 = vpow.pop %v4015
        %v4017 = vmul.f32 %v4002, 1.442695
        %v4018 = vpow.pop %v4017
        %4027 = vst [vmem:[#allocation1] ss:$9 sm:$0xff] %v4004
        %s4028 = scalar_lea.vmem [#allocation1], 1
        %4029 = vst [vmem:[%s4028] ss:$9 sm:$0xff] %v4006
        %s4030 = scalar_lea.vmem [#allocation1], 2
        %4031 = vst [vmem:[%s4030] ss:$9 sm:$0xff] %v4008
        %s4032 = scalar_lea.vmem [#allocation1], 3
        %4033 = vst [vmem:[%s4032] ss:$9 sm:$0xff] %v4010
        %s4034 = scalar_lea.vmem [#allocation1], 4
        %4035 = vst [vmem:[%s4034] ss:$9 sm:$0xff] %v4012
        %s4036 = scalar_lea.vmem [#allocation1], 5
        %4037 = vst [vmem:[%s4036] ss:$9 sm:$0xff] %v4014
        %s4038 = scalar_lea.vmem [#allocation1], 6
        %4039 = vst [vmem:[%s4038] ss:$9 sm:$0xff] %v4016
        %s4040 = scalar_lea.vmem [#allocation1], 7
        %4041 = vst [vmem:[%s4040] ss:$9 sm:$0xff] %v4018
        %v4042 = vld [vmem:[#allocation1] sm:$0xff]
        %v4044 = vsel %vm2416, %v4042, 0.0
        %4045 = vadd.xlane.f32.xlu0 %v4044
        %v4046 = vpop.xlane.xlu0 %4045
        %v4047 = vrcp.pop %v4046
        %v4049 = vperm.slane %v4047, 0
        %v4050 = vperm.slane %v4047, 1
        %v4051 = vperm.slane %v4047, 2
        %v4052 = vperm.slane %v4047, 3
        %v4053 = vperm.slane %v4047, 4
        %v4054 = vperm.slane %v4047, 5
        %v4055 = vperm.slane %v4047, 6
        %v4056 = vperm.slane %v4047, 7
        %v4065 = vmul.f32 %v4004, %v4049
        %v4066 = vmul.f32 %v4006, %v4050
        %v4067 = vmul.f32 %v4008, %v4051
        %v4068 = vmul.f32 %v4010, %v4052
        %v4069 = vmul.f32 %v4012, %v4053
        %v4070 = vmul.f32 %v4014, %v4054
        %v4071 = vmul.f32 %v4016, %v4055
        %v4072 = vmul.f32 %v4018, %v4056
        %v4073 = vpack.c.bf16 %v4065, %v4065
        %v4074 = vpack.c.bf16 %v4066, %v4066
        %v4075 = vpack.c.bf16 %v4067, %v4067
        %v4076 = vpack.c.bf16 %v4068, %v4068
        %v4077 = vpack.c.bf16 %v4069, %v4069
        %v4078 = vpack.c.bf16 %v4070, %v4070
        %v4079 = vpack.c.bf16 %v4071, %v4071
        %v4080 = vpack.c.bf16 %v4072, %v4072
        %v4089 = vunpack.c.l.b16 %v4073
        %v4090 = vunpack.c.l.b16 %v4074
        %v4091 = vunpack.c.l.b16 %v4075
        %v4092 = vunpack.c.l.b16 %v4076
        %v4093 = vunpack.c.l.b16 %v4077
        %v4094 = vunpack.c.l.b16 %v4078
        %v4095 = vunpack.c.l.b16 %v4079
        %v4096 = vunpack.c.l.b16 %v4080
        %v4097 = vrot.slane %v4090, 7
        %v4098 = vsel %vm2540, %v4097, %v4089
        %v4099 = vrot.slane %v4091, 6
        %v4100 = vsel %vm2543, %v4099, %v4098
        %v4101 = vrot.slane %v4092, 5
        %v4102 = vsel %vm2546, %v4101, %v4100
        %v4103 = vrot.slane %v4093, 4
        %v4104 = vsel %vm2549, %v4103, %v4102
        %v4105 = vrot.slane %v4094, 3
        %v4106 = vsel %vm2552, %v4105, %v4104
        %v4107 = vrot.slane %v4095, 2
        %v4108 = vsel %vm2555, %v4107, %v4106
        %v4109 = vrot.slane %v4096, 1
        %v4110 = vsel %vm2558, %v4109, %v4108
        %v4111 = vpack.c.b16 %v4110, %v4110
        %v4113 = vsel %vm2416, %v4111, 0
        %v4116 = vsel %vm2564, %v3913, 0
        %4118 = vmatpush.bf16.msra.mxu0 0
        %4119 = vmatpush.bf16.msra.mxu0 0
        %4120 = vmatpush.bf16.msra.mxu0 0
        %4121 = vmatpush.bf16.msra.mxu0 0
        %4122 = vmatpush.bf16.msra.mxu0 0
        %4123 = vmatpush.bf16.msra.mxu0 0
        %4124 = vmatpush.bf16.msra.mxu0 0
        %4125 = vmatpush.bf16.msra.mxu0 %v4116
        %4126 = vmatmul.bf16.gmra.mxu0 %v4113
        %v4127 = vpop.f32.mrf.mxu0
        %v4128 = vadd.f32 0.0, %v4127
        %v4129 = vpop.f32.mrf.mxu0
        %4130 = vdwg.mxu0
        %v4131 = vpack.c.bf16 %v3468, %v2578
        %v4132 = vpack.c.bf16 %v3688, %v2798
        %v4133 = vpack.c.bf16 %v3908, %v3018
        %v4134 = vpack.c.bf16 %v4128, %v3238
        %v4135 = vld [vmem:[%s1246] sm:$0xf]
        %v4136 = vld [vmem:[%s1246 + $0x4] sm:$0xf]
        %v4137 = vld [vmem:[%s1246 + $0x8] sm:$0xf]
        %v4138 = vld [vmem:[%s1246 + $0xc] sm:$0xf]
        %v4139 = vld [vmem:[%s1246 + $0x10] sm:$0xf]
        %v4140 = vld [vmem:[%s1246 + $0x14] sm:$0xf]
        %v4141 = vld [vmem:[%s1246 + $0x18] sm:$0xf]
        %v4142 = vld [vmem:[%s1246 + $0x1c] sm:$0xf]
        %v4143 = vld [vmem:[%s1246 + $0x20] sm:$0xf]
        %v4144 = vld [vmem:[%s1246 + $0x24] sm:$0xf]
        %v4145 = vld [vmem:[%s1246 + $0x28] sm:$0xf]
        %v4146 = vld [vmem:[%s1246 + $0x2c] sm:$0xf]
        %v4147 = vld [vmem:[%s1246 + $0x30] sm:$0xf]
        %v4148 = vld [vmem:[%s1246 + $0x34] sm:$0xf]
        %v4149 = vld [vmem:[%s1246 + $0x38] sm:$0xf]
        %v4150 = vld [vmem:[%s1246 + $0x3c] sm:$0xf]
        %v4151 = vld [vmem:[%s1246 + $0x40] sm:$0xf]
        %v4152 = vld [vmem:[%s1246 + $0x44] sm:$0xf]
        %v4153 = vld [vmem:[%s1246 + $0x48] sm:$0xf]
        %v4154 = vld [vmem:[%s1246 + $0x4c] sm:$0xf]
        %v4155 = vld [vmem:[%s1246 + $0x50] sm:$0xf]
        %v4156 = vld [vmem:[%s1246 + $0x54] sm:$0xf]
        %v4157 = vld [vmem:[%s1246 + $0x58] sm:$0xf]
        %v4158 = vld [vmem:[%s1246 + $0x5c] sm:$0xf]
        %v4159 = vld [vmem:[%s1246 + $0x60] sm:$0xf]
        %v4160 = vld [vmem:[%s1246 + $0x64] sm:$0xf]
        %v4161 = vld [vmem:[%s1246 + $0x68] sm:$0xf]
        %v4162 = vld [vmem:[%s1246 + $0x6c] sm:$0xf]
        %v4163 = vld [vmem:[%s1246 + $0x70] sm:$0xf]
        %v4164 = vld [vmem:[%s1246 + $0x74] sm:$0xf]
        %v4165 = vld [vmem:[%s1246 + $0x78] sm:$0xf]
        %v4166 = vld [vmem:[%s1246 + $0x7c] sm:$0xf]
        %v4167 = vld [vmem:[%s1246 + $0x80] sm:$0xf]
        %v4168 = vld [vmem:[%s1246 + $0x84] sm:$0xf]
        %v4169 = vld [vmem:[%s1246 + $0x88] sm:$0xf]
        %v4170 = vld [vmem:[%s1246 + $0x8c] sm:$0xf]
        %v4171 = vld [vmem:[%s1246 + $0x90] sm:$0xf]
        %v4172 = vld [vmem:[%s1246 + $0x94] sm:$0xf]
        %v4173 = vld [vmem:[%s1246 + $0x98] sm:$0xf]
        %v4174 = vld [vmem:[%s1246 + $0x9c] sm:$0xf]
        %v4175 = vld [vmem:[%s1246 + $0xa0] sm:$0xf]
        %v4176 = vld [vmem:[%s1246 + $0xa4] sm:$0xf]
        %v4177 = vld [vmem:[%s1246 + $0xa8] sm:$0xf]
        %v4178 = vld [vmem:[%s1246 + $0xac] sm:$0xf]
        %v4179 = vld [vmem:[%s1246 + $0xb0] sm:$0xf]
        %v4180 = vld [vmem:[%s1246 + $0xb4] sm:$0xf]
        %v4181 = vld [vmem:[%s1246 + $0xb8] sm:$0xf]
        %v4182 = vld [vmem:[%s1246 + $0xbc] sm:$0xf]
        %v4183 = vld [vmem:[%s1246 + $0xc0] sm:$0xf]
        %v4184 = vld [vmem:[%s1246 + $0xc4] sm:$0xf]
        %v4185 = vld [vmem:[%s1246 + $0xc8] sm:$0xf]
        %v4186 = vld [vmem:[%s1246 + $0xcc] sm:$0xf]
        %v4187 = vld [vmem:[%s1246 + $0xd0] sm:$0xf]
        %v4188 = vld [vmem:[%s1246 + $0xd4] sm:$0xf]
        %v4189 = vld [vmem:[%s1246 + $0xd8] sm:$0xf]
        %v4190 = vld [vmem:[%s1246 + $0xdc] sm:$0xf]
        %v4191 = vld [vmem:[%s1246 + $0xe0] sm:$0xf]
        %v4192 = vld [vmem:[%s1246 + $0xe4] sm:$0xf]
        %v4193 = vld [vmem:[%s1246 + $0xe8] sm:$0xf]
        %v4194 = vld [vmem:[%s1246 + $0xec] sm:$0xf]
        %v4195 = vld [vmem:[%s1246 + $0xf0] sm:$0xf]
        %v4196 = vld [vmem:[%s1246 + $0xf4] sm:$0xf]
        %v4197 = vld [vmem:[%s1246 + $0xf8] sm:$0xf]
        %v4198 = vld [vmem:[%s1246 + $0xfc] sm:$0xf]
        %v4199 = vld [vmem:[%s1499] sm:$0x1]
        %v4201 = vperm.slane %v4199, 0
        %v4267 = vunpack.c.l.b16 %v4135
        %v4268 = vunpack.c.l.b16 %v4136
        %v4269 = vunpack.c.l.b16 %v4137
        %v4270 = vunpack.c.l.b16 %v4138
        %v4271 = vunpack.c.l.b16 %v4139
        %v4272 = vunpack.c.l.b16 %v4140
        %v4273 = vunpack.c.l.b16 %v4141
        %v4274 = vunpack.c.l.b16 %v4142
        %v4275 = vunpack.c.l.b16 %v4143
        %v4276 = vunpack.c.l.b16 %v4144
        %v4277 = vunpack.c.l.b16 %v4145
        %v4278 = vunpack.c.l.b16 %v4146
        %v4279 = vunpack.c.l.b16 %v4147
        %v4280 = vunpack.c.l.b16 %v4148
        %v4281 = vunpack.c.l.b16 %v4149
        %v4282 = vunpack.c.l.b16 %v4150
        %v4283 = vunpack.c.l.b16 %v4151
        %v4284 = vunpack.c.l.b16 %v4152
        %v4285 = vunpack.c.l.b16 %v4153
        %v4286 = vunpack.c.l.b16 %v4154
        %v4287 = vunpack.c.l.b16 %v4155
        %v4288 = vunpack.c.l.b16 %v4156
        %v4289 = vunpack.c.l.b16 %v4157
        %v4290 = vunpack.c.l.b16 %v4158
        %v4291 = vunpack.c.l.b16 %v4159
        %v4292 = vunpack.c.l.b16 %v4160
        %v4293 = vunpack.c.l.b16 %v4161
        %v4294 = vunpack.c.l.b16 %v4162
        %v4295 = vunpack.c.l.b16 %v4163
        %v4296 = vunpack.c.l.b16 %v4164
        %v4297 = vunpack.c.l.b16 %v4165
        %v4298 = vunpack.c.l.b16 %v4166
        %v4299 = vunpack.c.l.b16 %v4167
        %v4300 = vunpack.c.l.b16 %v4168
        %v4301 = vunpack.c.l.b16 %v4169
        %v4302 = vunpack.c.l.b16 %v4170
        %v4303 = vunpack.c.l.b16 %v4171
        %v4304 = vunpack.c.l.b16 %v4172
        %v4305 = vunpack.c.l.b16 %v4173
        %v4306 = vunpack.c.l.b16 %v4174
        %v4307 = vunpack.c.l.b16 %v4175
        %v4308 = vunpack.c.l.b16 %v4176
        %v4309 = vunpack.c.l.b16 %v4177
        %v4310 = vunpack.c.l.b16 %v4178
        %v4311 = vunpack.c.l.b16 %v4179
        %v4312 = vunpack.c.l.b16 %v4180
        %v4313 = vunpack.c.l.b16 %v4181
        %v4314 = vunpack.c.l.b16 %v4182
        %v4315 = vunpack.c.l.b16 %v4183
        %v4316 = vunpack.c.l.b16 %v4184
        %v4317 = vunpack.c.l.b16 %v4185
        %v4318 = vunpack.c.l.b16 %v4186
        %v4319 = vunpack.c.l.b16 %v4187
        %v4320 = vunpack.c.l.b16 %v4188
        %v4321 = vunpack.c.l.b16 %v4189
        %v4322 = vunpack.c.l.b16 %v4190
        %v4323 = vunpack.c.l.b16 %v4191
        %v4324 = vunpack.c.l.b16 %v4192
        %v4325 = vunpack.c.l.b16 %v4193
        %v4326 = vunpack.c.l.b16 %v4194
        %v4327 = vunpack.c.l.b16 %v4195
        %v4328 = vunpack.c.l.b16 %v4196
        %v4329 = vunpack.c.l.b16 %v4197
        %v4330 = vunpack.c.l.b16 %v4198
        %v4331 = vpack.c.b16 %v4268, %v4267
        %v4332 = vpack.c.b16 %v4270, %v4269
        %v4333 = vpack.c.b16 %v4272, %v4271
        %v4334 = vpack.c.b16 %v4274, %v4273
        %v4335 = vpack.c.b16 %v4276, %v4275
        %v4336 = vpack.c.b16 %v4278, %v4277
        %v4337 = vpack.c.b16 %v4280, %v4279
        %v4338 = vpack.c.b16 %v4282, %v4281
        %v4339 = vpack.c.b16 %v4284, %v4283
        %v4340 = vpack.c.b16 %v4286, %v4285
        %v4341 = vpack.c.b16 %v4288, %v4287
        %v4342 = vpack.c.b16 %v4290, %v4289
        %v4343 = vpack.c.b16 %v4292, %v4291
        %v4344 = vpack.c.b16 %v4294, %v4293
        %v4345 = vpack.c.b16 %v4296, %v4295
        %v4346 = vpack.c.b16 %v4298, %v4297
        %v4347 = vpack.c.b16 %v4300, %v4299
        %v4348 = vpack.c.b16 %v4302, %v4301
        %v4349 = vpack.c.b16 %v4304, %v4303
        %v4350 = vpack.c.b16 %v4306, %v4305
        %v4351 = vpack.c.b16 %v4308, %v4307
        %v4352 = vpack.c.b16 %v4310, %v4309
        %v4353 = vpack.c.b16 %v4312, %v4311
        %v4354 = vpack.c.b16 %v4314, %v4313
        %v4355 = vpack.c.b16 %v4316, %v4315
        %v4356 = vpack.c.b16 %v4318, %v4317
        %v4357 = vpack.c.b16 %v4320, %v4319
        %v4358 = vpack.c.b16 %v4322, %v4321
        %v4359 = vpack.c.b16 %v4324, %v4323
        %v4360 = vpack.c.b16 %v4326, %v4325
        %v4361 = vpack.c.b16 %v4328, %v4327
        %v4362 = vpack.c.b16 %v4330, %v4329
        %4395 = vmatpush.bf16.msra.mxu0 %v4338
        %4396 = vmatpush.bf16.msra.mxu0 %v4337
        %4397 = vmatpush.bf16.msra.mxu0 %v4336
        %4398 = vmatpush.bf16.msra.mxu0 %v4335
        %4399 = vmatpush.bf16.msra.mxu0 %v4334
        %4400 = vmatpush.bf16.msra.mxu0 %v4333
        %4401 = vmatpush.bf16.msra.mxu0 %v4332
        %4402 = vmatpush.bf16.msra.mxu0 %v4331
        %4403 = vmatmul.bf16.gmra.mxu0 %v4131
        %v4404 = vpop.f32.mrf.mxu0
        %v4405 = vadd.f32 %v4201, %v4404
        %v4406 = vpop.f32.mrf.mxu0
        %v4407 = vadd.f32 %v4201, %v4406
        %4408 = vdwg.mxu0
        %4409 = vmatpush.bf16.msra.mxu0 %v4346
        %4410 = vmatpush.bf16.msra.mxu0 %v4345
        %4411 = vmatpush.bf16.msra.mxu0 %v4344
        %4412 = vmatpush.bf16.msra.mxu0 %v4343
        %4413 = vmatpush.bf16.msra.mxu0 %v4342
        %4414 = vmatpush.bf16.msra.mxu0 %v4341
        %4415 = vmatpush.bf16.msra.mxu0 %v4340
        %4416 = vmatpush.bf16.msra.mxu0 %v4339
        %4417 = vmatmul.bf16.gmra.mxu0 %v4132
        %v4418 = vpop.f32.mrf.mxu0
        %v4419 = vadd.f32 %v4405, %v4418
        %v4420 = vpop.f32.mrf.mxu0
        %v4421 = vadd.f32 %v4407, %v4420
        %4422 = vdwg.mxu0
        %4423 = vmatpush.bf16.msra.mxu0 %v4354
        %4424 = vmatpush.bf16.msra.mxu0 %v4353
        %4425 = vmatpush.bf16.msra.mxu0 %v4352
        %4426 = vmatpush.bf16.msra.mxu0 %v4351
        %4427 = vmatpush.bf16.msra.mxu0 %v4350
        %4428 = vmatpush.bf16.msra.mxu0 %v4349
        %4429 = vmatpush.bf16.msra.mxu0 %v4348
        %4430 = vmatpush.bf16.msra.mxu0 %v4347
        %4431 = vmatmul.bf16.gmra.mxu0 %v4133
        %v4432 = vpop.f32.mrf.mxu0
        %v4433 = vadd.f32 %v4419, %v4432
        %v4434 = vpop.f32.mrf.mxu0
        %v4435 = vadd.f32 %v4421, %v4434
        %4436 = vdwg.mxu0
        %4437 = vmatpush.bf16.msra.mxu0 %v4362
        %4438 = vmatpush.bf16.msra.mxu0 %v4361
        %4439 = vmatpush.bf16.msra.mxu0 %v4360
        %4440 = vmatpush.bf16.msra.mxu0 %v4359
        %4441 = vmatpush.bf16.msra.mxu0 %v4358
        %4442 = vmatpush.bf16.msra.mxu0 %v4357
        %4443 = vmatpush.bf16.msra.mxu0 %v4356
        %4444 = vmatpush.bf16.msra.mxu0 %v4355
        %4445 = vmatmul.bf16.gmra.mxu0 %v4134
        %v4446 = vpop.f32.mrf.mxu0
        %v4447 = vadd.f32 %v4433, %v4446
        %v4448 = vpop.f32.mrf.mxu0
        %v4449 = vadd.f32 %v4435, %v4448
        %4450 = vdwg.mxu0
        %v4451 = vadd.f32 %v4447, %v1534
        %v4452 = vadd.f32 %v4449, %v1535
        %4453 = vadd.xlane.f32.xlu0 %v4451
        %v4454 = vpop.xlane.xlu0 %4453
        %4455 = vadd.xlane.f32.xlu0 %v4452
        %v4456 = vpop.xlane.xlu0 %4455
        %v4457 = vmul.f32 %v4454, 0.03125
        %v4458 = vmul.f32 %v4456, 0.03125
        %v4459 = vsub.f32 %v4451, %v4457
        %v4460 = vsub.f32 %v4452, %v4458
        %v4461 = vmul.f32 %v4459, %v1550
        %v4462 = vmul.f32 %v4460, %v1550
        %v4463 = vmul.f32 %v4461, %v4461
        %v4464 = vmul.f32 %v4462, %v4462
        %4465 = vadd.xlane.f32.xlu0 %v4463
        %v4466 = vpop.xlane.xlu0 %4465
        %4467 = vadd.xlane.f32.xlu0 %v4464
        %v4468 = vpop.xlane.xlu0 %4467
        %v4469 = vmul.f32 %v4466, 0.03125
        %v4470 = vmul.f32 %v4468, 0.03125
        %v4471 = vadd.f32 %v4469, 1e-05
        %v4472 = vadd.f32 %v4470, 1e-05
        %v4473 = vrsqrt.pop %v4471
        %v4474 = vmul.f32 %v4473, %v4471
        %v4475 = vmul.f32 %v4474, %v4473
        %v4476 = vmul.f32 0.5, %v4475
        %v4477 = vsub.f32 1.5, %v4476
        %v4478 = vmul.f32 %v4473, %v4477
        %vm4479 = vweird.f32 %v4471
        %vm4480 = vweird.f32 %v4473
        %vm4481 = vmor %vm4479, %vm4480
        %v4482 = vsel %vm4481, %v4473, %v4478
        %v4483 = vrsqrt.pop %v4472
        %v4484 = vmul.f32 %v4483, %v4472
        %v4485 = vmul.f32 %v4484, %v4483
        %v4486 = vmul.f32 0.5, %v4485
        %v4487 = vsub.f32 1.5, %v4486
        %v4488 = vmul.f32 %v4483, %v4487
        %vm4489 = vweird.f32 %v4472
        %vm4490 = vweird.f32 %v4483
        %vm4491 = vmor %vm4489, %vm4490
        %v4492 = vsel %vm4491, %v4483, %v4488
        %v4493 = vmul.f32 %v4461, %v4482
        %v4494 = vmul.f32 %v4462, %v4492
        %v4495 = vld [vmem:[%s1255] sm:$0x1]
        %v4497 = vperm.slane %v4495, 0
        %v4499 = vmul.f32 %v4493, %v4497
        %v4500 = vmul.f32 %v4494, %v4497
        %v4501 = vld [vmem:[%s1264] sm:$0x1]
        %v4503 = vperm.slane %v4501, 0
        %v4505 = vadd.f32 %v4499, %v4503
        %v4506 = vadd.f32 %v4500, %v4503
        %v4507 = vpack.c.bf16 %v4506, %v4505
        %v4508 = vld [vmem:[%s1274] sm:$0xff]
        %v4509 = vld [vmem:[%s1274 + $0x8] sm:$0xff]
        %v4510 = vld [vmem:[%s1274 + $0x10] sm:$0xff]
        %v4511 = vld [vmem:[%s1274 + $0x18] sm:$0xff]
        %v4512 = vld [vmem:[%s1274 + $0x20] sm:$0xff]
        %v4513 = vld [vmem:[%s1274 + $0x28] sm:$0xff]
        %v4514 = vld [vmem:[%s1274 + $0x30] sm:$0xff]
        %v4515 = vld [vmem:[%s1274 + $0x38] sm:$0xff]
        %v4516 = vld [vmem:[%s1274 + $0x40] sm:$0xff]
        %v4517 = vld [vmem:[%s1274 + $0x48] sm:$0xff]
        %v4518 = vld [vmem:[%s1274 + $0x50] sm:$0xff]
        %v4519 = vld [vmem:[%s1274 + $0x58] sm:$0xff]
        %v4520 = vld [vmem:[%s1274 + $0x60] sm:$0xff]
        %v4521 = vld [vmem:[%s1274 + $0x68] sm:$0xff]
        %v4522 = vld [vmem:[%s1274 + $0x70] sm:$0xff]
        %v4523 = vld [vmem:[%s1274 + $0x78] sm:$0xff]
        %v4524 = vld [vmem:[%s1274 + $0x80] sm:$0xff]
        %v4525 = vld [vmem:[%s1274 + $0x88] sm:$0xff]
        %v4526 = vld [vmem:[%s1274 + $0x90] sm:$0xff]
        %v4527 = vld [vmem:[%s1274 + $0x98] sm:$0xff]
        %v4528 = vld [vmem:[%s1274 + $0xa0] sm:$0xff]
        %v4529 = vld [vmem:[%s1274 + $0xa8] sm:$0xff]
        %v4530 = vld [vmem:[%s1274 + $0xb0] sm:$0xff]
        %v4531 = vld [vmem:[%s1274 + $0xb8] sm:$0xff]
        %v4532 = vld [vmem:[%s1274 + $0xc0] sm:$0xff]
        %v4533 = vld [vmem:[%s1274 + $0xc8] sm:$0xff]
        %v4534 = vld [vmem:[%s1274 + $0xd0] sm:$0xff]
        %v4535 = vld [vmem:[%s1274 + $0xd8] sm:$0xff]
        %v4536 = vld [vmem:[%s1274 + $0xe0] sm:$0xff]
        %v4537 = vld [vmem:[%s1274 + $0xe8] sm:$0xff]
        %v4538 = vld [vmem:[%s1274 + $0xf0] sm:$0xff]
        %v4539 = vld [vmem:[%s1274 + $0xf8] sm:$0xff]
        %v4540 = vld [vmem:[%s1503] sm:$0xf]
        %v4542 = vperm.slane %v4540, 0
        %v4543 = vperm.slane %v4540, 1
        %v4544 = vperm.slane %v4540, 2
        %v4545 = vperm.slane %v4540, 3
        %v4582 = vunpack.c.l.b16 %v4508
        %v4583 = vunpack.c.h.b16 %v4508
        %v4584 = vunpack.c.l.b16 %v4509
        %v4585 = vunpack.c.h.b16 %v4509
        %v4586 = vunpack.c.l.b16 %v4510
        %v4587 = vunpack.c.h.b16 %v4510
        %v4588 = vunpack.c.l.b16 %v4511
        %v4589 = vunpack.c.h.b16 %v4511
        %v4590 = vunpack.c.l.b16 %v4512
        %v4591 = vunpack.c.h.b16 %v4512
        %v4592 = vunpack.c.l.b16 %v4513
        %v4593 = vunpack.c.h.b16 %v4513
        %v4594 = vunpack.c.l.b16 %v4514
        %v4595 = vunpack.c.h.b16 %v4514
        %v4596 = vunpack.c.l.b16 %v4515
        %v4597 = vunpack.c.h.b16 %v4515
        %v4598 = vunpack.c.l.b16 %v4516
        %v4599 = vunpack.c.h.b16 %v4516
        %v4600 = vunpack.c.l.b16 %v4517
        %v4601 = vunpack.c.h.b16 %v4517
        %v4602 = vunpack.c.l.b16 %v4518
        %v4603 = vunpack.c.h.b16 %v4518
        %v4604 = vunpack.c.l.b16 %v4519
        %v4605 = vunpack.c.h.b16 %v4519
        %v4606 = vunpack.c.l.b16 %v4520
        %v4607 = vunpack.c.h.b16 %v4520
        %v4608 = vunpack.c.l.b16 %v4521
        %v4609 = vunpack.c.h.b16 %v4521
        %v4610 = vunpack.c.l.b16 %v4522
        %v4611 = vunpack.c.h.b16 %v4522
        %v4612 = vunpack.c.l.b16 %v4523
        %v4613 = vunpack.c.h.b16 %v4523
        %v4614 = vunpack.c.l.b16 %v4524
        %v4615 = vunpack.c.h.b16 %v4524
        %v4616 = vunpack.c.l.b16 %v4525
        %v4617 = vunpack.c.h.b16 %v4525
        %v4618 = vunpack.c.l.b16 %v4526
        %v4619 = vunpack.c.h.b16 %v4526
        %v4620 = vunpack.c.l.b16 %v4527
        %v4621 = vunpack.c.h.b16 %v4527
        %v4622 = vunpack.c.l.b16 %v4528
        %v4623 = vunpack.c.h.b16 %v4528
        %v4624 = vunpack.c.l.b16 %v4529
        %v4625 = vunpack.c.h.b16 %v4529
        %v4626 = vunpack.c.l.b16 %v4530
        %v4627 = vunpack.c.h.b16 %v4530
        %v4628 = vunpack.c.l.b16 %v4531
        %v4629 = vunpack.c.h.b16 %v4531
        %v4630 = vunpack.c.l.b16 %v4532
        %v4631 = vunpack.c.h.b16 %v4532
        %v4632 = vunpack.c.l.b16 %v4533
        %v4633 = vunpack.c.h.b16 %v4533
        %v4634 = vunpack.c.l.b16 %v4534
        %v4635 = vunpack.c.h.b16 %v4534
        %v4636 = vunpack.c.l.b16 %v4535
        %v4637 = vunpack.c.h.b16 %v4535
        %v4638 = vunpack.c.l.b16 %v4536
        %v4639 = vunpack.c.h.b16 %v4536
        %v4640 = vunpack.c.l.b16 %v4537
        %v4641 = vunpack.c.h.b16 %v4537
        %v4642 = vunpack.c.l.b16 %v4538
        %v4643 = vunpack.c.h.b16 %v4538
        %v4644 = vunpack.c.l.b16 %v4539
        %v4645 = vunpack.c.h.b16 %v4539
        %v4646 = vpack.c.b16 %v4586, %v4582
        %v4647 = vpack.c.b16 %v4587, %v4583
        %v4648 = vpack.c.b16 %v4588, %v4584
        %v4649 = vpack.c.b16 %v4589, %v4585
        %v4650 = vpack.c.b16 %v4594, %v4590
        %v4651 = vpack.c.b16 %v4595, %v4591
        %v4652 = vpack.c.b16 %v4596, %v4592
        %v4653 = vpack.c.b16 %v4597, %v4593
        %v4654 = vpack.c.b16 %v4602, %v4598
        %v4655 = vpack.c.b16 %v4603, %v4599
        %v4656 = vpack.c.b16 %v4604, %v4600
        %v4657 = vpack.c.b16 %v4605, %v4601
        %v4658 = vpack.c.b16 %v4610, %v4606
        %v4659 = vpack.c.b16 %v4611, %v4607
        %v4660 = vpack.c.b16 %v4612, %v4608
        %v4661 = vpack.c.b16 %v4613, %v4609
        %v4662 = vpack.c.b16 %v4618, %v4614
        %v4663 = vpack.c.b16 %v4619, %v4615
        %v4664 = vpack.c.b16 %v4620, %v4616
        %v4665 = vpack.c.b16 %v4621, %v4617
        %v4666 = vpack.c.b16 %v4626, %v4622
        %v4667 = vpack.c.b16 %v4627, %v4623
        %v4668 = vpack.c.b16 %v4628, %v4624
        %v4669 = vpack.c.b16 %v4629, %v4625
        %v4670 = vpack.c.b16 %v4634, %v4630
        %v4671 = vpack.c.b16 %v4635, %v4631
        %v4672 = vpack.c.b16 %v4636, %v4632
        %v4673 = vpack.c.b16 %v4637, %v4633
        %v4674 = vpack.c.b16 %v4642, %v4638
        %v4675 = vpack.c.b16 %v4643, %v4639
        %v4676 = vpack.c.b16 %v4644, %v4640
        %v4677 = vpack.c.b16 %v4645, %v4641
        %4710 = vmatpush.bf16.msra.mxu0 %v4674
        %4711 = vmatpush.bf16.msra.mxu0 %v4670
        %4712 = vmatpush.bf16.msra.mxu0 %v4666
        %4713 = vmatpush.bf16.msra.mxu0 %v4662
        %4714 = vmatpush.bf16.msra.mxu0 %v4658
        %4715 = vmatpush.bf16.msra.mxu0 %v4654
        %4716 = vmatpush.bf16.msra.mxu0 %v4650
        %4717 = vmatpush.bf16.msra.mxu0 %v4646
        %4718 = vmatmul.bf16.gmra.mxu0 %v4507
        %v4719 = vpop.f32.mrf.mxu0
        %v4720 = vadd.f32 %v4542, %v4719
        %v4721 = vpop.f32.mrf.mxu0
        %v4722 = vadd.f32 %v4542, %v4721
        %4723 = vdwg.mxu0
        %4724 = vmatpush.bf16.msra.mxu0 %v4675
        %4725 = vmatpush.bf16.msra.mxu0 %v4671
        %4726 = vmatpush.bf16.msra.mxu0 %v4667
        %4727 = vmatpush.bf16.msra.mxu0 %v4663
        %4728 = vmatpush.bf16.msra.mxu0 %v4659
        %4729 = vmatpush.bf16.msra.mxu0 %v4655
        %4730 = vmatpush.bf16.msra.mxu0 %v4651
        %4731 = vmatpush.bf16.msra.mxu0 %v4647
        %4732 = vmatmul.bf16.gmra.mxu0 %v4507
        %v4733 = vpop.f32.mrf.mxu0
        %v4734 = vadd.f32 %v4543, %v4733
        %v4735 = vpop.f32.mrf.mxu0
        %v4736 = vadd.f32 %v4543, %v4735
        %4737 = vdwg.mxu0
        %4738 = vmatpush.bf16.msra.mxu0 %v4676
        %4739 = vmatpush.bf16.msra.mxu0 %v4672
        %4740 = vmatpush.bf16.msra.mxu0 %v4668
        %4741 = vmatpush.bf16.msra.mxu0 %v4664
        %4742 = vmatpush.bf16.msra.mxu0 %v4660
        %4743 = vmatpush.bf16.msra.mxu0 %v4656
        %4744 = vmatpush.bf16.msra.mxu0 %v4652
        %4745 = vmatpush.bf16.msra.mxu0 %v4648
        %4746 = vmatmul.bf16.gmra.mxu0 %v4507
        %v4747 = vpop.f32.mrf.mxu0
        %v4748 = vadd.f32 %v4544, %v4747
        %v4749 = vpop.f32.mrf.mxu0
        %v4750 = vadd.f32 %v4544, %v4749
        %4751 = vdwg.mxu0
        %4752 = vmatpush.bf16.msra.mxu0 %v4677
        %4753 = vmatpush.bf16.msra.mxu0 %v4673
        %4754 = vmatpush.bf16.msra.mxu0 %v4669
        %4755 = vmatpush.bf16.msra.mxu0 %v4665
        %4756 = vmatpush.bf16.msra.mxu0 %v4661
        %4757 = vmatpush.bf16.msra.mxu0 %v4657
        %4758 = vmatpush.bf16.msra.mxu0 %v4653
        %4759 = vmatpush.bf16.msra.mxu0 %v4649
        %4760 = vmatmul.bf16.gmra.mxu0 %v4507
        %v4761 = vpop.f32.mrf.mxu0
        %v4762 = vadd.f32 %v4545, %v4761
        %v4763 = vpop.f32.mrf.mxu0
        %v4764 = vadd.f32 %v4545, %v4763
        %4765 = vdwg.mxu0
        %v4766 = vld [vmem:[%s1284] sm:$0xff]
        %v4767 = vld [vmem:[%s1284 + $0x8] sm:$0xff]
        %v4768 = vld [vmem:[%s1284 + $0x10] sm:$0xff]
        %v4769 = vld [vmem:[%s1284 + $0x18] sm:$0xff]
        %v4770 = vld [vmem:[%s1284 + $0x20] sm:$0xff]
        %v4771 = vld [vmem:[%s1284 + $0x28] sm:$0xff]
        %v4772 = vld [vmem:[%s1284 + $0x30] sm:$0xff]
        %v4773 = vld [vmem:[%s1284 + $0x38] sm:$0xff]
        %v4774 = vld [vmem:[%s1284 + $0x40] sm:$0xff]
        %v4775 = vld [vmem:[%s1284 + $0x48] sm:$0xff]
        %v4776 = vld [vmem:[%s1284 + $0x50] sm:$0xff]
        %v4777 = vld [vmem:[%s1284 + $0x58] sm:$0xff]
        %v4778 = vld [vmem:[%s1284 + $0x60] sm:$0xff]
        %v4779 = vld [vmem:[%s1284 + $0x68] sm:$0xff]
        %v4780 = vld [vmem:[%s1284 + $0x70] sm:$0xff]
        %v4781 = vld [vmem:[%s1284 + $0x78] sm:$0xff]
        %v4782 = vld [vmem:[%s1284 + $0x80] sm:$0xff]
        %v4783 = vld [vmem:[%s1284 + $0x88] sm:$0xff]
        %v4784 = vld [vmem:[%s1284 + $0x90] sm:$0xff]
        %v4785 = vld [vmem:[%s1284 + $0x98] sm:$0xff]
        %v4786 = vld [vmem:[%s1284 + $0xa0] sm:$0xff]
        %v4787 = vld [vmem:[%s1284 + $0xa8] sm:$0xff]
        %v4788 = vld [vmem:[%s1284 + $0xb0] sm:$0xff]
        %v4789 = vld [vmem:[%s1284 + $0xb8] sm:$0xff]
        %v4790 = vld [vmem:[%s1284 + $0xc0] sm:$0xff]
        %v4791 = vld [vmem:[%s1284 + $0xc8] sm:$0xff]
        %v4792 = vld [vmem:[%s1284 + $0xd0] sm:$0xff]
        %v4793 = vld [vmem:[%s1284 + $0xd8] sm:$0xff]
        %v4794 = vld [vmem:[%s1284 + $0xe0] sm:$0xff]
        %v4795 = vld [vmem:[%s1284 + $0xe8] sm:$0xff]
        %v4796 = vld [vmem:[%s1284 + $0xf0] sm:$0xff]
        %v4797 = vld [vmem:[%s1284 + $0xf8] sm:$0xff]
        %v4798 = vld [vmem:[%s1284 + $0x100] sm:$0xff]
        %v4799 = vld [vmem:[%s1284 + $0x108] sm:$0xff]
        %v4800 = vld [vmem:[%s1284 + $0x110] sm:$0xff]
        %v4801 = vld [vmem:[%s1284 + $0x118] sm:$0xff]
        %v4802 = vld [vmem:[%s1284 + $0x120] sm:$0xff]
        %v4803 = vld [vmem:[%s1284 + $0x128] sm:$0xff]
        %v4804 = vld [vmem:[%s1284 + $0x130] sm:$0xff]
        %v4805 = vld [vmem:[%s1284 + $0x138] sm:$0xff]
        %v4806 = vld [vmem:[%s1284 + $0x140] sm:$0xff]
        %v4807 = vld [vmem:[%s1284 + $0x148] sm:$0xff]
        %v4808 = vld [vmem:[%s1284 + $0x150] sm:$0xff]
        %v4809 = vld [vmem:[%s1284 + $0x158] sm:$0xff]
        %v4810 = vld [vmem:[%s1284 + $0x160] sm:$0xff]
        %v4811 = vld [vmem:[%s1284 + $0x168] sm:$0xff]
        %v4812 = vld [vmem:[%s1284 + $0x170] sm:$0xff]
        %v4813 = vld [vmem:[%s1284 + $0x178] sm:$0xff]
        %v4814 = vld [vmem:[%s1284 + $0x180] sm:$0xff]
        %v4815 = vld [vmem:[%s1284 + $0x188] sm:$0xff]
        %v4816 = vld [vmem:[%s1284 + $0x190] sm:$0xff]
        %v4817 = vld [vmem:[%s1284 + $0x198] sm:$0xff]
        %v4818 = vld [vmem:[%s1284 + $0x1a0] sm:$0xff]
        %v4819 = vld [vmem:[%s1284 + $0x1a8] sm:$0xff]
        %v4820 = vld [vmem:[%s1284 + $0x1b0] sm:$0xff]
        %v4821 = vld [vmem:[%s1284 + $0x1b8] sm:$0xff]
        %v4822 = vld [vmem:[%s1284 + $0x1c0] sm:$0xff]
        %v4823 = vld [vmem:[%s1284 + $0x1c8] sm:$0xff]
        %v4824 = vld [vmem:[%s1284 + $0x1d0] sm:$0xff]
        %v4825 = vld [vmem:[%s1284 + $0x1d8] sm:$0xff]
        %v4826 = vld [vmem:[%s1284 + $0x1e0] sm:$0xff]
        %v4827 = vld [vmem:[%s1284 + $0x1e8] sm:$0xff]
        %v4828 = vld [vmem:[%s1284 + $0x1f0] sm:$0xff]
        %v4829 = vld [vmem:[%s1284 + $0x1f8] sm:$0xff]
        %v4830 = vld [vmem:[%s1294] sm:$0xff]
        %v4832 = vperm.slane %v4830, 0
        %v4833 = vperm.slane %v4830, 1
        %v4834 = vperm.slane %v4830, 2
        %v4835 = vperm.slane %v4830, 3
        %v4836 = vperm.slane %v4830, 4
        %v4837 = vperm.slane %v4830, 5
        %v4838 = vperm.slane %v4830, 6
        %v4839 = vperm.slane %v4830, 7
        %v4850 = vunpack.c.l.b16 %v1536
        %v4851 = vunpack.c.l.b16 %v1537
        %v4852 = vpack.c.b16 %v4851, %v4850
        %v4918 = vunpack.c.l.b16 %v4766
        %v4919 = vunpack.c.h.b16 %v4766
        %v4920 = vunpack.c.l.b16 %v4767
        %v4921 = vunpack.c.h.b16 %v4767
        %v4922 = vunpack.c.l.b16 %v4768
        %v4923 = vunpack.c.h.b16 %v4768
        %v4924 = vunpack.c.l.b16 %v4769
        %v4925 = vunpack.c.h.b16 %v4769
        %v4926 = vunpack.c.l.b16 %v4770
        %v4927 = vunpack.c.h.b16 %v4770
        %v4928 = vunpack.c.l.b16 %v4771
        %v4929 = vunpack.c.h.b16 %v4771
        %v4930 = vunpack.c.l.b16 %v4772
        %v4931 = vunpack.c.h.b16 %v4772
        %v4932 = vunpack.c.l.b16 %v4773
        %v4933 = vunpack.c.h.b16 %v4773
        %v4934 = vunpack.c.l.b16 %v4774
        %v4935 = vunpack.c.h.b16 %v4774
        %v4936 = vunpack.c.l.b16 %v4775
        %v4937 = vunpack.c.h.b16 %v4775
        %v4938 = vunpack.c.l.b16 %v4776
        %v4939 = vunpack.c.h.b16 %v4776
        %v4940 = vunpack.c.l.b16 %v4777
        %v4941 = vunpack.c.h.b16 %v4777
        %v4942 = vunpack.c.l.b16 %v4778
        %v4943 = vunpack.c.h.b16 %v4778
        %v4944 = vunpack.c.l.b16 %v4779
        %v4945 = vunpack.c.h.b16 %v4779
        %v4946 = vunpack.c.l.b16 %v4780
        %v4947 = vunpack.c.h.b16 %v4780
        %v4948 = vunpack.c.l.b16 %v4781
        %v4949 = vunpack.c.h.b16 %v4781
        %v4950 = vunpack.c.l.b16 %v4782
        %v4951 = vunpack.c.h.b16 %v4782
        %v4952 = vunpack.c.l.b16 %v4783
        %v4953 = vunpack.c.h.b16 %v4783
        %v4954 = vunpack.c.l.b16 %v4784
        %v4955 = vunpack.c.h.b16 %v4784
        %v4956 = vunpack.c.l.b16 %v4785
        %v4957 = vunpack.c.h.b16 %v4785
        %v4958 = vunpack.c.l.b16 %v4786
        %v4959 = vunpack.c.h.b16 %v4786
        %v4960 = vunpack.c.l.b16 %v4787
        %v4961 = vunpack.c.h.b16 %v4787
        %v4962 = vunpack.c.l.b16 %v4788
        %v4963 = vunpack.c.h.b16 %v4788
        %v4964 = vunpack.c.l.b16 %v4789
        %v4965 = vunpack.c.h.b16 %v4789
        %v4966 = vunpack.c.l.b16 %v4790
        %v4967 = vunpack.c.h.b16 %v4790
        %v4968 = vunpack.c.l.b16 %v4791
        %v4969 = vunpack.c.h.b16 %v4791
        %v4970 = vunpack.c.l.b16 %v4792
        %v4971 = vunpack.c.h.b16 %v4792
        %v4972 = vunpack.c.l.b16 %v4793
        %v4973 = vunpack.c.h.b16 %v4793
        %v4974 = vunpack.c.l.b16 %v4794
        %v4975 = vunpack.c.h.b16 %v4794
        %v4976 = vunpack.c.l.b16 %v4795
        %v4977 = vunpack.c.h.b16 %v4795
        %v4978 = vunpack.c.l.b16 %v4796
        %v4979 = vunpack.c.h.b16 %v4796
        %v4980 = vunpack.c.l.b16 %v4797
        %v4981 = vunpack.c.h.b16 %v4797
        %v4982 = vunpack.c.l.b16 %v4798
        %v4983 = vunpack.c.h.b16 %v4798
        %v4984 = vunpack.c.l.b16 %v4799
        %v4985 = vunpack.c.h.b16 %v4799
        %v4986 = vunpack.c.l.b16 %v4800
        %v4987 = vunpack.c.h.b16 %v4800
        %v4988 = vunpack.c.l.b16 %v4801
        %v4989 = vunpack.c.h.b16 %v4801
        %v4990 = vunpack.c.l.b16 %v4802
        %v4991 = vunpack.c.h.b16 %v4802
        %v4992 = vunpack.c.l.b16 %v4803
        %v4993 = vunpack.c.h.b16 %v4803
        %v4994 = vunpack.c.l.b16 %v4804
        %v4995 = vunpack.c.h.b16 %v4804
        %v4996 = vunpack.c.l.b16 %v4805
        %v4997 = vunpack.c.h.b16 %v4805
        %v4998 = vunpack.c.l.b16 %v4806
        %v4999 = vunpack.c.h.b16 %v4806
        %v5000 = vunpack.c.l.b16 %v4807
        %v5001 = vunpack.c.h.b16 %v4807
        %v5002 = vunpack.c.l.b16 %v4808
        %v5003 = vunpack.c.h.b16 %v4808
        %v5004 = vunpack.c.l.b16 %v4809
        %v5005 = vunpack.c.h.b16 %v4809
        %v5006 = vunpack.c.l.b16 %v4810
        %v5007 = vunpack.c.h.b16 %v4810
        %v5008 = vunpack.c.l.b16 %v4811
        %v5009 = vunpack.c.h.b16 %v4811
        %v5010 = vunpack.c.l.b16 %v4812
        %v5011 = vunpack.c.h.b16 %v4812
        %v5012 = vunpack.c.l.b16 %v4813
        %v5013 = vunpack.c.h.b16 %v4813
        %v5014 = vunpack.c.l.b16 %v4814
        %v5015 = vunpack.c.h.b16 %v4814
        %v5016 = vunpack.c.l.b16 %v4815
        %v5017 = vunpack.c.h.b16 %v4815
        %v5018 = vunpack.c.l.b16 %v4816
        %v5019 = vunpack.c.h.b16 %v4816
        %v5020 = vunpack.c.l.b16 %v4817
        %v5021 = vunpack.c.h.b16 %v4817
        %v5022 = vunpack.c.l.b16 %v4818
        %v5023 = vunpack.c.h.b16 %v4818
        %v5024 = vunpack.c.l.b16 %v4819
        %v5025 = vunpack.c.h.b16 %v4819
        %v5026 = vunpack.c.l.b16 %v4820
        %v5027 = vunpack.c.h.b16 %v4820
        %v5028 = vunpack.c.l.b16 %v4821
        %v5029 = vunpack.c.h.b16 %v4821
        %v5030 = vunpack.c.l.b16 %v4822
        %v5031 = vunpack.c.h.b16 %v4822
        %v5032 = vunpack.c.l.b16 %v4823
        %v5033 = vunpack.c.h.b16 %v4823
        %v5034 = vunpack.c.l.b16 %v4824
        %v5035 = vunpack.c.h.b16 %v4824
        %v5036 = vunpack.c.l.b16 %v4825
        %v5037 = vunpack.c.h.b16 %v4825
        %v5038 = vunpack.c.l.b16 %v4826
        %v5039 = vunpack.c.h.b16 %v4826
        %v5040 = vunpack.c.l.b16 %v4827
        %v5041 = vunpack.c.h.b16 %v4827
        %v5042 = vunpack.c.l.b16 %v4828
        %v5043 = vunpack.c.h.b16 %v4828
        %v5044 = vunpack.c.l.b16 %v4829
        %v5045 = vunpack.c.h.b16 %v4829
        %v5046 = vpack.c.b16 %v4926, %v4918
        %v5047 = vpack.c.b16 %v4927, %v4919
        %v5048 = vpack.c.b16 %v4928, %v4920
        %v5049 = vpack.c.b16 %v4929, %v4921
        %v5050 = vpack.c.b16 %v4930, %v4922
        %v5051 = vpack.c.b16 %v4931, %v4923
        %v5052 = vpack.c.b16 %v4932, %v4924
        %v5053 = vpack.c.b16 %v4933, %v4925
        %v5054 = vpack.c.b16 %v4942, %v4934
        %v5055 = vpack.c.b16 %v4943, %v4935
        %v5056 = vpack.c.b16 %v4944, %v4936
        %v5057 = vpack.c.b16 %v4945, %v4937
        %v5058 = vpack.c.b16 %v4946, %v4938
        %v5059 = vpack.c.b16 %v4947, %v4939
        %v5060 = vpack.c.b16 %v4948, %v4940
        %v5061 = vpack.c.b16 %v4949, %v4941
        %v5062 = vpack.c.b16 %v4958, %v4950
        %v5063 = vpack.c.b16 %v4959, %v4951
        %v5064 = vpack.c.b16 %v4960, %v4952
        %v5065 = vpack.c.b16 %v4961, %v4953
        %v5066 = vpack.c.b16 %v4962, %v4954
        %v5067 = vpack.c.b16 %v4963, %v4955
        %v5068 = vpack.c.b16 %v4964, %v4956
        %v5069 = vpack.c.b16 %v4965, %v4957
        %v5070 = vpack.c.b16 %v4974, %v4966
        %v5071 = vpack.c.b16 %v4975, %v4967
        %v5072 = vpack.c.b16 %v4976, %v4968
        %v5073 = vpack.c.b16 %v4977, %v4969
        %v5074 = vpack.c.b16 %v4978, %v4970
        %v5075 = vpack.c.b16 %v4979, %v4971
        %v5076 = vpack.c.b16 %v4980, %v4972
        %v5077 = vpack.c.b16 %v4981, %v4973
        %v5078 = vpack.c.b16 %v4990, %v4982
        %v5079 = vpack.c.b16 %v4991, %v4983
        %v5080 = vpack.c.b16 %v4992, %v4984
        %v5081 = vpack.c.b16 %v4993, %v4985
        %v5082 = vpack.c.b16 %v4994, %v4986
        %v5083 = vpack.c.b16 %v4995, %v4987
        %v5084 = vpack.c.b16 %v4996, %v4988
        %v5085 = vpack.c.b16 %v4997, %v4989
        %v5086 = vpack.c.b16 %v5006, %v4998
        %v5087 = vpack.c.b16 %v5007, %v4999
        %v5088 = vpack.c.b16 %v5008, %v5000
        %v5089 = vpack.c.b16 %v5009, %v5001
        %v5090 = vpack.c.b16 %v5010, %v5002
        %v5091 = vpack.c.b16 %v5011, %v5003
        %v5092 = vpack.c.b16 %v5012, %v5004
        %v5093 = vpack.c.b16 %v5013, %v5005
        %v5094 = vpack.c.b16 %v5022, %v5014
        %v5095 = vpack.c.b16 %v5023, %v5015
        %v5096 = vpack.c.b16 %v5024, %v5016
        %v5097 = vpack.c.b16 %v5025, %v5017
        %v5098 = vpack.c.b16 %v5026, %v5018
        %v5099 = vpack.c.b16 %v5027, %v5019
        %v5100 = vpack.c.b16 %v5028, %v5020
        %v5101 = vpack.c.b16 %v5029, %v5021
        %v5102 = vpack.c.b16 %v5038, %v5030
        %v5103 = vpack.c.b16 %v5039, %v5031
        %v5104 = vpack.c.b16 %v5040, %v5032
        %v5105 = vpack.c.b16 %v5041, %v5033
        %v5106 = vpack.c.b16 %v5042, %v5034
        %v5107 = vpack.c.b16 %v5043, %v5035
        %v5108 = vpack.c.b16 %v5044, %v5036
        %v5109 = vpack.c.b16 %v5045, %v5037
        %5174 = vmatpush.bf16.msra.mxu0 %v5102
        %5175 = vmatpush.bf16.msra.mxu0 %v5094
        %5176 = vmatpush.bf16.msra.mxu0 %v5086
        %5177 = vmatpush.bf16.msra.mxu0 %v5078
        %5178 = vmatpush.bf16.msra.mxu0 %v5070
        %5179 = vmatpush.bf16.msra.mxu0 %v5062
        %5180 = vmatpush.bf16.msra.mxu0 %v5054
        %5181 = vmatpush.bf16.msra.mxu0 %v5046
        %5182 = vmatmul.bf16.gmra.mxu0 %v4852
        %v5183 = vpop.f32.mrf.mxu0
        %v5184 = vadd.f32 %v4832, %v5183
        %v5185 = vpop.f32.mrf.mxu0
        %v5186 = vadd.f32 %v4832, %v5185
        %5187 = vdwg.mxu0
        %5188 = vmatpush.bf16.msra.mxu0 %v5103
        %5189 = vmatpush.bf16.msra.mxu0 %v5095
        %5190 = vmatpush.bf16.msra.mxu0 %v5087
        %5191 = vmatpush.bf16.msra.mxu0 %v5079
        %5192 = vmatpush.bf16.msra.mxu0 %v5071
        %5193 = vmatpush.bf16.msra.mxu0 %v5063
        %5194 = vmatpush.bf16.msra.mxu0 %v5055
        %5195 = vmatpush.bf16.msra.mxu0 %v5047
        %5196 = vmatmul.bf16.gmra.mxu0 %v4852
        %v5197 = vpop.f32.mrf.mxu0
        %v5198 = vadd.f32 %v4833, %v5197
        %v5199 = vpop.f32.mrf.mxu0
        %v5200 = vadd.f32 %v4833, %v5199
        %5201 = vdwg.mxu0
        %5202 = vmatpush.bf16.msra.mxu0 %v5104
        %5203 = vmatpush.bf16.msra.mxu0 %v5096
        %5204 = vmatpush.bf16.msra.mxu0 %v5088
        %5205 = vmatpush.bf16.msra.mxu0 %v5080
        %5206 = vmatpush.bf16.msra.mxu0 %v5072
        %5207 = vmatpush.bf16.msra.mxu0 %v5064
        %5208 = vmatpush.bf16.msra.mxu0 %v5056
        %5209 = vmatpush.bf16.msra.mxu0 %v5048
        %5210 = vmatmul.bf16.gmra.mxu0 %v4852
        %v5211 = vpop.f32.mrf.mxu0
        %v5212 = vadd.f32 %v4834, %v5211
        %v5213 = vpop.f32.mrf.mxu0
        %v5214 = vadd.f32 %v4834, %v5213
        %5215 = vdwg.mxu0
        %5216 = vmatpush.bf16.msra.mxu0 %v5105
        %5217 = vmatpush.bf16.msra.mxu0 %v5097
        %5218 = vmatpush.bf16.msra.mxu0 %v5089
        %5219 = vmatpush.bf16.msra.mxu0 %v5081
        %5220 = vmatpush.bf16.msra.mxu0 %v5073
        %5221 = vmatpush.bf16.msra.mxu0 %v5065
        %5222 = vmatpush.bf16.msra.mxu0 %v5057
        %5223 = vmatpush.bf16.msra.mxu0 %v5049
        %5224 = vmatmul.bf16.gmra.mxu0 %v4852
        %v5225 = vpop.f32.mrf.mxu0
        %v5226 = vadd.f32 %v4835, %v5225
        %v5227 = vpop.f32.mrf.mxu0
        %v5228 = vadd.f32 %v4835, %v5227
        %5229 = vdwg.mxu0
        %5230 = vmatpush.bf16.msra.mxu0 %v5106
        %5231 = vmatpush.bf16.msra.mxu0 %v5098
        %5232 = vmatpush.bf16.msra.mxu0 %v5090
        %5233 = vmatpush.bf16.msra.mxu0 %v5082
        %5234 = vmatpush.bf16.msra.mxu0 %v5074
        %5235 = vmatpush.bf16.msra.mxu0 %v5066
        %5236 = vmatpush.bf16.msra.mxu0 %v5058
        %5237 = vmatpush.bf16.msra.mxu0 %v5050
        %5238 = vmatmul.bf16.gmra.mxu0 %v4852
        %v5239 = vpop.f32.mrf.mxu0
        %v5240 = vadd.f32 %v4836, %v5239
        %v5241 = vpop.f32.mrf.mxu0
        %v5242 = vadd.f32 %v4836, %v5241
        %5243 = vdwg.mxu0
        %5244 = vmatpush.bf16.msra.mxu0 %v5107
        %5245 = vmatpush.bf16.msra.mxu0 %v5099
        %5246 = vmatpush.bf16.msra.mxu0 %v5091
        %5247 = vmatpush.bf16.msra.mxu0 %v5083
        %5248 = vmatpush.bf16.msra.mxu0 %v5075
        %5249 = vmatpush.bf16.msra.mxu0 %v5067
        %5250 = vmatpush.bf16.msra.mxu0 %v5059
        %5251 = vmatpush.bf16.msra.mxu0 %v5051
        %5252 = vmatmul.bf16.gmra.mxu0 %v4852
        %v5253 = vpop.f32.mrf.mxu0
        %v5254 = vadd.f32 %v4837, %v5253
        %v5255 = vpop.f32.mrf.mxu0
        %v5256 = vadd.f32 %v4837, %v5255
        %5257 = vdwg.mxu0
        %5258 = vmatpush.bf16.msra.mxu0 %v5108
        %5259 = vmatpush.bf16.msra.mxu0 %v5100
        %5260 = vmatpush.bf16.msra.mxu0 %v5092
        %5261 = vmatpush.bf16.msra.mxu0 %v5084
        %5262 = vmatpush.bf16.msra.mxu0 %v5076
        %5263 = vmatpush.bf16.msra.mxu0 %v5068
        %5264 = vmatpush.bf16.msra.mxu0 %v5060
        %5265 = vmatpush.bf16.msra.mxu0 %v5052
        %5266 = vmatmul.bf16.gmra.mxu0 %v4852
        %v5267 = vpop.f32.mrf.mxu0
        %v5268 = vadd.f32 %v4838, %v5267
        %v5269 = vpop.f32.mrf.mxu0
        %v5270 = vadd.f32 %v4838, %v5269
        %5271 = vdwg.mxu0
        %5272 = vmatpush.bf16.msra.mxu0 %v5109
        %5273 = vmatpush.bf16.msra.mxu0 %v5101
        %5274 = vmatpush.bf16.msra.mxu0 %v5093
        %5275 = vmatpush.bf16.msra.mxu0 %v5085
        %5276 = vmatpush.bf16.msra.mxu0 %v5077
        %5277 = vmatpush.bf16.msra.mxu0 %v5069
        %5278 = vmatpush.bf16.msra.mxu0 %v5061
        %5279 = vmatpush.bf16.msra.mxu0 %v5053
        %5280 = vmatmul.bf16.gmra.mxu0 %v4852
        %v5281 = vpop.f32.mrf.mxu0
        %v5282 = vadd.f32 %v4839, %v5281
        %v5283 = vpop.f32.mrf.mxu0
        %v5284 = vadd.f32 %v4839, %v5283
        %5285 = vdwg.mxu0
        %v5286 = vsel %vm1544, 1, 0
        %vm5287 = vcmp.eq.s32.totalorder %v5286, 1
        %v5288 = vpack.c.bf16 %v4720, %v4720
        %v5289 = vpack.c.bf16 %v5184, %v5184
        %v5290 = vpack.c.bf16 %v5240, %v5240
        %5291 = vmatpush.bf16.xpose.msra.mxu0 0
        %5292 = vmatpush.bf16.xpose.msra.mxu0 0
        %5293 = vmatpush.bf16.xpose.msra.mxu0 0
        %5294 = vmatpush.bf16.xpose.msra.mxu0 0
        %5295 = vmatpush.bf16.xpose.msra.mxu0 0
        %5296 = vmatpush.bf16.xpose.msra.mxu0 0
        %5297 = vmatpush.bf16.xpose.msra.mxu0 0
        %5298 = vmatpush.bf16.xpose.msra.mxu0 %v5289
        %5299 = vmatmul.bf16.gmra.mxu0 %v5288
        %v5300 = vpop.f32.mrf.mxu0
        %v5301 = vadd.f32 0.0, %v5300
        %v5302 = vpop.f32.mrf.mxu0
        %5303 = vdwg.mxu0
        %v5305 = vrot.slane %v5301, 1
        %v5306 = vrot.slane %v5301, 2
        %v5307 = vrot.slane %v5301, 3
        %v5308 = vrot.slane %v5301, 4
        %v5309 = vrot.slane %v5301, 5
        %v5310 = vrot.slane %v5301, 6
        %v5311 = vrot.slane %v5301, 7
        %v5319 = vsel %vm5287, -1e+30, %v5301
        %v5320 = vsel %vm5287, -1e+30, %v5305
        %v5321 = vsel %vm5287, -1e+30, %v5306
        %v5322 = vsel %vm5287, -1e+30, %v5307
        %v5323 = vsel %vm5287, -1e+30, %v5308
        %v5324 = vsel %vm5287, -1e+30, %v5309
        %v5325 = vsel %vm5287, -1e+30, %v5310
        %v5326 = vsel %vm5287, -1e+30, %v5311
        %5335 = vst [vmem:[#allocation1] ss:$9 sm:$0xff] %v5319
        %s5336 = scalar_lea.vmem [#allocation1], 1
        %5337 = vst [vmem:[%s5336] ss:$9 sm:$0xff] %v5320
        %s5338 = scalar_lea.vmem [#allocation1], 2
        %5339 = vst [vmem:[%s5338] ss:$9 sm:$0xff] %v5321
        %s5340 = scalar_lea.vmem [#allocation1], 3
        %5341 = vst [vmem:[%s5340] ss:$9 sm:$0xff] %v5322
        %s5342 = scalar_lea.vmem [#allocation1], 4
        %5343 = vst [vmem:[%s5342] ss:$9 sm:$0xff] %v5323
        %s5344 = scalar_lea.vmem [#allocation1], 5
        %5345 = vst [vmem:[%s5344] ss:$9 sm:$0xff] %v5324
        %s5346 = scalar_lea.vmem [#allocation1], 6
        %5347 = vst [vmem:[%s5346] ss:$9 sm:$0xff] %v5325
        %s5348 = scalar_lea.vmem [#allocation1], 7
        %5349 = vst [vmem:[%s5348] ss:$9 sm:$0xff] %v5326
        %v5350 = vld [vmem:[#allocation1] sm:$0xff]
        %v5352 = vsel %vm2416, %v5350, -inf
        %5353 = vmax.xlane.f32.xlu0 %v5352
        %v5354 = vpop.xlane.xlu0 %5353
        %v5356 = vperm.slane %v5354, 0
        %v5357 = vperm.slane %v5354, 1
        %v5358 = vperm.slane %v5354, 2
        %v5359 = vperm.slane %v5354, 3
        %v5360 = vperm.slane %v5354, 4
        %v5361 = vperm.slane %v5354, 5
        %v5362 = vperm.slane %v5354, 6
        %v5363 = vperm.slane %v5354, 7
        %v5372 = vsub.f32 %v5319, %v5356
        %v5373 = vsub.f32 %v5320, %v5357
        %v5374 = vsub.f32 %v5321, %v5358
        %v5375 = vsub.f32 %v5322, %v5359
        %v5376 = vsub.f32 %v5323, %v5360
        %v5377 = vsub.f32 %v5324, %v5361
        %v5378 = vsub.f32 %v5325, %v5362
        %v5379 = vsub.f32 %v5326, %v5363
        %v5380 = vmul.f32 %v5372, 1.442695
        %v5381 = vpow.pop %v5380
        %v5382 = vmul.f32 %v5373, 1.442695
        %v5383 = vpow.pop %v5382
        %v5384 = vmul.f32 %v5374, 1.442695
        %v5385 = vpow.pop %v5384
        %v5386 = vmul.f32 %v5375, 1.442695
        %v5387 = vpow.pop %v5386
        %v5388 = vmul.f32 %v5376, 1.442695
        %v5389 = vpow.pop %v5388
        %v5390 = vmul.f32 %v5377, 1.442695
        %v5391 = vpow.pop %v5390
        %v5392 = vmul.f32 %v5378, 1.442695
        %v5393 = vpow.pop %v5392
        %v5394 = vmul.f32 %v5379, 1.442695
        %v5395 = vpow.pop %v5394
        %5404 = vst [vmem:[#allocation1] ss:$9 sm:$0xff] %v5381
        %s5405 = scalar_lea.vmem [#allocation1], 1
        %5406 = vst [vmem:[%s5405] ss:$9 sm:$0xff] %v5383
        %s5407 = scalar_lea.vmem [#allocation1], 2
        %5408 = vst [vmem:[%s5407] ss:$9 sm:$0xff] %v5385
        %s5409 = scalar_lea.vmem [#allocation1], 3
        %5410 = vst [vmem:[%s5409] ss:$9 sm:$0xff] %v5387
        %s5411 = scalar_lea.vmem [#allocation1], 4
        %5412 = vst [vmem:[%s5411] ss:$9 sm:$0xff] %v5389
        %s5413 = scalar_lea.vmem [#allocation1], 5
        %5414 = vst [vmem:[%s5413] ss:$9 sm:$0xff] %v5391
        %s5415 = scalar_lea.vmem [#allocation1], 6
        %5416 = vst [vmem:[%s5415] ss:$9 sm:$0xff] %v5393
        %s5417 = scalar_lea.vmem [#allocation1], 7
        %5418 = vst [vmem:[%s5417] ss:$9 sm:$0xff] %v5395
        %v5419 = vld [vmem:[#allocation1] sm:$0xff]
        %v5421 = vsel %vm2416, %v5419, 0.0
        %5422 = vadd.xlane.f32.xlu0 %v5421
        %v5423 = vpop.xlane.xlu0 %5422
        %v5424 = vrcp.pop %v5423
        %v5426 = vperm.slane %v5424, 0
        %v5427 = vperm.slane %v5424, 1
        %v5428 = vperm.slane %v5424, 2
        %v5429 = vperm.slane %v5424, 3
        %v5430 = vperm.slane %v5424, 4
        %v5431 = vperm.slane %v5424, 5
        %v5432 = vperm.slane %v5424, 6
        %v5433 = vperm.slane %v5424, 7
        %v5442 = vmul.f32 %v5381, %v5426
        %v5443 = vmul.f32 %v5383, %v5427
        %v5444 = vmul.f32 %v5385, %v5428
        %v5445 = vmul.f32 %v5387, %v5429
        %v5446 = vmul.f32 %v5389, %v5430
        %v5447 = vmul.f32 %v5391, %v5431
        %v5448 = vmul.f32 %v5393, %v5432
        %v5449 = vmul.f32 %v5395, %v5433
        %v5450 = vpack.c.bf16 %v5442, %v5442
        %v5451 = vpack.c.bf16 %v5443, %v5443
        %v5452 = vpack.c.bf16 %v5444, %v5444
        %v5453 = vpack.c.bf16 %v5445, %v5445
        %v5454 = vpack.c.bf16 %v5446, %v5446
        %v5455 = vpack.c.bf16 %v5447, %v5447
        %v5456 = vpack.c.bf16 %v5448, %v5448
        %v5457 = vpack.c.bf16 %v5449, %v5449
        %v5466 = vunpack.c.l.b16 %v5450
        %v5467 = vunpack.c.l.b16 %v5451
        %v5468 = vunpack.c.l.b16 %v5452
        %v5469 = vunpack.c.l.b16 %v5453
        %v5470 = vunpack.c.l.b16 %v5454
        %v5471 = vunpack.c.l.b16 %v5455
        %v5472 = vunpack.c.l.b16 %v5456
        %v5473 = vunpack.c.l.b16 %v5457
        %v5474 = vrot.slane %v5467, 7
        %v5475 = vsel %vm2540, %v5474, %v5466
        %v5476 = vrot.slane %v5468, 6
        %v5477 = vsel %vm2543, %v5476, %v5475
        %v5478 = vrot.slane %v5469, 5
        %v5479 = vsel %vm2546, %v5478, %v5477
        %v5480 = vrot.slane %v5470, 4
        %v5481 = vsel %vm2549, %v5480, %v5479
        %v5482 = vrot.slane %v5471, 3
        %v5483 = vsel %vm2552, %v5482, %v5481
        %v5484 = vrot.slane %v5472, 2
        %v5485 = vsel %vm2555, %v5484, %v5483
        %v5486 = vrot.slane %v5473, 1
        %v5487 = vsel %vm2558, %v5486, %v5485
        %v5488 = vpack.c.b16 %v5487, %v5487
        %v5490 = vsel %vm2416, %v5488, 0
        %v5493 = vsel %vm2564, %v5290, 0
        %5495 = vmatpush.bf16.msra.mxu0 0
        %5496 = vmatpush.bf16.msra.mxu0 0
        %5497 = vmatpush.bf16.msra.mxu0 0
        %5498 = vmatpush.bf16.msra.mxu0 0
        %5499 = vmatpush.bf16.msra.mxu0 0
        %5500 = vmatpush.bf16.msra.mxu0 0
        %5501 = vmatpush.bf16.msra.mxu0 0
        %5502 = vmatpush.bf16.msra.mxu0 %v5493
        %5503 = vmatmul.bf16.gmra.mxu0 %v5490
        %v5504 = vpop.f32.mrf.mxu0
        %v5505 = vadd.f32 0.0, %v5504
        %v5506 = vpop.f32.mrf.mxu0
        %5507 = vdwg.mxu0
        %v5508 = vpack.c.bf16 %v4734, %v4734
        %v5509 = vpack.c.bf16 %v5198, %v5198
        %v5510 = vpack.c.bf16 %v5254, %v5254
        %5511 = vmatpush.bf16.xpose.msra.mxu0 0
        %5512 = vmatpush.bf16.xpose.msra.mxu0 0
        %5513 = vmatpush.bf16.xpose.msra.mxu0 0
        %5514 = vmatpush.bf16.xpose.msra.mxu0 0
        %5515 = vmatpush.bf16.xpose.msra.mxu0 0
        %5516 = vmatpush.bf16.xpose.msra.mxu0 0
        %5517 = vmatpush.bf16.xpose.msra.mxu0 0
        %5518 = vmatpush.bf16.xpose.msra.mxu0 %v5509
        %5519 = vmatmul.bf16.gmra.mxu0 %v5508
        %v5520 = vpop.f32.mrf.mxu0
        %v5521 = vadd.f32 0.0, %v5520
        %v5522 = vpop.f32.mrf.mxu0
        %5523 = vdwg.mxu0
        %v5525 = vrot.slane %v5521, 1
        %v5526 = vrot.slane %v5521, 2
        %v5527 = vrot.slane %v5521, 3
        %v5528 = vrot.slane %v5521, 4
        %v5529 = vrot.slane %v5521, 5
        %v5530 = vrot.slane %v5521, 6
        %v5531 = vrot.slane %v5521, 7
        %v5539 = vsel %vm5287, -1e+30, %v5521
        %v5540 = vsel %vm5287, -1e+30, %v5525
        %v5541 = vsel %vm5287, -1e+30, %v5526
        %v5542 = vsel %vm5287, -1e+30, %v5527
        %v5543 = vsel %vm5287, -1e+30, %v5528
        %v5544 = vsel %vm5287, -1e+30, %v5529
        %v5545 = vsel %vm5287, -1e+30, %v5530
        %v5546 = vsel %vm5287, -1e+30, %v5531
        %5555 = vst [vmem:[#allocation1] ss:$9 sm:$0xff] %v5539
        %s5556 = scalar_lea.vmem [#allocation1], 1
        %5557 = vst [vmem:[%s5556] ss:$9 sm:$0xff] %v5540
        %s5558 = scalar_lea.vmem [#allocation1], 2
        %5559 = vst [vmem:[%s5558] ss:$9 sm:$0xff] %v5541
        %s5560 = scalar_lea.vmem [#allocation1], 3
        %5561 = vst [vmem:[%s5560] ss:$9 sm:$0xff] %v5542
        %s5562 = scalar_lea.vmem [#allocation1], 4
        %5563 = vst [vmem:[%s5562] ss:$9 sm:$0xff] %v5543
        %s5564 = scalar_lea.vmem [#allocation1], 5
        %5565 = vst [vmem:[%s5564] ss:$9 sm:$0xff] %v5544
        %s5566 = scalar_lea.vmem [#allocation1], 6
        %5567 = vst [vmem:[%s5566] ss:$9 sm:$0xff] %v5545
        %s5568 = scalar_lea.vmem [#allocation1], 7
        %5569 = vst [vmem:[%s5568] ss:$9 sm:$0xff] %v5546
        %v5570 = vld [vmem:[#allocation1] sm:$0xff]
        %v5572 = vsel %vm2416, %v5570, -inf
        %5573 = vmax.xlane.f32.xlu0 %v5572
        %v5574 = vpop.xlane.xlu0 %5573
        %v5576 = vperm.slane %v5574, 0
        %v5577 = vperm.slane %v5574, 1
        %v5578 = vperm.slane %v5574, 2
        %v5579 = vperm.slane %v5574, 3
        %v5580 = vperm.slane %v5574, 4
        %v5581 = vperm.slane %v5574, 5
        %v5582 = vperm.slane %v5574, 6
        %v5583 = vperm.slane %v5574, 7
        %v5592 = vsub.f32 %v5539, %v5576
        %v5593 = vsub.f32 %v5540, %v5577
        %v5594 = vsub.f32 %v5541, %v5578
        %v5595 = vsub.f32 %v5542, %v5579
        %v5596 = vsub.f32 %v5543, %v5580
        %v5597 = vsub.f32 %v5544, %v5581
        %v5598 = vsub.f32 %v5545, %v5582
        %v5599 = vsub.f32 %v5546, %v5583
        %v5600 = vmul.f32 %v5592, 1.442695
        %v5601 = vpow.pop %v5600
        %v5602 = vmul.f32 %v5593, 1.442695
        %v5603 = vpow.pop %v5602
        %v5604 = vmul.f32 %v5594, 1.442695
        %v5605 = vpow.pop %v5604
        %v5606 = vmul.f32 %v5595, 1.442695
        %v5607 = vpow.pop %v5606
        %v5608 = vmul.f32 %v5596, 1.442695
        %v5609 = vpow.pop %v5608
        %v5610 = vmul.f32 %v5597, 1.442695
        %v5611 = vpow.pop %v5610
        %v5612 = vmul.f32 %v5598, 1.442695
        %v5613 = vpow.pop %v5612
        %v5614 = vmul.f32 %v5599, 1.442695
        %v5615 = vpow.pop %v5614
        %5624 = vst [vmem:[#allocation1] ss:$9 sm:$0xff] %v5601
        %s5625 = scalar_lea.vmem [#allocation1], 1
        %5626 = vst [vmem:[%s5625] ss:$9 sm:$0xff] %v5603
        %s5627 = scalar_lea.vmem [#allocation1], 2
        %5628 = vst [vmem:[%s5627] ss:$9 sm:$0xff] %v5605
        %s5629 = scalar_lea.vmem [#allocation1], 3
        %5630 = vst [vmem:[%s5629] ss:$9 sm:$0xff] %v5607
        %s5631 = scalar_lea.vmem [#allocation1], 4
        %5632 = vst [vmem:[%s5631] ss:$9 sm:$0xff] %v5609
        %s5633 = scalar_lea.vmem [#allocation1], 5
        %5634 = vst [vmem:[%s5633] ss:$9 sm:$0xff] %v5611
        %s5635 = scalar_lea.vmem [#allocation1], 6
        %5636 = vst [vmem:[%s5635] ss:$9 sm:$0xff] %v5613
        %s5637 = scalar_lea.vmem [#allocation1], 7
        %5638 = vst [vmem:[%s5637] ss:$9 sm:$0xff] %v5615
        %v5639 = vld [vmem:[#allocation1] sm:$0xff]
        %v5641 = vsel %vm2416, %v5639, 0.0
        %5642 = vadd.xlane.f32.xlu0 %v5641
        %v5643 = vpop.xlane.xlu0 %5642
        %v5644 = vrcp.pop %v5643
        %v5646 = vperm.slane %v5644, 0
        %v5647 = vperm.slane %v5644, 1
        %v5648 = vperm.slane %v5644, 2
        %v5649 = vperm.slane %v5644, 3
        %v5650 = vperm.slane %v5644, 4
        %v5651 = vperm.slane %v5644, 5
        %v5652 = vperm.slane %v5644, 6
        %v5653 = vperm.slane %v5644, 7
        %v5662 = vmul.f32 %v5601, %v5646
        %v5663 = vmul.f32 %v5603, %v5647
        %v5664 = vmul.f32 %v5605, %v5648
        %v5665 = vmul.f32 %v5607, %v5649
        %v5666 = vmul.f32 %v5609, %v5650
        %v5667 = vmul.f32 %v5611, %v5651
        %v5668 = vmul.f32 %v5613, %v5652
        %v5669 = vmul.f32 %v5615, %v5653
        %v5670 = vpack.c.bf16 %v5662, %v5662
        %v5671 = vpack.c.bf16 %v5663, %v5663
        %v5672 = vpack.c.bf16 %v5664, %v5664
        %v5673 = vpack.c.bf16 %v5665, %v5665
        %v5674 = vpack.c.bf16 %v5666, %v5666
        %v5675 = vpack.c.bf16 %v5667, %v5667
        %v5676 = vpack.c.bf16 %v5668, %v5668
        %v5677 = vpack.c.bf16 %v5669, %v5669
        %v5686 = vunpack.c.l.b16 %v5670
        %v5687 = vunpack.c.l.b16 %v5671
        %v5688 = vunpack.c.l.b16 %v5672
        %v5689 = vunpack.c.l.b16 %v5673
        %v5690 = vunpack.c.l.b16 %v5674
        %v5691 = vunpack.c.l.b16 %v5675
        %v5692 = vunpack.c.l.b16 %v5676
        %v5693 = vunpack.c.l.b16 %v5677
        %v5694 = vrot.slane %v5687, 7
        %v5695 = vsel %vm2540, %v5694, %v5686
        %v5696 = vrot.slane %v5688, 6
        %v5697 = vsel %vm2543, %v5696, %v5695
        %v5698 = vrot.slane %v5689, 5
        %v5699 = vsel %vm2546, %v5698, %v5697
        %v5700 = vrot.slane %v5690, 4
        %v5701 = vsel %vm2549, %v5700, %v5699
        %v5702 = vrot.slane %v5691, 3
        %v5703 = vsel %vm2552, %v5702, %v5701
        %v5704 = vrot.slane %v5692, 2
        %v5705 = vsel %vm2555, %v5704, %v5703
        %v5706 = vrot.slane %v5693, 1
        %v5707 = vsel %vm2558, %v5706, %v5705
        %v5708 = vpack.c.b16 %v5707, %v5707
        %v5710 = vsel %vm2416, %v5708, 0
        %v5713 = vsel %vm2564, %v5510, 0
        %5715 = vmatpush.bf16.msra.mxu0 0
        %5716 = vmatpush.bf16.msra.mxu0 0
        %5717 = vmatpush.bf16.msra.mxu0 0
        %5718 = vmatpush.bf16.msra.mxu0 0
        %5719 = vmatpush.bf16.msra.mxu0 0
        %5720 = vmatpush.bf16.msra.mxu0 0
        %5721 = vmatpush.bf16.msra.mxu0 0
        %5722 = vmatpush.bf16.msra.mxu0 %v5713
        %5723 = vmatmul.bf16.gmra.mxu0 %v5710
        %v5724 = vpop.f32.mrf.mxu0
        %v5725 = vadd.f32 0.0, %v5724
        %v5726 = vpop.f32.mrf.mxu0
        %5727 = vdwg.mxu0
        %v5728 = vpack.c.bf16 %v4748, %v4748
        %v5729 = vpack.c.bf16 %v5212, %v5212
        %v5730 = vpack.c.bf16 %v5268, %v5268
        %5731 = vmatpush.bf16.xpose.msra.mxu0 0
        %5732 = vmatpush.bf16.xpose.msra.mxu0 0
        %5733 = vmatpush.bf16.xpose.msra.mxu0 0
        %5734 = vmatpush.bf16.xpose.msra.mxu0 0
        %5735 = vmatpush.bf16.xpose.msra.mxu0 0
        %5736 = vmatpush.bf16.xpose.msra.mxu0 0
        %5737 = vmatpush.bf16.xpose.msra.mxu0 0
        %5738 = vmatpush.bf16.xpose.msra.mxu0 %v5729
        %5739 = vmatmul.bf16.gmra.mxu0 %v5728
        %v5740 = vpop.f32.mrf.mxu0
        %v5741 = vadd.f32 0.0, %v5740
        %v5742 = vpop.f32.mrf.mxu0
        %5743 = vdwg.mxu0
        %v5745 = vrot.slane %v5741, 1
        %v5746 = vrot.slane %v5741, 2
        %v5747 = vrot.slane %v5741, 3
        %v5748 = vrot.slane %v5741, 4
        %v5749 = vrot.slane %v5741, 5
        %v5750 = vrot.slane %v5741, 6
        %v5751 = vrot.slane %v5741, 7
        %v5759 = vsel %vm5287, -1e+30, %v5741
        %v5760 = vsel %vm5287, -1e+30, %v5745
        %v5761 = vsel %vm5287, -1e+30, %v5746
        %v5762 = vsel %vm5287, -1e+30, %v5747
        %v5763 = vsel %vm5287, -1e+30, %v5748
        %v5764 = vsel %vm5287, -1e+30, %v5749
        %v5765 = vsel %vm5287, -1e+30, %v5750
        %v5766 = vsel %vm5287, -1e+30, %v5751
        %5775 = vst [vmem:[#allocation1] ss:$9 sm:$0xff] %v5759
        %s5776 = scalar_lea.vmem [#allocation1], 1
        %5777 = vst [vmem:[%s5776] ss:$9 sm:$0xff] %v5760
        %s5778 = scalar_lea.vmem [#allocation1], 2
        %5779 = vst [vmem:[%s5778] ss:$9 sm:$0xff] %v5761
        %s5780 = scalar_lea.vmem [#allocation1], 3
        %5781 = vst [vmem:[%s5780] ss:$9 sm:$0xff] %v5762
        %s5782 = scalar_lea.vmem [#allocation1], 4
        %5783 = vst [vmem:[%s5782] ss:$9 sm:$0xff] %v5763
        %s5784 = scalar_lea.vmem [#allocation1], 5
        %5785 = vst [vmem:[%s5784] ss:$9 sm:$0xff] %v5764
        %s5786 = scalar_lea.vmem [#allocation1], 6
        %5787 = vst [vmem:[%s5786] ss:$9 sm:$0xff] %v5765
        %s5788 = scalar_lea.vmem [#allocation1], 7
        %5789 = vst [vmem:[%s5788] ss:$9 sm:$0xff] %v5766
        %v5790 = vld [vmem:[#allocation1] sm:$0xff]
        %v5792 = vsel %vm2416, %v5790, -inf
        %5793 = vmax.xlane.f32.xlu0 %v5792
        %v5794 = vpop.xlane.xlu0 %5793
        %v5796 = vperm.slane %v5794, 0
        %v5797 = vperm.slane %v5794, 1
        %v5798 = vperm.slane %v5794, 2
        %v5799 = vperm.slane %v5794, 3
        %v5800 = vperm.slane %v5794, 4
        %v5801 = vperm.slane %v5794, 5
        %v5802 = vperm.slane %v5794, 6
        %v5803 = vperm.slane %v5794, 7
        %v5812 = vsub.f32 %v5759, %v5796
        %v5813 = vsub.f32 %v5760, %v5797
        %v5814 = vsub.f32 %v5761, %v5798
        %v5815 = vsub.f32 %v5762, %v5799
        %v5816 = vsub.f32 %v5763, %v5800
        %v5817 = vsub.f32 %v5764, %v5801
        %v5818 = vsub.f32 %v5765, %v5802
        %v5819 = vsub.f32 %v5766, %v5803
        %v5820 = vmul.f32 %v5812, 1.442695
        %v5821 = vpow.pop %v5820
        %v5822 = vmul.f32 %v5813, 1.442695
        %v5823 = vpow.pop %v5822
        %v5824 = vmul.f32 %v5814, 1.442695
        %v5825 = vpow.pop %v5824
        %v5826 = vmul.f32 %v5815, 1.442695
        %v5827 = vpow.pop %v5826
        %v5828 = vmul.f32 %v5816, 1.442695
        %v5829 = vpow.pop %v5828
        %v5830 = vmul.f32 %v5817, 1.442695
        %v5831 = vpow.pop %v5830
        %v5832 = vmul.f32 %v5818, 1.442695
        %v5833 = vpow.pop %v5832
        %v5834 = vmul.f32 %v5819, 1.442695
        %v5835 = vpow.pop %v5834
        %5844 = vst [vmem:[#allocation1] ss:$9 sm:$0xff] %v5821
        %s5845 = scalar_lea.vmem [#allocation1], 1
        %5846 = vst [vmem:[%s5845] ss:$9 sm:$0xff] %v5823
        %s5847 = scalar_lea.vmem [#allocation1], 2
        %5848 = vst [vmem:[%s5847] ss:$9 sm:$0xff] %v5825
        %s5849 = scalar_lea.vmem [#allocation1], 3
        %5850 = vst [vmem:[%s5849] ss:$9 sm:$0xff] %v5827
        %s5851 = scalar_lea.vmem [#allocation1], 4
        %5852 = vst [vmem:[%s5851] ss:$9 sm:$0xff] %v5829
        %s5853 = scalar_lea.vmem [#allocation1], 5
        %5854 = vst [vmem:[%s5853] ss:$9 sm:$0xff] %v5831
        %s5855 = scalar_lea.vmem [#allocation1], 6
        %5856 = vst [vmem:[%s5855] ss:$9 sm:$0xff] %v5833
        %s5857 = scalar_lea.vmem [#allocation1], 7
        %5858 = vst [vmem:[%s5857] ss:$9 sm:$0xff] %v5835
        %v5859 = vld [vmem:[#allocation1] sm:$0xff]
        %v5861 = vsel %vm2416, %v5859, 0.0
        %5862 = vadd.xlane.f32.xlu0 %v5861
        %v5863 = vpop.xlane.xlu0 %5862
        %v5864 = vrcp.pop %v5863
        %v5866 = vperm.slane %v5864, 0
        %v5867 = vperm.slane %v5864, 1
        %v5868 = vperm.slane %v5864, 2
        %v5869 = vperm.slane %v5864, 3
        %v5870 = vperm.slane %v5864, 4
        %v5871 = vperm.slane %v5864, 5
        %v5872 = vperm.slane %v5864, 6
        %v5873 = vperm.slane %v5864, 7
        %v5882 = vmul.f32 %v5821, %v5866
        %v5883 = vmul.f32 %v5823, %v5867
        %v5884 = vmul.f32 %v5825, %v5868
        %v5885 = vmul.f32 %v5827, %v5869
        %v5886 = vmul.f32 %v5829, %v5870
        %v5887 = vmul.f32 %v5831, %v5871
        %v5888 = vmul.f32 %v5833, %v5872
        %v5889 = vmul.f32 %v5835, %v5873
        %v5890 = vpack.c.bf16 %v5882, %v5882
        %v5891 = vpack.c.bf16 %v5883, %v5883
        %v5892 = vpack.c.bf16 %v5884, %v5884
        %v5893 = vpack.c.bf16 %v5885, %v5885
        %v5894 = vpack.c.bf16 %v5886, %v5886
        %v5895 = vpack.c.bf16 %v5887, %v5887
        %v5896 = vpack.c.bf16 %v5888, %v5888
        %v5897 = vpack.c.bf16 %v5889, %v5889
        %v5906 = vunpack.c.l.b16 %v5890
        %v5907 = vunpack.c.l.b16 %v5891
        %v5908 = vunpack.c.l.b16 %v5892
        %v5909 = vunpack.c.l.b16 %v5893
        %v5910 = vunpack.c.l.b16 %v5894
        %v5911 = vunpack.c.l.b16 %v5895
        %v5912 = vunpack.c.l.b16 %v5896
        %v5913 = vunpack.c.l.b16 %v5897
        %v5914 = vrot.slane %v5907, 7
        %v5915 = vsel %vm2540, %v5914, %v5906
        %v5916 = vrot.slane %v5908, 6
        %v5917 = vsel %vm2543, %v5916, %v5915
        %v5918 = vrot.slane %v5909, 5
        %v5919 = vsel %vm2546, %v5918, %v5917
        %v5920 = vrot.slane %v5910, 4
        %v5921 = vsel %vm2549, %v5920, %v5919
        %v5922 = vrot.slane %v5911, 3
        %v5923 = vsel %vm2552, %v5922, %v5921
        %v5924 = vrot.slane %v5912, 2
        %v5925 = vsel %vm2555, %v5924, %v5923
        %v5926 = vrot.slane %v5913, 1
        %v5927 = vsel %vm2558, %v5926, %v5925
        %v5928 = vpack.c.b16 %v5927, %v5927
        %v5930 = vsel %vm2416, %v5928, 0
        %v5933 = vsel %vm2564, %v5730, 0
        %5935 = vmatpush.bf16.msra.mxu0 0
        %5936 = vmatpush.bf16.msra.mxu0 0
        %5937 = vmatpush.bf16.msra.mxu0 0
        %5938 = vmatpush.bf16.msra.mxu0 0
        %5939 = vmatpush.bf16.msra.mxu0 0
        %5940 = vmatpush.bf16.msra.mxu0 0
        %5941 = vmatpush.bf16.msra.mxu0 0
        %5942 = vmatpush.bf16.msra.mxu0 %v5933
        %5943 = vmatmul.bf16.gmra.mxu0 %v5930
        %v5944 = vpop.f32.mrf.mxu0
        %v5945 = vadd.f32 0.0, %v5944
        %v5946 = vpop.f32.mrf.mxu0
        %5947 = vdwg.mxu0
        %v5948 = vpack.c.bf16 %v4762, %v4762
        %v5949 = vpack.c.bf16 %v5226, %v5226
        %v5950 = vpack.c.bf16 %v5282, %v5282
        %5951 = vmatpush.bf16.xpose.msra.mxu0 0
        %5952 = vmatpush.bf16.xpose.msra.mxu0 0
        %5953 = vmatpush.bf16.xpose.msra.mxu0 0
        %5954 = vmatpush.bf16.xpose.msra.mxu0 0
        %5955 = vmatpush.bf16.xpose.msra.mxu0 0
        %5956 = vmatpush.bf16.xpose.msra.mxu0 0
        %5957 = vmatpush.bf16.xpose.msra.mxu0 0
        %5958 = vmatpush.bf16.xpose.msra.mxu0 %v5949
        %5959 = vmatmul.bf16.gmra.mxu0 %v5948
        %v5960 = vpop.f32.mrf.mxu0
        %v5961 = vadd.f32 0.0, %v5960
        %v5962 = vpop.f32.mrf.mxu0
        %5963 = vdwg.mxu0
        %v5965 = vrot.slane %v5961, 1
        %v5966 = vrot.slane %v5961, 2
        %v5967 = vrot.slane %v5961, 3
        %v5968 = vrot.slane %v5961, 4
        %v5969 = vrot.slane %v5961, 5
        %v5970 = vrot.slane %v5961, 6
        %v5971 = vrot.slane %v5961, 7
        %v5979 = vsel %vm5287, -1e+30, %v5961
        %v5980 = vsel %vm5287, -1e+30, %v5965
        %v5981 = vsel %vm5287, -1e+30, %v5966
        %v5982 = vsel %vm5287, -1e+30, %v5967
        %v5983 = vsel %vm5287, -1e+30, %v5968
        %v5984 = vsel %vm5287, -1e+30, %v5969
        %v5985 = vsel %vm5287, -1e+30, %v5970
        %v5986 = vsel %vm5287, -1e+30, %v5971
        %5995 = vst [vmem:[#allocation1] ss:$9 sm:$0xff] %v5979
        %s5996 = scalar_lea.vmem [#allocation1], 1
        %5997 = vst [vmem:[%s5996] ss:$9 sm:$0xff] %v5980
        %s5998 = scalar_lea.vmem [#allocation1], 2
        %5999 = vst [vmem:[%s5998] ss:$9 sm:$0xff] %v5981
        %s6000 = scalar_lea.vmem [#allocation1], 3
        %6001 = vst [vmem:[%s6000] ss:$9 sm:$0xff] %v5982
        %s6002 = scalar_lea.vmem [#allocation1], 4
        %6003 = vst [vmem:[%s6002] ss:$9 sm:$0xff] %v5983
        %s6004 = scalar_lea.vmem [#allocation1], 5
        %6005 = vst [vmem:[%s6004] ss:$9 sm:$0xff] %v5984
        %s6006 = scalar_lea.vmem [#allocation1], 6
        %6007 = vst [vmem:[%s6006] ss:$9 sm:$0xff] %v5985
        %s6008 = scalar_lea.vmem [#allocation1], 7
        %6009 = vst [vmem:[%s6008] ss:$9 sm:$0xff] %v5986
        %v6010 = vld [vmem:[#allocation1] sm:$0xff]
        %v6012 = vsel %vm2416, %v6010, -inf
        %6013 = vmax.xlane.f32.xlu0 %v6012
        %v6014 = vpop.xlane.xlu0 %6013
        %v6016 = vperm.slane %v6014, 0
        %v6017 = vperm.slane %v6014, 1
        %v6018 = vperm.slane %v6014, 2
        %v6019 = vperm.slane %v6014, 3
        %v6020 = vperm.slane %v6014, 4
        %v6021 = vperm.slane %v6014, 5
        %v6022 = vperm.slane %v6014, 6
        %v6023 = vperm.slane %v6014, 7
        %v6032 = vsub.f32 %v5979, %v6016
        %v6033 = vsub.f32 %v5980, %v6017
        %v6034 = vsub.f32 %v5981, %v6018
        %v6035 = vsub.f32 %v5982, %v6019
        %v6036 = vsub.f32 %v5983, %v6020
        %v6037 = vsub.f32 %v5984, %v6021
        %v6038 = vsub.f32 %v5985, %v6022
        %v6039 = vsub.f32 %v5986, %v6023
        %v6040 = vmul.f32 %v6032, 1.442695
        %v6041 = vpow.pop %v6040
        %v6042 = vmul.f32 %v6033, 1.442695
        %v6043 = vpow.pop %v6042
        %v6044 = vmul.f32 %v6034, 1.442695
        %v6045 = vpow.pop %v6044
        %v6046 = vmul.f32 %v6035, 1.442695
        %v6047 = vpow.pop %v6046
        %v6048 = vmul.f32 %v6036, 1.442695
        %v6049 = vpow.pop %v6048
        %v6050 = vmul.f32 %v6037, 1.442695
        %v6051 = vpow.pop %v6050
        %v6052 = vmul.f32 %v6038, 1.442695
        %v6053 = vpow.pop %v6052
        %v6054 = vmul.f32 %v6039, 1.442695
        %v6055 = vpow.pop %v6054
        %6064 = vst [vmem:[#allocation1] ss:$9 sm:$0xff] %v6041
        %s6065 = scalar_lea.vmem [#allocation1], 1
        %6066 = vst [vmem:[%s6065] ss:$9 sm:$0xff] %v6043
        %s6067 = scalar_lea.vmem [#allocation1], 2
        %6068 = vst [vmem:[%s6067] ss:$9 sm:$0xff] %v6045
        %s6069 = scalar_lea.vmem [#allocation1], 3
        %6070 = vst [vmem:[%s6069] ss:$9 sm:$0xff] %v6047
        %s6071 = scalar_lea.vmem [#allocation1], 4
        %6072 = vst [vmem:[%s6071] ss:$9 sm:$0xff] %v6049
        %s6073 = scalar_lea.vmem [#allocation1], 5
        %6074 = vst [vmem:[%s6073] ss:$9 sm:$0xff] %v6051
        %s6075 = scalar_lea.vmem [#allocation1], 6
        %6076 = vst [vmem:[%s6075] ss:$9 sm:$0xff] %v6053
        %s6077 = scalar_lea.vmem [#allocation1], 7
        %6078 = vst [vmem:[%s6077] ss:$9 sm:$0xff] %v6055
        %v6079 = vld [vmem:[#allocation1] sm:$0xff]
        %v6081 = vsel %vm2416, %v6079, 0.0
        %6082 = vadd.xlane.f32.xlu0 %v6081
        %v6083 = vpop.xlane.xlu0 %6082
        %v6084 = vrcp.pop %v6083
        %v6086 = vperm.slane %v6084, 0
        %v6087 = vperm.slane %v6084, 1
        %v6088 = vperm.slane %v6084, 2
        %v6089 = vperm.slane %v6084, 3
        %v6090 = vperm.slane %v6084, 4
        %v6091 = vperm.slane %v6084, 5
        %v6092 = vperm.slane %v6084, 6
        %v6093 = vperm.slane %v6084, 7
        %v6102 = vmul.f32 %v6041, %v6086
        %v6103 = vmul.f32 %v6043, %v6087
        %v6104 = vmul.f32 %v6045, %v6088
        %v6105 = vmul.f32 %v6047, %v6089
        %v6106 = vmul.f32 %v6049, %v6090
        %v6107 = vmul.f32 %v6051, %v6091
        %v6108 = vmul.f32 %v6053, %v6092
        %v6109 = vmul.f32 %v6055, %v6093
        %v6110 = vpack.c.bf16 %v6102, %v6102
        %v6111 = vpack.c.bf16 %v6103, %v6103
        %v6112 = vpack.c.bf16 %v6104, %v6104
        %v6113 = vpack.c.bf16 %v6105, %v6105
        %v6114 = vpack.c.bf16 %v6106, %v6106
        %v6115 = vpack.c.bf16 %v6107, %v6107
        %v6116 = vpack.c.bf16 %v6108, %v6108
        %v6117 = vpack.c.bf16 %v6109, %v6109
        %v6126 = vunpack.c.l.b16 %v6110
        %v6127 = vunpack.c.l.b16 %v6111
        %v6128 = vunpack.c.l.b16 %v6112
        %v6129 = vunpack.c.l.b16 %v6113
        %v6130 = vunpack.c.l.b16 %v6114
        %v6131 = vunpack.c.l.b16 %v6115
        %v6132 = vunpack.c.l.b16 %v6116
        %v6133 = vunpack.c.l.b16 %v6117
        %v6134 = vrot.slane %v6127, 7
        %v6135 = vsel %vm2540, %v6134, %v6126
        %v6136 = vrot.slane %v6128, 6
        %v6137 = vsel %vm2543, %v6136, %v6135
        %v6138 = vrot.slane %v6129, 5
        %v6139 = vsel %vm2546, %v6138, %v6137
        %v6140 = vrot.slane %v6130, 4
        %v6141 = vsel %vm2549, %v6140, %v6139
        %v6142 = vrot.slane %v6131, 3
        %v6143 = vsel %vm2552, %v6142, %v6141
        %v6144 = vrot.slane %v6132, 2
        %v6145 = vsel %vm2555, %v6144, %v6143
        %v6146 = vrot.slane %v6133, 1
        %v6147 = vsel %vm2558, %v6146, %v6145
        %v6148 = vpack.c.b16 %v6147, %v6147
        %v6150 = vsel %vm2416, %v6148, 0
        %v6153 = vsel %vm2564, %v5950, 0
        %6155 = vmatpush.bf16.msra.mxu0 0
        %6156 = vmatpush.bf16.msra.mxu0 0
        %6157 = vmatpush.bf16.msra.mxu0 0
        %6158 = vmatpush.bf16.msra.mxu0 0
        %6159 = vmatpush.bf16.msra.mxu0 0
        %6160 = vmatpush.bf16.msra.mxu0 0
        %6161 = vmatpush.bf16.msra.mxu0 0
        %6162 = vmatpush.bf16.msra.mxu0 %v6153
        %6163 = vmatmul.bf16.gmra.mxu0 %v6150
        %v6164 = vpop.f32.mrf.mxu0
        %v6165 = vadd.f32 0.0, %v6164
        %v6166 = vpop.f32.mrf.mxu0
        %6167 = vdwg.mxu0
        %v6168 = vsel %vm1545, 1, 0
        %vm6169 = vcmp.eq.s32.totalorder %v6168, 1
        %v6170 = vpack.c.bf16 %v4722, %v4722
        %v6171 = vpack.c.bf16 %v5186, %v5186
        %v6172 = vpack.c.bf16 %v5242, %v5242
        %6173 = vmatpush.bf16.xpose.msra.mxu0 0
        %6174 = vmatpush.bf16.xpose.msra.mxu0 0
        %6175 = vmatpush.bf16.xpose.msra.mxu0 0
        %6176 = vmatpush.bf16.xpose.msra.mxu0 0
        %6177 = vmatpush.bf16.xpose.msra.mxu0 0
        %6178 = vmatpush.bf16.xpose.msra.mxu0 0
        %6179 = vmatpush.bf16.xpose.msra.mxu0 0
        %6180 = vmatpush.bf16.xpose.msra.mxu0 %v6171
        %6181 = vmatmul.bf16.gmra.mxu0 %v6170
        %v6182 = vpop.f32.mrf.mxu0
        %v6183 = vadd.f32 0.0, %v6182
        %v6184 = vpop.f32.mrf.mxu0
        %6185 = vdwg.mxu0
        %v6187 = vrot.slane %v6183, 1
        %v6188 = vrot.slane %v6183, 2
        %v6189 = vrot.slane %v6183, 3
        %v6190 = vrot.slane %v6183, 4
        %v6191 = vrot.slane %v6183, 5
        %v6192 = vrot.slane %v6183, 6
        %v6193 = vrot.slane %v6183, 7
        %v6201 = vsel %vm6169, -1e+30, %v6183
        %v6202 = vsel %vm6169, -1e+30, %v6187
        %v6203 = vsel %vm6169, -1e+30, %v6188
        %v6204 = vsel %vm6169, -1e+30, %v6189
        %v6205 = vsel %vm6169, -1e+30, %v6190
        %v6206 = vsel %vm6169, -1e+30, %v6191
        %v6207 = vsel %vm6169, -1e+30, %v6192
        %v6208 = vsel %vm6169, -1e+30, %v6193
        %6217 = vst [vmem:[#allocation1] ss:$9 sm:$0xff] %v6201
        %s6218 = scalar_lea.vmem [#allocation1], 1
        %6219 = vst [vmem:[%s6218] ss:$9 sm:$0xff] %v6202
        %s6220 = scalar_lea.vmem [#allocation1], 2
        %6221 = vst [vmem:[%s6220] ss:$9 sm:$0xff] %v6203
        %s6222 = scalar_lea.vmem [#allocation1], 3
        %6223 = vst [vmem:[%s6222] ss:$9 sm:$0xff] %v6204
        %s6224 = scalar_lea.vmem [#allocation1], 4
        %6225 = vst [vmem:[%s6224] ss:$9 sm:$0xff] %v6205
        %s6226 = scalar_lea.vmem [#allocation1], 5
        %6227 = vst [vmem:[%s6226] ss:$9 sm:$0xff] %v6206
        %s6228 = scalar_lea.vmem [#allocation1], 6
        %6229 = vst [vmem:[%s6228] ss:$9 sm:$0xff] %v6207
        %s6230 = scalar_lea.vmem [#allocation1], 7
        %6231 = vst [vmem:[%s6230] ss:$9 sm:$0xff] %v6208
        %v6232 = vld [vmem:[#allocation1] sm:$0xff]
        %v6234 = vsel %vm2416, %v6232, -inf
        %6235 = vmax.xlane.f32.xlu0 %v6234
        %v6236 = vpop.xlane.xlu0 %6235
        %v6238 = vperm.slane %v6236, 0
        %v6239 = vperm.slane %v6236, 1
        %v6240 = vperm.slane %v6236, 2
        %v6241 = vperm.slane %v6236, 3
        %v6242 = vperm.slane %v6236, 4
        %v6243 = vperm.slane %v6236, 5
        %v6244 = vperm.slane %v6236, 6
        %v6245 = vperm.slane %v6236, 7
        %v6254 = vsub.f32 %v6201, %v6238
        %v6255 = vsub.f32 %v6202, %v6239
        %v6256 = vsub.f32 %v6203, %v6240
        %v6257 = vsub.f32 %v6204, %v6241
        %v6258 = vsub.f32 %v6205, %v6242
        %v6259 = vsub.f32 %v6206, %v6243
        %v6260 = vsub.f32 %v6207, %v6244
        %v6261 = vsub.f32 %v6208, %v6245
        %v6262 = vmul.f32 %v6254, 1.442695
        %v6263 = vpow.pop %v6262
        %v6264 = vmul.f32 %v6255, 1.442695
        %v6265 = vpow.pop %v6264
        %v6266 = vmul.f32 %v6256, 1.442695
        %v6267 = vpow.pop %v6266
        %v6268 = vmul.f32 %v6257, 1.442695
        %v6269 = vpow.pop %v6268
        %v6270 = vmul.f32 %v6258, 1.442695
        %v6271 = vpow.pop %v6270
        %v6272 = vmul.f32 %v6259, 1.442695
        %v6273 = vpow.pop %v6272
        %v6274 = vmul.f32 %v6260, 1.442695
        %v6275 = vpow.pop %v6274
        %v6276 = vmul.f32 %v6261, 1.442695
        %v6277 = vpow.pop %v6276
        %6286 = vst [vmem:[#allocation1] ss:$9 sm:$0xff] %v6263
        %s6287 = scalar_lea.vmem [#allocation1], 1
        %6288 = vst [vmem:[%s6287] ss:$9 sm:$0xff] %v6265
        %s6289 = scalar_lea.vmem [#allocation1], 2
        %6290 = vst [vmem:[%s6289] ss:$9 sm:$0xff] %v6267
        %s6291 = scalar_lea.vmem [#allocation1], 3
        %6292 = vst [vmem:[%s6291] ss:$9 sm:$0xff] %v6269
        %s6293 = scalar_lea.vmem [#allocation1], 4
        %6294 = vst [vmem:[%s6293] ss:$9 sm:$0xff] %v6271
        %s6295 = scalar_lea.vmem [#allocation1], 5
        %6296 = vst [vmem:[%s6295] ss:$9 sm:$0xff] %v6273
        %s6297 = scalar_lea.vmem [#allocation1], 6
        %6298 = vst [vmem:[%s6297] ss:$9 sm:$0xff] %v6275
        %s6299 = scalar_lea.vmem [#allocation1], 7
        %6300 = vst [vmem:[%s6299] ss:$9 sm:$0xff] %v6277
        %v6301 = vld [vmem:[#allocation1] sm:$0xff]
        %v6303 = vsel %vm2416, %v6301, 0.0
        %6304 = vadd.xlane.f32.xlu0 %v6303
        %v6305 = vpop.xlane.xlu0 %6304
        %v6306 = vrcp.pop %v6305
        %v6308 = vperm.slane %v6306, 0
        %v6309 = vperm.slane %v6306, 1
        %v6310 = vperm.slane %v6306, 2
        %v6311 = vperm.slane %v6306, 3
        %v6312 = vperm.slane %v6306, 4
        %v6313 = vperm.slane %v6306, 5
        %v6314 = vperm.slane %v6306, 6
        %v6315 = vperm.slane %v6306, 7
        %v6324 = vmul.f32 %v6263, %v6308
        %v6325 = vmul.f32 %v6265, %v6309
        %v6326 = vmul.f32 %v6267, %v6310
        %v6327 = vmul.f32 %v6269, %v6311
        %v6328 = vmul.f32 %v6271, %v6312
        %v6329 = vmul.f32 %v6273, %v6313
        %v6330 = vmul.f32 %v6275, %v6314
        %v6331 = vmul.f32 %v6277, %v6315
        %v6332 = vpack.c.bf16 %v6324, %v6324
        %v6333 = vpack.c.bf16 %v6325, %v6325
        %v6334 = vpack.c.bf16 %v6326, %v6326
        %v6335 = vpack.c.bf16 %v6327, %v6327
        %v6336 = vpack.c.bf16 %v6328, %v6328
        %v6337 = vpack.c.bf16 %v6329, %v6329
        %v6338 = vpack.c.bf16 %v6330, %v6330
        %v6339 = vpack.c.bf16 %v6331, %v6331
        %v6348 = vunpack.c.l.b16 %v6332
        %v6349 = vunpack.c.l.b16 %v6333
        %v6350 = vunpack.c.l.b16 %v6334
        %v6351 = vunpack.c.l.b16 %v6335
        %v6352 = vunpack.c.l.b16 %v6336
        %v6353 = vunpack.c.l.b16 %v6337
        %v6354 = vunpack.c.l.b16 %v6338
        %v6355 = vunpack.c.l.b16 %v6339
        %v6356 = vrot.slane %v6349, 7
        %v6357 = vsel %vm2540, %v6356, %v6348
        %v6358 = vrot.slane %v6350, 6
        %v6359 = vsel %vm2543, %v6358, %v6357
        %v6360 = vrot.slane %v6351, 5
        %v6361 = vsel %vm2546, %v6360, %v6359
        %v6362 = vrot.slane %v6352, 4
        %v6363 = vsel %vm2549, %v6362, %v6361
        %v6364 = vrot.slane %v6353, 3
        %v6365 = vsel %vm2552, %v6364, %v6363
        %v6366 = vrot.slane %v6354, 2
        %v6367 = vsel %vm2555, %v6366, %v6365
        %v6368 = vrot.slane %v6355, 1
        %v6369 = vsel %vm2558, %v6368, %v6367
        %v6370 = vpack.c.b16 %v6369, %v6369
        %v6372 = vsel %vm2416, %v6370, 0
        %v6375 = vsel %vm2564, %v6172, 0
        %6377 = vmatpush.bf16.msra.mxu0 0
        %6378 = vmatpush.bf16.msra.mxu0 0
        %6379 = vmatpush.bf16.msra.mxu0 0
        %6380 = vmatpush.bf16.msra.mxu0 0
        %6381 = vmatpush.bf16.msra.mxu0 0
        %6382 = vmatpush.bf16.msra.mxu0 0
        %6383 = vmatpush.bf16.msra.mxu0 0
        %6384 = vmatpush.bf16.msra.mxu0 %v6375
        %6385 = vmatmul.bf16.gmra.mxu0 %v6372
        %v6386 = vpop.f32.mrf.mxu0
        %v6387 = vadd.f32 0.0, %v6386
        %v6388 = vpop.f32.mrf.mxu0
        %6389 = vdwg.mxu0
        %v6390 = vpack.c.bf16 %v4736, %v4736
        %v6391 = vpack.c.bf16 %v5200, %v5200
        %v6392 = vpack.c.bf16 %v5256, %v5256
        %6393 = vmatpush.bf16.xpose.msra.mxu0 0
        %6394 = vmatpush.bf16.xpose.msra.mxu0 0
        %6395 = vmatpush.bf16.xpose.msra.mxu0 0
        %6396 = vmatpush.bf16.xpose.msra.mxu0 0
        %6397 = vmatpush.bf16.xpose.msra.mxu0 0
        %6398 = vmatpush.bf16.xpose.msra.mxu0 0
        %6399 = vmatpush.bf16.xpose.msra.mxu0 0
        %6400 = vmatpush.bf16.xpose.msra.mxu0 %v6391
        %6401 = vmatmul.bf16.gmra.mxu0 %v6390
        %v6402 = vpop.f32.mrf.mxu0
        %v6403 = vadd.f32 0.0, %v6402
        %v6404 = vpop.f32.mrf.mxu0
        %6405 = vdwg.mxu0
        %v6407 = vrot.slane %v6403, 1
        %v6408 = vrot.slane %v6403, 2
        %v6409 = vrot.slane %v6403, 3
        %v6410 = vrot.slane %v6403, 4
        %v6411 = vrot.slane %v6403, 5
        %v6412 = vrot.slane %v6403, 6
        %v6413 = vrot.slane %v6403, 7
        %v6421 = vsel %vm6169, -1e+30, %v6403
        %v6422 = vsel %vm6169, -1e+30, %v6407
        %v6423 = vsel %vm6169, -1e+30, %v6408
        %v6424 = vsel %vm6169, -1e+30, %v6409
        %v6425 = vsel %vm6169, -1e+30, %v6410
        %v6426 = vsel %vm6169, -1e+30, %v6411
        %v6427 = vsel %vm6169, -1e+30, %v6412
        %v6428 = vsel %vm6169, -1e+30, %v6413
        %6437 = vst [vmem:[#allocation1] ss:$9 sm:$0xff] %v6421
        %s6438 = scalar_lea.vmem [#allocation1], 1
        %6439 = vst [vmem:[%s6438] ss:$9 sm:$0xff] %v6422
        %s6440 = scalar_lea.vmem [#allocation1], 2
        %6441 = vst [vmem:[%s6440] ss:$9 sm:$0xff] %v6423
        %s6442 = scalar_lea.vmem [#allocation1], 3
        %6443 = vst [vmem:[%s6442] ss:$9 sm:$0xff] %v6424
        %s6444 = scalar_lea.vmem [#allocation1], 4
        %6445 = vst [vmem:[%s6444] ss:$9 sm:$0xff] %v6425
        %s6446 = scalar_lea.vmem [#allocation1], 5
        %6447 = vst [vmem:[%s6446] ss:$9 sm:$0xff] %v6426
        %s6448 = scalar_lea.vmem [#allocation1], 6
        %6449 = vst [vmem:[%s6448] ss:$9 sm:$0xff] %v6427
        %s6450 = scalar_lea.vmem [#allocation1], 7
        %6451 = vst [vmem:[%s6450] ss:$9 sm:$0xff] %v6428
        %v6452 = vld [vmem:[#allocation1] sm:$0xff]
        %v6454 = vsel %vm2416, %v6452, -inf
        %6455 = vmax.xlane.f32.xlu0 %v6454
        %v6456 = vpop.xlane.xlu0 %6455
        %v6458 = vperm.slane %v6456, 0
        %v6459 = vperm.slane %v6456, 1
        %v6460 = vperm.slane %v6456, 2
        %v6461 = vperm.slane %v6456, 3
        %v6462 = vperm.slane %v6456, 4
        %v6463 = vperm.slane %v6456, 5
        %v6464 = vperm.slane %v6456, 6
        %v6465 = vperm.slane %v6456, 7
        %v6474 = vsub.f32 %v6421, %v6458
        %v6475 = vsub.f32 %v6422, %v6459
        %v6476 = vsub.f32 %v6423, %v6460
        %v6477 = vsub.f32 %v6424, %v6461
        %v6478 = vsub.f32 %v6425, %v6462
        %v6479 = vsub.f32 %v6426, %v6463
        %v6480 = vsub.f32 %v6427, %v6464
        %v6481 = vsub.f32 %v6428, %v6465
        %v6482 = vmul.f32 %v6474, 1.442695
        %v6483 = vpow.pop %v6482
        %v6484 = vmul.f32 %v6475, 1.442695
        %v6485 = vpow.pop %v6484
        %v6486 = vmul.f32 %v6476, 1.442695
        %v6487 = vpow.pop %v6486
        %v6488 = vmul.f32 %v6477, 1.442695
        %v6489 = vpow.pop %v6488
        %v6490 = vmul.f32 %v6478, 1.442695
        %v6491 = vpow.pop %v6490
        %v6492 = vmul.f32 %v6479, 1.442695
        %v6493 = vpow.pop %v6492
        %v6494 = vmul.f32 %v6480, 1.442695
        %v6495 = vpow.pop %v6494
        %v6496 = vmul.f32 %v6481, 1.442695
        %v6497 = vpow.pop %v6496
        %6506 = vst [vmem:[#allocation1] ss:$9 sm:$0xff] %v6483
        %s6507 = scalar_lea.vmem [#allocation1], 1
        %6508 = vst [vmem:[%s6507] ss:$9 sm:$0xff] %v6485
        %s6509 = scalar_lea.vmem [#allocation1], 2
        %6510 = vst [vmem:[%s6509] ss:$9 sm:$0xff] %v6487
        %s6511 = scalar_lea.vmem [#allocation1], 3
        %6512 = vst [vmem:[%s6511] ss:$9 sm:$0xff] %v6489
        %s6513 = scalar_lea.vmem [#allocation1], 4
        %6514 = vst [vmem:[%s6513] ss:$9 sm:$0xff] %v6491
        %s6515 = scalar_lea.vmem [#allocation1], 5
        %6516 = vst [vmem:[%s6515] ss:$9 sm:$0xff] %v6493
        %s6517 = scalar_lea.vmem [#allocation1], 6
        %6518 = vst [vmem:[%s6517] ss:$9 sm:$0xff] %v6495
        %s6519 = scalar_lea.vmem [#allocation1], 7
        %6520 = vst [vmem:[%s6519] ss:$9 sm:$0xff] %v6497
        %v6521 = vld [vmem:[#allocation1] sm:$0xff]
        %v6523 = vsel %vm2416, %v6521, 0.0
        %6524 = vadd.xlane.f32.xlu0 %v6523
        %v6525 = vpop.xlane.xlu0 %6524
        %v6526 = vrcp.pop %v6525
        %v6528 = vperm.slane %v6526, 0
        %v6529 = vperm.slane %v6526, 1
        %v6530 = vperm.slane %v6526, 2
        %v6531 = vperm.slane %v6526, 3
        %v6532 = vperm.slane %v6526, 4
        %v6533 = vperm.slane %v6526, 5
        %v6534 = vperm.slane %v6526, 6
        %v6535 = vperm.slane %v6526, 7
        %v6544 = vmul.f32 %v6483, %v6528
        %v6545 = vmul.f32 %v6485, %v6529
        %v6546 = vmul.f32 %v6487, %v6530
        %v6547 = vmul.f32 %v6489, %v6531
        %v6548 = vmul.f32 %v6491, %v6532
        %v6549 = vmul.f32 %v6493, %v6533
        %v6550 = vmul.f32 %v6495, %v6534
        %v6551 = vmul.f32 %v6497, %v6535
        %v6552 = vpack.c.bf16 %v6544, %v6544
        %v6553 = vpack.c.bf16 %v6545, %v6545
        %v6554 = vpack.c.bf16 %v6546, %v6546
        %v6555 = vpack.c.bf16 %v6547, %v6547
        %v6556 = vpack.c.bf16 %v6548, %v6548
        %v6557 = vpack.c.bf16 %v6549, %v6549
        %v6558 = vpack.c.bf16 %v6550, %v6550
        %v6559 = vpack.c.bf16 %v6551, %v6551
        %v6568 = vunpack.c.l.b16 %v6552
        %v6569 = vunpack.c.l.b16 %v6553
        %v6570 = vunpack.c.l.b16 %v6554
        %v6571 = vunpack.c.l.b16 %v6555
        %v6572 = vunpack.c.l.b16 %v6556
        %v6573 = vunpack.c.l.b16 %v6557
        %v6574 = vunpack.c.l.b16 %v6558
        %v6575 = vunpack.c.l.b16 %v6559
        %v6576 = vrot.slane %v6569, 7
        %v6577 = vsel %vm2540, %v6576, %v6568
        %v6578 = vrot.slane %v6570, 6
        %v6579 = vsel %vm2543, %v6578, %v6577
        %v6580 = vrot.slane %v6571, 5
        %v6581 = vsel %vm2546, %v6580, %v6579
        %v6582 = vrot.slane %v6572, 4
        %v6583 = vsel %vm2549, %v6582, %v6581
        %v6584 = vrot.slane %v6573, 3
        %v6585 = vsel %vm2552, %v6584, %v6583
        %v6586 = vrot.slane %v6574, 2
        %v6587 = vsel %vm2555, %v6586, %v6585
        %v6588 = vrot.slane %v6575, 1
        %v6589 = vsel %vm2558, %v6588, %v6587
        %v6590 = vpack.c.b16 %v6589, %v6589
        %v6592 = vsel %vm2416, %v6590, 0
        %v6595 = vsel %vm2564, %v6392, 0
        %6597 = vmatpush.bf16.msra.mxu0 0
        %6598 = vmatpush.bf16.msra.mxu0 0
        %6599 = vmatpush.bf16.msra.mxu0 0
        %6600 = vmatpush.bf16.msra.mxu0 0
        %6601 = vmatpush.bf16.msra.mxu0 0
        %6602 = vmatpush.bf16.msra.mxu0 0
        %6603 = vmatpush.bf16.msra.mxu0 0
        %6604 = vmatpush.bf16.msra.mxu0 %v6595
        %6605 = vmatmul.bf16.gmra.mxu0 %v6592
        %v6606 = vpop.f32.mrf.mxu0
        %v6607 = vadd.f32 0.0, %v6606
        %v6608 = vpop.f32.mrf.mxu0
        %6609 = vdwg.mxu0
        %v6610 = vpack.c.bf16 %v4750, %v4750
        %v6611 = vpack.c.bf16 %v5214, %v5214
        %v6612 = vpack.c.bf16 %v5270, %v5270
        %6613 = vmatpush.bf16.xpose.msra.mxu0 0
        %6614 = vmatpush.bf16.xpose.msra.mxu0 0
        %6615 = vmatpush.bf16.xpose.msra.mxu0 0
        %6616 = vmatpush.bf16.xpose.msra.mxu0 0
        %6617 = vmatpush.bf16.xpose.msra.mxu0 0
        %6618 = vmatpush.bf16.xpose.msra.mxu0 0
        %6619 = vmatpush.bf16.xpose.msra.mxu0 0
        %6620 = vmatpush.bf16.xpose.msra.mxu0 %v6611
        %6621 = vmatmul.bf16.gmra.mxu0 %v6610
        %v6622 = vpop.f32.mrf.mxu0
        %v6623 = vadd.f32 0.0, %v6622
        %v6624 = vpop.f32.mrf.mxu0
        %6625 = vdwg.mxu0
        %v6627 = vrot.slane %v6623, 1
        %v6628 = vrot.slane %v6623, 2
        %v6629 = vrot.slane %v6623, 3
        %v6630 = vrot.slane %v6623, 4
        %v6631 = vrot.slane %v6623, 5
        %v6632 = vrot.slane %v6623, 6
        %v6633 = vrot.slane %v6623, 7
        %v6641 = vsel %vm6169, -1e+30, %v6623
        %v6642 = vsel %vm6169, -1e+30, %v6627
        %v6643 = vsel %vm6169, -1e+30, %v6628
        %v6644 = vsel %vm6169, -1e+30, %v6629
        %v6645 = vsel %vm6169, -1e+30, %v6630
        %v6646 = vsel %vm6169, -1e+30, %v6631
        %v6647 = vsel %vm6169, -1e+30, %v6632
        %v6648 = vsel %vm6169, -1e+30, %v6633
        %6657 = vst [vmem:[#allocation1] ss:$9 sm:$0xff] %v6641
        %s6658 = scalar_lea.vmem [#allocation1], 1
        %6659 = vst [vmem:[%s6658] ss:$9 sm:$0xff] %v6642
        %s6660 = scalar_lea.vmem [#allocation1], 2
        %6661 = vst [vmem:[%s6660] ss:$9 sm:$0xff] %v6643
        %s6662 = scalar_lea.vmem [#allocation1], 3
        %6663 = vst [vmem:[%s6662] ss:$9 sm:$0xff] %v6644
        %s6664 = scalar_lea.vmem [#allocation1], 4
        %6665 = vst [vmem:[%s6664] ss:$9 sm:$0xff] %v6645
        %s6666 = scalar_lea.vmem [#allocation1], 5
        %6667 = vst [vmem:[%s6666] ss:$9 sm:$0xff] %v6646
        %s6668 = scalar_lea.vmem [#allocation1], 6
        %6669 = vst [vmem:[%s6668] ss:$9 sm:$0xff] %v6647
        %s6670 = scalar_lea.vmem [#allocation1], 7
        %6671 = vst [vmem:[%s6670] ss:$9 sm:$0xff] %v6648
        %v6672 = vld [vmem:[#allocation1] sm:$0xff]
        %v6674 = vsel %vm2416, %v6672, -inf
        %6675 = vmax.xlane.f32.xlu0 %v6674
        %v6676 = vpop.xlane.xlu0 %6675
        %v6678 = vperm.slane %v6676, 0
        %v6679 = vperm.slane %v6676, 1
        %v6680 = vperm.slane %v6676, 2
        %v6681 = vperm.slane %v6676, 3
        %v6682 = vperm.slane %v6676, 4
        %v6683 = vperm.slane %v6676, 5
        %v6684 = vperm.slane %v6676, 6
        %v6685 = vperm.slane %v6676, 7
        %v6694 = vsub.f32 %v6641, %v6678
        %v6695 = vsub.f32 %v6642, %v6679
        %v6696 = vsub.f32 %v6643, %v6680
        %v6697 = vsub.f32 %v6644, %v6681
        %v6698 = vsub.f32 %v6645, %v6682
        %v6699 = vsub.f32 %v6646, %v6683
        %v6700 = vsub.f32 %v6647, %v6684
        %v6701 = vsub.f32 %v6648, %v6685
        %v6702 = vmul.f32 %v6694, 1.442695
        %v6703 = vpow.pop %v6702
        %v6704 = vmul.f32 %v6695, 1.442695
        %v6705 = vpow.pop %v6704
        %v6706 = vmul.f32 %v6696, 1.442695
        %v6707 = vpow.pop %v6706
        %v6708 = vmul.f32 %v6697, 1.442695
        %v6709 = vpow.pop %v6708
        %v6710 = vmul.f32 %v6698, 1.442695
        %v6711 = vpow.pop %v6710
        %v6712 = vmul.f32 %v6699, 1.442695
        %v6713 = vpow.pop %v6712
        %v6714 = vmul.f32 %v6700, 1.442695
        %v6715 = vpow.pop %v6714
        %v6716 = vmul.f32 %v6701, 1.442695
        %v6717 = vpow.pop %v6716
        %6726 = vst [vmem:[#allocation1] ss:$9 sm:$0xff] %v6703
        %s6727 = scalar_lea.vmem [#allocation1], 1
        %6728 = vst [vmem:[%s6727] ss:$9 sm:$0xff] %v6705
        %s6729 = scalar_lea.vmem [#allocation1], 2
        %6730 = vst [vmem:[%s6729] ss:$9 sm:$0xff] %v6707
        %s6731 = scalar_lea.vmem [#allocation1], 3
        %6732 = vst [vmem:[%s6731] ss:$9 sm:$0xff] %v6709
        %s6733 = scalar_lea.vmem [#allocation1], 4
        %6734 = vst [vmem:[%s6733] ss:$9 sm:$0xff] %v6711
        %s6735 = scalar_lea.vmem [#allocation1], 5
        %6736 = vst [vmem:[%s6735] ss:$9 sm:$0xff] %v6713
        %s6737 = scalar_lea.vmem [#allocation1], 6
        %6738 = vst [vmem:[%s6737] ss:$9 sm:$0xff] %v6715
        %s6739 = scalar_lea.vmem [#allocation1], 7
        %6740 = vst [vmem:[%s6739] ss:$9 sm:$0xff] %v6717
        %v6741 = vld [vmem:[#allocation1] sm:$0xff]
        %v6743 = vsel %vm2416, %v6741, 0.0
        %6744 = vadd.xlane.f32.xlu0 %v6743
        %v6745 = vpop.xlane.xlu0 %6744
        %v6746 = vrcp.pop %v6745
        %v6748 = vperm.slane %v6746, 0
        %v6749 = vperm.slane %v6746, 1
        %v6750 = vperm.slane %v6746, 2
        %v6751 = vperm.slane %v6746, 3
        %v6752 = vperm.slane %v6746, 4
        %v6753 = vperm.slane %v6746, 5
        %v6754 = vperm.slane %v6746, 6
        %v6755 = vperm.slane %v6746, 7
        %v6764 = vmul.f32 %v6703, %v6748
        %v6765 = vmul.f32 %v6705, %v6749
        %v6766 = vmul.f32 %v6707, %v6750
        %v6767 = vmul.f32 %v6709, %v6751
        %v6768 = vmul.f32 %v6711, %v6752
        %v6769 = vmul.f32 %v6713, %v6753
        %v6770 = vmul.f32 %v6715, %v6754
        %v6771 = vmul.f32 %v6717, %v6755
        %v6772 = vpack.c.bf16 %v6764, %v6764
        %v6773 = vpack.c.bf16 %v6765, %v6765
        %v6774 = vpack.c.bf16 %v6766, %v6766
        %v6775 = vpack.c.bf16 %v6767, %v6767
        %v6776 = vpack.c.bf16 %v6768, %v6768
        %v6777 = vpack.c.bf16 %v6769, %v6769
        %v6778 = vpack.c.bf16 %v6770, %v6770
        %v6779 = vpack.c.bf16 %v6771, %v6771
        %v6788 = vunpack.c.l.b16 %v6772
        %v6789 = vunpack.c.l.b16 %v6773
        %v6790 = vunpack.c.l.b16 %v6774
        %v6791 = vunpack.c.l.b16 %v6775
        %v6792 = vunpack.c.l.b16 %v6776
        %v6793 = vunpack.c.l.b16 %v6777
        %v6794 = vunpack.c.l.b16 %v6778
        %v6795 = vunpack.c.l.b16 %v6779
        %v6796 = vrot.slane %v6789, 7
        %v6797 = vsel %vm2540, %v6796, %v6788
        %v6798 = vrot.slane %v6790, 6
        %v6799 = vsel %vm2543, %v6798, %v6797
        %v6800 = vrot.slane %v6791, 5
        %v6801 = vsel %vm2546, %v6800, %v6799
        %v6802 = vrot.slane %v6792, 4
        %v6803 = vsel %vm2549, %v6802, %v6801
        %v6804 = vrot.slane %v6793, 3
        %v6805 = vsel %vm2552, %v6804, %v6803
        %v6806 = vrot.slane %v6794, 2
        %v6807 = vsel %vm2555, %v6806, %v6805
        %v6808 = vrot.slane %v6795, 1
        %v6809 = vsel %vm2558, %v6808, %v6807
        %v6810 = vpack.c.b16 %v6809, %v6809
        %v6812 = vsel %vm2416, %v6810, 0
        %v6815 = vsel %vm2564, %v6612, 0
        %6817 = vmatpush.bf16.msra.mxu0 0
        %6818 = vmatpush.bf16.msra.mxu0 0
        %6819 = vmatpush.bf16.msra.mxu0 0
        %6820 = vmatpush.bf16.msra.mxu0 0
        %6821 = vmatpush.bf16.msra.mxu0 0
        %6822 = vmatpush.bf16.msra.mxu0 0
        %6823 = vmatpush.bf16.msra.mxu0 0
        %6824 = vmatpush.bf16.msra.mxu0 %v6815
        %6825 = vmatmul.bf16.gmra.mxu0 %v6812
        %v6826 = vpop.f32.mrf.mxu0
        %v6827 = vadd.f32 0.0, %v6826
        %v6828 = vpop.f32.mrf.mxu0
        %6829 = vdwg.mxu0
        %v6830 = vpack.c.bf16 %v4764, %v4764
        %v6831 = vpack.c.bf16 %v5228, %v5228
        %v6832 = vpack.c.bf16 %v5284, %v5284
        %6833 = vmatpush.bf16.xpose.msra.mxu0 0
        %6834 = vmatpush.bf16.xpose.msra.mxu0 0
        %6835 = vmatpush.bf16.xpose.msra.mxu0 0
        %6836 = vmatpush.bf16.xpose.msra.mxu0 0
        %6837 = vmatpush.bf16.xpose.msra.mxu0 0
        %6838 = vmatpush.bf16.xpose.msra.mxu0 0
        %6839 = vmatpush.bf16.xpose.msra.mxu0 0
        %6840 = vmatpush.bf16.xpose.msra.mxu0 %v6831
        %6841 = vmatmul.bf16.gmra.mxu0 %v6830
        %v6842 = vpop.f32.mrf.mxu0
        %v6843 = vadd.f32 0.0, %v6842
        %v6844 = vpop.f32.mrf.mxu0
        %6845 = vdwg.mxu0
        %v6847 = vrot.slane %v6843, 1
        %v6848 = vrot.slane %v6843, 2
        %v6849 = vrot.slane %v6843, 3
        %v6850 = vrot.slane %v6843, 4
        %v6851 = vrot.slane %v6843, 5
        %v6852 = vrot.slane %v6843, 6
        %v6853 = vrot.slane %v6843, 7
        %v6861 = vsel %vm6169, -1e+30, %v6843
        %v6862 = vsel %vm6169, -1e+30, %v6847
        %v6863 = vsel %vm6169, -1e+30, %v6848
        %v6864 = vsel %vm6169, -1e+30, %v6849
        %v6865 = vsel %vm6169, -1e+30, %v6850
        %v6866 = vsel %vm6169, -1e+30, %v6851
        %v6867 = vsel %vm6169, -1e+30, %v6852
        %v6868 = vsel %vm6169, -1e+30, %v6853
        %6877 = vst [vmem:[#allocation1] ss:$9 sm:$0xff] %v6861
        %s6878 = scalar_lea.vmem [#allocation1], 1
        %6879 = vst [vmem:[%s6878] ss:$9 sm:$0xff] %v6862
        %s6880 = scalar_lea.vmem [#allocation1], 2
        %6881 = vst [vmem:[%s6880] ss:$9 sm:$0xff] %v6863
        %s6882 = scalar_lea.vmem [#allocation1], 3
        %6883 = vst [vmem:[%s6882] ss:$9 sm:$0xff] %v6864
        %s6884 = scalar_lea.vmem [#allocation1], 4
        %6885 = vst [vmem:[%s6884] ss:$9 sm:$0xff] %v6865
        %s6886 = scalar_lea.vmem [#allocation1], 5
        %6887 = vst [vmem:[%s6886] ss:$9 sm:$0xff] %v6866
        %s6888 = scalar_lea.vmem [#allocation1], 6
        %6889 = vst [vmem:[%s6888] ss:$9 sm:$0xff] %v6867
        %s6890 = scalar_lea.vmem [#allocation1], 7
        %6891 = vst [vmem:[%s6890] ss:$9 sm:$0xff] %v6868
        %v6892 = vld [vmem:[#allocation1] sm:$0xff]
        %v6894 = vsel %vm2416, %v6892, -inf
        %6895 = vmax.xlane.f32.xlu0 %v6894
        %v6896 = vpop.xlane.xlu0 %6895
        %v6898 = vperm.slane %v6896, 0
        %v6899 = vperm.slane %v6896, 1
        %v6900 = vperm.slane %v6896, 2
        %v6901 = vperm.slane %v6896, 3
        %v6902 = vperm.slane %v6896, 4
        %v6903 = vperm.slane %v6896, 5
        %v6904 = vperm.slane %v6896, 6
        %v6905 = vperm.slane %v6896, 7
        %v6914 = vsub.f32 %v6861, %v6898
        %v6915 = vsub.f32 %v6862, %v6899
        %v6916 = vsub.f32 %v6863, %v6900
        %v6917 = vsub.f32 %v6864, %v6901
        %v6918 = vsub.f32 %v6865, %v6902
        %v6919 = vsub.f32 %v6866, %v6903
        %v6920 = vsub.f32 %v6867, %v6904
        %v6921 = vsub.f32 %v6868, %v6905
        %v6922 = vmul.f32 %v6914, 1.442695
        %v6923 = vpow.pop %v6922
        %v6924 = vmul.f32 %v6915, 1.442695
        %v6925 = vpow.pop %v6924
        %v6926 = vmul.f32 %v6916, 1.442695
        %v6927 = vpow.pop %v6926
        %v6928 = vmul.f32 %v6917, 1.442695
        %v6929 = vpow.pop %v6928
        %v6930 = vmul.f32 %v6918, 1.442695
        %v6931 = vpow.pop %v6930
        %v6932 = vmul.f32 %v6919, 1.442695
        %v6933 = vpow.pop %v6932
        %v6934 = vmul.f32 %v6920, 1.442695
        %v6935 = vpow.pop %v6934
        %v6936 = vmul.f32 %v6921, 1.442695
        %v6937 = vpow.pop %v6936
        %6946 = vst [vmem:[#allocation1] ss:$9 sm:$0xff] %v6923
        %s6947 = scalar_lea.vmem [#allocation1], 1
        %6948 = vst [vmem:[%s6947] ss:$9 sm:$0xff] %v6925
        %s6949 = scalar_lea.vmem [#allocation1], 2
        %6950 = vst [vmem:[%s6949] ss:$9 sm:$0xff] %v6927
        %s6951 = scalar_lea.vmem [#allocation1], 3
        %6952 = vst [vmem:[%s6951] ss:$9 sm:$0xff] %v6929
        %s6953 = scalar_lea.vmem [#allocation1], 4
        %6954 = vst [vmem:[%s6953] ss:$9 sm:$0xff] %v6931
        %s6955 = scalar_lea.vmem [#allocation1], 5
        %6956 = vst [vmem:[%s6955] ss:$9 sm:$0xff] %v6933
        %s6957 = scalar_lea.vmem [#allocation1], 6
        %6958 = vst [vmem:[%s6957] ss:$9 sm:$0xff] %v6935
        %s6959 = scalar_lea.vmem [#allocation1], 7
        %6960 = vst [vmem:[%s6959] ss:$9 sm:$0xff] %v6937
        %v6961 = vld [vmem:[#allocation1] sm:$0xff]
        %v6963 = vsel %vm2416, %v6961, 0.0
        %6964 = vadd.xlane.f32.xlu0 %v6963
        %v6965 = vpop.xlane.xlu0 %6964
        %v6966 = vrcp.pop %v6965
        %v6968 = vperm.slane %v6966, 0
        %v6969 = vperm.slane %v6966, 1
        %v6970 = vperm.slane %v6966, 2
        %v6971 = vperm.slane %v6966, 3
        %v6972 = vperm.slane %v6966, 4
        %v6973 = vperm.slane %v6966, 5
        %v6974 = vperm.slane %v6966, 6
        %v6975 = vperm.slane %v6966, 7
        %v6984 = vmul.f32 %v6923, %v6968
        %v6985 = vmul.f32 %v6925, %v6969
        %v6986 = vmul.f32 %v6927, %v6970
        %v6987 = vmul.f32 %v6929, %v6971
        %v6988 = vmul.f32 %v6931, %v6972
        %v6989 = vmul.f32 %v6933, %v6973
        %v6990 = vmul.f32 %v6935, %v6974
        %v6991 = vmul.f32 %v6937, %v6975
        %v6992 = vpack.c.bf16 %v6984, %v6984
        %v6993 = vpack.c.bf16 %v6985, %v6985
        %v6994 = vpack.c.bf16 %v6986, %v6986
        %v6995 = vpack.c.bf16 %v6987, %v6987
        %v6996 = vpack.c.bf16 %v6988, %v6988
        %v6997 = vpack.c.bf16 %v6989, %v6989
        %v6998 = vpack.c.bf16 %v6990, %v6990
        %v6999 = vpack.c.bf16 %v6991, %v6991
        %v7008 = vunpack.c.l.b16 %v6992
        %v7009 = vunpack.c.l.b16 %v6993
        %v7010 = vunpack.c.l.b16 %v6994
        %v7011 = vunpack.c.l.b16 %v6995
        %v7012 = vunpack.c.l.b16 %v6996
        %v7013 = vunpack.c.l.b16 %v6997
        %v7014 = vunpack.c.l.b16 %v6998
        %v7015 = vunpack.c.l.b16 %v6999
        %v7016 = vrot.slane %v7009, 7
        %v7017 = vsel %vm2540, %v7016, %v7008
        %v7018 = vrot.slane %v7010, 6
        %v7019 = vsel %vm2543, %v7018, %v7017
        %v7020 = vrot.slane %v7011, 5
        %v7021 = vsel %vm2546, %v7020, %v7019
        %v7022 = vrot.slane %v7012, 4
        %v7023 = vsel %vm2549, %v7022, %v7021
        %v7024 = vrot.slane %v7013, 3
        %v7025 = vsel %vm2552, %v7024, %v7023
        %v7026 = vrot.slane %v7014, 2
        %v7027 = vsel %vm2555, %v7026, %v7025
        %v7028 = vrot.slane %v7015, 1
        %v7029 = vsel %vm2558, %v7028, %v7027
        %v7030 = vpack.c.b16 %v7029, %v7029
        %v7032 = vsel %vm2416, %v7030, 0
        %v7035 = vsel %vm2564, %v6832, 0
        %7037 = vmatpush.bf16.msra.mxu0 0
        %7038 = vmatpush.bf16.msra.mxu0 0
        %7039 = vmatpush.bf16.msra.mxu0 0
        %7040 = vmatpush.bf16.msra.mxu0 0
        %7041 = vmatpush.bf16.msra.mxu0 0
        %7042 = vmatpush.bf16.msra.mxu0 0
        %7043 = vmatpush.bf16.msra.mxu0 0
        %7044 = vmatpush.bf16.msra.mxu0 %v7035
        %7045 = vmatmul.bf16.gmra.mxu0 %v7032
        %v7046 = vpop.f32.mrf.mxu0
        %v7047 = vadd.f32 0.0, %v7046
        %v7048 = vpop.f32.mrf.mxu0
        %7049 = vdwg.mxu0
        %v7050 = vpack.c.bf16 %v6387, %v5505
        %v7051 = vpack.c.bf16 %v6607, %v5725
        %v7052 = vpack.c.bf16 %v6827, %v5945
        %v7053 = vpack.c.bf16 %v7047, %v6165
        %v7054 = vld [vmem:[%s1304] sm:$0xf]
        %v7055 = vld [vmem:[%s1304 + $0x4] sm:$0xf]
        %v7056 = vld [vmem:[%s1304 + $0x8] sm:$0xf]
        %v7057 = vld [vmem:[%s1304 + $0xc] sm:$0xf]
        %v7058 = vld [vmem:[%s1304 + $0x10] sm:$0xf]
        %v7059 = vld [vmem:[%s1304 + $0x14] sm:$0xf]
        %v7060 = vld [vmem:[%s1304 + $0x18] sm:$0xf]
        %v7061 = vld [vmem:[%s1304 + $0x1c] sm:$0xf]
        %v7062 = vld [vmem:[%s1304 + $0x20] sm:$0xf]
        %v7063 = vld [vmem:[%s1304 + $0x24] sm:$0xf]
        %v7064 = vld [vmem:[%s1304 + $0x28] sm:$0xf]
        %v7065 = vld [vmem:[%s1304 + $0x2c] sm:$0xf]
        %v7066 = vld [vmem:[%s1304 + $0x30] sm:$0xf]
        %v7067 = vld [vmem:[%s1304 + $0x34] sm:$0xf]
        %v7068 = vld [vmem:[%s1304 + $0x38] sm:$0xf]
        %v7069 = vld [vmem:[%s1304 + $0x3c] sm:$0xf]
        %v7070 = vld [vmem:[%s1304 + $0x40] sm:$0xf]
        %v7071 = vld [vmem:[%s1304 + $0x44] sm:$0xf]
        %v7072 = vld [vmem:[%s1304 + $0x48] sm:$0xf]
        %v7073 = vld [vmem:[%s1304 + $0x4c] sm:$0xf]
        %v7074 = vld [vmem:[%s1304 + $0x50] sm:$0xf]
        %v7075 = vld [vmem:[%s1304 + $0x54] sm:$0xf]
        %v7076 = vld [vmem:[%s1304 + $0x58] sm:$0xf]
        %v7077 = vld [vmem:[%s1304 + $0x5c] sm:$0xf]
        %v7078 = vld [vmem:[%s1304 + $0x60] sm:$0xf]
        %v7079 = vld [vmem:[%s1304 + $0x64] sm:$0xf]
        %v7080 = vld [vmem:[%s1304 + $0x68] sm:$0xf]
        %v7081 = vld [vmem:[%s1304 + $0x6c] sm:$0xf]
        %v7082 = vld [vmem:[%s1304 + $0x70] sm:$0xf]
        %v7083 = vld [vmem:[%s1304 + $0x74] sm:$0xf]
        %v7084 = vld [vmem:[%s1304 + $0x78] sm:$0xf]
        %v7085 = vld [vmem:[%s1304 + $0x7c] sm:$0xf]
        %v7086 = vld [vmem:[%s1304 + $0x80] sm:$0xf]
        %v7087 = vld [vmem:[%s1304 + $0x84] sm:$0xf]
        %v7088 = vld [vmem:[%s1304 + $0x88] sm:$0xf]
        %v7089 = vld [vmem:[%s1304 + $0x8c] sm:$0xf]
        %v7090 = vld [vmem:[%s1304 + $0x90] sm:$0xf]
        %v7091 = vld [vmem:[%s1304 + $0x94] sm:$0xf]
        %v7092 = vld [vmem:[%s1304 + $0x98] sm:$0xf]
        %v7093 = vld [vmem:[%s1304 + $0x9c] sm:$0xf]
        %v7094 = vld [vmem:[%s1304 + $0xa0] sm:$0xf]
        %v7095 = vld [vmem:[%s1304 + $0xa4] sm:$0xf]
        %v7096 = vld [vmem:[%s1304 + $0xa8] sm:$0xf]
        %v7097 = vld [vmem:[%s1304 + $0xac] sm:$0xf]
        %v7098 = vld [vmem:[%s1304 + $0xb0] sm:$0xf]
        %v7099 = vld [vmem:[%s1304 + $0xb4] sm:$0xf]
        %v7100 = vld [vmem:[%s1304 + $0xb8] sm:$0xf]
        %v7101 = vld [vmem:[%s1304 + $0xbc] sm:$0xf]
        %v7102 = vld [vmem:[%s1304 + $0xc0] sm:$0xf]
        %v7103 = vld [vmem:[%s1304 + $0xc4] sm:$0xf]
        %v7104 = vld [vmem:[%s1304 + $0xc8] sm:$0xf]
        %v7105 = vld [vmem:[%s1304 + $0xcc] sm:$0xf]
        %v7106 = vld [vmem:[%s1304 + $0xd0] sm:$0xf]
        %v7107 = vld [vmem:[%s1304 + $0xd4] sm:$0xf]
        %v7108 = vld [vmem:[%s1304 + $0xd8] sm:$0xf]
        %v7109 = vld [vmem:[%s1304 + $0xdc] sm:$0xf]
        %v7110 = vld [vmem:[%s1304 + $0xe0] sm:$0xf]
        %v7111 = vld [vmem:[%s1304 + $0xe4] sm:$0xf]
        %v7112 = vld [vmem:[%s1304 + $0xe8] sm:$0xf]
        %v7113 = vld [vmem:[%s1304 + $0xec] sm:$0xf]
        %v7114 = vld [vmem:[%s1304 + $0xf0] sm:$0xf]
        %v7115 = vld [vmem:[%s1304 + $0xf4] sm:$0xf]
        %v7116 = vld [vmem:[%s1304 + $0xf8] sm:$0xf]
        %v7117 = vld [vmem:[%s1304 + $0xfc] sm:$0xf]
        %v7118 = vld [vmem:[%s1506] sm:$0x1]
        %v7120 = vperm.slane %v7118, 0
        %v7186 = vunpack.c.l.b16 %v7054
        %v7187 = vunpack.c.l.b16 %v7055
        %v7188 = vunpack.c.l.b16 %v7056
        %v7189 = vunpack.c.l.b16 %v7057
        %v7190 = vunpack.c.l.b16 %v7058
        %v7191 = vunpack.c.l.b16 %v7059
        %v7192 = vunpack.c.l.b16 %v7060
        %v7193 = vunpack.c.l.b16 %v7061
        %v7194 = vunpack.c.l.b16 %v7062
        %v7195 = vunpack.c.l.b16 %v7063
        %v7196 = vunpack.c.l.b16 %v7064
        %v7197 = vunpack.c.l.b16 %v7065
        %v7198 = vunpack.c.l.b16 %v7066
        %v7199 = vunpack.c.l.b16 %v7067
        %v7200 = vunpack.c.l.b16 %v7068
        %v7201 = vunpack.c.l.b16 %v7069
        %v7202 = vunpack.c.l.b16 %v7070
        %v7203 = vunpack.c.l.b16 %v7071
        %v7204 = vunpack.c.l.b16 %v7072
        %v7205 = vunpack.c.l.b16 %v7073
        %v7206 = vunpack.c.l.b16 %v7074
        %v7207 = vunpack.c.l.b16 %v7075
        %v7208 = vunpack.c.l.b16 %v7076
        %v7209 = vunpack.c.l.b16 %v7077
        %v7210 = vunpack.c.l.b16 %v7078
        %v7211 = vunpack.c.l.b16 %v7079
        %v7212 = vunpack.c.l.b16 %v7080
        %v7213 = vunpack.c.l.b16 %v7081
        %v7214 = vunpack.c.l.b16 %v7082
        %v7215 = vunpack.c.l.b16 %v7083
        %v7216 = vunpack.c.l.b16 %v7084
        %v7217 = vunpack.c.l.b16 %v7085
        %v7218 = vunpack.c.l.b16 %v7086
        %v7219 = vunpack.c.l.b16 %v7087
        %v7220 = vunpack.c.l.b16 %v7088
        %v7221 = vunpack.c.l.b16 %v7089
        %v7222 = vunpack.c.l.b16 %v7090
        %v7223 = vunpack.c.l.b16 %v7091
        %v7224 = vunpack.c.l.b16 %v7092
        %v7225 = vunpack.c.l.b16 %v7093
        %v7226 = vunpack.c.l.b16 %v7094
        %v7227 = vunpack.c.l.b16 %v7095
        %v7228 = vunpack.c.l.b16 %v7096
        %v7229 = vunpack.c.l.b16 %v7097
        %v7230 = vunpack.c.l.b16 %v7098
        %v7231 = vunpack.c.l.b16 %v7099
        %v7232 = vunpack.c.l.b16 %v7100
        %v7233 = vunpack.c.l.b16 %v7101
        %v7234 = vunpack.c.l.b16 %v7102
        %v7235 = vunpack.c.l.b16 %v7103
        %v7236 = vunpack.c.l.b16 %v7104
        %v7237 = vunpack.c.l.b16 %v7105
        %v7238 = vunpack.c.l.b16 %v7106
        %v7239 = vunpack.c.l.b16 %v7107
        %v7240 = vunpack.c.l.b16 %v7108
        %v7241 = vunpack.c.l.b16 %v7109
        %v7242 = vunpack.c.l.b16 %v7110
        %v7243 = vunpack.c.l.b16 %v7111
        %v7244 = vunpack.c.l.b16 %v7112
        %v7245 = vunpack.c.l.b16 %v7113
        %v7246 = vunpack.c.l.b16 %v7114
        %v7247 = vunpack.c.l.b16 %v7115
        %v7248 = vunpack.c.l.b16 %v7116
        %v7249 = vunpack.c.l.b16 %v7117
        %v7250 = vpack.c.b16 %v7187, %v7186
        %v7251 = vpack.c.b16 %v7189, %v7188
        %v7252 = vpack.c.b16 %v7191, %v7190
        %v7253 = vpack.c.b16 %v7193, %v7192
        %v7254 = vpack.c.b16 %v7195, %v7194
        %v7255 = vpack.c.b16 %v7197, %v7196
        %v7256 = vpack.c.b16 %v7199, %v7198
        %v7257 = vpack.c.b16 %v7201, %v7200
        %v7258 = vpack.c.b16 %v7203, %v7202
        %v7259 = vpack.c.b16 %v7205, %v7204
        %v7260 = vpack.c.b16 %v7207, %v7206
        %v7261 = vpack.c.b16 %v7209, %v7208
        %v7262 = vpack.c.b16 %v7211, %v7210
        %v7263 = vpack.c.b16 %v7213, %v7212
        %v7264 = vpack.c.b16 %v7215, %v7214
        %v7265 = vpack.c.b16 %v7217, %v7216
        %v7266 = vpack.c.b16 %v7219, %v7218
        %v7267 = vpack.c.b16 %v7221, %v7220
        %v7268 = vpack.c.b16 %v7223, %v7222
        %v7269 = vpack.c.b16 %v7225, %v7224
        %v7270 = vpack.c.b16 %v7227, %v7226
        %v7271 = vpack.c.b16 %v7229, %v7228
        %v7272 = vpack.c.b16 %v7231, %v7230
        %v7273 = vpack.c.b16 %v7233, %v7232
        %v7274 = vpack.c.b16 %v7235, %v7234
        %v7275 = vpack.c.b16 %v7237, %v7236
        %v7276 = vpack.c.b16 %v7239, %v7238
        %v7277 = vpack.c.b16 %v7241, %v7240
        %v7278 = vpack.c.b16 %v7243, %v7242
        %v7279 = vpack.c.b16 %v7245, %v7244
        %v7280 = vpack.c.b16 %v7247, %v7246
        %v7281 = vpack.c.b16 %v7249, %v7248
        %7314 = vmatpush.bf16.msra.mxu0 %v7257
        %7315 = vmatpush.bf16.msra.mxu0 %v7256
        %7316 = vmatpush.bf16.msra.mxu0 %v7255
        %7317 = vmatpush.bf16.msra.mxu0 %v7254
        %7318 = vmatpush.bf16.msra.mxu0 %v7253
        %7319 = vmatpush.bf16.msra.mxu0 %v7252
        %7320 = vmatpush.bf16.msra.mxu0 %v7251
        %7321 = vmatpush.bf16.msra.mxu0 %v7250
        %7322 = vmatmul.bf16.gmra.mxu0 %v7050
        %v7323 = vpop.f32.mrf.mxu0
        %v7324 = vadd.f32 %v7120, %v7323
        %v7325 = vpop.f32.mrf.mxu0
        %v7326 = vadd.f32 %v7120, %v7325
        %7327 = vdwg.mxu0
        %7328 = vmatpush.bf16.msra.mxu0 %v7265
        %7329 = vmatpush.bf16.msra.mxu0 %v7264
        %7330 = vmatpush.bf16.msra.mxu0 %v7263
        %7331 = vmatpush.bf16.msra.mxu0 %v7262
        %7332 = vmatpush.bf16.msra.mxu0 %v7261
        %7333 = vmatpush.bf16.msra.mxu0 %v7260
        %7334 = vmatpush.bf16.msra.mxu0 %v7259
        %7335 = vmatpush.bf16.msra.mxu0 %v7258
        %7336 = vmatmul.bf16.gmra.mxu0 %v7051
        %v7337 = vpop.f32.mrf.mxu0
        %v7338 = vadd.f32 %v7324, %v7337
        %v7339 = vpop.f32.mrf.mxu0
        %v7340 = vadd.f32 %v7326, %v7339
        %7341 = vdwg.mxu0
        %7342 = vmatpush.bf16.msra.mxu0 %v7273
        %7343 = vmatpush.bf16.msra.mxu0 %v7272
        %7344 = vmatpush.bf16.msra.mxu0 %v7271
        %7345 = vmatpush.bf16.msra.mxu0 %v7270
        %7346 = vmatpush.bf16.msra.mxu0 %v7269
        %7347 = vmatpush.bf16.msra.mxu0 %v7268
        %7348 = vmatpush.bf16.msra.mxu0 %v7267
        %7349 = vmatpush.bf16.msra.mxu0 %v7266
        %7350 = vmatmul.bf16.gmra.mxu0 %v7052
        %v7351 = vpop.f32.mrf.mxu0
        %v7352 = vadd.f32 %v7338, %v7351
        %v7353 = vpop.f32.mrf.mxu0
        %v7354 = vadd.f32 %v7340, %v7353
        %7355 = vdwg.mxu0
        %7356 = vmatpush.bf16.msra.mxu0 %v7281
        %7357 = vmatpush.bf16.msra.mxu0 %v7280
        %7358 = vmatpush.bf16.msra.mxu0 %v7279
        %7359 = vmatpush.bf16.msra.mxu0 %v7278
        %7360 = vmatpush.bf16.msra.mxu0 %v7277
        %7361 = vmatpush.bf16.msra.mxu0 %v7276
        %7362 = vmatpush.bf16.msra.mxu0 %v7275
        %7363 = vmatpush.bf16.msra.mxu0 %v7274
        %7364 = vmatmul.bf16.gmra.mxu0 %v7053
        %v7365 = vpop.f32.mrf.mxu0
        %v7366 = vadd.f32 %v7352, %v7365
        %v7367 = vpop.f32.mrf.mxu0
        %v7368 = vadd.f32 %v7354, %v7367
        %7369 = vdwg.mxu0
        %v7370 = vadd.f32 %v7366, %v4505
        %v7371 = vadd.f32 %v7368, %v4506
        %7372 = vadd.xlane.f32.xlu0 %v7370
        %v7373 = vpop.xlane.xlu0 %7372
        %7374 = vadd.xlane.f32.xlu0 %v7371
        %v7375 = vpop.xlane.xlu0 %7374
        %v7376 = vmul.f32 %v7373, 0.03125
        %v7377 = vmul.f32 %v7375, 0.03125
        %v7378 = vsub.f32 %v7370, %v7376
        %v7379 = vsub.f32 %v7371, %v7377
        %v7380 = vmul.f32 %v7378, %v1550
        %v7381 = vmul.f32 %v7379, %v1550
        %v7382 = vmul.f32 %v7380, %v7380
        %v7383 = vmul.f32 %v7381, %v7381
        %7384 = vadd.xlane.f32.xlu0 %v7382
        %v7385 = vpop.xlane.xlu0 %7384
        %7386 = vadd.xlane.f32.xlu0 %v7383
        %v7387 = vpop.xlane.xlu0 %7386
        %v7388 = vmul.f32 %v7385, 0.03125
        %v7389 = vmul.f32 %v7387, 0.03125
        %v7390 = vadd.f32 %v7388, 1e-05
        %v7391 = vadd.f32 %v7389, 1e-05
        %v7392 = vrsqrt.pop %v7390
        %v7393 = vmul.f32 %v7392, %v7390
        %v7394 = vmul.f32 %v7393, %v7392
        %v7395 = vmul.f32 0.5, %v7394
        %v7396 = vsub.f32 1.5, %v7395
        %v7397 = vmul.f32 %v7392, %v7396
        %vm7398 = vweird.f32 %v7390
        %vm7399 = vweird.f32 %v7392
        %vm7400 = vmor %vm7398, %vm7399
        %v7401 = vsel %vm7400, %v7392, %v7397
        %v7402 = vrsqrt.pop %v7391
        %v7403 = vmul.f32 %v7402, %v7391
        %v7404 = vmul.f32 %v7403, %v7402
        %v7405 = vmul.f32 0.5, %v7404
        %v7406 = vsub.f32 1.5, %v7405
        %v7407 = vmul.f32 %v7402, %v7406
        %vm7408 = vweird.f32 %v7391
        %vm7409 = vweird.f32 %v7402
        %vm7410 = vmor %vm7408, %vm7409
        %v7411 = vsel %vm7410, %v7402, %v7407
        %v7412 = vmul.f32 %v7380, %v7401
        %v7413 = vmul.f32 %v7381, %v7411
        %v7414 = vld [vmem:[%s1509] sm:$0x1]
        %v7416 = vperm.slane %v7414, 0
        %v7418 = vmul.f32 %v7412, %v7416
        %v7419 = vmul.f32 %v7413, %v7416
        %v7420 = vld [vmem:[%s1512] sm:$0x1]
        %v7422 = vperm.slane %v7420, 0
        %v7424 = vadd.f32 %v7418, %v7422
        %v7425 = vadd.f32 %v7419, %v7422
        %v7426 = vpack.c.bf16 %v7425, %v7424
        %v7427 = vld [vmem:[%s1314] sm:$0xf]
        %v7428 = vld [vmem:[%s1314 + $0x4] sm:$0xf]
        %v7429 = vld [vmem:[%s1314 + $0x8] sm:$0xf]
        %v7430 = vld [vmem:[%s1314 + $0xc] sm:$0xf]
        %v7431 = vld [vmem:[%s1314 + $0x10] sm:$0xf]
        %v7432 = vld [vmem:[%s1314 + $0x14] sm:$0xf]
        %v7433 = vld [vmem:[%s1314 + $0x18] sm:$0xf]
        %v7434 = vld [vmem:[%s1314 + $0x1c] sm:$0xf]
        %v7435 = vld [vmem:[%s1314 + $0x20] sm:$0xf]
        %v7436 = vld [vmem:[%s1314 + $0x24] sm:$0xf]
        %v7437 = vld [vmem:[%s1314 + $0x28] sm:$0xf]
        %v7438 = vld [vmem:[%s1314 + $0x2c] sm:$0xf]
        %v7439 = vld [vmem:[%s1314 + $0x30] sm:$0xf]
        %v7440 = vld [vmem:[%s1314 + $0x34] sm:$0xf]
        %v7441 = vld [vmem:[%s1314 + $0x38] sm:$0xf]
        %v7442 = vld [vmem:[%s1314 + $0x3c] sm:$0xf]
        %v7443 = vld [vmem:[%s1515] sm:$0x1]
        %v7445 = vperm.slane %v7443, 0
        %v7463 = vunpack.c.l.b16 %v7427
        %v7464 = vunpack.c.l.b16 %v7428
        %v7465 = vunpack.c.l.b16 %v7429
        %v7466 = vunpack.c.l.b16 %v7430
        %v7467 = vunpack.c.l.b16 %v7431
        %v7468 = vunpack.c.l.b16 %v7432
        %v7469 = vunpack.c.l.b16 %v7433
        %v7470 = vunpack.c.l.b16 %v7434
        %v7471 = vunpack.c.l.b16 %v7435
        %v7472 = vunpack.c.l.b16 %v7436
        %v7473 = vunpack.c.l.b16 %v7437
        %v7474 = vunpack.c.l.b16 %v7438
        %v7475 = vunpack.c.l.b16 %v7439
        %v7476 = vunpack.c.l.b16 %v7440
        %v7477 = vunpack.c.l.b16 %v7441
        %v7478 = vunpack.c.l.b16 %v7442
        %v7479 = vpack.c.b16 %v7464, %v7463
        %v7480 = vpack.c.b16 %v7466, %v7465
        %v7481 = vpack.c.b16 %v7468, %v7467
        %v7482 = vpack.c.b16 %v7470, %v7469
        %v7483 = vpack.c.b16 %v7472, %v7471
        %v7484 = vpack.c.b16 %v7474, %v7473
        %v7485 = vpack.c.b16 %v7476, %v7475
        %v7486 = vpack.c.b16 %v7478, %v7477
        %7495 = vmatpush.bf16.msra.mxu0 %v7486
        %7496 = vmatpush.bf16.msra.mxu0 %v7485
        %7497 = vmatpush.bf16.msra.mxu0 %v7484
        %7498 = vmatpush.bf16.msra.mxu0 %v7483
        %7499 = vmatpush.bf16.msra.mxu0 %v7482
        %7500 = vmatpush.bf16.msra.mxu0 %v7481
        %7501 = vmatpush.bf16.msra.mxu0 %v7480
        %7502 = vmatpush.bf16.msra.mxu0 %v7479
        %7503 = vmatmul.bf16.gmra.mxu0 %v7426
        %v7504 = vpop.f32.mrf.mxu0
        %v7505 = vadd.f32 %v7445, %v7504
        %v7506 = vpop.f32.mrf.mxu0
        %v7507 = vadd.f32 %v7445, %v7506
        %7508 = vdwg.mxu0
        %v7509 = vmax.f32 %v7505, 0.0
        %v7510 = vmax.f32 %v7507, 0.0
        %v7511 = vpack.c.bf16 %v7510, %v7509
        %v7512 = vld [vmem:[%s1324] sm:$0xf]
        %v7513 = vld [vmem:[%s1324 + $0x4] sm:$0xf]
        %v7514 = vld [vmem:[%s1324 + $0x8] sm:$0xf]
        %v7515 = vld [vmem:[%s1324 + $0xc] sm:$0xf]
        %v7516 = vld [vmem:[%s1324 + $0x10] sm:$0xf]
        %v7517 = vld [vmem:[%s1324 + $0x14] sm:$0xf]
        %v7518 = vld [vmem:[%s1324 + $0x18] sm:$0xf]
        %v7519 = vld [vmem:[%s1324 + $0x1c] sm:$0xf]
        %v7520 = vld [vmem:[%s1324 + $0x20] sm:$0xf]
        %v7521 = vld [vmem:[%s1324 + $0x24] sm:$0xf]
        %v7522 = vld [vmem:[%s1324 + $0x28] sm:$0xf]
        %v7523 = vld [vmem:[%s1324 + $0x2c] sm:$0xf]
        %v7524 = vld [vmem:[%s1324 + $0x30] sm:$0xf]
        %v7525 = vld [vmem:[%s1324 + $0x34] sm:$0xf]
        %v7526 = vld [vmem:[%s1324 + $0x38] sm:$0xf]
        %v7527 = vld [vmem:[%s1324 + $0x3c] sm:$0xf]
        %v7528 = vld [vmem:[%s1518] sm:$0x1]
        %v7530 = vperm.slane %v7528, 0
        %v7548 = vunpack.c.l.b16 %v7512
        %v7549 = vunpack.c.l.b16 %v7513
        %v7550 = vunpack.c.l.b16 %v7514
        %v7551 = vunpack.c.l.b16 %v7515
        %v7552 = vunpack.c.l.b16 %v7516
        %v7553 = vunpack.c.l.b16 %v7517
        %v7554 = vunpack.c.l.b16 %v7518
        %v7555 = vunpack.c.l.b16 %v7519
        %v7556 = vunpack.c.l.b16 %v7520
        %v7557 = vunpack.c.l.b16 %v7521
        %v7558 = vunpack.c.l.b16 %v7522
        %v7559 = vunpack.c.l.b16 %v7523
        %v7560 = vunpack.c.l.b16 %v7524
        %v7561 = vunpack.c.l.b16 %v7525
        %v7562 = vunpack.c.l.b16 %v7526
        %v7563 = vunpack.c.l.b16 %v7527
        %v7564 = vpack.c.b16 %v7549, %v7548
        %v7565 = vpack.c.b16 %v7551, %v7550
        %v7566 = vpack.c.b16 %v7553, %v7552
        %v7567 = vpack.c.b16 %v7555, %v7554
        %v7568 = vpack.c.b16 %v7557, %v7556
        %v7569 = vpack.c.b16 %v7559, %v7558
        %v7570 = vpack.c.b16 %v7561, %v7560
        %v7571 = vpack.c.b16 %v7563, %v7562
        %7580 = vmatpush.bf16.msra.mxu0 %v7571
        %7581 = vmatpush.bf16.msra.mxu0 %v7570
        %7582 = vmatpush.bf16.msra.mxu0 %v7569
        %7583 = vmatpush.bf16.msra.mxu0 %v7568
        %7584 = vmatpush.bf16.msra.mxu0 %v7567
        %7585 = vmatpush.bf16.msra.mxu0 %v7566
        %7586 = vmatpush.bf16.msra.mxu0 %v7565
        %7587 = vmatpush.bf16.msra.mxu0 %v7564
        %7588 = vmatmul.bf16.gmra.mxu0 %v7511
        %v7589 = vpop.f32.mrf.mxu0
        %v7590 = vadd.f32 %v7530, %v7589
        %v7591 = vpop.f32.mrf.mxu0
        %v7592 = vadd.f32 %v7530, %v7591
        %7593 = vdwg.mxu0
        %v7594 = vadd.f32 %v7590, %v7424
        %v7595 = vadd.f32 %v7592, %v7425
        %7596 = vadd.xlane.f32.xlu0 %v7594
        %v7597 = vpop.xlane.xlu0 %7596
        %7598 = vadd.xlane.f32.xlu0 %v7595
        %v7599 = vpop.xlane.xlu0 %7598
        %v7600 = vmul.f32 %v7597, 0.03125
        %v7601 = vmul.f32 %v7599, 0.03125
        %v7602 = vsub.f32 %v7594, %v7600
        %v7603 = vsub.f32 %v7595, %v7601
        %v7604 = vmul.f32 %v7602, %v1550
        %v7605 = vmul.f32 %v7603, %v1550
        %v7606 = vmul.f32 %v7604, %v7604
        %v7607 = vmul.f32 %v7605, %v7605
        %7608 = vadd.xlane.f32.xlu0 %v7606
        %v7609 = vpop.xlane.xlu0 %7608
        %7610 = vadd.xlane.f32.xlu0 %v7607
        %v7611 = vpop.xlane.xlu0 %7610
        %v7612 = vmul.f32 %v7609, 0.03125
        %v7613 = vmul.f32 %v7611, 0.03125
        %v7614 = vadd.f32 %v7612, 1e-05
        %v7615 = vadd.f32 %v7613, 1e-05
        %v7616 = vrsqrt.pop %v7614
        %v7617 = vmul.f32 %v7616, %v7614
        %v7618 = vmul.f32 %v7617, %v7616
        %v7619 = vmul.f32 0.5, %v7618
        %v7620 = vsub.f32 1.5, %v7619
        %v7621 = vmul.f32 %v7616, %v7620
        %vm7622 = vweird.f32 %v7614
        %vm7623 = vweird.f32 %v7616
        %vm7624 = vmor %vm7622, %vm7623
        %v7625 = vsel %vm7624, %v7616, %v7621
        %v7626 = vrsqrt.pop %v7615
        %v7627 = vmul.f32 %v7626, %v7615
        %v7628 = vmul.f32 %v7627, %v7626
        %v7629 = vmul.f32 0.5, %v7628
        %v7630 = vsub.f32 1.5, %v7629
        %v7631 = vmul.f32 %v7626, %v7630
        %vm7632 = vweird.f32 %v7615
        %vm7633 = vweird.f32 %v7626
        %vm7634 = vmor %vm7632, %vm7633
        %v7635 = vsel %vm7634, %v7626, %v7631
        %v7636 = vmul.f32 %v7604, %v7625
        %v7637 = vmul.f32 %v7605, %v7635
        %v7638 = vld [vmem:[%s1333] sm:$0x1]
        %v7640 = vperm.slane %v7638, 0
        %v7642 = vmul.f32 %v7636, %v7640
        %v7643 = vmul.f32 %v7637, %v7640
        %v7644 = vld [vmem:[%s1521] sm:$0x1]
        %v7646 = vperm.slane %v7644, 0
        %v7648 = vadd.f32 %v7642, %v7646
        %v7649 = vadd.f32 %v7643, %v7646
        %v7650 = vpack.c.bf16 %v7648, %v7648
        %v7651 = vpack.c.bf16 %v7649, %v7649
        %7652 = vst [vmem:[#allocation29] sm:$0xf] %v7650
        %7653 = vst [vmem:[#allocation29 + $0x4] sm:$0xf] %v7651
        // Predicated region
        $region197: #{tpu_custom_call.1} parent=123 // pred_check
          %p7654 = pneg %p767
        $region198: #{tpu_custom_call.1} parent=123 // pred_check_branch
          %7656 = sbr.rel (%p7654) target = $region200
        $region199: #{tpu_custom_call.1} parent=123 // pred_region
          %s7657 = smul.u32 2, %s65
          %7659 = vsyncadd [#allocation4], 0
          %s7660 = smul.addr %s7657, 4
          %s7661 = scalar_lea.hbm %s26, %s7660
          %s7662 = sshll.u32 [#allocation29], 4
          %s7663 = int_to_ptr.vmem [resolvable:$true] %s7662
          %s7664 = sshll.u32 %s7661, 4
          %s7665 = int_to_ptr.hbm [resolvable:$true] %s7664
          %7670 = dma.vmem_to_hbm [thread:$0]  %s7663, 128, %s7665, [#allocation4], 64, 64, 4
        $region200: #{tpu_custom_call.1} parent=123 // pred_fallthru
          _
        // Predicated region
        $region201: #{tpu_custom_call.1} parent=123 // pred_check
          %p7671 = pneg %p767
        $region202: #{tpu_custom_call.1} parent=123 // pred_check_branch
          %7673 = sbr.rel (%p7671) target = $region204
        $region203: #{tpu_custom_call.1} parent=123 // pred_region
          %7675 = dma.done [#allocation4], 128
        $region204: #{tpu_custom_call.1} parent=123 // pred_fallthru
          _
      $region124: #{tpu_custom_call.1} parent=5 // pred_fallthru
        _
      %p7676 = scmp.le.s32.totalorder 2, %s56
      // Predicated region
      $region205: #{tpu_custom_call.1} parent=5 // pred_check
        %p7677 = pneg %p7676
      $region206: #{tpu_custom_call.1} parent=5 // pred_check_branch
        %7679 = sbr.rel (%p7677) target = $region208
      $region207: #{tpu_custom_call.1} parent=5 // pred_region
        %s7680 = ssub.s32 %s56, 2
      $region208: #{tpu_custom_call.1} parent=5 // pred_fallthru
        _
    $region6: #{tpu_custom_call.1} parent=1 // loop_footer
      %s60 = sadd.s32 1, %s56
    $region7: #{tpu_custom_call.1} parent=1 // loop_footer_branch
      %55 = sbr.rel target = $region3
    $region8: #{tpu_custom_call.1} parent=1 // loop_exit
      _
    %7681 = vsyncpa [#allocation3], 1
    %s7682 = scalar_lea.sflag [#allocation3], 1
    %7683 = vsyncpa %s7682, 1
    %7684 = vsyncpa [#allocation6], 1
    %7685 = vsyncpa [#allocation9], 1
    %s7686 = scalar_lea.sflag [#allocation9], 1
    %7687 = vsyncpa %s7686, 1
    %7688 = vsyncpa [#allocation12], 1
    %s7689 = scalar_lea.sflag [#allocation12], 1
    %7690 = vsyncpa %s7689, 1
    %7691 = vsyncpa [#allocation15], 1
    %s7692 = scalar_lea.sflag [#allocation15], 1
    %7693 = vsyncpa %s7692, 1
    %7694 = vsyncpa [#allocation18], 1
    %s7695 = scalar_lea.sflag [#allocation18], 1
    %7696 = vsyncpa %s7695, 1
    %7697 = vsyncpa [#allocation21], 1
    %s7698 = scalar_lea.sflag [#allocation21], 1
    %7699 = vsyncpa %s7698, 1
    %7700 = vsyncpa [#allocation24], 1
    %s7701 = scalar_lea.sflag [#allocation24], 1
    %7702 = vsyncpa %s7701, 1
    %7703 = vsyncpa [#allocation27], 1
    %s7704 = scalar_lea.sflag [#allocation27], 1
    %7705 = vsyncpa %s7704, 1
    %7706 = vsyncpa [#allocation4], 1
    %s7707 = scalar_lea.sflag [#allocation4], 1
    %7708 = vsyncpa %s7707, 1

</llo_original>
